<compile_context>
chip_gen: v7x
topology: tpu7x:2x2x1
jax: 0.10.0
libtpu: 0.0.40
codegen_flags: <defaults>
</compile_context>

<pallas_src>
import functools

import jax
import jax.numpy as jnp
from jax.experimental import pallas as pl
from jax.experimental.pallas import tpu as pltpu

BN_EPS = 0.001                       # matches nn.BatchNorm1d(..., eps=0.001)
_FALLBACK_VMEM_CAP = 64 * 1024 * 1024  # conservative (v7x-sized) if query fails


def _round_up(x, m):
    return -(-x // m) * m


def _vmem_limit_bytes():
    """Generation-aware VMEM limit: physical capacity minus headroom, capped."""
    try:
        cap = int(getattr(pltpu.get_tpu_info(), "vmem_capacity_bytes",
                          _FALLBACK_VMEM_CAP))
    except Exception:  # pragma: no cover - defensive on exotic backends
        cap = _FALLBACK_VMEM_CAP
    # ~48 MiB on v7x (64 MiB physical), ~100 MiB on v5e/v6e (128 MiB physical).
    return max(min(cap - 16 * 1024 * 1024, 100 * 1024 * 1024), 32 * 1024 * 1024)


# ----------------------------------------------------------------------------
# Kernel
# ----------------------------------------------------------------------------
def _bn_relu(h, gamma, beta, inv_b):
    """Fused BatchNorm1d (training batch stats, biased var) + ReLU -> bf16.

    One-pass stats (E[h^2]-mean^2, clamped at 0), folded into a single
    scale/shift so the per-element VPU work is one fma + one max. The result is
    cast to bf16 since the next consumer is a bf16 MXU matmul anyway.
    """
    s1 = jnp.sum(h, axis=0, keepdims=True)
    s2 = jnp.sum(h * h, axis=0, keepdims=True)
    mean = s1 * inv_b
    var = jnp.maximum(s2 * inv_b - mean * mean, 0.0)
    scale = gamma * jax.lax.rsqrt(var + BN_EPS)
    shift = beta - mean * scale
    return jnp.maximum(h * scale + shift, 0.0).astype(jnp.bfloat16)


def _dot(a_bf16, w_bf16):
    """MXU matmul: bf16 operands, f32 accumulation."""
    return jnp.dot(a_bf16, w_bf16, preferred_element_type=jnp.float32)


def vae_kernel(x_ref, eps_ref, w_in_ref, w_slab_ref, w_lat_ref, bn_ref,
               w_out_ref, b_out_ref, recon_ref, mulv_ref):
    batch = x_ref.shape[0]
    latent = eps_ref.shape[-1]
    inv_b = jnp.float32(1.0 / batch)

    bn = bn_ref[...]                       # [24,128]: gamma(0-7) | beta(8-15) | b_mulv(16)
    gamma = lambda i: bn[i:i + 1]
    beta = lambda i: bn[8 + i:9 + i]
    b_mulv = bn[16:17]

    # ---- encoder: 4 x (Linear(no bias) -> fused BN -> ReLU) ----
    h = _bn_relu(_dot(x_ref[...], w_in_ref[...]), gamma(0), beta(0), inv_b)
    for i in range(3):
        h = _bn_relu(_dot(h, w_slab_ref[i]), gamma(1 + i), beta(1 + i), inv_b)

    # ---- fused fc_mu | fc_logvar: one [128,128] lane-dense matmul & store ----
    mulv = _dot(h, w_slab_ref[6]) + b_mulv          # cols >= 2*latent are exactly 0
    mulv_ref[...] = mulv
    mu = mulv[:, :latent]
    logvar = mulv[:, latent:2 * latent]

    # ---- reparameterize: z = mu + eps * exp(0.5 * logvar) ----
    z = mu + eps_ref[...] * jnp.exp(0.5 * logvar)

    # ---- decoder: 4 x (Linear(no bias) -> fused BN -> ReLU) + Linear(128, D) ----
    h = _bn_relu(_dot(z.astype(jnp.bfloat16), w_lat_ref[...]), gamma(4), beta(4), inv_b)
    for i in range(3):
        h = _bn_relu(_dot(h, w_slab_ref[3 + i]), gamma(5 + i), beta(5 + i), inv_b)

    # lane-dense (multiple-of-128) reconstruction store; wrapper slices to input_dim
    recon_ref[...] = _dot(h, w_out_ref[...]) + b_out_ref[...]


# ----------------------------------------------------------------------------
# Parameter construction (packed, lane-padded layout)
# ----------------------------------------------------------------------------
def init_vae_params(key, input_dim, latent_dim, block_size):
    """Deterministic init mirroring the PyTorch module.

    Linear weights are stored pre-transposed as [in, out] in bf16. The six
    128x128 mid weights plus the fused/zero-padded mu|logvar weight live in one
    [7,128,128] bf16 slab. gamma/beta/b_mulv live in one [24,128] f32 slab. The
    8 pre-BN linear biases are omitted (BN mean subtraction cancels them).
    BatchNorm affine params: gamma=1, beta=0 (PyTorch default init).
    """
    assert latent_dim <= 64, "fused mu|logvar packing assumes 2*latent_dim <= 128"
    out_pad = _round_up(input_dim, 128)

    def linear_w(k, fan_in, fan_out):
        bound = 1.0 / float(fan_in) ** 0.5
        return jax.random.uniform(k, (fan_in, fan_out), jnp.float32, -bound, bound)

    def linear_b(k, fan_in, fan_out):
        bound = 1.0 / float(fan_in) ** 0.5
        return jax.random.uniform(k, (1, fan_out), jnp.float32, -bound, bound)

    keys = jax.random.split(key, 16)

    w_in = linear_w(keys[0], input_dim, 128)
    mids = ([linear_w(keys[1 + i], 128, 128) for i in range(3)]     # encoder L2-4
            + [linear_w(keys[8 + i], 128, 128) for i in range(3)])  # decoder L2-4
    w_mu, w_lv = linear_w(keys[4], 128, latent_dim), linear_w(keys[5], 128, latent_dim)
    b_mu, b_lv = linear_b(keys[6], 128, latent_dim), linear_b(keys[7], 128, latent_dim)
    w_lat = linear_w(keys[11], latent_dim, 128)
    w_out = linear_w(keys[12], 128, input_dim)
    b_out = linear_b(keys[13], 128, input_dim)

    # fused + lane-padded fc_mu | fc_logvar (cols >= 2*latent are zero)
    w_mulv = jnp.zeros((128, 128), jnp.float32)
    w_mulv = w_mulv.at[:, :latent_dim].set(w_mu).at[:, latent_dim:2 * latent_dim].set(w_lv)
    b_mulv = jnp.zeros((1, 128), jnp.float32)
    b_mulv = b_mulv.at[:, :latent_dim].set(b_mu).at[:, latent_dim:2 * latent_dim].set(b_lv)

    # bf16 weight slab: [0..2]=enc mid, [3..5]=dec mid, [6]=mu|logvar
    w_slab = jnp.stack(mids + [w_mulv], axis=0).astype(jnp.bfloat16)

    # f32 slab: rows 0-7 gamma, 8-15 beta, 16 b_mulv, 17-23 zero pad
    bn_slab = jnp.zeros((24, 128), jnp.float32)
    bn_slab = bn_slab.at[0:8, :].set(1.0)
    bn_slab = bn_slab.at[16:17, :].set(b_mulv)

    # lane-padded output layer (recon padded to a multiple of 128 lanes)
    w_out_pad = jnp.zeros((128, out_pad), jnp.float32).at[:, :input_dim].set(w_out)
    b_out_pad = jnp.zeros((1, out_pad), jnp.float32).at[:, :input_dim].set(b_out)

    params = {
        "w_in": w_in.astype(jnp.bfloat16),
        "w_slab": w_slab,
        "w_lat": w_lat.astype(jnp.bfloat16),
        "bn_slab": bn_slab,
        "w_out": w_out_pad.astype(jnp.bfloat16),
        "b_out": b_out_pad,
    }

    # cov_source / cov_target exist in the module but are unused in forward().
    cov_source = jnp.zeros((block_size, block_size), jnp.float32)
    cov_target = jnp.zeros((block_size, block_size), jnp.float32)
    return params, (cov_source, cov_target)


# ----------------------------------------------------------------------------
# VMEM budget check (whole-batch-resident; BN needs whole-batch statistics)
# ----------------------------------------------------------------------------
def _padded_bytes(rows, cols, itemsize):
    sub = 8 * (4 // itemsize)                 # 8 for f32, 16 for bf16
    return _round_up(rows, sub) * _round_up(cols, 128) * itemsize


def _estimate_vmem_bytes(batch, input_dim, latent_dim):
    out_pad = _round_up(input_dim, 128)
    b = 0
    b += _padded_bytes(batch, input_dim, 2)            # x (bf16)
    b += _padded_bytes(batch, latent_dim, 4)           # eps
    b += _padded_bytes(batch, out_pad, 4)              # recon (padded)
    b += _padded_bytes(batch, 128, 4)                  # mu|logvar (padded)
    b += _padded_bytes(input_dim, 128, 2)              # w_in
    b += 7 * 128 * 128 * 2                             # w_slab
    b += _padded_bytes(latent_dim, 128, 2)              # w_lat
    b += _padded_bytes(24, 128, 4)                      # bn_slab
    b += _padded_bytes(128, out_pad, 2)                 # w_out
    b += _padded_bytes(1, out_pad, 4)                   # b_out
    # live intermediates (a handful of [B,128] f32/bf16 tensors)
    b += 6 * _padded_bytes(batch, 128, 4)
    return b


# ----------------------------------------------------------------------------
# Wrapper
# ----------------------------------------------------------------------------
@functools.partial(jax.jit, static_argnames=("input_dim",))
def vae_forward(x, eps, params, *, input_dim):
    """x: any shape flattening to [-1, input_dim]; eps: [B, latent_dim] ~ N(0,1)."""
    xb = x.reshape(-1, input_dim).astype(jnp.bfloat16)   # first dot is bf16 anyway
    batch = xb.shape[0]
    latent_dim = eps.shape[-1]
    out_pad = _round_up(input_dim, 128)

    vmem_limit = _vmem_limit_bytes()
    need = _estimate_vmem_bytes(batch, input_dim, latent_dim)
    # No grid, no double buffering -> no 2x factor on the estimate.
    assert need <= vmem_limit, (
        "batch too large for single-call, whole-batch-resident VAE kernel "
        f"(need ~{need} B, limit {vmem_limit} B); reduce batch per call "
        "(BN uses whole-batch statistics, so batch tiling needs a two-pass scheme)")

    inputs = [
        xb,
        eps.astype(jnp.float32),
        params["w_in"],
        params["w_slab"],
        params["w_lat"],
        params["bn_slab"],
        params["w_out"],
        params["b_out"],
    ]
    vmem_spec = pl.BlockSpec(memory_space=pltpu.MemorySpace.VMEM)

    out_shape = (
        jax.ShapeDtypeStruct((batch, out_pad), jnp.float32),   # recon (lane-padded)
        jax.ShapeDtypeStruct((batch, 128), jnp.float32),       # mu | logvar (lane-padded)
    )

    # Advisory cost so XLA can overlap the custom call with surrounding ops.
    flops = 2 * batch * (input_dim * 128 + 7 * 128 * 128
                         + latent_dim * 128 + 128 * out_pad)
    transcendentals = batch * latent_dim + 8 * 128
    bytes_accessed = (batch * input_dim * 2 + batch * latent_dim * 4
                      + batch * out_pad * 4 + batch * 128 * 4
                      + input_dim * 128 * 2 + 7 * 128 * 128 * 2
                      + latent_dim * 128 * 2 + 24 * 128 * 4
                      + 128 * out_pad * 2 + out_pad * 4)
    cost = pl.CostEstimate(flops=int(flops),
                           transcendentals=int(transcendentals),
                           bytes_accessed=int(bytes_accessed))

    recon_pad, mulv = pl.pallas_call(
        vae_kernel,
        out_shape=out_shape,
        in_specs=[vmem_spec] * len(inputs),
        out_specs=(vmem_spec, vmem_spec),
        compiler_params=pltpu.CompilerParams(vmem_limit_bytes=vmem_limit),
        cost_estimate=cost,
    )(*inputs)

    recon = recon_pad[:, :input_dim]
    mu = mulv[:, :latent_dim]
    logvar = mulv[:, latent_dim:2 * latent_dim]
    return recon, mu, logvar


if __name__ == "__main__":
    input_dim = 64
    latent_dim = 8
    block_size = 16   # only sizes cov_source/cov_target (unused in forward)

    key = jax.random.PRNGKey(0)
    k_params, k_x, k_eps = jax.random.split(key, 3)

    params, _covs = init_vae_params(k_params, input_dim, latent_dim, block_size)

    # 8 clips x 64 frames -> view(-1, 64) -> 512 rows per call (amortizes weight
    # DMA and fills the MXU; ~5 KB VMEM per row, far under the per-chip budget).
    x = jax.random.normal(k_x, (8, 64, input_dim), dtype=jnp.float32)
    batch = x.shape[0] * x.shape[1]
    eps = jax.random.normal(k_eps, (batch, latent_dim), dtype=jnp.float32)

    recon, mu, logvar = vae_forward(x, eps, params, input_dim=input_dim)
    jax.block_until_ready((recon, mu, logvar))

    assert recon.shape == (batch, input_dim)
    assert mu.shape == (batch, latent_dim)
    assert logvar.shape == (batch, latent_dim)
    assert bool(jnp.all(jnp.isfinite(recon)))
    assert bool(jnp.all(jnp.isfinite(mu)))
    assert bool(jnp.all(jnp.isfinite(logvar)))
    print("KERNEL_OK")
</pallas_src>

<mosaic_0001>
module attributes {stable_mosaic.version = 11 : i64} {
  func.func @vae_kernel(%arg0: memref<512x64xbf16, #tpu.memory_space<vmem>>, %arg1: memref<512x8xf32, #tpu.memory_space<vmem>>, %arg2: memref<64x128xbf16, #tpu.memory_space<vmem>>, %arg3: memref<7x128x128xbf16, #tpu.memory_space<vmem>>, %arg4: memref<8x128xbf16, #tpu.memory_space<vmem>>, %arg5: memref<24x128xf32, #tpu.memory_space<vmem>>, %arg6: memref<128x128xbf16, #tpu.memory_space<vmem>>, %arg7: memref<1x128xf32, #tpu.memory_space<vmem>>, %arg8: memref<512x128xf32, #tpu.memory_space<vmem>>, %arg9: memref<512x128xf32, #tpu.memory_space<vmem>>) attributes {dimension_semantics = [], scalar_prefetch = 0 : i64, scratch_operands = 0 : i64, tpu.core_type = #tpu.core_type<tc>} {
    %c0 = arith.constant 0 : index
    %c0_0 = arith.constant 0 : index
    %0 = vector.load %arg5[%c0, %c0_0] : memref<24x128xf32, #tpu.memory_space<vmem>>, vector<24x128xf32>
    %1 = vector.extract_strided_slice %0 {offsets = [16, 0], sizes = [1, 128], strides = [1, 1]} : vector<24x128xf32> to vector<1x128xf32>
    %c0_1 = arith.constant 0 : index
    %c0_2 = arith.constant 0 : index
    %2 = vector.load %arg0[%c0_1, %c0_2] : memref<512x64xbf16, #tpu.memory_space<vmem>>, vector<512x64xbf16>
    %c0_3 = arith.constant 0 : index
    %c0_4 = arith.constant 0 : index
    %3 = vector.load %arg2[%c0_3, %c0_4] : memref<64x128xbf16, #tpu.memory_space<vmem>>, vector<64x128xbf16>
    %cst = arith.constant dense<0.000000e+00> : vector<512x128xf32>
    %4 = tpu.matmul %2, %3, %cst {dimension_numbers = #tpu.dot_dimension_numbers<[1], [0], [0], [1], [0, 0, 1, 1], [], []>} : vector<512x64xbf16>, vector<64x128xbf16>, vector<512x128xf32> -> vector<512x128xf32>
    %5 = vector.extract_strided_slice %0 {offsets = [0, 0], sizes = [1, 128], strides = [1, 1]} : vector<24x128xf32> to vector<1x128xf32>
    %6 = vector.extract_strided_slice %0 {offsets = [8, 0], sizes = [1, 128], strides = [1, 1]} : vector<24x128xf32> to vector<1x128xf32>
    %cst_5 = arith.constant dense<0.000000e+00> : vector<128xf32>
    %7 = vector.multi_reduction <add>, %4, %cst_5 [0] : vector<512x128xf32> to vector<128xf32>
    %8 = vector.shape_cast %7 : vector<128xf32> to vector<1x128xf32>
    %9 = arith.mulf %4, %4 : vector<512x128xf32>
    %cst_6 = arith.constant dense<0.000000e+00> : vector<128xf32>
    %10 = vector.multi_reduction <add>, %9, %cst_6 [0] : vector<512x128xf32> to vector<128xf32>
    %11 = vector.shape_cast %10 : vector<128xf32> to vector<1x128xf32>
    %cst_7 = arith.constant 0.001953125 : f32
    %12 = vector.broadcast %cst_7 : f32 to vector<1x128xf32>
    %13 = arith.mulf %8, %12 : vector<1x128xf32>
    %cst_8 = arith.constant 0.001953125 : f32
    %14 = vector.broadcast %cst_8 : f32 to vector<1x128xf32>
    %15 = arith.mulf %11, %14 : vector<1x128xf32>
    %16 = arith.mulf %13, %13 : vector<1x128xf32>
    %17 = arith.subf %15, %16 : vector<1x128xf32>
    %cst_9 = arith.constant 0.000000e+00 : f32
    %18 = vector.broadcast %cst_9 : f32 to vector<1x128xf32>
    %19 = arith.maximumf %17, %18 : vector<1x128xf32>
    %cst_10 = arith.constant 1.000000e-03 : f32
    %20 = vector.broadcast %cst_10 : f32 to vector<1x128xf32>
    %21 = arith.addf %19, %20 : vector<1x128xf32>
    %22 = math.rsqrt %21 : vector<1x128xf32>
    %23 = arith.mulf %5, %22 : vector<1x128xf32>
    %24 = arith.mulf %13, %23 : vector<1x128xf32>
    %25 = arith.subf %6, %24 : vector<1x128xf32>
    %26 = vector.broadcast %23 : vector<1x128xf32> to vector<512x128xf32>
    %27 = arith.mulf %4, %26 : vector<512x128xf32>
    %28 = vector.broadcast %25 : vector<1x128xf32> to vector<512x128xf32>
    %29 = arith.addf %27, %28 : vector<512x128xf32>
    %cst_11 = arith.constant 0.000000e+00 : f32
    %30 = vector.broadcast %cst_11 : f32 to vector<512x128xf32>
    %31 = arith.maximumf %29, %30 : vector<512x128xf32>
    %32 = arith.truncf %31 : vector<512x128xf32> to vector<512x128xbf16>
    %c0_12 = arith.constant 0 : index
    %c0_13 = arith.constant 0 : index
    %c0_14 = arith.constant 0 : index
    %33 = vector.load %arg3[%c0_12, %c0_13, %c0_14] : memref<7x128x128xbf16, #tpu.memory_space<vmem>>, vector<1x128x128xbf16>
    %34 = vector.shape_cast %33 : vector<1x128x128xbf16> to vector<128x128xbf16>
    %cst_15 = arith.constant dense<0.000000e+00> : vector<512x128xf32>
    %35 = tpu.matmul %32, %34, %cst_15 {dimension_numbers = #tpu.dot_dimension_numbers<[1], [0], [0], [1], [0, 0, 1, 1], [], []>} : vector<512x128xbf16>, vector<128x128xbf16>, vector<512x128xf32> -> vector<512x128xf32>
    %36 = vector.extract_strided_slice %0 {offsets = [1, 0], sizes = [1, 128], strides = [1, 1]} : vector<24x128xf32> to vector<1x128xf32>
    %37 = vector.extract_strided_slice %0 {offsets = [9, 0], sizes = [1, 128], strides = [1, 1]} : vector<24x128xf32> to vector<1x128xf32>
    %cst_16 = arith.constant dense<0.000000e+00> : vector<128xf32>
    %38 = vector.multi_reduction <add>, %35, %cst_16 [0] : vector<512x128xf32> to vector<128xf32>
    %39 = vector.shape_cast %38 : vector<128xf32> to vector<1x128xf32>
    %40 = arith.mulf %35, %35 : vector<512x128xf32>
    %cst_17 = arith.constant dense<0.000000e+00> : vector<128xf32>
    %41 = vector.multi_reduction <add>, %40, %cst_17 [0] : vector<512x128xf32> to vector<128xf32>
    %42 = vector.shape_cast %41 : vector<128xf32> to vector<1x128xf32>
    %cst_18 = arith.constant 0.001953125 : f32
    %43 = vector.broadcast %cst_18 : f32 to vector<1x128xf32>
    %44 = arith.mulf %39, %43 : vector<1x128xf32>
    %cst_19 = arith.constant 0.001953125 : f32
    %45 = vector.broadcast %cst_19 : f32 to vector<1x128xf32>
    %46 = arith.mulf %42, %45 : vector<1x128xf32>
    %47 = arith.mulf %44, %44 : vector<1x128xf32>
    %48 = arith.subf %46, %47 : vector<1x128xf32>
    %cst_20 = arith.constant 0.000000e+00 : f32
    %49 = vector.broadcast %cst_20 : f32 to vector<1x128xf32>
    %50 = arith.maximumf %48, %49 : vector<1x128xf32>
    %cst_21 = arith.constant 1.000000e-03 : f32
    %51 = vector.broadcast %cst_21 : f32 to vector<1x128xf32>
    %52 = arith.addf %50, %51 : vector<1x128xf32>
    %53 = math.rsqrt %52 : vector<1x128xf32>
    %54 = arith.mulf %36, %53 : vector<1x128xf32>
    %55 = arith.mulf %44, %54 : vector<1x128xf32>
    %56 = arith.subf %37, %55 : vector<1x128xf32>
    %57 = vector.broadcast %54 : vector<1x128xf32> to vector<512x128xf32>
    %58 = arith.mulf %35, %57 : vector<512x128xf32>
    %59 = vector.broadcast %56 : vector<1x128xf32> to vector<512x128xf32>
    %60 = arith.addf %58, %59 : vector<512x128xf32>
    %cst_22 = arith.constant 0.000000e+00 : f32
    %61 = vector.broadcast %cst_22 : f32 to vector<512x128xf32>
    %62 = arith.maximumf %60, %61 : vector<512x128xf32>
    %63 = arith.truncf %62 : vector<512x128xf32> to vector<512x128xbf16>
    %c1 = arith.constant 1 : index
    %c0_23 = arith.constant 0 : index
    %c0_24 = arith.constant 0 : index
    %64 = vector.load %arg3[%c1, %c0_23, %c0_24] : memref<7x128x128xbf16, #tpu.memory_space<vmem>>, vector<1x128x128xbf16>
    %65 = vector.shape_cast %64 : vector<1x128x128xbf16> to vector<128x128xbf16>
    %cst_25 = arith.constant dense<0.000000e+00> : vector<512x128xf32>
    %66 = tpu.matmul %63, %65, %cst_25 {dimension_numbers = #tpu.dot_dimension_numbers<[1], [0], [0], [1], [0, 0, 1, 1], [], []>} : vector<512x128xbf16>, vector<128x128xbf16>, vector<512x128xf32> -> vector<512x128xf32>
    %67 = vector.extract_strided_slice %0 {offsets = [2, 0], sizes = [1, 128], strides = [1, 1]} : vector<24x128xf32> to vector<1x128xf32>
    %68 = vector.extract_strided_slice %0 {offsets = [10, 0], sizes = [1, 128], strides = [1, 1]} : vector<24x128xf32> to vector<1x128xf32>
    %cst_26 = arith.constant dense<0.000000e+00> : vector<128xf32>
    %69 = vector.multi_reduction <add>, %66, %cst_26 [0] : vector<512x128xf32> to vector<128xf32>
    %70 = vector.shape_cast %69 : vector<128xf32> to vector<1x128xf32>
    %71 = arith.mulf %66, %66 : vector<512x128xf32>
    %cst_27 = arith.constant dense<0.000000e+00> : vector<128xf32>
    %72 = vector.multi_reduction <add>, %71, %cst_27 [0] : vector<512x128xf32> to vector<128xf32>
    %73 = vector.shape_cast %72 : vector<128xf32> to vector<1x128xf32>
    %cst_28 = arith.constant 0.001953125 : f32
    %74 = vector.broadcast %cst_28 : f32 to vector<1x128xf32>
    %75 = arith.mulf %70, %74 : vector<1x128xf32>
    %cst_29 = arith.constant 0.001953125 : f32
    %76 = vector.broadcast %cst_29 : f32 to vector<1x128xf32>
    %77 = arith.mulf %73, %76 : vector<1x128xf32>
    %78 = arith.mulf %75, %75 : vector<1x128xf32>
    %79 = arith.subf %77, %78 : vector<1x128xf32>
    %cst_30 = arith.constant 0.000000e+00 : f32
    %80 = vector.broadcast %cst_30 : f32 to vector<1x128xf32>
    %81 = arith.maximumf %79, %80 : vector<1x128xf32>
    %cst_31 = arith.constant 1.000000e-03 : f32
    %82 = vector.broadcast %cst_31 : f32 to vector<1x128xf32>
    %83 = arith.addf %81, %82 : vector<1x128xf32>
    %84 = math.rsqrt %83 : vector<1x128xf32>
    %85 = arith.mulf %67, %84 : vector<1x128xf32>
    %86 = arith.mulf %75, %85 : vector<1x128xf32>
    %87 = arith.subf %68, %86 : vector<1x128xf32>
    %88 = vector.broadcast %85 : vector<1x128xf32> to vector<512x128xf32>
    %89 = arith.mulf %66, %88 : vector<512x128xf32>
    %90 = vector.broadcast %87 : vector<1x128xf32> to vector<512x128xf32>
    %91 = arith.addf %89, %90 : vector<512x128xf32>
    %cst_32 = arith.constant 0.000000e+00 : f32
    %92 = vector.broadcast %cst_32 : f32 to vector<512x128xf32>
    %93 = arith.maximumf %91, %92 : vector<512x128xf32>
    %94 = arith.truncf %93 : vector<512x128xf32> to vector<512x128xbf16>
    %c2 = arith.constant 2 : index
    %c0_33 = arith.constant 0 : index
    %c0_34 = arith.constant 0 : index
    %95 = vector.load %arg3[%c2, %c0_33, %c0_34] : memref<7x128x128xbf16, #tpu.memory_space<vmem>>, vector<1x128x128xbf16>
    %96 = vector.shape_cast %95 : vector<1x128x128xbf16> to vector<128x128xbf16>
    %cst_35 = arith.constant dense<0.000000e+00> : vector<512x128xf32>
    %97 = tpu.matmul %94, %96, %cst_35 {dimension_numbers = #tpu.dot_dimension_numbers<[1], [0], [0], [1], [0, 0, 1, 1], [], []>} : vector<512x128xbf16>, vector<128x128xbf16>, vector<512x128xf32> -> vector<512x128xf32>
    %98 = vector.extract_strided_slice %0 {offsets = [3, 0], sizes = [1, 128], strides = [1, 1]} : vector<24x128xf32> to vector<1x128xf32>
    %99 = vector.extract_strided_slice %0 {offsets = [11, 0], sizes = [1, 128], strides = [1, 1]} : vector<24x128xf32> to vector<1x128xf32>
    %cst_36 = arith.constant dense<0.000000e+00> : vector<128xf32>
    %100 = vector.multi_reduction <add>, %97, %cst_36 [0] : vector<512x128xf32> to vector<128xf32>
    %101 = vector.shape_cast %100 : vector<128xf32> to vector<1x128xf32>
    %102 = arith.mulf %97, %97 : vector<512x128xf32>
    %cst_37 = arith.constant dense<0.000000e+00> : vector<128xf32>
    %103 = vector.multi_reduction <add>, %102, %cst_37 [0] : vector<512x128xf32> to vector<128xf32>
    %104 = vector.shape_cast %103 : vector<128xf32> to vector<1x128xf32>
    %cst_38 = arith.constant 0.001953125 : f32
    %105 = vector.broadcast %cst_38 : f32 to vector<1x128xf32>
    %106 = arith.mulf %101, %105 : vector<1x128xf32>
    %cst_39 = arith.constant 0.001953125 : f32
    %107 = vector.broadcast %cst_39 : f32 to vector<1x128xf32>
    %108 = arith.mulf %104, %107 : vector<1x128xf32>
    %109 = arith.mulf %106, %106 : vector<1x128xf32>
    %110 = arith.subf %108, %109 : vector<1x128xf32>
    %cst_40 = arith.constant 0.000000e+00 : f32
    %111 = vector.broadcast %cst_40 : f32 to vector<1x128xf32>
    %112 = arith.maximumf %110, %111 : vector<1x128xf32>
    %cst_41 = arith.constant 1.000000e-03 : f32
    %113 = vector.broadcast %cst_41 : f32 to vector<1x128xf32>
    %114 = arith.addf %112, %113 : vector<1x128xf32>
    %115 = math.rsqrt %114 : vector<1x128xf32>
    %116 = arith.mulf %98, %115 : vector<1x128xf32>
    %117 = arith.mulf %106, %116 : vector<1x128xf32>
    %118 = arith.subf %99, %117 : vector<1x128xf32>
    %119 = vector.broadcast %116 : vector<1x128xf32> to vector<512x128xf32>
    %120 = arith.mulf %97, %119 : vector<512x128xf32>
    %121 = vector.broadcast %118 : vector<1x128xf32> to vector<512x128xf32>
    %122 = arith.addf %120, %121 : vector<512x128xf32>
    %cst_42 = arith.constant 0.000000e+00 : f32
    %123 = vector.broadcast %cst_42 : f32 to vector<512x128xf32>
    %124 = arith.maximumf %122, %123 : vector<512x128xf32>
    %125 = arith.truncf %124 : vector<512x128xf32> to vector<512x128xbf16>
    %c6 = arith.constant 6 : index
    %c0_43 = arith.constant 0 : index
    %c0_44 = arith.constant 0 : index
    %126 = vector.load %arg3[%c6, %c0_43, %c0_44] : memref<7x128x128xbf16, #tpu.memory_space<vmem>>, vector<1x128x128xbf16>
    %127 = vector.shape_cast %126 : vector<1x128x128xbf16> to vector<128x128xbf16>
    %cst_45 = arith.constant dense<0.000000e+00> : vector<512x128xf32>
    %128 = tpu.matmul %125, %127, %cst_45 {dimension_numbers = #tpu.dot_dimension_numbers<[1], [0], [0], [1], [0, 0, 1, 1], [], []>} : vector<512x128xbf16>, vector<128x128xbf16>, vector<512x128xf32> -> vector<512x128xf32>
    %129 = vector.broadcast %1 : vector<1x128xf32> to vector<512x128xf32>
    %130 = arith.addf %128, %129 : vector<512x128xf32>
    %c0_46 = arith.constant 0 : index
    %c0_47 = arith.constant 0 : index
    %131 = vector.load %arg9[%c0_46, %c0_47] : memref<512x128xf32, #tpu.memory_space<vmem>>, vector<512x128xf32>
    tpu.vector_store %arg9[%c0_46, %c0_47], %130 {strides = array<i32>} : memref<512x128xf32, #tpu.memory_space<vmem>>, vector<512x128xf32>,
    %132 = vector.extract_strided_slice %130 {offsets = [0, 0], sizes = [512, 8], strides = [1, 1]} : vector<512x128xf32> to vector<512x8xf32>
    %133 = vector.extract_strided_slice %130 {offsets = [0, 8], sizes = [512, 8], strides = [1, 1]} : vector<512x128xf32> to vector<512x8xf32>
    %c0_48 = arith.constant 0 : index
    %c0_49 = arith.constant 0 : index
    %134 = vector.load %arg1[%c0_48, %c0_49] : memref<512x8xf32, #tpu.memory_space<vmem>>, vector<512x8xf32>
    %cst_50 = arith.constant 5.000000e-01 : f32
    %135 = vector.broadcast %cst_50 : f32 to vector<512x8xf32>
    %136 = arith.mulf %135, %133 : vector<512x8xf32>
    %137 = math.exp %136 : vector<512x8xf32>
    %138 = arith.mulf %134, %137 : vector<512x8xf32>
    %139 = arith.addf %132, %138 : vector<512x8xf32>
    %140 = arith.truncf %139 : vector<512x8xf32> to vector<512x8xbf16>
    %c0_51 = arith.constant 0 : index
    %c0_52 = arith.constant 0 : index
    %141 = vector.load %arg4[%c0_51, %c0_52] : memref<8x128xbf16, #tpu.memory_space<vmem>>, vector<8x128xbf16>
    %cst_53 = arith.constant dense<0.000000e+00> : vector<512x128xf32>
    %142 = tpu.matmul %140, %141, %cst_53 {dimension_numbers = #tpu.dot_dimension_numbers<[1], [0], [0], [1], [0, 0, 1, 1], [], []>} : vector<512x8xbf16>, vector<8x128xbf16>, vector<512x128xf32> -> vector<512x128xf32>
    %143 = vector.extract_strided_slice %0 {offsets = [4, 0], sizes = [1, 128], strides = [1, 1]} : vector<24x128xf32> to vector<1x128xf32>
    %144 = vector.extract_strided_slice %0 {offsets = [12, 0], sizes = [1, 128], strides = [1, 1]} : vector<24x128xf32> to vector<1x128xf32>
    %cst_54 = arith.constant dense<0.000000e+00> : vector<128xf32>
    %145 = vector.multi_reduction <add>, %142, %cst_54 [0] : vector<512x128xf32> to vector<128xf32>
    %146 = vector.shape_cast %145 : vector<128xf32> to vector<1x128xf32>
    %147 = arith.mulf %142, %142 : vector<512x128xf32>
    %cst_55 = arith.constant dense<0.000000e+00> : vector<128xf32>
    %148 = vector.multi_reduction <add>, %147, %cst_55 [0] : vector<512x128xf32> to vector<128xf32>
    %149 = vector.shape_cast %148 : vector<128xf32> to vector<1x128xf32>
    %cst_56 = arith.constant 0.001953125 : f32
    %150 = vector.broadcast %cst_56 : f32 to vector<1x128xf32>
    %151 = arith.mulf %146, %150 : vector<1x128xf32>
    %cst_57 = arith.constant 0.001953125 : f32
    %152 = vector.broadcast %cst_57 : f32 to vector<1x128xf32>
    %153 = arith.mulf %149, %152 : vector<1x128xf32>
    %154 = arith.mulf %151, %151 : vector<1x128xf32>
    %155 = arith.subf %153, %154 : vector<1x128xf32>
    %cst_58 = arith.constant 0.000000e+00 : f32
    %156 = vector.broadcast %cst_58 : f32 to vector<1x128xf32>
    %157 = arith.maximumf %155, %156 : vector<1x128xf32>
    %cst_59 = arith.constant 1.000000e-03 : f32
    %158 = vector.broadcast %cst_59 : f32 to vector<1x128xf32>
    %159 = arith.addf %157, %158 : vector<1x128xf32>
    %160 = math.rsqrt %159 : vector<1x128xf32>
    %161 = arith.mulf %143, %160 : vector<1x128xf32>
    %162 = arith.mulf %151, %161 : vector<1x128xf32>
    %163 = arith.subf %144, %162 : vector<1x128xf32>
    %164 = vector.broadcast %161 : vector<1x128xf32> to vector<512x128xf32>
    %165 = arith.mulf %142, %164 : vector<512x128xf32>
    %166 = vector.broadcast %163 : vector<1x128xf32> to vector<512x128xf32>
    %167 = arith.addf %165, %166 : vector<512x128xf32>
    %cst_60 = arith.constant 0.000000e+00 : f32
    %168 = vector.broadcast %cst_60 : f32 to vector<512x128xf32>
    %169 = arith.maximumf %167, %168 : vector<512x128xf32>
    %170 = arith.truncf %169 : vector<512x128xf32> to vector<512x128xbf16>
    %c3 = arith.constant 3 : index
    %c0_61 = arith.constant 0 : index
    %c0_62 = arith.constant 0 : index
    %171 = vector.load %arg3[%c3, %c0_61, %c0_62] : memref<7x128x128xbf16, #tpu.memory_space<vmem>>, vector<1x128x128xbf16>
    %172 = vector.shape_cast %171 : vector<1x128x128xbf16> to vector<128x128xbf16>
    %cst_63 = arith.constant dense<0.000000e+00> : vector<512x128xf32>
    %173 = tpu.matmul %170, %172, %cst_63 {dimension_numbers = #tpu.dot_dimension_numbers<[1], [0], [0], [1], [0, 0, 1, 1], [], []>} : vector<512x128xbf16>, vector<128x128xbf16>, vector<512x128xf32> -> vector<512x128xf32>
    %174 = vector.extract_strided_slice %0 {offsets = [5, 0], sizes = [1, 128], strides = [1, 1]} : vector<24x128xf32> to vector<1x128xf32>
    %175 = vector.extract_strided_slice %0 {offsets = [13, 0], sizes = [1, 128], strides = [1, 1]} : vector<24x128xf32> to vector<1x128xf32>
    %cst_64 = arith.constant dense<0.000000e+00> : vector<128xf32>
    %176 = vector.multi_reduction <add>, %173, %cst_64 [0] : vector<512x128xf32> to vector<128xf32>
    %177 = vector.shape_cast %176 : vector<128xf32> to vector<1x128xf32>
    %178 = arith.mulf %173, %173 : vector<512x128xf32>
    %cst_65 = arith.constant dense<0.000000e+00> : vector<128xf32>
    %179 = vector.multi_reduction <add>, %178, %cst_65 [0] : vector<512x128xf32> to vector<128xf32>
    %180 = vector.shape_cast %179 : vector<128xf32> to vector<1x128xf32>
    %cst_66 = arith.constant 0.001953125 : f32
    %181 = vector.broadcast %cst_66 : f32 to vector<1x128xf32>
    %182 = arith.mulf %177, %181 : vector<1x128xf32>
    %cst_67 = arith.constant 0.001953125 : f32
    %183 = vector.broadcast %cst_67 : f32 to vector<1x128xf32>
    %184 = arith.mulf %180, %183 : vector<1x128xf32>
    %185 = arith.mulf %182, %182 : vector<1x128xf32>
    %186 = arith.subf %184, %185 : vector<1x128xf32>
    %cst_68 = arith.constant 0.000000e+00 : f32
    %187 = vector.broadcast %cst_68 : f32 to vector<1x128xf32>
    %188 = arith.maximumf %186, %187 : vector<1x128xf32>
    %cst_69 = arith.constant 1.000000e-03 : f32
    %189 = vector.broadcast %cst_69 : f32 to vector<1x128xf32>
    %190 = arith.addf %188, %189 : vector<1x128xf32>
    %191 = math.rsqrt %190 : vector<1x128xf32>
    %192 = arith.mulf %174, %191 : vector<1x128xf32>
    %193 = arith.mulf %182, %192 : vector<1x128xf32>
    %194 = arith.subf %175, %193 : vector<1x128xf32>
    %195 = vector.broadcast %192 : vector<1x128xf32> to vector<512x128xf32>
    %196 = arith.mulf %173, %195 : vector<512x128xf32>
    %197 = vector.broadcast %194 : vector<1x128xf32> to vector<512x128xf32>
    %198 = arith.addf %196, %197 : vector<512x128xf32>
    %cst_70 = arith.constant 0.000000e+00 : f32
    %199 = vector.broadcast %cst_70 : f32 to vector<512x128xf32>
    %200 = arith.maximumf %198, %199 : vector<512x128xf32>
    %201 = arith.truncf %200 : vector<512x128xf32> to vector<512x128xbf16>
    %c4 = arith.constant 4 : index
    %c0_71 = arith.constant 0 : index
    %c0_72 = arith.constant 0 : index
    %202 = vector.load %arg3[%c4, %c0_71, %c0_72] : memref<7x128x128xbf16, #tpu.memory_space<vmem>>, vector<1x128x128xbf16>
    %203 = vector.shape_cast %202 : vector<1x128x128xbf16> to vector<128x128xbf16>
    %cst_73 = arith.constant dense<0.000000e+00> : vector<512x128xf32>
    %204 = tpu.matmul %201, %203, %cst_73 {dimension_numbers = #tpu.dot_dimension_numbers<[1], [0], [0], [1], [0, 0, 1, 1], [], []>} : vector<512x128xbf16>, vector<128x128xbf16>, vector<512x128xf32> -> vector<512x128xf32>
    %205 = vector.extract_strided_slice %0 {offsets = [6, 0], sizes = [1, 128], strides = [1, 1]} : vector<24x128xf32> to vector<1x128xf32>
    %206 = vector.extract_strided_slice %0 {offsets = [14, 0], sizes = [1, 128], strides = [1, 1]} : vector<24x128xf32> to vector<1x128xf32>
    %cst_74 = arith.constant dense<0.000000e+00> : vector<128xf32>
    %207 = vector.multi_reduction <add>, %204, %cst_74 [0] : vector<512x128xf32> to vector<128xf32>
    %208 = vector.shape_cast %207 : vector<128xf32> to vector<1x128xf32>
    %209 = arith.mulf %204, %204 : vector<512x128xf32>
    %cst_75 = arith.constant dense<0.000000e+00> : vector<128xf32>
    %210 = vector.multi_reduction <add>, %209, %cst_75 [0] : vector<512x128xf32> to vector<128xf32>
    %211 = vector.shape_cast %210 : vector<128xf32> to vector<1x128xf32>
    %cst_76 = arith.constant 0.001953125 : f32
    %212 = vector.broadcast %cst_76 : f32 to vector<1x128xf32>
    %213 = arith.mulf %208, %212 : vector<1x128xf32>
    %cst_77 = arith.constant 0.001953125 : f32
    %214 = vector.broadcast %cst_77 : f32 to vector<1x128xf32>
    %215 = arith.mulf %211, %214 : vector<1x128xf32>
    %216 = arith.mulf %213, %213 : vector<1x128xf32>
    %217 = arith.subf %215, %216 : vector<1x128xf32>
    %cst_78 = arith.constant 0.000000e+00 : f32
    %218 = vector.broadcast %cst_78 : f32 to vector<1x128xf32>
    %219 = arith.maximumf %217, %218 : vector<1x128xf32>
    %cst_79 = arith.constant 1.000000e-03 : f32
    %220 = vector.broadcast %cst_79 : f32 to vector<1x128xf32>
    %221 = arith.addf %219, %220 : vector<1x128xf32>
    %222 = math.rsqrt %221 : vector<1x128xf32>
    %223 = arith.mulf %205, %222 : vector<1x128xf32>
    %224 = arith.mulf %213, %223 : vector<1x128xf32>
    %225 = arith.subf %206, %224 : vector<1x128xf32>
    %226 = vector.broadcast %223 : vector<1x128xf32> to vector<512x128xf32>
    %227 = arith.mulf %204, %226 : vector<512x128xf32>
    %228 = vector.broadcast %225 : vector<1x128xf32> to vector<512x128xf32>
    %229 = arith.addf %227, %228 : vector<512x128xf32>
    %cst_80 = arith.constant 0.000000e+00 : f32
    %230 = vector.broadcast %cst_80 : f32 to vector<512x128xf32>
    %231 = arith.maximumf %229, %230 : vector<512x128xf32>
    %232 = arith.truncf %231 : vector<512x128xf32> to vector<512x128xbf16>
    %c5 = arith.constant 5 : index
    %c0_81 = arith.constant 0 : index
    %c0_82 = arith.constant 0 : index
    %233 = vector.load %arg3[%c5, %c0_81, %c0_82] : memref<7x128x128xbf16, #tpu.memory_space<vmem>>, vector<1x128x128xbf16>
    %234 = vector.shape_cast %233 : vector<1x128x128xbf16> to vector<128x128xbf16>
    %cst_83 = arith.constant dense<0.000000e+00> : vector<512x128xf32>
    %235 = tpu.matmul %232, %234, %cst_83 {dimension_numbers = #tpu.dot_dimension_numbers<[1], [0], [0], [1], [0, 0, 1, 1], [], []>} : vector<512x128xbf16>, vector<128x128xbf16>, vector<512x128xf32> -> vector<512x128xf32>
    %236 = vector.extract_strided_slice %0 {offsets = [7, 0], sizes = [1, 128], strides = [1, 1]} : vector<24x128xf32> to vector<1x128xf32>
    %237 = vector.extract_strided_slice %0 {offsets = [15, 0], sizes = [1, 128], strides = [1, 1]} : vector<24x128xf32> to vector<1x128xf32>
    %cst_84 = arith.constant dense<0.000000e+00> : vector<128xf32>
    %238 = vector.multi_reduction <add>, %235, %cst_84 [0] : vector<512x128xf32> to vector<128xf32>
    %239 = vector.shape_cast %238 : vector<128xf32> to vector<1x128xf32>
    %240 = arith.mulf %235, %235 : vector<512x128xf32>
    %cst_85 = arith.constant dense<0.000000e+00> : vector<128xf32>
    %241 = vector.multi_reduction <add>, %240, %cst_85 [0] : vector<512x128xf32> to vector<128xf32>
    %242 = vector.shape_cast %241 : vector<128xf32> to vector<1x128xf32>
    %cst_86 = arith.constant 0.001953125 : f32
    %243 = vector.broadcast %cst_86 : f32 to vector<1x128xf32>
    %244 = arith.mulf %239, %243 : vector<1x128xf32>
    %cst_87 = arith.constant 0.001953125 : f32
    %245 = vector.broadcast %cst_87 : f32 to vector<1x128xf32>
    %246 = arith.mulf %242, %245 : vector<1x128xf32>
    %247 = arith.mulf %244, %244 : vector<1x128xf32>
    %248 = arith.subf %246, %247 : vector<1x128xf32>
    %cst_88 = arith.constant 0.000000e+00 : f32
    %249 = vector.broadcast %cst_88 : f32 to vector<1x128xf32>
    %250 = arith.maximumf %248, %249 : vector<1x128xf32>
    %cst_89 = arith.constant 1.000000e-03 : f32
    %251 = vector.broadcast %cst_89 : f32 to vector<1x128xf32>
    %252 = arith.addf %250, %251 : vector<1x128xf32>
    %253 = math.rsqrt %252 : vector<1x128xf32>
    %254 = arith.mulf %236, %253 : vector<1x128xf32>
    %255 = arith.mulf %244, %254 : vector<1x128xf32>
    %256 = arith.subf %237, %255 : vector<1x128xf32>
    %257 = vector.broadcast %254 : vector<1x128xf32> to vector<512x128xf32>
    %258 = arith.mulf %235, %257 : vector<512x128xf32>
    %259 = vector.broadcast %256 : vector<1x128xf32> to vector<512x128xf32>
    %260 = arith.addf %258, %259 : vector<512x128xf32>
    %cst_90 = arith.constant 0.000000e+00 : f32
    %261 = vector.broadcast %cst_90 : f32 to vector<512x128xf32>
    %262 = arith.maximumf %260, %261 : vector<512x128xf32>
    %263 = arith.truncf %262 : vector<512x128xf32> to vector<512x128xbf16>
    %c0_91 = arith.constant 0 : index
    %c0_92 = arith.constant 0 : index
    %264 = vector.load %arg6[%c0_91, %c0_92] : memref<128x128xbf16, #tpu.memory_space<vmem>>, vector<128x128xbf16>
    %cst_93 = arith.constant dense<0.000000e+00> : vector<512x128xf32>
    %265 = tpu.matmul %263, %264, %cst_93 {dimension_numbers = #tpu.dot_dimension_numbers<[1], [0], [0], [1], [0, 0, 1, 1], [], []>} : vector<512x128xbf16>, vector<128x128xbf16>, vector<512x128xf32> -> vector<512x128xf32>
    %c0_94 = arith.constant 0 : index
    %c0_95 = arith.constant 0 : index
    %266 = vector.load %arg7[%c0_94, %c0_95] : memref<1x128xf32, #tpu.memory_space<vmem>>, vector<1x128xf32>
    %267 = vector.broadcast %266 : vector<1x128xf32> to vector<512x128xf32>
    %268 = arith.addf %265, %267 : vector<512x128xf32>
    %c0_96 = arith.constant 0 : index
    %c0_97 = arith.constant 0 : index
    %269 = vector.load %arg8[%c0_96, %c0_97] : memref<512x128xf32, #tpu.memory_space<vmem>>, vector<512x128xf32>
    tpu.vector_store %arg8[%c0_96, %c0_97], %268 {strides = array<i32>} : memref<512x128xf32, #tpu.memory_space<vmem>>, vector<512x128xf32>,
    return
  }
}

</mosaic_0001>

<llo_original>
// kernel: vae_forward.1
$region0: #{vae_forward.1}
  #allocation0 [shape = 'u32[]', space=smem, size = 0x4, offset = 0x4, fixed_abs, tag = 'smem constant byte address 0x4 - core index']
  #allocation1 [shape = 'u32[144,128]{1,0:T(1,128)}', space=vmem, size = 0x12000, scoped, tag = 'internal scratch']
  %s0 = inlined_call_operand.vmem [shape: bf16[512,64], index: 0, kind: input, shape index: {}]
  %s1 = inlined_call_operand.vmem [shape: f32[512,8], index: 1, kind: input, shape index: {}]
  %s2 = inlined_call_operand.vmem [shape: bf16[64,128], index: 2, kind: input, shape index: {}]
  %s3 = inlined_call_operand.vmem [shape: bf16[7,128,128], index: 3, kind: input, shape index: {}]
  %s4 = inlined_call_operand.vmem [shape: bf16[8,128], index: 4, kind: input, shape index: {}]
  %s5 = inlined_call_operand.vmem [shape: f32[24,128], index: 5, kind: input, shape index: {}]
  %s6 = inlined_call_operand.vmem [shape: bf16[128,128], index: 6, kind: input, shape index: {}]
  %s7 = inlined_call_operand.vmem [shape: f32[1,128], index: 7, kind: input, shape index: {}]
  %s8 = inlined_call_operand.vmem [shape: f32[512,128], index: 8, kind: output, shape index: {0}]
  %s9 = inlined_call_operand.vmem [shape: f32[512,128], index: 9, kind: output, shape index: {1}]
  %10 = xla_tuple %s8, %s9
  %s11 = sld [smem:[#allocation0]]
  $region50: #{vae_forward.1} parent=0
    _
  %s13 = ssub.s32 1, %s11
  %s14 = scalar_select 0, %s13, %s11
  // Predicated region
  $region2: #{vae_forward.1} parent=0 // pred_check
    _
  $region3: #{vae_forward.1} parent=0 // pred_check_branch
    %16 = sbr.rel (0) target = $region5
  $region4: #{vae_forward.1} parent=0 // pred_region
    _
  $region5: #{vae_forward.1} parent=0 // pred_fallthru
    _
  // Predicated region
  $region6: #{vae_forward.1} parent=0 // pred_check
    _
  $region7: #{vae_forward.1} parent=0 // pred_check_branch
    %18 = sbr.rel (0) target = $region9
  $region8: #{vae_forward.1} parent=0 // pred_region
    _
  $region9: #{vae_forward.1} parent=0 // pred_fallthru
    _
  // Predicated region
  $region10: #{vae_forward.1} parent=0 // pred_check
    _
  $region11: #{vae_forward.1} parent=0 // pred_check_branch
    %20 = sbr.rel (0) target = $region13
  $region12: #{vae_forward.1} parent=0 // pred_region
    _
  $region13: #{vae_forward.1} parent=0 // pred_fallthru
    _
  // Predicated region
  $region14: #{vae_forward.1} parent=0 // pred_check
    _
  $region15: #{vae_forward.1} parent=0 // pred_check_branch
    %22 = sbr.rel (0) target = $region17
  $region16: #{vae_forward.1} parent=0 // pred_region
    _
  $region17: #{vae_forward.1} parent=0 // pred_fallthru
    _
  // Predicated region
  $region18: #{vae_forward.1} parent=0 // pred_check
    _
  $region19: #{vae_forward.1} parent=0 // pred_check_branch
    %24 = sbr.rel (0) target = $region21
  $region20: #{vae_forward.1} parent=0 // pred_region
    _
  $region21: #{vae_forward.1} parent=0 // pred_fallthru
    _
  // Predicated region
  $region22: #{vae_forward.1} parent=0 // pred_check
    _
  $region23: #{vae_forward.1} parent=0 // pred_check_branch
    %26 = sbr.rel (0) target = $region25
  $region24: #{vae_forward.1} parent=0 // pred_region
    _
  $region25: #{vae_forward.1} parent=0 // pred_fallthru
    _
  // Predicated region
  $region26: #{vae_forward.1} parent=0 // pred_check
    _
  $region27: #{vae_forward.1} parent=0 // pred_check_branch
    %28 = sbr.rel (0) target = $region29
  $region28: #{vae_forward.1} parent=0 // pred_region
    _
  $region29: #{vae_forward.1} parent=0 // pred_fallthru
    _
  // Predicated region
  $region30: #{vae_forward.1} parent=0 // pred_check
    _
  $region31: #{vae_forward.1} parent=0 // pred_check_branch
    %30 = sbr.rel (0) target = $region33
  $region32: #{vae_forward.1} parent=0 // pred_region
    _
  $region33: #{vae_forward.1} parent=0 // pred_fallthru
    _
  %v32 = vld [vmem:[%s5] sm:$0xff]
  %v33 = vld [vmem:[%s5 + $0x8] sm:$0xff]
  %v34 = vld [vmem:[%s5 + $0x10] sm:$0xff]
  %v35 = vld [vmem:[%s0] sm:$0xf]
  %v36 = vld [vmem:[%s0 + $0x4] sm:$0xf]
  %v37 = vld [vmem:[%s0 + $0x8] sm:$0xf]
  %v38 = vld [vmem:[%s0 + $0xc] sm:$0xf]
  %v39 = vld [vmem:[%s0 + $0x10] sm:$0xf]
  %v40 = vld [vmem:[%s0 + $0x14] sm:$0xf]
  %v41 = vld [vmem:[%s0 + $0x18] sm:$0xf]
  %v42 = vld [vmem:[%s0 + $0x1c] sm:$0xf]
  %v43 = vld [vmem:[%s0 + $0x20] sm:$0xf]
  %v44 = vld [vmem:[%s0 + $0x24] sm:$0xf]
  %v45 = vld [vmem:[%s0 + $0x28] sm:$0xf]
  %v46 = vld [vmem:[%s0 + $0x2c] sm:$0xf]
  %v47 = vld [vmem:[%s0 + $0x30] sm:$0xf]
  %v48 = vld [vmem:[%s0 + $0x34] sm:$0xf]
  %v49 = vld [vmem:[%s0 + $0x38] sm:$0xf]
  %v50 = vld [vmem:[%s0 + $0x3c] sm:$0xf]
  %v51 = vld [vmem:[%s0 + $0x40] sm:$0xf]
  %v52 = vld [vmem:[%s0 + $0x44] sm:$0xf]
  %v53 = vld [vmem:[%s0 + $0x48] sm:$0xf]
  %v54 = vld [vmem:[%s0 + $0x4c] sm:$0xf]
  %v55 = vld [vmem:[%s0 + $0x50] sm:$0xf]
  %v56 = vld [vmem:[%s0 + $0x54] sm:$0xf]
  %v57 = vld [vmem:[%s0 + $0x58] sm:$0xf]
  %v58 = vld [vmem:[%s0 + $0x5c] sm:$0xf]
  %v59 = vld [vmem:[%s0 + $0x60] sm:$0xf]
  %v60 = vld [vmem:[%s0 + $0x64] sm:$0xf]
  %v61 = vld [vmem:[%s0 + $0x68] sm:$0xf]
  %v62 = vld [vmem:[%s0 + $0x6c] sm:$0xf]
  %v63 = vld [vmem:[%s0 + $0x70] sm:$0xf]
  %v64 = vld [vmem:[%s0 + $0x74] sm:$0xf]
  %v65 = vld [vmem:[%s0 + $0x78] sm:$0xf]
  %v66 = vld [vmem:[%s0 + $0x7c] sm:$0xf]
  %v67 = vld [vmem:[%s0 + $0x80] sm:$0xf]
  %v68 = vld [vmem:[%s0 + $0x84] sm:$0xf]
  %v69 = vld [vmem:[%s0 + $0x88] sm:$0xf]
  %v70 = vld [vmem:[%s0 + $0x8c] sm:$0xf]
  %v71 = vld [vmem:[%s0 + $0x90] sm:$0xf]
  %v72 = vld [vmem:[%s0 + $0x94] sm:$0xf]
  %v73 = vld [vmem:[%s0 + $0x98] sm:$0xf]
  %v74 = vld [vmem:[%s0 + $0x9c] sm:$0xf]
  %v75 = vld [vmem:[%s0 + $0xa0] sm:$0xf]
  %v76 = vld [vmem:[%s0 + $0xa4] sm:$0xf]
  %v77 = vld [vmem:[%s0 + $0xa8] sm:$0xf]
  %v78 = vld [vmem:[%s0 + $0xac] sm:$0xf]
  %v79 = vld [vmem:[%s0 + $0xb0] sm:$0xf]
  %v80 = vld [vmem:[%s0 + $0xb4] sm:$0xf]
  %v81 = vld [vmem:[%s0 + $0xb8] sm:$0xf]
  %v82 = vld [vmem:[%s0 + $0xbc] sm:$0xf]
  %v83 = vld [vmem:[%s0 + $0xc0] sm:$0xf]
  %v84 = vld [vmem:[%s0 + $0xc4] sm:$0xf]
  %v85 = vld [vmem:[%s0 + $0xc8] sm:$0xf]
  %v86 = vld [vmem:[%s0 + $0xcc] sm:$0xf]
  %v87 = vld [vmem:[%s0 + $0xd0] sm:$0xf]
  %v88 = vld [vmem:[%s0 + $0xd4] sm:$0xf]
  %v89 = vld [vmem:[%s0 + $0xd8] sm:$0xf]
  %v90 = vld [vmem:[%s0 + $0xdc] sm:$0xf]
  %v91 = vld [vmem:[%s0 + $0xe0] sm:$0xf]
  %v92 = vld [vmem:[%s0 + $0xe4] sm:$0xf]
  %v93 = vld [vmem:[%s0 + $0xe8] sm:$0xf]
  %v94 = vld [vmem:[%s0 + $0xec] sm:$0xf]
  %v95 = vld [vmem:[%s0 + $0xf0] sm:$0xf]
  %v96 = vld [vmem:[%s0 + $0xf4] sm:$0xf]
  %v97 = vld [vmem:[%s0 + $0xf8] sm:$0xf]
  %v98 = vld [vmem:[%s0 + $0xfc] sm:$0xf]
  %v99 = vld [vmem:[%s2] sm:$0xf]
  %v100 = vld [vmem:[%s2 + $0x4] sm:$0xf]
  %v101 = vld [vmem:[%s2 + $0x8] sm:$0xf]
  %v102 = vld [vmem:[%s2 + $0xc] sm:$0xf]
  %v103 = vld [vmem:[%s2 + $0x10] sm:$0xf]
  %v104 = vld [vmem:[%s2 + $0x14] sm:$0xf]
  %v105 = vld [vmem:[%s2 + $0x18] sm:$0xf]
  %v106 = vld [vmem:[%s2 + $0x1c] sm:$0xf]
  %v171 = vunpack.c.l.b16 %v35
  %v172 = vunpack.c.l.b16 %v36
  %v173 = vunpack.c.l.b16 %v37
  %v174 = vunpack.c.l.b16 %v38
  %v175 = vunpack.c.l.b16 %v39
  %v176 = vunpack.c.l.b16 %v40
  %v177 = vunpack.c.l.b16 %v41
  %v178 = vunpack.c.l.b16 %v42
  %v179 = vunpack.c.l.b16 %v43
  %v180 = vunpack.c.l.b16 %v44
  %v181 = vunpack.c.l.b16 %v45
  %v182 = vunpack.c.l.b16 %v46
  %v183 = vunpack.c.l.b16 %v47
  %v184 = vunpack.c.l.b16 %v48
  %v185 = vunpack.c.l.b16 %v49
  %v186 = vunpack.c.l.b16 %v50
  %v187 = vunpack.c.l.b16 %v51
  %v188 = vunpack.c.l.b16 %v52
  %v189 = vunpack.c.l.b16 %v53
  %v190 = vunpack.c.l.b16 %v54
  %v191 = vunpack.c.l.b16 %v55
  %v192 = vunpack.c.l.b16 %v56
  %v193 = vunpack.c.l.b16 %v57
  %v194 = vunpack.c.l.b16 %v58
  %v195 = vunpack.c.l.b16 %v59
  %v196 = vunpack.c.l.b16 %v60
  %v197 = vunpack.c.l.b16 %v61
  %v198 = vunpack.c.l.b16 %v62
  %v199 = vunpack.c.l.b16 %v63
  %v200 = vunpack.c.l.b16 %v64
  %v201 = vunpack.c.l.b16 %v65
  %v202 = vunpack.c.l.b16 %v66
  %v203 = vunpack.c.l.b16 %v67
  %v204 = vunpack.c.l.b16 %v68
  %v205 = vunpack.c.l.b16 %v69
  %v206 = vunpack.c.l.b16 %v70
  %v207 = vunpack.c.l.b16 %v71
  %v208 = vunpack.c.l.b16 %v72
  %v209 = vunpack.c.l.b16 %v73
  %v210 = vunpack.c.l.b16 %v74
  %v211 = vunpack.c.l.b16 %v75
  %v212 = vunpack.c.l.b16 %v76
  %v213 = vunpack.c.l.b16 %v77
  %v214 = vunpack.c.l.b16 %v78
  %v215 = vunpack.c.l.b16 %v79
  %v216 = vunpack.c.l.b16 %v80
  %v217 = vunpack.c.l.b16 %v81
  %v218 = vunpack.c.l.b16 %v82
  %v219 = vunpack.c.l.b16 %v83
  %v220 = vunpack.c.l.b16 %v84
  %v221 = vunpack.c.l.b16 %v85
  %v222 = vunpack.c.l.b16 %v86
  %v223 = vunpack.c.l.b16 %v87
  %v224 = vunpack.c.l.b16 %v88
  %v225 = vunpack.c.l.b16 %v89
  %v226 = vunpack.c.l.b16 %v90
  %v227 = vunpack.c.l.b16 %v91
  %v228 = vunpack.c.l.b16 %v92
  %v229 = vunpack.c.l.b16 %v93
  %v230 = vunpack.c.l.b16 %v94
  %v231 = vunpack.c.l.b16 %v95
  %v232 = vunpack.c.l.b16 %v96
  %v233 = vunpack.c.l.b16 %v97
  %v234 = vunpack.c.l.b16 %v98
  %v235 = vpack.c.b16 %v172, %v171
  %v236 = vpack.c.b16 %v174, %v173
  %v237 = vpack.c.b16 %v176, %v175
  %v238 = vpack.c.b16 %v178, %v177
  %v239 = vpack.c.b16 %v180, %v179
  %v240 = vpack.c.b16 %v182, %v181
  %v241 = vpack.c.b16 %v184, %v183
  %v242 = vpack.c.b16 %v186, %v185
  %v243 = vpack.c.b16 %v188, %v187
  %v244 = vpack.c.b16 %v190, %v189
  %v245 = vpack.c.b16 %v192, %v191
  %v246 = vpack.c.b16 %v194, %v193
  %v247 = vpack.c.b16 %v196, %v195
  %v248 = vpack.c.b16 %v198, %v197
  %v249 = vpack.c.b16 %v200, %v199
  %v250 = vpack.c.b16 %v202, %v201
  %v251 = vpack.c.b16 %v204, %v203
  %v252 = vpack.c.b16 %v206, %v205
  %v253 = vpack.c.b16 %v208, %v207
  %v254 = vpack.c.b16 %v210, %v209
  %v255 = vpack.c.b16 %v212, %v211
  %v256 = vpack.c.b16 %v214, %v213
  %v257 = vpack.c.b16 %v216, %v215
  %v258 = vpack.c.b16 %v218, %v217
  %v259 = vpack.c.b16 %v220, %v219
  %v260 = vpack.c.b16 %v222, %v221
  %v261 = vpack.c.b16 %v224, %v223
  %v262 = vpack.c.b16 %v226, %v225
  %v263 = vpack.c.b16 %v228, %v227
  %v264 = vpack.c.b16 %v230, %v229
  %v265 = vpack.c.b16 %v232, %v231
  %v266 = vpack.c.b16 %v234, %v233
  %v275 = vunpack.c.l.b16 %v99
  %v276 = vunpack.c.l.b16 %v100
  %v277 = vunpack.c.l.b16 %v101
  %v278 = vunpack.c.l.b16 %v102
  %v279 = vunpack.c.l.b16 %v103
  %v280 = vunpack.c.l.b16 %v104
  %v281 = vunpack.c.l.b16 %v105
  %v282 = vunpack.c.l.b16 %v106
  %v283 = vpack.c.b16 %v276, %v275
  %v284 = vpack.c.b16 %v278, %v277
  %v285 = vpack.c.b16 %v280, %v279
  %v286 = vpack.c.b16 %v282, %v281
  %vm291 = vcmask 523264
  %v293 = vsel %vm291, %v235, 0
  %v296 = vsel %vm291, %v236, 0
  %v299 = vsel %vm291, %v237, 0
  %v302 = vsel %vm291, %v238, 0
  %v305 = vsel %vm291, %v239, 0
  %v308 = vsel %vm291, %v240, 0
  %v311 = vsel %vm291, %v241, 0
  %v314 = vsel %vm291, %v242, 0
  %v317 = vsel %vm291, %v243, 0
  %v320 = vsel %vm291, %v244, 0
  %v323 = vsel %vm291, %v245, 0
  %v326 = vsel %vm291, %v246, 0
  %v329 = vsel %vm291, %v247, 0
  %v332 = vsel %vm291, %v248, 0
  %v335 = vsel %vm291, %v249, 0
  %v338 = vsel %vm291, %v250, 0
  %v341 = vsel %vm291, %v251, 0
  %v344 = vsel %vm291, %v252, 0
  %v347 = vsel %vm291, %v253, 0
  %v350 = vsel %vm291, %v254, 0
  %v353 = vsel %vm291, %v255, 0
  %v356 = vsel %vm291, %v256, 0
  %v359 = vsel %vm291, %v257, 0
  %v362 = vsel %vm291, %v258, 0
  %v365 = vsel %vm291, %v259, 0
  %v368 = vsel %vm291, %v260, 0
  %v371 = vsel %vm291, %v261, 0
  %v374 = vsel %vm291, %v262, 0
  %v377 = vsel %vm291, %v263, 0
  %v380 = vsel %vm291, %v264, 0
  %v383 = vsel %vm291, %v265, 0
  %v386 = vsel %vm291, %v266, 0
  %388 = vmatprep.subr.bf16.mxu0 0
  %389 = vmatpush1.bf16.msra.mxu0 %v283
  %390 = vmatprep.subr.bf16.mxu0 0
  %391 = vmatpush1.bf16.msra.mxu0 %v284
  %392 = vmatprep.subr.bf16.mxu0 0
  %393 = vmatpush1.bf16.msra.mxu0 %v285
  %394 = vmatprep.subr.bf16.mxu0 0
  %395 = vmatpush1.bf16.msra.mxu0 %v286
  %396 = vmatprep.subr.bf16.mxu0 0
  %397 = vmatpush1.bf16.msra.mxu0 0
  %398 = vmatprep.subr.bf16.mxu0 0
  %399 = vmatpush1.bf16.msra.mxu0 0
  %400 = vmatprep.subr.bf16.mxu0 0
  %401 = vmatpush1.bf16.msra.mxu0 0
  %402 = vmatprep.subr.bf16.mxu0 0
  %403 = vmatpush1.bf16.msra.mxu0 0
  %404 = vmatprep.subr.bf16.mxu0 0
  %405 = vmatpush1.bf16.msra.mxu0 0
  %406 = vmatprep.subr.bf16.mxu0 0
  %407 = vmatpush1.bf16.msra.mxu0 0
  %408 = vmatprep.subr.bf16.mxu0 0
  %409 = vmatpush1.bf16.msra.mxu0 0
  %410 = vmatprep.subr.bf16.mxu0 0
  %411 = vmatpush1.bf16.msra.mxu0 0
  %412 = vmatprep.subr.bf16.mxu0 0
  %413 = vmatpush1.bf16.msra.mxu0 0
  %414 = vmatprep.subr.bf16.mxu0 0
  %415 = vmatpush1.bf16.msra.mxu0 0
  %416 = vmatprep.subr.bf16.mxu0 0
  %417 = vmatpush1.bf16.msra.mxu0 0
  %418 = vmatprep.subr.bf16.mxu0 0
  %419 = vmatpush1.bf16.msra.mxu0 0
  %420 = vmatprep.mubr.bf16.mxu0 0
  %421 = vmatmul.mubr.bf16.gmra.mrb[0].mxu0 %v293
  %v422 = vpop.f32.mrb[0].mxu0
  %v423 = vadd.f32 0.0, %v422
  %v424 = vpop.f32.mrb[0].mxu0
  %v425 = vpop.f32.mrb[0].mxu0
  %v426 = vadd.f32 0.0, %v425
  %v427 = vpop.f32.mrb[0].mxu0
  %428 = vmatprep.mubr.bf16.mxu0 0
  %429 = vmatmul.mubr.bf16.gmra.mrb[0].mxu0 %v296
  %v430 = vpop.f32.mrb[0].mxu0
  %v431 = vadd.f32 0.0, %v430
  %v432 = vpop.f32.mrb[0].mxu0
  %v433 = vpop.f32.mrb[0].mxu0
  %v434 = vadd.f32 0.0, %v433
  %v435 = vpop.f32.mrb[0].mxu0
  %436 = vmatprep.mubr.bf16.mxu0 0
  %437 = vmatmul.mubr.bf16.gmra.mrb[0].mxu0 %v299
  %v438 = vpop.f32.mrb[0].mxu0
  %v439 = vadd.f32 0.0, %v438
  %v440 = vpop.f32.mrb[0].mxu0
  %v441 = vpop.f32.mrb[0].mxu0
  %v442 = vadd.f32 0.0, %v441
  %v443 = vpop.f32.mrb[0].mxu0
  %444 = vmatprep.mubr.bf16.mxu0 0
  %445 = vmatmul.mubr.bf16.gmra.mrb[0].mxu0 %v302
  %v446 = vpop.f32.mrb[0].mxu0
  %v447 = vadd.f32 0.0, %v446
  %v448 = vpop.f32.mrb[0].mxu0
  %v449 = vpop.f32.mrb[0].mxu0
  %v450 = vadd.f32 0.0, %v449
  %v451 = vpop.f32.mrb[0].mxu0
  %452 = vmatprep.mubr.bf16.mxu0 0
  %453 = vmatmul.mubr.bf16.gmra.mrb[0].mxu0 %v305
  %v454 = vpop.f32.mrb[0].mxu0
  %v455 = vadd.f32 0.0, %v454
  %v456 = vpop.f32.mrb[0].mxu0
  %v457 = vpop.f32.mrb[0].mxu0
  %v458 = vadd.f32 0.0, %v457
  %v459 = vpop.f32.mrb[0].mxu0
  %460 = vmatprep.mubr.bf16.mxu0 0
  %461 = vmatmul.mubr.bf16.gmra.mrb[0].mxu0 %v308
  %v462 = vpop.f32.mrb[0].mxu0
  %v463 = vadd.f32 0.0, %v462
  %v464 = vpop.f32.mrb[0].mxu0
  %v465 = vpop.f32.mrb[0].mxu0
  %v466 = vadd.f32 0.0, %v465
  %v467 = vpop.f32.mrb[0].mxu0
  %468 = vmatprep.mubr.bf16.mxu0 0
  %469 = vmatmul.mubr.bf16.gmra.mrb[0].mxu0 %v311
  %v470 = vpop.f32.mrb[0].mxu0
  %v471 = vadd.f32 0.0, %v470
  %v472 = vpop.f32.mrb[0].mxu0
  %v473 = vpop.f32.mrb[0].mxu0
  %v474 = vadd.f32 0.0, %v473
  %v475 = vpop.f32.mrb[0].mxu0
  %476 = vmatprep.mubr.bf16.mxu0 0
  %477 = vmatmul.mubr.bf16.gmra.mrb[0].mxu0 %v314
  %v478 = vpop.f32.mrb[0].mxu0
  %v479 = vadd.f32 0.0, %v478
  %v480 = vpop.f32.mrb[0].mxu0
  %v481 = vpop.f32.mrb[0].mxu0
  %v482 = vadd.f32 0.0, %v481
  %v483 = vpop.f32.mrb[0].mxu0
  %484 = vmatprep.mubr.bf16.mxu0 0
  %485 = vmatmul.mubr.bf16.gmra.mrb[0].mxu0 %v317
  %v486 = vpop.f32.mrb[0].mxu0
  %v487 = vadd.f32 0.0, %v486
  %v488 = vpop.f32.mrb[0].mxu0
  %v489 = vpop.f32.mrb[0].mxu0
  %v490 = vadd.f32 0.0, %v489
  %v491 = vpop.f32.mrb[0].mxu0
  %492 = vmatprep.mubr.bf16.mxu0 0
  %493 = vmatmul.mubr.bf16.gmra.mrb[0].mxu0 %v320
  %v494 = vpop.f32.mrb[0].mxu0
  %v495 = vadd.f32 0.0, %v494
  %v496 = vpop.f32.mrb[0].mxu0
  %v497 = vpop.f32.mrb[0].mxu0
  %v498 = vadd.f32 0.0, %v497
  %v499 = vpop.f32.mrb[0].mxu0
  %500 = vmatprep.mubr.bf16.mxu0 0
  %501 = vmatmul.mubr.bf16.gmra.mrb[0].mxu0 %v323
  %v502 = vpop.f32.mrb[0].mxu0
  %v503 = vadd.f32 0.0, %v502
  %v504 = vpop.f32.mrb[0].mxu0
  %v505 = vpop.f32.mrb[0].mxu0
  %v506 = vadd.f32 0.0, %v505
  %v507 = vpop.f32.mrb[0].mxu0
  %508 = vmatprep.mubr.bf16.mxu0 0
  %509 = vmatmul.mubr.bf16.gmra.mrb[0].mxu0 %v326
  %v510 = vpop.f32.mrb[0].mxu0
  %v511 = vadd.f32 0.0, %v510
  %v512 = vpop.f32.mrb[0].mxu0
  %v513 = vpop.f32.mrb[0].mxu0
  %v514 = vadd.f32 0.0, %v513
  %v515 = vpop.f32.mrb[0].mxu0
  %516 = vmatprep.mubr.bf16.mxu0 0
  %517 = vmatmul.mubr.bf16.gmra.mrb[0].mxu0 %v329
  %v518 = vpop.f32.mrb[0].mxu0
  %v519 = vadd.f32 0.0, %v518
  %v520 = vpop.f32.mrb[0].mxu0
  %v521 = vpop.f32.mrb[0].mxu0
  %v522 = vadd.f32 0.0, %v521
  %v523 = vpop.f32.mrb[0].mxu0
  %524 = vmatprep.mubr.bf16.mxu0 0
  %525 = vmatmul.mubr.bf16.gmra.mrb[0].mxu0 %v332
  %v526 = vpop.f32.mrb[0].mxu0
  %v527 = vadd.f32 0.0, %v526
  %v528 = vpop.f32.mrb[0].mxu0
  %v529 = vpop.f32.mrb[0].mxu0
  %v530 = vadd.f32 0.0, %v529
  %v531 = vpop.f32.mrb[0].mxu0
  %532 = vmatprep.mubr.bf16.mxu0 0
  %533 = vmatmul.mubr.bf16.gmra.mrb[0].mxu0 %v335
  %v534 = vpop.f32.mrb[0].mxu0
  %v535 = vadd.f32 0.0, %v534
  %v536 = vpop.f32.mrb[0].mxu0
  %v537 = vpop.f32.mrb[0].mxu0
  %v538 = vadd.f32 0.0, %v537
  %v539 = vpop.f32.mrb[0].mxu0
  %540 = vmatprep.mubr.bf16.mxu0 0
  %541 = vmatmul.mubr.bf16.gmra.mrb[0].mxu0 %v338
  %v542 = vpop.f32.mrb[0].mxu0
  %v543 = vadd.f32 0.0, %v542
  %v544 = vpop.f32.mrb[0].mxu0
  %v545 = vpop.f32.mrb[0].mxu0
  %v546 = vadd.f32 0.0, %v545
  %v547 = vpop.f32.mrb[0].mxu0
  %548 = vmatprep.mubr.bf16.mxu0 0
  %549 = vmatmul.mubr.bf16.gmra.mrb[0].mxu0 %v341
  %v550 = vpop.f32.mrb[0].mxu0
  %v551 = vadd.f32 0.0, %v550
  %v552 = vpop.f32.mrb[0].mxu0
  %v553 = vpop.f32.mrb[0].mxu0
  %v554 = vadd.f32 0.0, %v553
  %v555 = vpop.f32.mrb[0].mxu0
  %556 = vmatprep.mubr.bf16.mxu0 0
  %557 = vmatmul.mubr.bf16.gmra.mrb[0].mxu0 %v344
  %v558 = vpop.f32.mrb[0].mxu0
  %v559 = vadd.f32 0.0, %v558
  %v560 = vpop.f32.mrb[0].mxu0
  %v561 = vpop.f32.mrb[0].mxu0
  %v562 = vadd.f32 0.0, %v561
  %v563 = vpop.f32.mrb[0].mxu0
  %564 = vmatprep.mubr.bf16.mxu0 0
  %565 = vmatmul.mubr.bf16.gmra.mrb[0].mxu0 %v347
  %v566 = vpop.f32.mrb[0].mxu0
  %v567 = vadd.f32 0.0, %v566
  %v568 = vpop.f32.mrb[0].mxu0
  %v569 = vpop.f32.mrb[0].mxu0
  %v570 = vadd.f32 0.0, %v569
  %v571 = vpop.f32.mrb[0].mxu0
  %572 = vmatprep.mubr.bf16.mxu0 0
  %573 = vmatmul.mubr.bf16.gmra.mrb[0].mxu0 %v350
  %v574 = vpop.f32.mrb[0].mxu0
  %v575 = vadd.f32 0.0, %v574
  %v576 = vpop.f32.mrb[0].mxu0
  %v577 = vpop.f32.mrb[0].mxu0
  %v578 = vadd.f32 0.0, %v577
  %v579 = vpop.f32.mrb[0].mxu0
  %580 = vmatprep.mubr.bf16.mxu0 0
  %581 = vmatmul.mubr.bf16.gmra.mrb[0].mxu0 %v353
  %v582 = vpop.f32.mrb[0].mxu0
  %v583 = vadd.f32 0.0, %v582
  %v584 = vpop.f32.mrb[0].mxu0
  %v585 = vpop.f32.mrb[0].mxu0
  %v586 = vadd.f32 0.0, %v585
  %v587 = vpop.f32.mrb[0].mxu0
  %588 = vmatprep.mubr.bf16.mxu0 0
  %589 = vmatmul.mubr.bf16.gmra.mrb[0].mxu0 %v356
  %v590 = vpop.f32.mrb[0].mxu0
  %v591 = vadd.f32 0.0, %v590
  %v592 = vpop.f32.mrb[0].mxu0
  %v593 = vpop.f32.mrb[0].mxu0
  %v594 = vadd.f32 0.0, %v593
  %v595 = vpop.f32.mrb[0].mxu0
  %596 = vmatprep.mubr.bf16.mxu0 0
  %597 = vmatmul.mubr.bf16.gmra.mrb[0].mxu0 %v359
  %v598 = vpop.f32.mrb[0].mxu0
  %v599 = vadd.f32 0.0, %v598
  %v600 = vpop.f32.mrb[0].mxu0
  %v601 = vpop.f32.mrb[0].mxu0
  %v602 = vadd.f32 0.0, %v601
  %v603 = vpop.f32.mrb[0].mxu0
  %604 = vmatprep.mubr.bf16.mxu0 0
  %605 = vmatmul.mubr.bf16.gmra.mrb[0].mxu0 %v362
  %v606 = vpop.f32.mrb[0].mxu0
  %v607 = vadd.f32 0.0, %v606
  %v608 = vpop.f32.mrb[0].mxu0
  %v609 = vpop.f32.mrb[0].mxu0
  %v610 = vadd.f32 0.0, %v609
  %v611 = vpop.f32.mrb[0].mxu0
  %612 = vmatprep.mubr.bf16.mxu0 0
  %613 = vmatmul.mubr.bf16.gmra.mrb[0].mxu0 %v365
  %v614 = vpop.f32.mrb[0].mxu0
  %v615 = vadd.f32 0.0, %v614
  %v616 = vpop.f32.mrb[0].mxu0
  %v617 = vpop.f32.mrb[0].mxu0
  %v618 = vadd.f32 0.0, %v617
  %v619 = vpop.f32.mrb[0].mxu0
  %620 = vmatprep.mubr.bf16.mxu0 0
  %621 = vmatmul.mubr.bf16.gmra.mrb[0].mxu0 %v368
  %v622 = vpop.f32.mrb[0].mxu0
  %v623 = vadd.f32 0.0, %v622
  %v624 = vpop.f32.mrb[0].mxu0
  %v625 = vpop.f32.mrb[0].mxu0
  %v626 = vadd.f32 0.0, %v625
  %v627 = vpop.f32.mrb[0].mxu0
  %628 = vmatprep.mubr.bf16.mxu0 0
  %629 = vmatmul.mubr.bf16.gmra.mrb[0].mxu0 %v371
  %v630 = vpop.f32.mrb[0].mxu0
  %v631 = vadd.f32 0.0, %v630
  %v632 = vpop.f32.mrb[0].mxu0
  %v633 = vpop.f32.mrb[0].mxu0
  %v634 = vadd.f32 0.0, %v633
  %v635 = vpop.f32.mrb[0].mxu0
  %636 = vmatprep.mubr.bf16.mxu0 0
  %637 = vmatmul.mubr.bf16.gmra.mrb[0].mxu0 %v374
  %v638 = vpop.f32.mrb[0].mxu0
  %v639 = vadd.f32 0.0, %v638
  %v640 = vpop.f32.mrb[0].mxu0
  %v641 = vpop.f32.mrb[0].mxu0
  %v642 = vadd.f32 0.0, %v641
  %v643 = vpop.f32.mrb[0].mxu0
  %644 = vmatprep.mubr.bf16.mxu0 0
  %645 = vmatmul.mubr.bf16.gmra.mrb[0].mxu0 %v377
  %v646 = vpop.f32.mrb[0].mxu0
  %v647 = vadd.f32 0.0, %v646
  %v648 = vpop.f32.mrb[0].mxu0
  %v649 = vpop.f32.mrb[0].mxu0
  %v650 = vadd.f32 0.0, %v649
  %v651 = vpop.f32.mrb[0].mxu0
  %652 = vmatprep.mubr.bf16.mxu0 0
  %653 = vmatmul.mubr.bf16.gmra.mrb[0].mxu0 %v380
  %v654 = vpop.f32.mrb[0].mxu0
  %v655 = vadd.f32 0.0, %v654
  %v656 = vpop.f32.mrb[0].mxu0
  %v657 = vpop.f32.mrb[0].mxu0
  %v658 = vadd.f32 0.0, %v657
  %v659 = vpop.f32.mrb[0].mxu0
  %660 = vmatprep.mubr.bf16.mxu0 0
  %661 = vmatmul.mubr.bf16.gmra.mrb[0].mxu0 %v383
  %v662 = vpop.f32.mrb[0].mxu0
  %v663 = vadd.f32 0.0, %v662
  %v664 = vpop.f32.mrb[0].mxu0
  %v665 = vpop.f32.mrb[0].mxu0
  %v666 = vadd.f32 0.0, %v665
  %v667 = vpop.f32.mrb[0].mxu0
  %668 = vmatprep.mubr.bf16.mxu0 0
  %669 = vmatmul.mubr.bf16.gmra.mrb[0].mxu0 %v386
  %v670 = vpop.f32.mrb[0].mxu0
  %v671 = vadd.f32 0.0, %v670
  %v672 = vpop.f32.mrb[0].mxu0
  %v673 = vpop.f32.mrb[0].mxu0
  %v674 = vadd.f32 0.0, %v673
  %v675 = vpop.f32.mrb[0].mxu0
  %676 = vdwg.mxu0
  %v677 = vadd.f32 %v423, %v426
  %v678 = vadd.f32 %v677, %v431
  %v679 = vadd.f32 %v678, %v434
  %v680 = vadd.f32 %v679, %v439
  %v681 = vadd.f32 %v680, %v442
  %v682 = vadd.f32 %v681, %v447
  %v683 = vadd.f32 %v682, %v450
  %v684 = vadd.f32 %v683, %v455
  %v685 = vadd.f32 %v684, %v458
  %v686 = vadd.f32 %v685, %v463
  %v687 = vadd.f32 %v686, %v466
  %v688 = vadd.f32 %v687, %v471
  %v689 = vadd.f32 %v688, %v474
  %v690 = vadd.f32 %v689, %v479
  %v691 = vadd.f32 %v690, %v482
  %v692 = vadd.f32 %v691, %v487
  %v693 = vadd.f32 %v692, %v490
  %v694 = vadd.f32 %v693, %v495
  %v695 = vadd.f32 %v694, %v498
  %v696 = vadd.f32 %v695, %v503
  %v697 = vadd.f32 %v696, %v506
  %v698 = vadd.f32 %v697, %v511
  %v699 = vadd.f32 %v698, %v514
  %v700 = vadd.f32 %v699, %v519
  %v701 = vadd.f32 %v700, %v522
  %v702 = vadd.f32 %v701, %v527
  %v703 = vadd.f32 %v702, %v530
  %v704 = vadd.f32 %v703, %v535
  %v705 = vadd.f32 %v704, %v538
  %v706 = vadd.f32 %v705, %v543
  %v707 = vadd.f32 %v706, %v546
  %v708 = vadd.f32 %v707, %v551
  %v709 = vadd.f32 %v708, %v554
  %v710 = vadd.f32 %v709, %v559
  %v711 = vadd.f32 %v710, %v562
  %v712 = vadd.f32 %v711, %v567
  %v713 = vadd.f32 %v712, %v570
  %v714 = vadd.f32 %v713, %v575
  %v715 = vadd.f32 %v714, %v578
  %v716 = vadd.f32 %v715, %v583
  %v717 = vadd.f32 %v716, %v586
  %v718 = vadd.f32 %v717, %v591
  %v719 = vadd.f32 %v718, %v594
  %v720 = vadd.f32 %v719, %v599
  %v721 = vadd.f32 %v720, %v602
  %v722 = vadd.f32 %v721, %v607
  %v723 = vadd.f32 %v722, %v610
  %v724 = vadd.f32 %v723, %v615
  %v725 = vadd.f32 %v724, %v618
  %v726 = vadd.f32 %v725, %v623
  %v727 = vadd.f32 %v726, %v626
  %v728 = vadd.f32 %v727, %v631
  %v729 = vadd.f32 %v728, %v634
  %v730 = vadd.f32 %v729, %v639
  %v731 = vadd.f32 %v730, %v642
  %v732 = vadd.f32 %v731, %v647
  %v733 = vadd.f32 %v732, %v650
  %v734 = vadd.f32 %v733, %v655
  %v735 = vadd.f32 %v734, %v658
  %v736 = vadd.f32 %v735, %v663
  %v737 = vadd.f32 %v736, %v666
  %v738 = vadd.f32 %v737, %v671
  %v739 = vadd.f32 %v738, %v674
  %v740 = vrot.slane %v739, 4
  %v741 = vadd.f32 %v739, %v740
  %v742 = vrot.slane %v741, 2
  %v743 = vadd.f32 %v741, %v742
  %v744 = vrot.slane %v743, 1
  %v745 = vadd.f32 %v743, %v744
  %v746 = vmul.f32 %v423, %v423
  %v747 = vmul.f32 %v426, %v426
  %v748 = vmul.f32 %v431, %v431
  %v749 = vmul.f32 %v434, %v434
  %v750 = vmul.f32 %v439, %v439
  %v751 = vmul.f32 %v442, %v442
  %v752 = vmul.f32 %v447, %v447
  %v753 = vmul.f32 %v450, %v450
  %v754 = vmul.f32 %v455, %v455
  %v755 = vmul.f32 %v458, %v458
  %v756 = vmul.f32 %v463, %v463
  %v757 = vmul.f32 %v466, %v466
  %v758 = vmul.f32 %v471, %v471
  %v759 = vmul.f32 %v474, %v474
  %v760 = vmul.f32 %v479, %v479
  %v761 = vmul.f32 %v482, %v482
  %v762 = vmul.f32 %v487, %v487
  %v763 = vmul.f32 %v490, %v490
  %v764 = vmul.f32 %v495, %v495
  %v765 = vmul.f32 %v498, %v498
  %v766 = vmul.f32 %v503, %v503
  %v767 = vmul.f32 %v506, %v506
  %v768 = vmul.f32 %v511, %v511
  %v769 = vmul.f32 %v514, %v514
  %v770 = vmul.f32 %v519, %v519
  %v771 = vmul.f32 %v522, %v522
  %v772 = vmul.f32 %v527, %v527
  %v773 = vmul.f32 %v530, %v530
  %v774 = vmul.f32 %v535, %v535
  %v775 = vmul.f32 %v538, %v538
  %v776 = vmul.f32 %v543, %v543
  %v777 = vmul.f32 %v546, %v546
  %v778 = vmul.f32 %v551, %v551
  %v779 = vmul.f32 %v554, %v554
  %v780 = vmul.f32 %v559, %v559
  %v781 = vmul.f32 %v562, %v562
  %v782 = vmul.f32 %v567, %v567
  %v783 = vmul.f32 %v570, %v570
  %v784 = vmul.f32 %v575, %v575
  %v785 = vmul.f32 %v578, %v578
  %v786 = vmul.f32 %v583, %v583
  %v787 = vmul.f32 %v586, %v586
  %v788 = vmul.f32 %v591, %v591
  %v789 = vmul.f32 %v594, %v594
  %v790 = vmul.f32 %v599, %v599
  %v791 = vmul.f32 %v602, %v602
  %v792 = vmul.f32 %v607, %v607
  %v793 = vmul.f32 %v610, %v610
  %v794 = vmul.f32 %v615, %v615
  %v795 = vmul.f32 %v618, %v618
  %v796 = vmul.f32 %v623, %v623
  %v797 = vmul.f32 %v626, %v626
  %v798 = vmul.f32 %v631, %v631
  %v799 = vmul.f32 %v634, %v634
  %v800 = vmul.f32 %v639, %v639
  %v801 = vmul.f32 %v642, %v642
  %v802 = vmul.f32 %v647, %v647
  %v803 = vmul.f32 %v650, %v650
  %v804 = vmul.f32 %v655, %v655
  %v805 = vmul.f32 %v658, %v658
  %v806 = vmul.f32 %v663, %v663
  %v807 = vmul.f32 %v666, %v666
  %v808 = vmul.f32 %v671, %v671
  %v809 = vmul.f32 %v674, %v674
  %v810 = vadd.f32 %v746, %v747
  %v811 = vadd.f32 %v810, %v748
  %v812 = vadd.f32 %v811, %v749
  %v813 = vadd.f32 %v812, %v750
  %v814 = vadd.f32 %v813, %v751
  %v815 = vadd.f32 %v814, %v752
  %v816 = vadd.f32 %v815, %v753
  %v817 = vadd.f32 %v816, %v754
  %v818 = vadd.f32 %v817, %v755
  %v819 = vadd.f32 %v818, %v756
  %v820 = vadd.f32 %v819, %v757
  %v821 = vadd.f32 %v820, %v758
  %v822 = vadd.f32 %v821, %v759
  %v823 = vadd.f32 %v822, %v760
  %v824 = vadd.f32 %v823, %v761
  %v825 = vadd.f32 %v824, %v762
  %v826 = vadd.f32 %v825, %v763
  %v827 = vadd.f32 %v826, %v764
  %v828 = vadd.f32 %v827, %v765
  %v829 = vadd.f32 %v828, %v766
  %v830 = vadd.f32 %v829, %v767
  %v831 = vadd.f32 %v830, %v768
  %v832 = vadd.f32 %v831, %v769
  %v833 = vadd.f32 %v832, %v770
  %v834 = vadd.f32 %v833, %v771
  %v835 = vadd.f32 %v834, %v772
  %v836 = vadd.f32 %v835, %v773
  %v837 = vadd.f32 %v836, %v774
  %v838 = vadd.f32 %v837, %v775
  %v839 = vadd.f32 %v838, %v776
  %v840 = vadd.f32 %v839, %v777
  %v841 = vadd.f32 %v840, %v778
  %v842 = vadd.f32 %v841, %v779
  %v843 = vadd.f32 %v842, %v780
  %v844 = vadd.f32 %v843, %v781
  %v845 = vadd.f32 %v844, %v782
  %v846 = vadd.f32 %v845, %v783
  %v847 = vadd.f32 %v846, %v784
  %v848 = vadd.f32 %v847, %v785
  %v849 = vadd.f32 %v848, %v786
  %v850 = vadd.f32 %v849, %v787
  %v851 = vadd.f32 %v850, %v788
  %v852 = vadd.f32 %v851, %v789
  %v853 = vadd.f32 %v852, %v790
  %v854 = vadd.f32 %v853, %v791
  %v855 = vadd.f32 %v854, %v792
  %v856 = vadd.f32 %v855, %v793
  %v857 = vadd.f32 %v856, %v794
  %v858 = vadd.f32 %v857, %v795
  %v859 = vadd.f32 %v858, %v796
  %v860 = vadd.f32 %v859, %v797
  %v861 = vadd.f32 %v860, %v798
  %v862 = vadd.f32 %v861, %v799
  %v863 = vadd.f32 %v862, %v800
  %v864 = vadd.f32 %v863, %v801
  %v865 = vadd.f32 %v864, %v802
  %v866 = vadd.f32 %v865, %v803
  %v867 = vadd.f32 %v866, %v804
  %v868 = vadd.f32 %v867, %v805
  %v869 = vadd.f32 %v868, %v806
  %v870 = vadd.f32 %v869, %v807
  %v871 = vadd.f32 %v870, %v808
  %v872 = vadd.f32 %v871, %v809
  %v873 = vrot.slane %v872, 4
  %v874 = vadd.f32 %v872, %v873
  %v875 = vrot.slane %v874, 2
  %v876 = vadd.f32 %v874, %v875
  %v877 = vrot.slane %v876, 1
  %v878 = vadd.f32 %v876, %v877
  %v879 = vmul.f32 %v745, 0.001953125
  %v880 = vmul.f32 %v878, 0.001953125
  %v881 = vmul.f32 %v879, %v879
  %v882 = vsub.f32 %v880, %v881
  %v883 = vmax.f32 %v882, 0.0
  %v884 = vadd.f32 %v883, 0.001
  %v885 = vrsqrt.pop %v884
  %v886 = vmul.f32 %v32, %v885
  %v887 = vmul.f32 %v879, %v886
  %v888 = vsub.f32 %v33, %v887
  %v889 = vlaneseq
  %v890 = vshrl.u32 %v889, 7
  %v891 = vsub.s32 0, %v890
  %v892 = vrot.slane %v886, %v891
  %v893 = vmul.f32 %v423, %v892
  %v894 = vmul.f32 %v426, %v892
  %v895 = vmul.f32 %v431, %v892
  %v896 = vmul.f32 %v434, %v892
  %v897 = vmul.f32 %v439, %v892
  %v898 = vmul.f32 %v442, %v892
  %v899 = vmul.f32 %v447, %v892
  %v900 = vmul.f32 %v450, %v892
  %v901 = vmul.f32 %v455, %v892
  %v902 = vmul.f32 %v458, %v892
  %v903 = vmul.f32 %v463, %v892
  %v904 = vmul.f32 %v466, %v892
  %v905 = vmul.f32 %v471, %v892
  %v906 = vmul.f32 %v474, %v892
  %v907 = vmul.f32 %v479, %v892
  %v908 = vmul.f32 %v482, %v892
  %v909 = vmul.f32 %v487, %v892
  %v910 = vmul.f32 %v490, %v892
  %v911 = vmul.f32 %v495, %v892
  %v912 = vmul.f32 %v498, %v892
  %v913 = vmul.f32 %v503, %v892
  %v914 = vmul.f32 %v506, %v892
  %v915 = vmul.f32 %v511, %v892
  %v916 = vmul.f32 %v514, %v892
  %v917 = vmul.f32 %v519, %v892
  %v918 = vmul.f32 %v522, %v892
  %v919 = vmul.f32 %v527, %v892
  %v920 = vmul.f32 %v530, %v892
  %v921 = vmul.f32 %v535, %v892
  %v922 = vmul.f32 %v538, %v892
  %v923 = vmul.f32 %v543, %v892
  %v924 = vmul.f32 %v546, %v892
  %v925 = vmul.f32 %v551, %v892
  %v926 = vmul.f32 %v554, %v892
  %v927 = vmul.f32 %v559, %v892
  %v928 = vmul.f32 %v562, %v892
  %v929 = vmul.f32 %v567, %v892
  %v930 = vmul.f32 %v570, %v892
  %v931 = vmul.f32 %v575, %v892
  %v932 = vmul.f32 %v578, %v892
  %v933 = vmul.f32 %v583, %v892
  %v934 = vmul.f32 %v586, %v892
  %v935 = vmul.f32 %v591, %v892
  %v936 = vmul.f32 %v594, %v892
  %v937 = vmul.f32 %v599, %v892
  %v938 = vmul.f32 %v602, %v892
  %v939 = vmul.f32 %v607, %v892
  %v940 = vmul.f32 %v610, %v892
  %v941 = vmul.f32 %v615, %v892
  %v942 = vmul.f32 %v618, %v892
  %v943 = vmul.f32 %v623, %v892
  %v944 = vmul.f32 %v626, %v892
  %v945 = vmul.f32 %v631, %v892
  %v946 = vmul.f32 %v634, %v892
  %v947 = vmul.f32 %v639, %v892
  %v948 = vmul.f32 %v642, %v892
  %v949 = vmul.f32 %v647, %v892
  %v950 = vmul.f32 %v650, %v892
  %v951 = vmul.f32 %v655, %v892
  %v952 = vmul.f32 %v658, %v892
  %v953 = vmul.f32 %v663, %v892
  %v954 = vmul.f32 %v666, %v892
  %v955 = vmul.f32 %v671, %v892
  %v956 = vmul.f32 %v674, %v892
  %v957 = vlaneseq
  %v958 = vshrl.u32 %v957, 7
  %v959 = vsub.s32 0, %v958
  %v960 = vrot.slane %v888, %v959
  %v961 = vadd.f32 %v893, %v960
  %v962 = vadd.f32 %v894, %v960
  %v963 = vadd.f32 %v895, %v960
  %v964 = vadd.f32 %v896, %v960
  %v965 = vadd.f32 %v897, %v960
  %v966 = vadd.f32 %v898, %v960
  %v967 = vadd.f32 %v899, %v960
  %v968 = vadd.f32 %v900, %v960
  %v969 = vadd.f32 %v901, %v960
  %v970 = vadd.f32 %v902, %v960
  %v971 = vadd.f32 %v903, %v960
  %v972 = vadd.f32 %v904, %v960
  %v973 = vadd.f32 %v905, %v960
  %v974 = vadd.f32 %v906, %v960
  %v975 = vadd.f32 %v907, %v960
  %v976 = vadd.f32 %v908, %v960
  %v977 = vadd.f32 %v909, %v960
  %v978 = vadd.f32 %v910, %v960
  %v979 = vadd.f32 %v911, %v960
  %v980 = vadd.f32 %v912, %v960
  %v981 = vadd.f32 %v913, %v960
  %v982 = vadd.f32 %v914, %v960
  %v983 = vadd.f32 %v915, %v960
  %v984 = vadd.f32 %v916, %v960
  %v985 = vadd.f32 %v917, %v960
  %v986 = vadd.f32 %v918, %v960
  %v987 = vadd.f32 %v919, %v960
  %v988 = vadd.f32 %v920, %v960
  %v989 = vadd.f32 %v921, %v960
  %v990 = vadd.f32 %v922, %v960
  %v991 = vadd.f32 %v923, %v960
  %v992 = vadd.f32 %v924, %v960
  %v993 = vadd.f32 %v925, %v960
  %v994 = vadd.f32 %v926, %v960
  %v995 = vadd.f32 %v927, %v960
  %v996 = vadd.f32 %v928, %v960
  %v997 = vadd.f32 %v929, %v960
  %v998 = vadd.f32 %v930, %v960
  %v999 = vadd.f32 %v931, %v960
  %v1000 = vadd.f32 %v932, %v960
  %v1001 = vadd.f32 %v933, %v960
  %v1002 = vadd.f32 %v934, %v960
  %v1003 = vadd.f32 %v935, %v960
  %v1004 = vadd.f32 %v936, %v960
  %v1005 = vadd.f32 %v937, %v960
  %v1006 = vadd.f32 %v938, %v960
  %v1007 = vadd.f32 %v939, %v960
  %v1008 = vadd.f32 %v940, %v960
  %v1009 = vadd.f32 %v941, %v960
  %v1010 = vadd.f32 %v942, %v960
  %v1011 = vadd.f32 %v943, %v960
  %v1012 = vadd.f32 %v944, %v960
  %v1013 = vadd.f32 %v945, %v960
  %v1014 = vadd.f32 %v946, %v960
  %v1015 = vadd.f32 %v947, %v960
  %v1016 = vadd.f32 %v948, %v960
  %v1017 = vadd.f32 %v949, %v960
  %v1018 = vadd.f32 %v950, %v960
  %v1019 = vadd.f32 %v951, %v960
  %v1020 = vadd.f32 %v952, %v960
  %v1021 = vadd.f32 %v953, %v960
  %v1022 = vadd.f32 %v954, %v960
  %v1023 = vadd.f32 %v955, %v960
  %v1024 = vadd.f32 %v956, %v960
  %v1025 = vmax.f32 %v961, 0.0
  %v1026 = vmax.f32 %v962, 0.0
  %v1027 = vmax.f32 %v963, 0.0
  %v1028 = vmax.f32 %v964, 0.0
  %v1029 = vmax.f32 %v965, 0.0
  %v1030 = vmax.f32 %v966, 0.0
  %v1031 = vmax.f32 %v967, 0.0
  %v1032 = vmax.f32 %v968, 0.0
  %v1033 = vmax.f32 %v969, 0.0
  %v1034 = vmax.f32 %v970, 0.0
  %v1035 = vmax.f32 %v971, 0.0
  %v1036 = vmax.f32 %v972, 0.0
  %v1037 = vmax.f32 %v973, 0.0
  %v1038 = vmax.f32 %v974, 0.0
  %v1039 = vmax.f32 %v975, 0.0
  %v1040 = vmax.f32 %v976, 0.0
  %v1041 = vmax.f32 %v977, 0.0
  %v1042 = vmax.f32 %v978, 0.0
  %v1043 = vmax.f32 %v979, 0.0
  %v1044 = vmax.f32 %v980, 0.0
  %v1045 = vmax.f32 %v981, 0.0
  %v1046 = vmax.f32 %v982, 0.0
  %v1047 = vmax.f32 %v983, 0.0
  %v1048 = vmax.f32 %v984, 0.0
  %v1049 = vmax.f32 %v985, 0.0
  %v1050 = vmax.f32 %v986, 0.0
  %v1051 = vmax.f32 %v987, 0.0
  %v1052 = vmax.f32 %v988, 0.0
  %v1053 = vmax.f32 %v989, 0.0
  %v1054 = vmax.f32 %v990, 0.0
  %v1055 = vmax.f32 %v991, 0.0
  %v1056 = vmax.f32 %v992, 0.0
  %v1057 = vmax.f32 %v993, 0.0
  %v1058 = vmax.f32 %v994, 0.0
  %v1059 = vmax.f32 %v995, 0.0
  %v1060 = vmax.f32 %v996, 0.0
  %v1061 = vmax.f32 %v997, 0.0
  %v1062 = vmax.f32 %v998, 0.0
  %v1063 = vmax.f32 %v999, 0.0
  %v1064 = vmax.f32 %v1000, 0.0
  %v1065 = vmax.f32 %v1001, 0.0
  %v1066 = vmax.f32 %v1002, 0.0
  %v1067 = vmax.f32 %v1003, 0.0
  %v1068 = vmax.f32 %v1004, 0.0
  %v1069 = vmax.f32 %v1005, 0.0
  %v1070 = vmax.f32 %v1006, 0.0
  %v1071 = vmax.f32 %v1007, 0.0
  %v1072 = vmax.f32 %v1008, 0.0
  %v1073 = vmax.f32 %v1009, 0.0
  %v1074 = vmax.f32 %v1010, 0.0
  %v1075 = vmax.f32 %v1011, 0.0
  %v1076 = vmax.f32 %v1012, 0.0
  %v1077 = vmax.f32 %v1013, 0.0
  %v1078 = vmax.f32 %v1014, 0.0
  %v1079 = vmax.f32 %v1015, 0.0
  %v1080 = vmax.f32 %v1016, 0.0
  %v1081 = vmax.f32 %v1017, 0.0
  %v1082 = vmax.f32 %v1018, 0.0
  %v1083 = vmax.f32 %v1019, 0.0
  %v1084 = vmax.f32 %v1020, 0.0
  %v1085 = vmax.f32 %v1021, 0.0
  %v1086 = vmax.f32 %v1022, 0.0
  %v1087 = vmax.f32 %v1023, 0.0
  %v1088 = vmax.f32 %v1024, 0.0
  %v1089 = vpack.c.bf16 %v1026, %v1025
  %v1090 = vpack.c.bf16 %v1028, %v1027
  %v1091 = vpack.c.bf16 %v1030, %v1029
  %v1092 = vpack.c.bf16 %v1032, %v1031
  %v1093 = vpack.c.bf16 %v1034, %v1033
  %v1094 = vpack.c.bf16 %v1036, %v1035
  %v1095 = vpack.c.bf16 %v1038, %v1037
  %v1096 = vpack.c.bf16 %v1040, %v1039
  %v1097 = vpack.c.bf16 %v1042, %v1041
  %v1098 = vpack.c.bf16 %v1044, %v1043
  %v1099 = vpack.c.bf16 %v1046, %v1045
  %v1100 = vpack.c.bf16 %v1048, %v1047
  %v1101 = vpack.c.bf16 %v1050, %v1049
  %v1102 = vpack.c.bf16 %v1052, %v1051
  %v1103 = vpack.c.bf16 %v1054, %v1053
  %v1104 = vpack.c.bf16 %v1056, %v1055
  %v1105 = vpack.c.bf16 %v1058, %v1057
  %v1106 = vpack.c.bf16 %v1060, %v1059
  %v1107 = vpack.c.bf16 %v1062, %v1061
  %v1108 = vpack.c.bf16 %v1064, %v1063
  %v1109 = vpack.c.bf16 %v1066, %v1065
  %v1110 = vpack.c.bf16 %v1068, %v1067
  %v1111 = vpack.c.bf16 %v1070, %v1069
  %v1112 = vpack.c.bf16 %v1072, %v1071
  %v1113 = vpack.c.bf16 %v1074, %v1073
  %v1114 = vpack.c.bf16 %v1076, %v1075
  %v1115 = vpack.c.bf16 %v1078, %v1077
  %v1116 = vpack.c.bf16 %v1080, %v1079
  %v1117 = vpack.c.bf16 %v1082, %v1081
  %v1118 = vpack.c.bf16 %v1084, %v1083
  %v1119 = vpack.c.bf16 %v1086, %v1085
  %v1120 = vpack.c.bf16 %v1088, %v1087
  %v1121 = vld [vmem:[%s3] sm:$0xf]
  %v1122 = vld [vmem:[%s3 + $0x4] sm:$0xf]
  %v1123 = vld [vmem:[%s3 + $0x8] sm:$0xf]
  %v1124 = vld [vmem:[%s3 + $0xc] sm:$0xf]
  %v1125 = vld [vmem:[%s3 + $0x10] sm:$0xf]
  %v1126 = vld [vmem:[%s3 + $0x14] sm:$0xf]
  %v1127 = vld [vmem:[%s3 + $0x18] sm:$0xf]
  %v1128 = vld [vmem:[%s3 + $0x1c] sm:$0xf]
  %v1129 = vld [vmem:[%s3 + $0x20] sm:$0xf]
  %v1130 = vld [vmem:[%s3 + $0x24] sm:$0xf]
  %v1131 = vld [vmem:[%s3 + $0x28] sm:$0xf]
  %v1132 = vld [vmem:[%s3 + $0x2c] sm:$0xf]
  %v1133 = vld [vmem:[%s3 + $0x30] sm:$0xf]
  %v1134 = vld [vmem:[%s3 + $0x34] sm:$0xf]
  %v1135 = vld [vmem:[%s3 + $0x38] sm:$0xf]
  %v1136 = vld [vmem:[%s3 + $0x3c] sm:$0xf]
  %v1153 = vunpack.c.l.b16 %v1121
  %v1154 = vunpack.c.l.b16 %v1122
  %v1155 = vunpack.c.l.b16 %v1123
  %v1156 = vunpack.c.l.b16 %v1124
  %v1157 = vunpack.c.l.b16 %v1125
  %v1158 = vunpack.c.l.b16 %v1126
  %v1159 = vunpack.c.l.b16 %v1127
  %v1160 = vunpack.c.l.b16 %v1128
  %v1161 = vunpack.c.l.b16 %v1129
  %v1162 = vunpack.c.l.b16 %v1130
  %v1163 = vunpack.c.l.b16 %v1131
  %v1164 = vunpack.c.l.b16 %v1132
  %v1165 = vunpack.c.l.b16 %v1133
  %v1166 = vunpack.c.l.b16 %v1134
  %v1167 = vunpack.c.l.b16 %v1135
  %v1168 = vunpack.c.l.b16 %v1136
  %v1169 = vpack.c.b16 %v1154, %v1153
  %v1170 = vpack.c.b16 %v1156, %v1155
  %v1171 = vpack.c.b16 %v1158, %v1157
  %v1172 = vpack.c.b16 %v1160, %v1159
  %v1173 = vpack.c.b16 %v1162, %v1161
  %v1174 = vpack.c.b16 %v1164, %v1163
  %v1175 = vpack.c.b16 %v1166, %v1165
  %v1176 = vpack.c.b16 %v1168, %v1167
  %1185 = vmatprep.subr.bf16.mxu0 0
  %1186 = vmatpush1.bf16.msra.mxu0 %v1169
  %1187 = vmatprep.subr.bf16.mxu0 0
  %1188 = vmatpush1.bf16.msra.mxu0 %v1170
  %1189 = vmatprep.subr.bf16.mxu0 0
  %1190 = vmatpush1.bf16.msra.mxu0 %v1171
  %1191 = vmatprep.subr.bf16.mxu0 0
  %1192 = vmatpush1.bf16.msra.mxu0 %v1172
  %1193 = vmatprep.subr.bf16.mxu0 0
  %1194 = vmatpush1.bf16.msra.mxu0 %v1173
  %1195 = vmatprep.subr.bf16.mxu0 0
  %1196 = vmatpush1.bf16.msra.mxu0 %v1174
  %1197 = vmatprep.subr.bf16.mxu0 0
  %1198 = vmatpush1.bf16.msra.mxu0 %v1175
  %1199 = vmatprep.subr.bf16.mxu0 0
  %1200 = vmatpush1.bf16.msra.mxu0 %v1176
  %1201 = vmatprep.subr.bf16.mxu0 0
  %1202 = vmatpush1.bf16.msra.mxu0 0
  %1203 = vmatprep.subr.bf16.mxu0 0
  %1204 = vmatpush1.bf16.msra.mxu0 0
  %1205 = vmatprep.subr.bf16.mxu0 0
  %1206 = vmatpush1.bf16.msra.mxu0 0
  %1207 = vmatprep.subr.bf16.mxu0 0
  %1208 = vmatpush1.bf16.msra.mxu0 0
  %1209 = vmatprep.subr.bf16.mxu0 0
  %1210 = vmatpush1.bf16.msra.mxu0 0
  %1211 = vmatprep.subr.bf16.mxu0 0
  %1212 = vmatpush1.bf16.msra.mxu0 0
  %1213 = vmatprep.subr.bf16.mxu0 0
  %1214 = vmatpush1.bf16.msra.mxu0 0
  %1215 = vmatprep.subr.bf16.mxu0 0
  %1216 = vmatpush1.bf16.msra.mxu0 0
  %1217 = vmatprep.mubr.bf16.mxu0 0
  %1218 = vmatmul.mubr.bf16.gmra.mrb[0].mxu0 %v1089
  %v1219 = vpop.f32.mrb[0].mxu0
  %v1220 = vadd.f32 0.0, %v1219
  %v1221 = vpop.f32.mrb[0].mxu0
  %v1222 = vpop.f32.mrb[0].mxu0
  %v1223 = vadd.f32 0.0, %v1222
  %v1224 = vpop.f32.mrb[0].mxu0
  %1225 = vmatprep.mubr.bf16.mxu0 0
  %1226 = vmatmul.mubr.bf16.gmra.mrb[0].mxu0 %v1090
  %v1227 = vpop.f32.mrb[0].mxu0
  %v1228 = vadd.f32 0.0, %v1227
  %v1229 = vpop.f32.mrb[0].mxu0
  %v1230 = vpop.f32.mrb[0].mxu0
  %v1231 = vadd.f32 0.0, %v1230
  %v1232 = vpop.f32.mrb[0].mxu0
  %1233 = vmatprep.mubr.bf16.mxu0 0
  %1234 = vmatmul.mubr.bf16.gmra.mrb[0].mxu0 %v1091
  %v1235 = vpop.f32.mrb[0].mxu0
  %v1236 = vadd.f32 0.0, %v1235
  %v1237 = vpop.f32.mrb[0].mxu0
  %v1238 = vpop.f32.mrb[0].mxu0
  %v1239 = vadd.f32 0.0, %v1238
  %v1240 = vpop.f32.mrb[0].mxu0
  %1241 = vmatprep.mubr.bf16.mxu0 0
  %1242 = vmatmul.mubr.bf16.gmra.mrb[0].mxu0 %v1092
  %v1243 = vpop.f32.mrb[0].mxu0
  %v1244 = vadd.f32 0.0, %v1243
  %v1245 = vpop.f32.mrb[0].mxu0
  %v1246 = vpop.f32.mrb[0].mxu0
  %v1247 = vadd.f32 0.0, %v1246
  %v1248 = vpop.f32.mrb[0].mxu0
  %1249 = vmatprep.mubr.bf16.mxu0 0
  %1250 = vmatmul.mubr.bf16.gmra.mrb[0].mxu0 %v1093
  %v1251 = vpop.f32.mrb[0].mxu0
  %v1252 = vadd.f32 0.0, %v1251
  %v1253 = vpop.f32.mrb[0].mxu0
  %v1254 = vpop.f32.mrb[0].mxu0
  %v1255 = vadd.f32 0.0, %v1254
  %v1256 = vpop.f32.mrb[0].mxu0
  %1257 = vmatprep.mubr.bf16.mxu0 0
  %1258 = vmatmul.mubr.bf16.gmra.mrb[0].mxu0 %v1094
  %v1259 = vpop.f32.mrb[0].mxu0
  %v1260 = vadd.f32 0.0, %v1259
  %v1261 = vpop.f32.mrb[0].mxu0
  %v1262 = vpop.f32.mrb[0].mxu0
  %v1263 = vadd.f32 0.0, %v1262
  %v1264 = vpop.f32.mrb[0].mxu0
  %1265 = vmatprep.mubr.bf16.mxu0 0
  %1266 = vmatmul.mubr.bf16.gmra.mrb[0].mxu0 %v1095
  %v1267 = vpop.f32.mrb[0].mxu0
  %v1268 = vadd.f32 0.0, %v1267
  %v1269 = vpop.f32.mrb[0].mxu0
  %v1270 = vpop.f32.mrb[0].mxu0
  %v1271 = vadd.f32 0.0, %v1270
  %v1272 = vpop.f32.mrb[0].mxu0
  %1273 = vmatprep.mubr.bf16.mxu0 0
  %1274 = vmatmul.mubr.bf16.gmra.mrb[0].mxu0 %v1096
  %v1275 = vpop.f32.mrb[0].mxu0
  %v1276 = vadd.f32 0.0, %v1275
  %v1277 = vpop.f32.mrb[0].mxu0
  %v1278 = vpop.f32.mrb[0].mxu0
  %v1279 = vadd.f32 0.0, %v1278
  %v1280 = vpop.f32.mrb[0].mxu0
  %1281 = vmatprep.mubr.bf16.mxu0 0
  %1282 = vmatmul.mubr.bf16.gmra.mrb[0].mxu0 %v1097
  %v1283 = vpop.f32.mrb[0].mxu0
  %v1284 = vadd.f32 0.0, %v1283
  %v1285 = vpop.f32.mrb[0].mxu0
  %v1286 = vpop.f32.mrb[0].mxu0
  %v1287 = vadd.f32 0.0, %v1286
  %v1288 = vpop.f32.mrb[0].mxu0
  %1289 = vmatprep.mubr.bf16.mxu0 0
  %1290 = vmatmul.mubr.bf16.gmra.mrb[0].mxu0 %v1098
  %v1291 = vpop.f32.mrb[0].mxu0
  %v1292 = vadd.f32 0.0, %v1291
  %v1293 = vpop.f32.mrb[0].mxu0
  %v1294 = vpop.f32.mrb[0].mxu0
  %v1295 = vadd.f32 0.0, %v1294
  %v1296 = vpop.f32.mrb[0].mxu0
  %1297 = vmatprep.mubr.bf16.mxu0 0
  %1298 = vmatmul.mubr.bf16.gmra.mrb[0].mxu0 %v1099
  %v1299 = vpop.f32.mrb[0].mxu0
  %v1300 = vadd.f32 0.0, %v1299
  %v1301 = vpop.f32.mrb[0].mxu0
  %v1302 = vpop.f32.mrb[0].mxu0
  %v1303 = vadd.f32 0.0, %v1302
  %v1304 = vpop.f32.mrb[0].mxu0
  %1305 = vmatprep.mubr.bf16.mxu0 0
  %1306 = vmatmul.mubr.bf16.gmra.mrb[0].mxu0 %v1100
  %v1307 = vpop.f32.mrb[0].mxu0
  %v1308 = vadd.f32 0.0, %v1307
  %v1309 = vpop.f32.mrb[0].mxu0
  %v1310 = vpop.f32.mrb[0].mxu0
  %v1311 = vadd.f32 0.0, %v1310
  %v1312 = vpop.f32.mrb[0].mxu0
  %1313 = vmatprep.mubr.bf16.mxu0 0
  %1314 = vmatmul.mubr.bf16.gmra.mrb[0].mxu0 %v1101
  %v1315 = vpop.f32.mrb[0].mxu0
  %v1316 = vadd.f32 0.0, %v1315
  %v1317 = vpop.f32.mrb[0].mxu0
  %v1318 = vpop.f32.mrb[0].mxu0
  %v1319 = vadd.f32 0.0, %v1318
  %v1320 = vpop.f32.mrb[0].mxu0
  %1321 = vmatprep.mubr.bf16.mxu0 0
  %1322 = vmatmul.mubr.bf16.gmra.mrb[0].mxu0 %v1102
  %v1323 = vpop.f32.mrb[0].mxu0
  %v1324 = vadd.f32 0.0, %v1323
  %v1325 = vpop.f32.mrb[0].mxu0
  %v1326 = vpop.f32.mrb[0].mxu0
  %v1327 = vadd.f32 0.0, %v1326
  %v1328 = vpop.f32.mrb[0].mxu0
  %1329 = vmatprep.mubr.bf16.mxu0 0
  %1330 = vmatmul.mubr.bf16.gmra.mrb[0].mxu0 %v1103
  %v1331 = vpop.f32.mrb[0].mxu0
  %v1332 = vadd.f32 0.0, %v1331
  %v1333 = vpop.f32.mrb[0].mxu0
  %v1334 = vpop.f32.mrb[0].mxu0
  %v1335 = vadd.f32 0.0, %v1334
  %v1336 = vpop.f32.mrb[0].mxu0
  %1337 = vmatprep.mubr.bf16.mxu0 0
  %1338 = vmatmul.mubr.bf16.gmra.mrb[0].mxu0 %v1104
  %v1339 = vpop.f32.mrb[0].mxu0
  %v1340 = vadd.f32 0.0, %v1339
  %v1341 = vpop.f32.mrb[0].mxu0
  %v1342 = vpop.f32.mrb[0].mxu0
  %v1343 = vadd.f32 0.0, %v1342
  %v1344 = vpop.f32.mrb[0].mxu0
  %1345 = vmatprep.mubr.bf16.mxu0 0
  %1346 = vmatmul.mubr.bf16.gmra.mrb[0].mxu0 %v1105
  %v1347 = vpop.f32.mrb[0].mxu0
  %v1348 = vadd.f32 0.0, %v1347
  %v1349 = vpop.f32.mrb[0].mxu0
  %v1350 = vpop.f32.mrb[0].mxu0
  %v1351 = vadd.f32 0.0, %v1350
  %v1352 = vpop.f32.mrb[0].mxu0
  %1353 = vmatprep.mubr.bf16.mxu0 0
  %1354 = vmatmul.mubr.bf16.gmra.mrb[0].mxu0 %v1106
  %v1355 = vpop.f32.mrb[0].mxu0
  %v1356 = vadd.f32 0.0, %v1355
  %v1357 = vpop.f32.mrb[0].mxu0
  %v1358 = vpop.f32.mrb[0].mxu0
  %v1359 = vadd.f32 0.0, %v1358
  %v1360 = vpop.f32.mrb[0].mxu0
  %1361 = vmatprep.mubr.bf16.mxu0 0
  %1362 = vmatmul.mubr.bf16.gmra.mrb[0].mxu0 %v1107
  %v1363 = vpop.f32.mrb[0].mxu0
  %v1364 = vadd.f32 0.0, %v1363
  %v1365 = vpop.f32.mrb[0].mxu0
  %v1366 = vpop.f32.mrb[0].mxu0
  %v1367 = vadd.f32 0.0, %v1366
  %v1368 = vpop.f32.mrb[0].mxu0
  %1369 = vmatprep.mubr.bf16.mxu0 0
  %1370 = vmatmul.mubr.bf16.gmra.mrb[0].mxu0 %v1108
  %v1371 = vpop.f32.mrb[0].mxu0
  %v1372 = vadd.f32 0.0, %v1371
  %v1373 = vpop.f32.mrb[0].mxu0
  %v1374 = vpop.f32.mrb[0].mxu0
  %v1375 = vadd.f32 0.0, %v1374
  %v1376 = vpop.f32.mrb[0].mxu0
  %1377 = vmatprep.mubr.bf16.mxu0 0
  %1378 = vmatmul.mubr.bf16.gmra.mrb[0].mxu0 %v1109
  %v1379 = vpop.f32.mrb[0].mxu0
  %v1380 = vadd.f32 0.0, %v1379
  %v1381 = vpop.f32.mrb[0].mxu0
  %v1382 = vpop.f32.mrb[0].mxu0
  %v1383 = vadd.f32 0.0, %v1382
  %v1384 = vpop.f32.mrb[0].mxu0
  %1385 = vmatprep.mubr.bf16.mxu0 0
  %1386 = vmatmul.mubr.bf16.gmra.mrb[0].mxu0 %v1110
  %v1387 = vpop.f32.mrb[0].mxu0
  %v1388 = vadd.f32 0.0, %v1387
  %v1389 = vpop.f32.mrb[0].mxu0
  %v1390 = vpop.f32.mrb[0].mxu0
  %v1391 = vadd.f32 0.0, %v1390
  %v1392 = vpop.f32.mrb[0].mxu0
  %1393 = vmatprep.mubr.bf16.mxu0 0
  %1394 = vmatmul.mubr.bf16.gmra.mrb[0].mxu0 %v1111
  %v1395 = vpop.f32.mrb[0].mxu0
  %v1396 = vadd.f32 0.0, %v1395
  %v1397 = vpop.f32.mrb[0].mxu0
  %v1398 = vpop.f32.mrb[0].mxu0
  %v1399 = vadd.f32 0.0, %v1398
  %v1400 = vpop.f32.mrb[0].mxu0
  %1401 = vmatprep.mubr.bf16.mxu0 0
  %1402 = vmatmul.mubr.bf16.gmra.mrb[0].mxu0 %v1112
  %v1403 = vpop.f32.mrb[0].mxu0
  %v1404 = vadd.f32 0.0, %v1403
  %v1405 = vpop.f32.mrb[0].mxu0
  %v1406 = vpop.f32.mrb[0].mxu0
  %v1407 = vadd.f32 0.0, %v1406
  %v1408 = vpop.f32.mrb[0].mxu0
  %1409 = vmatprep.mubr.bf16.mxu0 0
  %1410 = vmatmul.mubr.bf16.gmra.mrb[0].mxu0 %v1113
  %v1411 = vpop.f32.mrb[0].mxu0
  %v1412 = vadd.f32 0.0, %v1411
  %v1413 = vpop.f32.mrb[0].mxu0
  %v1414 = vpop.f32.mrb[0].mxu0
  %v1415 = vadd.f32 0.0, %v1414
  %v1416 = vpop.f32.mrb[0].mxu0
  %1417 = vmatprep.mubr.bf16.mxu0 0
  %1418 = vmatmul.mubr.bf16.gmra.mrb[0].mxu0 %v1114
  %v1419 = vpop.f32.mrb[0].mxu0
  %v1420 = vadd.f32 0.0, %v1419
  %v1421 = vpop.f32.mrb[0].mxu0
  %v1422 = vpop.f32.mrb[0].mxu0
  %v1423 = vadd.f32 0.0, %v1422
  %v1424 = vpop.f32.mrb[0].mxu0
  %1425 = vmatprep.mubr.bf16.mxu0 0
  %1426 = vmatmul.mubr.bf16.gmra.mrb[0].mxu0 %v1115
  %v1427 = vpop.f32.mrb[0].mxu0
  %v1428 = vadd.f32 0.0, %v1427
  %v1429 = vpop.f32.mrb[0].mxu0
  %v1430 = vpop.f32.mrb[0].mxu0
  %v1431 = vadd.f32 0.0, %v1430
  %v1432 = vpop.f32.mrb[0].mxu0
  %1433 = vmatprep.mubr.bf16.mxu0 0
  %1434 = vmatmul.mubr.bf16.gmra.mrb[0].mxu0 %v1116
  %v1435 = vpop.f32.mrb[0].mxu0
  %v1436 = vadd.f32 0.0, %v1435
  %v1437 = vpop.f32.mrb[0].mxu0
  %v1438 = vpop.f32.mrb[0].mxu0
  %v1439 = vadd.f32 0.0, %v1438
  %v1440 = vpop.f32.mrb[0].mxu0
  %1441 = vmatprep.mubr.bf16.mxu0 0
  %1442 = vmatmul.mubr.bf16.gmra.mrb[0].mxu0 %v1117
  %v1443 = vpop.f32.mrb[0].mxu0
  %v1444 = vadd.f32 0.0, %v1443
  %v1445 = vpop.f32.mrb[0].mxu0
  %v1446 = vpop.f32.mrb[0].mxu0
  %v1447 = vadd.f32 0.0, %v1446
  %v1448 = vpop.f32.mrb[0].mxu0
  %1449 = vmatprep.mubr.bf16.mxu0 0
  %1450 = vmatmul.mubr.bf16.gmra.mrb[0].mxu0 %v1118
  %v1451 = vpop.f32.mrb[0].mxu0
  %v1452 = vadd.f32 0.0, %v1451
  %v1453 = vpop.f32.mrb[0].mxu0
  %v1454 = vpop.f32.mrb[0].mxu0
  %v1455 = vadd.f32 0.0, %v1454
  %v1456 = vpop.f32.mrb[0].mxu0
  %1457 = vmatprep.mubr.bf16.mxu0 0
  %1458 = vmatmul.mubr.bf16.gmra.mrb[0].mxu0 %v1119
  %v1459 = vpop.f32.mrb[0].mxu0
  %v1460 = vadd.f32 0.0, %v1459
  %v1461 = vpop.f32.mrb[0].mxu0
  %v1462 = vpop.f32.mrb[0].mxu0
  %v1463 = vadd.f32 0.0, %v1462
  %v1464 = vpop.f32.mrb[0].mxu0
  %1465 = vmatprep.mubr.bf16.mxu0 0
  %1466 = vmatmul.mubr.bf16.gmra.mrb[0].mxu0 %v1120
  %v1467 = vpop.f32.mrb[0].mxu0
  %v1468 = vadd.f32 0.0, %v1467
  %v1469 = vpop.f32.mrb[0].mxu0
  %v1470 = vpop.f32.mrb[0].mxu0
  %v1471 = vadd.f32 0.0, %v1470
  %v1472 = vpop.f32.mrb[0].mxu0
  %1473 = vdwg.mxu0
  %v1474 = vadd.f32 %v1220, %v1223
  %v1475 = vadd.f32 %v1474, %v1228
  %v1476 = vadd.f32 %v1475, %v1231
  %v1477 = vadd.f32 %v1476, %v1236
  %v1478 = vadd.f32 %v1477, %v1239
  %v1479 = vadd.f32 %v1478, %v1244
  %v1480 = vadd.f32 %v1479, %v1247
  %v1481 = vadd.f32 %v1480, %v1252
  %v1482 = vadd.f32 %v1481, %v1255
  %v1483 = vadd.f32 %v1482, %v1260
  %v1484 = vadd.f32 %v1483, %v1263
  %v1485 = vadd.f32 %v1484, %v1268
  %v1486 = vadd.f32 %v1485, %v1271
  %v1487 = vadd.f32 %v1486, %v1276
  %v1488 = vadd.f32 %v1487, %v1279
  %v1489 = vadd.f32 %v1488, %v1284
  %v1490 = vadd.f32 %v1489, %v1287
  %v1491 = vadd.f32 %v1490, %v1292
  %v1492 = vadd.f32 %v1491, %v1295
  %v1493 = vadd.f32 %v1492, %v1300
  %v1494 = vadd.f32 %v1493, %v1303
  %v1495 = vadd.f32 %v1494, %v1308
  %v1496 = vadd.f32 %v1495, %v1311
  %v1497 = vadd.f32 %v1496, %v1316
  %v1498 = vadd.f32 %v1497, %v1319
  %v1499 = vadd.f32 %v1498, %v1324
  %v1500 = vadd.f32 %v1499, %v1327
  %v1501 = vadd.f32 %v1500, %v1332
  %v1502 = vadd.f32 %v1501, %v1335
  %v1503 = vadd.f32 %v1502, %v1340
  %v1504 = vadd.f32 %v1503, %v1343
  %v1505 = vadd.f32 %v1504, %v1348
  %v1506 = vadd.f32 %v1505, %v1351
  %v1507 = vadd.f32 %v1506, %v1356
  %v1508 = vadd.f32 %v1507, %v1359
  %v1509 = vadd.f32 %v1508, %v1364
  %v1510 = vadd.f32 %v1509, %v1367
  %v1511 = vadd.f32 %v1510, %v1372
  %v1512 = vadd.f32 %v1511, %v1375
  %v1513 = vadd.f32 %v1512, %v1380
  %v1514 = vadd.f32 %v1513, %v1383
  %v1515 = vadd.f32 %v1514, %v1388
  %v1516 = vadd.f32 %v1515, %v1391
  %v1517 = vadd.f32 %v1516, %v1396
  %v1518 = vadd.f32 %v1517, %v1399
  %v1519 = vadd.f32 %v1518, %v1404
  %v1520 = vadd.f32 %v1519, %v1407
  %v1521 = vadd.f32 %v1520, %v1412
  %v1522 = vadd.f32 %v1521, %v1415
  %v1523 = vadd.f32 %v1522, %v1420
  %v1524 = vadd.f32 %v1523, %v1423
  %v1525 = vadd.f32 %v1524, %v1428
  %v1526 = vadd.f32 %v1525, %v1431
  %v1527 = vadd.f32 %v1526, %v1436
  %v1528 = vadd.f32 %v1527, %v1439
  %v1529 = vadd.f32 %v1528, %v1444
  %v1530 = vadd.f32 %v1529, %v1447
  %v1531 = vadd.f32 %v1530, %v1452
  %v1532 = vadd.f32 %v1531, %v1455
  %v1533 = vadd.f32 %v1532, %v1460
  %v1534 = vadd.f32 %v1533, %v1463
  %v1535 = vadd.f32 %v1534, %v1468
  %v1536 = vadd.f32 %v1535, %v1471
  %v1537 = vrot.slane %v1536, 4
  %v1538 = vadd.f32 %v1536, %v1537
  %v1539 = vrot.slane %v1538, 2
  %v1540 = vadd.f32 %v1538, %v1539
  %v1541 = vrot.slane %v1540, 1
  %v1542 = vadd.f32 %v1540, %v1541
  %v1543 = vmul.f32 %v1220, %v1220
  %v1544 = vmul.f32 %v1223, %v1223
  %v1545 = vmul.f32 %v1228, %v1228
  %v1546 = vmul.f32 %v1231, %v1231
  %v1547 = vmul.f32 %v1236, %v1236
  %v1548 = vmul.f32 %v1239, %v1239
  %v1549 = vmul.f32 %v1244, %v1244
  %v1550 = vmul.f32 %v1247, %v1247
  %v1551 = vmul.f32 %v1252, %v1252
  %v1552 = vmul.f32 %v1255, %v1255
  %v1553 = vmul.f32 %v1260, %v1260
  %v1554 = vmul.f32 %v1263, %v1263
  %v1555 = vmul.f32 %v1268, %v1268
  %v1556 = vmul.f32 %v1271, %v1271
  %v1557 = vmul.f32 %v1276, %v1276
  %v1558 = vmul.f32 %v1279, %v1279
  %v1559 = vmul.f32 %v1284, %v1284
  %v1560 = vmul.f32 %v1287, %v1287
  %v1561 = vmul.f32 %v1292, %v1292
  %v1562 = vmul.f32 %v1295, %v1295
  %v1563 = vmul.f32 %v1300, %v1300
  %v1564 = vmul.f32 %v1303, %v1303
  %v1565 = vmul.f32 %v1308, %v1308
  %v1566 = vmul.f32 %v1311, %v1311
  %v1567 = vmul.f32 %v1316, %v1316
  %v1568 = vmul.f32 %v1319, %v1319
  %v1569 = vmul.f32 %v1324, %v1324
  %v1570 = vmul.f32 %v1327, %v1327
  %v1571 = vmul.f32 %v1332, %v1332
  %v1572 = vmul.f32 %v1335, %v1335
  %v1573 = vmul.f32 %v1340, %v1340
  %v1574 = vmul.f32 %v1343, %v1343
  %v1575 = vmul.f32 %v1348, %v1348
  %v1576 = vmul.f32 %v1351, %v1351
  %v1577 = vmul.f32 %v1356, %v1356
  %v1578 = vmul.f32 %v1359, %v1359
  %v1579 = vmul.f32 %v1364, %v1364
  %v1580 = vmul.f32 %v1367, %v1367
  %v1581 = vmul.f32 %v1372, %v1372
  %v1582 = vmul.f32 %v1375, %v1375
  %v1583 = vmul.f32 %v1380, %v1380
  %v1584 = vmul.f32 %v1383, %v1383
  %v1585 = vmul.f32 %v1388, %v1388
  %v1586 = vmul.f32 %v1391, %v1391
  %v1587 = vmul.f32 %v1396, %v1396
  %v1588 = vmul.f32 %v1399, %v1399
  %v1589 = vmul.f32 %v1404, %v1404
  %v1590 = vmul.f32 %v1407, %v1407
  %v1591 = vmul.f32 %v1412, %v1412
  %v1592 = vmul.f32 %v1415, %v1415
  %v1593 = vmul.f32 %v1420, %v1420
  %v1594 = vmul.f32 %v1423, %v1423
  %v1595 = vmul.f32 %v1428, %v1428
  %v1596 = vmul.f32 %v1431, %v1431
  %v1597 = vmul.f32 %v1436, %v1436
  %v1598 = vmul.f32 %v1439, %v1439
  %v1599 = vmul.f32 %v1444, %v1444
  %v1600 = vmul.f32 %v1447, %v1447
  %v1601 = vmul.f32 %v1452, %v1452
  %v1602 = vmul.f32 %v1455, %v1455
  %v1603 = vmul.f32 %v1460, %v1460
  %v1604 = vmul.f32 %v1463, %v1463
  %v1605 = vmul.f32 %v1468, %v1468
  %v1606 = vmul.f32 %v1471, %v1471
  %v1607 = vadd.f32 %v1543, %v1544
  %v1608 = vadd.f32 %v1607, %v1545
  %v1609 = vadd.f32 %v1608, %v1546
  %v1610 = vadd.f32 %v1609, %v1547
  %v1611 = vadd.f32 %v1610, %v1548
  %v1612 = vadd.f32 %v1611, %v1549
  %v1613 = vadd.f32 %v1612, %v1550
  %v1614 = vadd.f32 %v1613, %v1551
  %v1615 = vadd.f32 %v1614, %v1552
  %v1616 = vadd.f32 %v1615, %v1553
  %v1617 = vadd.f32 %v1616, %v1554
  %v1618 = vadd.f32 %v1617, %v1555
  %v1619 = vadd.f32 %v1618, %v1556
  %v1620 = vadd.f32 %v1619, %v1557
  %v1621 = vadd.f32 %v1620, %v1558
  %v1622 = vadd.f32 %v1621, %v1559
  %v1623 = vadd.f32 %v1622, %v1560
  %v1624 = vadd.f32 %v1623, %v1561
  %v1625 = vadd.f32 %v1624, %v1562
  %v1626 = vadd.f32 %v1625, %v1563
  %v1627 = vadd.f32 %v1626, %v1564
  %v1628 = vadd.f32 %v1627, %v1565
  %v1629 = vadd.f32 %v1628, %v1566
  %v1630 = vadd.f32 %v1629, %v1567
  %v1631 = vadd.f32 %v1630, %v1568
  %v1632 = vadd.f32 %v1631, %v1569
  %v1633 = vadd.f32 %v1632, %v1570
  %v1634 = vadd.f32 %v1633, %v1571
  %v1635 = vadd.f32 %v1634, %v1572
  %v1636 = vadd.f32 %v1635, %v1573
  %v1637 = vadd.f32 %v1636, %v1574
  %v1638 = vadd.f32 %v1637, %v1575
  %v1639 = vadd.f32 %v1638, %v1576
  %v1640 = vadd.f32 %v1639, %v1577
  %v1641 = vadd.f32 %v1640, %v1578
  %v1642 = vadd.f32 %v1641, %v1579
  %v1643 = vadd.f32 %v1642, %v1580
  %v1644 = vadd.f32 %v1643, %v1581
  %v1645 = vadd.f32 %v1644, %v1582
  %v1646 = vadd.f32 %v1645, %v1583
  %v1647 = vadd.f32 %v1646, %v1584
  %v1648 = vadd.f32 %v1647, %v1585
  %v1649 = vadd.f32 %v1648, %v1586
  %v1650 = vadd.f32 %v1649, %v1587
  %v1651 = vadd.f32 %v1650, %v1588
  %v1652 = vadd.f32 %v1651, %v1589
  %v1653 = vadd.f32 %v1652, %v1590
  %v1654 = vadd.f32 %v1653, %v1591
  %v1655 = vadd.f32 %v1654, %v1592
  %v1656 = vadd.f32 %v1655, %v1593
  %v1657 = vadd.f32 %v1656, %v1594
  %v1658 = vadd.f32 %v1657, %v1595
  %v1659 = vadd.f32 %v1658, %v1596
  %v1660 = vadd.f32 %v1659, %v1597
  %v1661 = vadd.f32 %v1660, %v1598
  %v1662 = vadd.f32 %v1661, %v1599
  %v1663 = vadd.f32 %v1662, %v1600
  %v1664 = vadd.f32 %v1663, %v1601
  %v1665 = vadd.f32 %v1664, %v1602
  %v1666 = vadd.f32 %v1665, %v1603
  %v1667 = vadd.f32 %v1666, %v1604
  %v1668 = vadd.f32 %v1667, %v1605
  %v1669 = vadd.f32 %v1668, %v1606
  %v1670 = vrot.slane %v1669, 4
  %v1671 = vadd.f32 %v1669, %v1670
  %v1672 = vrot.slane %v1671, 2
  %v1673 = vadd.f32 %v1671, %v1672
  %v1674 = vrot.slane %v1673, 1
  %v1675 = vadd.f32 %v1673, %v1674
  %v1676 = vmul.f32 %v1542, 0.001953125
  %v1677 = vmul.f32 %v1675, 0.001953125
  %v1678 = vmul.f32 %v1676, %v1676
  %v1679 = vsub.f32 %v1677, %v1678
  %v1680 = vmax.f32 %v1679, 0.0
  %v1681 = vadd.f32 %v1680, 0.001
  %v1682 = vrsqrt.pop %v1681
  %v1683 = vmul.f32 %v32, %v1682
  %v1684 = vmul.f32 %v1676, %v1683
  %v1685 = vsub.f32 %v33, %v1684
  %v1686 = vlaneseq
  %v1687 = vshrl.u32 %v1686, 7
  %v1688 = vsub.s32 1, %v1687
  %v1689 = vrot.slane %v1683, %v1688
  %v1690 = vmul.f32 %v1220, %v1689
  %v1691 = vmul.f32 %v1223, %v1689
  %v1692 = vmul.f32 %v1228, %v1689
  %v1693 = vmul.f32 %v1231, %v1689
  %v1694 = vmul.f32 %v1236, %v1689
  %v1695 = vmul.f32 %v1239, %v1689
  %v1696 = vmul.f32 %v1244, %v1689
  %v1697 = vmul.f32 %v1247, %v1689
  %v1698 = vmul.f32 %v1252, %v1689
  %v1699 = vmul.f32 %v1255, %v1689
  %v1700 = vmul.f32 %v1260, %v1689
  %v1701 = vmul.f32 %v1263, %v1689
  %v1702 = vmul.f32 %v1268, %v1689
  %v1703 = vmul.f32 %v1271, %v1689
  %v1704 = vmul.f32 %v1276, %v1689
  %v1705 = vmul.f32 %v1279, %v1689
  %v1706 = vmul.f32 %v1284, %v1689
  %v1707 = vmul.f32 %v1287, %v1689
  %v1708 = vmul.f32 %v1292, %v1689
  %v1709 = vmul.f32 %v1295, %v1689
  %v1710 = vmul.f32 %v1300, %v1689
  %v1711 = vmul.f32 %v1303, %v1689
  %v1712 = vmul.f32 %v1308, %v1689
  %v1713 = vmul.f32 %v1311, %v1689
  %v1714 = vmul.f32 %v1316, %v1689
  %v1715 = vmul.f32 %v1319, %v1689
  %v1716 = vmul.f32 %v1324, %v1689
  %v1717 = vmul.f32 %v1327, %v1689
  %v1718 = vmul.f32 %v1332, %v1689
  %v1719 = vmul.f32 %v1335, %v1689
  %v1720 = vmul.f32 %v1340, %v1689
  %v1721 = vmul.f32 %v1343, %v1689
  %v1722 = vmul.f32 %v1348, %v1689
  %v1723 = vmul.f32 %v1351, %v1689
  %v1724 = vmul.f32 %v1356, %v1689
  %v1725 = vmul.f32 %v1359, %v1689
  %v1726 = vmul.f32 %v1364, %v1689
  %v1727 = vmul.f32 %v1367, %v1689
  %v1728 = vmul.f32 %v1372, %v1689
  %v1729 = vmul.f32 %v1375, %v1689
  %v1730 = vmul.f32 %v1380, %v1689
  %v1731 = vmul.f32 %v1383, %v1689
  %v1732 = vmul.f32 %v1388, %v1689
  %v1733 = vmul.f32 %v1391, %v1689
  %v1734 = vmul.f32 %v1396, %v1689
  %v1735 = vmul.f32 %v1399, %v1689
  %v1736 = vmul.f32 %v1404, %v1689
  %v1737 = vmul.f32 %v1407, %v1689
  %v1738 = vmul.f32 %v1412, %v1689
  %v1739 = vmul.f32 %v1415, %v1689
  %v1740 = vmul.f32 %v1420, %v1689
  %v1741 = vmul.f32 %v1423, %v1689
  %v1742 = vmul.f32 %v1428, %v1689
  %v1743 = vmul.f32 %v1431, %v1689
  %v1744 = vmul.f32 %v1436, %v1689
  %v1745 = vmul.f32 %v1439, %v1689
  %v1746 = vmul.f32 %v1444, %v1689
  %v1747 = vmul.f32 %v1447, %v1689
  %v1748 = vmul.f32 %v1452, %v1689
  %v1749 = vmul.f32 %v1455, %v1689
  %v1750 = vmul.f32 %v1460, %v1689
  %v1751 = vmul.f32 %v1463, %v1689
  %v1752 = vmul.f32 %v1468, %v1689
  %v1753 = vmul.f32 %v1471, %v1689
  %v1754 = vlaneseq
  %v1755 = vshrl.u32 %v1754, 7
  %v1756 = vsub.s32 1, %v1755
  %v1757 = vrot.slane %v1685, %v1756
  %v1758 = vadd.f32 %v1690, %v1757
  %v1759 = vadd.f32 %v1691, %v1757
  %v1760 = vadd.f32 %v1692, %v1757
  %v1761 = vadd.f32 %v1693, %v1757
  %v1762 = vadd.f32 %v1694, %v1757
  %v1763 = vadd.f32 %v1695, %v1757
  %v1764 = vadd.f32 %v1696, %v1757
  %v1765 = vadd.f32 %v1697, %v1757
  %v1766 = vadd.f32 %v1698, %v1757
  %v1767 = vadd.f32 %v1699, %v1757
  %v1768 = vadd.f32 %v1700, %v1757
  %v1769 = vadd.f32 %v1701, %v1757
  %v1770 = vadd.f32 %v1702, %v1757
  %v1771 = vadd.f32 %v1703, %v1757
  %v1772 = vadd.f32 %v1704, %v1757
  %v1773 = vadd.f32 %v1705, %v1757
  %v1774 = vadd.f32 %v1706, %v1757
  %v1775 = vadd.f32 %v1707, %v1757
  %v1776 = vadd.f32 %v1708, %v1757
  %v1777 = vadd.f32 %v1709, %v1757
  %v1778 = vadd.f32 %v1710, %v1757
  %v1779 = vadd.f32 %v1711, %v1757
  %v1780 = vadd.f32 %v1712, %v1757
  %v1781 = vadd.f32 %v1713, %v1757
  %v1782 = vadd.f32 %v1714, %v1757
  %v1783 = vadd.f32 %v1715, %v1757
  %v1784 = vadd.f32 %v1716, %v1757
  %v1785 = vadd.f32 %v1717, %v1757
  %v1786 = vadd.f32 %v1718, %v1757
  %v1787 = vadd.f32 %v1719, %v1757
  %v1788 = vadd.f32 %v1720, %v1757
  %v1789 = vadd.f32 %v1721, %v1757
  %v1790 = vadd.f32 %v1722, %v1757
  %v1791 = vadd.f32 %v1723, %v1757
  %v1792 = vadd.f32 %v1724, %v1757
  %v1793 = vadd.f32 %v1725, %v1757
  %v1794 = vadd.f32 %v1726, %v1757
  %v1795 = vadd.f32 %v1727, %v1757
  %v1796 = vadd.f32 %v1728, %v1757
  %v1797 = vadd.f32 %v1729, %v1757
  %v1798 = vadd.f32 %v1730, %v1757
  %v1799 = vadd.f32 %v1731, %v1757
  %v1800 = vadd.f32 %v1732, %v1757
  %v1801 = vadd.f32 %v1733, %v1757
  %v1802 = vadd.f32 %v1734, %v1757
  %v1803 = vadd.f32 %v1735, %v1757
  %v1804 = vadd.f32 %v1736, %v1757
  %v1805 = vadd.f32 %v1737, %v1757
  %v1806 = vadd.f32 %v1738, %v1757
  %v1807 = vadd.f32 %v1739, %v1757
  %v1808 = vadd.f32 %v1740, %v1757
  %v1809 = vadd.f32 %v1741, %v1757
  %v1810 = vadd.f32 %v1742, %v1757
  %v1811 = vadd.f32 %v1743, %v1757
  %v1812 = vadd.f32 %v1744, %v1757
  %v1813 = vadd.f32 %v1745, %v1757
  %v1814 = vadd.f32 %v1746, %v1757
  %v1815 = vadd.f32 %v1747, %v1757
  %v1816 = vadd.f32 %v1748, %v1757
  %v1817 = vadd.f32 %v1749, %v1757
  %v1818 = vadd.f32 %v1750, %v1757
  %v1819 = vadd.f32 %v1751, %v1757
  %v1820 = vadd.f32 %v1752, %v1757
  %v1821 = vadd.f32 %v1753, %v1757
  %v1822 = vmax.f32 %v1758, 0.0
  %v1823 = vmax.f32 %v1759, 0.0
  %v1824 = vmax.f32 %v1760, 0.0
  %v1825 = vmax.f32 %v1761, 0.0
  %v1826 = vmax.f32 %v1762, 0.0
  %v1827 = vmax.f32 %v1763, 0.0
  %v1828 = vmax.f32 %v1764, 0.0
  %v1829 = vmax.f32 %v1765, 0.0
  %v1830 = vmax.f32 %v1766, 0.0
  %v1831 = vmax.f32 %v1767, 0.0
  %v1832 = vmax.f32 %v1768, 0.0
  %v1833 = vmax.f32 %v1769, 0.0
  %v1834 = vmax.f32 %v1770, 0.0
  %v1835 = vmax.f32 %v1771, 0.0
  %v1836 = vmax.f32 %v1772, 0.0
  %v1837 = vmax.f32 %v1773, 0.0
  %v1838 = vmax.f32 %v1774, 0.0
  %v1839 = vmax.f32 %v1775, 0.0
  %v1840 = vmax.f32 %v1776, 0.0
  %v1841 = vmax.f32 %v1777, 0.0
  %v1842 = vmax.f32 %v1778, 0.0
  %v1843 = vmax.f32 %v1779, 0.0
  %v1844 = vmax.f32 %v1780, 0.0
  %v1845 = vmax.f32 %v1781, 0.0
  %v1846 = vmax.f32 %v1782, 0.0
  %v1847 = vmax.f32 %v1783, 0.0
  %v1848 = vmax.f32 %v1784, 0.0
  %v1849 = vmax.f32 %v1785, 0.0
  %v1850 = vmax.f32 %v1786, 0.0
  %v1851 = vmax.f32 %v1787, 0.0
  %v1852 = vmax.f32 %v1788, 0.0
  %v1853 = vmax.f32 %v1789, 0.0
  %v1854 = vmax.f32 %v1790, 0.0
  %v1855 = vmax.f32 %v1791, 0.0
  %v1856 = vmax.f32 %v1792, 0.0
  %v1857 = vmax.f32 %v1793, 0.0
  %v1858 = vmax.f32 %v1794, 0.0
  %v1859 = vmax.f32 %v1795, 0.0
  %v1860 = vmax.f32 %v1796, 0.0
  %v1861 = vmax.f32 %v1797, 0.0
  %v1862 = vmax.f32 %v1798, 0.0
  %v1863 = vmax.f32 %v1799, 0.0
  %v1864 = vmax.f32 %v1800, 0.0
  %v1865 = vmax.f32 %v1801, 0.0
  %v1866 = vmax.f32 %v1802, 0.0
  %v1867 = vmax.f32 %v1803, 0.0
  %v1868 = vmax.f32 %v1804, 0.0
  %v1869 = vmax.f32 %v1805, 0.0
  %v1870 = vmax.f32 %v1806, 0.0
  %v1871 = vmax.f32 %v1807, 0.0
  %v1872 = vmax.f32 %v1808, 0.0
  %v1873 = vmax.f32 %v1809, 0.0
  %v1874 = vmax.f32 %v1810, 0.0
  %v1875 = vmax.f32 %v1811, 0.0
  %v1876 = vmax.f32 %v1812, 0.0
  %v1877 = vmax.f32 %v1813, 0.0
  %v1878 = vmax.f32 %v1814, 0.0
  %v1879 = vmax.f32 %v1815, 0.0
  %v1880 = vmax.f32 %v1816, 0.0
  %v1881 = vmax.f32 %v1817, 0.0
  %v1882 = vmax.f32 %v1818, 0.0
  %v1883 = vmax.f32 %v1819, 0.0
  %v1884 = vmax.f32 %v1820, 0.0
  %v1885 = vmax.f32 %v1821, 0.0
  %v1886 = vpack.c.bf16 %v1823, %v1822
  %v1887 = vpack.c.bf16 %v1825, %v1824
  %v1888 = vpack.c.bf16 %v1827, %v1826
  %v1889 = vpack.c.bf16 %v1829, %v1828
  %v1890 = vpack.c.bf16 %v1831, %v1830
  %v1891 = vpack.c.bf16 %v1833, %v1832
  %v1892 = vpack.c.bf16 %v1835, %v1834
  %v1893 = vpack.c.bf16 %v1837, %v1836
  %v1894 = vpack.c.bf16 %v1839, %v1838
  %v1895 = vpack.c.bf16 %v1841, %v1840
  %v1896 = vpack.c.bf16 %v1843, %v1842
  %v1897 = vpack.c.bf16 %v1845, %v1844
  %v1898 = vpack.c.bf16 %v1847, %v1846
  %v1899 = vpack.c.bf16 %v1849, %v1848
  %v1900 = vpack.c.bf16 %v1851, %v1850
  %v1901 = vpack.c.bf16 %v1853, %v1852
  %v1902 = vpack.c.bf16 %v1855, %v1854
  %v1903 = vpack.c.bf16 %v1857, %v1856
  %v1904 = vpack.c.bf16 %v1859, %v1858
  %v1905 = vpack.c.bf16 %v1861, %v1860
  %v1906 = vpack.c.bf16 %v1863, %v1862
  %v1907 = vpack.c.bf16 %v1865, %v1864
  %v1908 = vpack.c.bf16 %v1867, %v1866
  %v1909 = vpack.c.bf16 %v1869, %v1868
  %v1910 = vpack.c.bf16 %v1871, %v1870
  %v1911 = vpack.c.bf16 %v1873, %v1872
  %v1912 = vpack.c.bf16 %v1875, %v1874
  %v1913 = vpack.c.bf16 %v1877, %v1876
  %v1914 = vpack.c.bf16 %v1879, %v1878
  %v1915 = vpack.c.bf16 %v1881, %v1880
  %v1916 = vpack.c.bf16 %v1883, %v1882
  %v1917 = vpack.c.bf16 %v1885, %v1884
  %s1918 = scalar_lea.vmem %s3, 64
  %v1919 = vld [vmem:[%s1918] sm:$0xf]
  %v1920 = vld [vmem:[%s1918 + $0x4] sm:$0xf]
  %v1921 = vld [vmem:[%s1918 + $0x8] sm:$0xf]
  %v1922 = vld [vmem:[%s1918 + $0xc] sm:$0xf]
  %v1923 = vld [vmem:[%s1918 + $0x10] sm:$0xf]
  %v1924 = vld [vmem:[%s1918 + $0x14] sm:$0xf]
  %v1925 = vld [vmem:[%s1918 + $0x18] sm:$0xf]
  %v1926 = vld [vmem:[%s1918 + $0x1c] sm:$0xf]
  %v1927 = vld [vmem:[%s1918 + $0x20] sm:$0xf]
  %v1928 = vld [vmem:[%s1918 + $0x24] sm:$0xf]
  %v1929 = vld [vmem:[%s1918 + $0x28] sm:$0xf]
  %v1930 = vld [vmem:[%s1918 + $0x2c] sm:$0xf]
  %v1931 = vld [vmem:[%s1918 + $0x30] sm:$0xf]
  %v1932 = vld [vmem:[%s1918 + $0x34] sm:$0xf]
  %v1933 = vld [vmem:[%s1918 + $0x38] sm:$0xf]
  %v1934 = vld [vmem:[%s1918 + $0x3c] sm:$0xf]
  %v1951 = vunpack.c.l.b16 %v1919
  %v1952 = vunpack.c.l.b16 %v1920
  %v1953 = vunpack.c.l.b16 %v1921
  %v1954 = vunpack.c.l.b16 %v1922
  %v1955 = vunpack.c.l.b16 %v1923
  %v1956 = vunpack.c.l.b16 %v1924
  %v1957 = vunpack.c.l.b16 %v1925
  %v1958 = vunpack.c.l.b16 %v1926
  %v1959 = vunpack.c.l.b16 %v1927
  %v1960 = vunpack.c.l.b16 %v1928
  %v1961 = vunpack.c.l.b16 %v1929
  %v1962 = vunpack.c.l.b16 %v1930
  %v1963 = vunpack.c.l.b16 %v1931
  %v1964 = vunpack.c.l.b16 %v1932
  %v1965 = vunpack.c.l.b16 %v1933
  %v1966 = vunpack.c.l.b16 %v1934
  %v1967 = vpack.c.b16 %v1952, %v1951
  %v1968 = vpack.c.b16 %v1954, %v1953
  %v1969 = vpack.c.b16 %v1956, %v1955
  %v1970 = vpack.c.b16 %v1958, %v1957
  %v1971 = vpack.c.b16 %v1960, %v1959
  %v1972 = vpack.c.b16 %v1962, %v1961
  %v1973 = vpack.c.b16 %v1964, %v1963
  %v1974 = vpack.c.b16 %v1966, %v1965
  %1983 = vmatprep.subr.bf16.mxu0 0
  %1984 = vmatpush1.bf16.msra.mxu0 %v1967
  %1985 = vmatprep.subr.bf16.mxu0 0
  %1986 = vmatpush1.bf16.msra.mxu0 %v1968
  %1987 = vmatprep.subr.bf16.mxu0 0
  %1988 = vmatpush1.bf16.msra.mxu0 %v1969
  %1989 = vmatprep.subr.bf16.mxu0 0
  %1990 = vmatpush1.bf16.msra.mxu0 %v1970
  %1991 = vmatprep.subr.bf16.mxu0 0
  %1992 = vmatpush1.bf16.msra.mxu0 %v1971
  %1993 = vmatprep.subr.bf16.mxu0 0
  %1994 = vmatpush1.bf16.msra.mxu0 %v1972
  %1995 = vmatprep.subr.bf16.mxu0 0
  %1996 = vmatpush1.bf16.msra.mxu0 %v1973
  %1997 = vmatprep.subr.bf16.mxu0 0
  %1998 = vmatpush1.bf16.msra.mxu0 %v1974
  %1999 = vmatprep.subr.bf16.mxu0 0
  %2000 = vmatpush1.bf16.msra.mxu0 0
  %2001 = vmatprep.subr.bf16.mxu0 0
  %2002 = vmatpush1.bf16.msra.mxu0 0
  %2003 = vmatprep.subr.bf16.mxu0 0
  %2004 = vmatpush1.bf16.msra.mxu0 0
  %2005 = vmatprep.subr.bf16.mxu0 0
  %2006 = vmatpush1.bf16.msra.mxu0 0
  %2007 = vmatprep.subr.bf16.mxu0 0
  %2008 = vmatpush1.bf16.msra.mxu0 0
  %2009 = vmatprep.subr.bf16.mxu0 0
  %2010 = vmatpush1.bf16.msra.mxu0 0
  %2011 = vmatprep.subr.bf16.mxu0 0
  %2012 = vmatpush1.bf16.msra.mxu0 0
  %2013 = vmatprep.subr.bf16.mxu0 0
  %2014 = vmatpush1.bf16.msra.mxu0 0
  %2015 = vmatprep.mubr.bf16.mxu0 0
  %2016 = vmatmul.mubr.bf16.gmra.mrb[0].mxu0 %v1886
  %v2017 = vpop.f32.mrb[0].mxu0
  %v2018 = vadd.f32 0.0, %v2017
  %v2019 = vpop.f32.mrb[0].mxu0
  %v2020 = vpop.f32.mrb[0].mxu0
  %v2021 = vadd.f32 0.0, %v2020
  %v2022 = vpop.f32.mrb[0].mxu0
  %2023 = vmatprep.mubr.bf16.mxu0 0
  %2024 = vmatmul.mubr.bf16.gmra.mrb[0].mxu0 %v1887
  %v2025 = vpop.f32.mrb[0].mxu0
  %v2026 = vadd.f32 0.0, %v2025
  %v2027 = vpop.f32.mrb[0].mxu0
  %v2028 = vpop.f32.mrb[0].mxu0
  %v2029 = vadd.f32 0.0, %v2028
  %v2030 = vpop.f32.mrb[0].mxu0
  %2031 = vmatprep.mubr.bf16.mxu0 0
  %2032 = vmatmul.mubr.bf16.gmra.mrb[0].mxu0 %v1888
  %v2033 = vpop.f32.mrb[0].mxu0
  %v2034 = vadd.f32 0.0, %v2033
  %v2035 = vpop.f32.mrb[0].mxu0
  %v2036 = vpop.f32.mrb[0].mxu0
  %v2037 = vadd.f32 0.0, %v2036
  %v2038 = vpop.f32.mrb[0].mxu0
  %2039 = vmatprep.mubr.bf16.mxu0 0
  %2040 = vmatmul.mubr.bf16.gmra.mrb[0].mxu0 %v1889
  %v2041 = vpop.f32.mrb[0].mxu0
  %v2042 = vadd.f32 0.0, %v2041
  %v2043 = vpop.f32.mrb[0].mxu0
  %v2044 = vpop.f32.mrb[0].mxu0
  %v2045 = vadd.f32 0.0, %v2044
  %v2046 = vpop.f32.mrb[0].mxu0
  %2047 = vmatprep.mubr.bf16.mxu0 0
  %2048 = vmatmul.mubr.bf16.gmra.mrb[0].mxu0 %v1890
  %v2049 = vpop.f32.mrb[0].mxu0
  %v2050 = vadd.f32 0.0, %v2049
  %v2051 = vpop.f32.mrb[0].mxu0
  %v2052 = vpop.f32.mrb[0].mxu0
  %v2053 = vadd.f32 0.0, %v2052
  %v2054 = vpop.f32.mrb[0].mxu0
  %2055 = vmatprep.mubr.bf16.mxu0 0
  %2056 = vmatmul.mubr.bf16.gmra.mrb[0].mxu0 %v1891
  %v2057 = vpop.f32.mrb[0].mxu0
  %v2058 = vadd.f32 0.0, %v2057
  %v2059 = vpop.f32.mrb[0].mxu0
  %v2060 = vpop.f32.mrb[0].mxu0
  %v2061 = vadd.f32 0.0, %v2060
  %v2062 = vpop.f32.mrb[0].mxu0
  %2063 = vmatprep.mubr.bf16.mxu0 0
  %2064 = vmatmul.mubr.bf16.gmra.mrb[0].mxu0 %v1892
  %v2065 = vpop.f32.mrb[0].mxu0
  %v2066 = vadd.f32 0.0, %v2065
  %v2067 = vpop.f32.mrb[0].mxu0
  %v2068 = vpop.f32.mrb[0].mxu0
  %v2069 = vadd.f32 0.0, %v2068
  %v2070 = vpop.f32.mrb[0].mxu0
  %2071 = vmatprep.mubr.bf16.mxu0 0
  %2072 = vmatmul.mubr.bf16.gmra.mrb[0].mxu0 %v1893
  %v2073 = vpop.f32.mrb[0].mxu0
  %v2074 = vadd.f32 0.0, %v2073
  %v2075 = vpop.f32.mrb[0].mxu0
  %v2076 = vpop.f32.mrb[0].mxu0
  %v2077 = vadd.f32 0.0, %v2076
  %v2078 = vpop.f32.mrb[0].mxu0
  %2079 = vmatprep.mubr.bf16.mxu0 0
  %2080 = vmatmul.mubr.bf16.gmra.mrb[0].mxu0 %v1894
  %v2081 = vpop.f32.mrb[0].mxu0
  %v2082 = vadd.f32 0.0, %v2081
  %v2083 = vpop.f32.mrb[0].mxu0
  %v2084 = vpop.f32.mrb[0].mxu0
  %v2085 = vadd.f32 0.0, %v2084
  %v2086 = vpop.f32.mrb[0].mxu0
  %2087 = vmatprep.mubr.bf16.mxu0 0
  %2088 = vmatmul.mubr.bf16.gmra.mrb[0].mxu0 %v1895
  %v2089 = vpop.f32.mrb[0].mxu0
  %v2090 = vadd.f32 0.0, %v2089
  %v2091 = vpop.f32.mrb[0].mxu0
  %v2092 = vpop.f32.mrb[0].mxu0
  %v2093 = vadd.f32 0.0, %v2092
  %v2094 = vpop.f32.mrb[0].mxu0
  %2095 = vmatprep.mubr.bf16.mxu0 0
  %2096 = vmatmul.mubr.bf16.gmra.mrb[0].mxu0 %v1896
  %v2097 = vpop.f32.mrb[0].mxu0
  %v2098 = vadd.f32 0.0, %v2097
  %v2099 = vpop.f32.mrb[0].mxu0
  %v2100 = vpop.f32.mrb[0].mxu0
  %v2101 = vadd.f32 0.0, %v2100
  %v2102 = vpop.f32.mrb[0].mxu0
  %2103 = vmatprep.mubr.bf16.mxu0 0
  %2104 = vmatmul.mubr.bf16.gmra.mrb[0].mxu0 %v1897
  %v2105 = vpop.f32.mrb[0].mxu0
  %v2106 = vadd.f32 0.0, %v2105
  %v2107 = vpop.f32.mrb[0].mxu0
  %v2108 = vpop.f32.mrb[0].mxu0
  %v2109 = vadd.f32 0.0, %v2108
  %v2110 = vpop.f32.mrb[0].mxu0
  %2111 = vmatprep.mubr.bf16.mxu0 0
  %2112 = vmatmul.mubr.bf16.gmra.mrb[0].mxu0 %v1898
  %v2113 = vpop.f32.mrb[0].mxu0
  %v2114 = vadd.f32 0.0, %v2113
  %v2115 = vpop.f32.mrb[0].mxu0
  %v2116 = vpop.f32.mrb[0].mxu0
  %v2117 = vadd.f32 0.0, %v2116
  %v2118 = vpop.f32.mrb[0].mxu0
  %2119 = vmatprep.mubr.bf16.mxu0 0
  %2120 = vmatmul.mubr.bf16.gmra.mrb[0].mxu0 %v1899
  %v2121 = vpop.f32.mrb[0].mxu0
  %v2122 = vadd.f32 0.0, %v2121
  %v2123 = vpop.f32.mrb[0].mxu0
  %v2124 = vpop.f32.mrb[0].mxu0
  %v2125 = vadd.f32 0.0, %v2124
  %v2126 = vpop.f32.mrb[0].mxu0
  %2127 = vmatprep.mubr.bf16.mxu0 0
  %2128 = vmatmul.mubr.bf16.gmra.mrb[0].mxu0 %v1900
  %v2129 = vpop.f32.mrb[0].mxu0
  %v2130 = vadd.f32 0.0, %v2129
  %v2131 = vpop.f32.mrb[0].mxu0
  %v2132 = vpop.f32.mrb[0].mxu0
  %v2133 = vadd.f32 0.0, %v2132
  %v2134 = vpop.f32.mrb[0].mxu0
  %2135 = vmatprep.mubr.bf16.mxu0 0
  %2136 = vmatmul.mubr.bf16.gmra.mrb[0].mxu0 %v1901
  %v2137 = vpop.f32.mrb[0].mxu0
  %v2138 = vadd.f32 0.0, %v2137
  %v2139 = vpop.f32.mrb[0].mxu0
  %v2140 = vpop.f32.mrb[0].mxu0
  %v2141 = vadd.f32 0.0, %v2140
  %v2142 = vpop.f32.mrb[0].mxu0
  %2143 = vmatprep.mubr.bf16.mxu0 0
  %2144 = vmatmul.mubr.bf16.gmra.mrb[0].mxu0 %v1902
  %v2145 = vpop.f32.mrb[0].mxu0
  %v2146 = vadd.f32 0.0, %v2145
  %v2147 = vpop.f32.mrb[0].mxu0
  %v2148 = vpop.f32.mrb[0].mxu0
  %v2149 = vadd.f32 0.0, %v2148
  %v2150 = vpop.f32.mrb[0].mxu0
  %2151 = vmatprep.mubr.bf16.mxu0 0
  %2152 = vmatmul.mubr.bf16.gmra.mrb[0].mxu0 %v1903
  %v2153 = vpop.f32.mrb[0].mxu0
  %v2154 = vadd.f32 0.0, %v2153
  %v2155 = vpop.f32.mrb[0].mxu0
  %v2156 = vpop.f32.mrb[0].mxu0
  %v2157 = vadd.f32 0.0, %v2156
  %v2158 = vpop.f32.mrb[0].mxu0
  %2159 = vmatprep.mubr.bf16.mxu0 0
  %2160 = vmatmul.mubr.bf16.gmra.mrb[0].mxu0 %v1904
  %v2161 = vpop.f32.mrb[0].mxu0
  %v2162 = vadd.f32 0.0, %v2161
  %v2163 = vpop.f32.mrb[0].mxu0
  %v2164 = vpop.f32.mrb[0].mxu0
  %v2165 = vadd.f32 0.0, %v2164
  %v2166 = vpop.f32.mrb[0].mxu0
  %2167 = vmatprep.mubr.bf16.mxu0 0
  %2168 = vmatmul.mubr.bf16.gmra.mrb[0].mxu0 %v1905
  %v2169 = vpop.f32.mrb[0].mxu0
  %v2170 = vadd.f32 0.0, %v2169
  %v2171 = vpop.f32.mrb[0].mxu0
  %v2172 = vpop.f32.mrb[0].mxu0
  %v2173 = vadd.f32 0.0, %v2172
  %v2174 = vpop.f32.mrb[0].mxu0
  %2175 = vmatprep.mubr.bf16.mxu0 0
  %2176 = vmatmul.mubr.bf16.gmra.mrb[0].mxu0 %v1906
  %v2177 = vpop.f32.mrb[0].mxu0
  %v2178 = vadd.f32 0.0, %v2177
  %v2179 = vpop.f32.mrb[0].mxu0
  %v2180 = vpop.f32.mrb[0].mxu0
  %v2181 = vadd.f32 0.0, %v2180
  %v2182 = vpop.f32.mrb[0].mxu0
  %2183 = vmatprep.mubr.bf16.mxu0 0
  %2184 = vmatmul.mubr.bf16.gmra.mrb[0].mxu0 %v1907
  %v2185 = vpop.f32.mrb[0].mxu0
  %v2186 = vadd.f32 0.0, %v2185
  %v2187 = vpop.f32.mrb[0].mxu0
  %v2188 = vpop.f32.mrb[0].mxu0
  %v2189 = vadd.f32 0.0, %v2188
  %v2190 = vpop.f32.mrb[0].mxu0
  %2191 = vmatprep.mubr.bf16.mxu0 0
  %2192 = vmatmul.mubr.bf16.gmra.mrb[0].mxu0 %v1908
  %v2193 = vpop.f32.mrb[0].mxu0
  %v2194 = vadd.f32 0.0, %v2193
  %v2195 = vpop.f32.mrb[0].mxu0
  %v2196 = vpop.f32.mrb[0].mxu0
  %v2197 = vadd.f32 0.0, %v2196
  %v2198 = vpop.f32.mrb[0].mxu0
  %2199 = vmatprep.mubr.bf16.mxu0 0
  %2200 = vmatmul.mubr.bf16.gmra.mrb[0].mxu0 %v1909
  %v2201 = vpop.f32.mrb[0].mxu0
  %v2202 = vadd.f32 0.0, %v2201
  %v2203 = vpop.f32.mrb[0].mxu0
  %v2204 = vpop.f32.mrb[0].mxu0
  %v2205 = vadd.f32 0.0, %v2204
  %v2206 = vpop.f32.mrb[0].mxu0
  %2207 = vmatprep.mubr.bf16.mxu0 0
  %2208 = vmatmul.mubr.bf16.gmra.mrb[0].mxu0 %v1910
  %v2209 = vpop.f32.mrb[0].mxu0
  %v2210 = vadd.f32 0.0, %v2209
  %v2211 = vpop.f32.mrb[0].mxu0
  %v2212 = vpop.f32.mrb[0].mxu0
  %v2213 = vadd.f32 0.0, %v2212
  %v2214 = vpop.f32.mrb[0].mxu0
  %2215 = vmatprep.mubr.bf16.mxu0 0
  %2216 = vmatmul.mubr.bf16.gmra.mrb[0].mxu0 %v1911
  %v2217 = vpop.f32.mrb[0].mxu0
  %v2218 = vadd.f32 0.0, %v2217
  %v2219 = vpop.f32.mrb[0].mxu0
  %v2220 = vpop.f32.mrb[0].mxu0
  %v2221 = vadd.f32 0.0, %v2220
  %v2222 = vpop.f32.mrb[0].mxu0
  %2223 = vmatprep.mubr.bf16.mxu0 0
  %2224 = vmatmul.mubr.bf16.gmra.mrb[0].mxu0 %v1912
  %v2225 = vpop.f32.mrb[0].mxu0
  %v2226 = vadd.f32 0.0, %v2225
  %v2227 = vpop.f32.mrb[0].mxu0
  %v2228 = vpop.f32.mrb[0].mxu0
  %v2229 = vadd.f32 0.0, %v2228
  %v2230 = vpop.f32.mrb[0].mxu0
  %2231 = vmatprep.mubr.bf16.mxu0 0
  %2232 = vmatmul.mubr.bf16.gmra.mrb[0].mxu0 %v1913
  %v2233 = vpop.f32.mrb[0].mxu0
  %v2234 = vadd.f32 0.0, %v2233
  %v2235 = vpop.f32.mrb[0].mxu0
  %v2236 = vpop.f32.mrb[0].mxu0
  %v2237 = vadd.f32 0.0, %v2236
  %v2238 = vpop.f32.mrb[0].mxu0
  %2239 = vmatprep.mubr.bf16.mxu0 0
  %2240 = vmatmul.mubr.bf16.gmra.mrb[0].mxu0 %v1914
  %v2241 = vpop.f32.mrb[0].mxu0
  %v2242 = vadd.f32 0.0, %v2241
  %v2243 = vpop.f32.mrb[0].mxu0
  %v2244 = vpop.f32.mrb[0].mxu0
  %v2245 = vadd.f32 0.0, %v2244
  %v2246 = vpop.f32.mrb[0].mxu0
  %2247 = vmatprep.mubr.bf16.mxu0 0
  %2248 = vmatmul.mubr.bf16.gmra.mrb[0].mxu0 %v1915
  %v2249 = vpop.f32.mrb[0].mxu0
  %v2250 = vadd.f32 0.0, %v2249
  %v2251 = vpop.f32.mrb[0].mxu0
  %v2252 = vpop.f32.mrb[0].mxu0
  %v2253 = vadd.f32 0.0, %v2252
  %v2254 = vpop.f32.mrb[0].mxu0
  %2255 = vmatprep.mubr.bf16.mxu0 0
  %2256 = vmatmul.mubr.bf16.gmra.mrb[0].mxu0 %v1916
  %v2257 = vpop.f32.mrb[0].mxu0
  %v2258 = vadd.f32 0.0, %v2257
  %v2259 = vpop.f32.mrb[0].mxu0
  %v2260 = vpop.f32.mrb[0].mxu0
  %v2261 = vadd.f32 0.0, %v2260
  %v2262 = vpop.f32.mrb[0].mxu0
  %2263 = vmatprep.mubr.bf16.mxu0 0
  %2264 = vmatmul.mubr.bf16.gmra.mrb[0].mxu0 %v1917
  %v2265 = vpop.f32.mrb[0].mxu0
  %v2266 = vadd.f32 0.0, %v2265
  %v2267 = vpop.f32.mrb[0].mxu0
  %v2268 = vpop.f32.mrb[0].mxu0
  %v2269 = vadd.f32 0.0, %v2268
  %v2270 = vpop.f32.mrb[0].mxu0
  %2271 = vdwg.mxu0
  %v2272 = vadd.f32 %v2018, %v2021
  %v2273 = vadd.f32 %v2272, %v2026
  %v2274 = vadd.f32 %v2273, %v2029
  %v2275 = vadd.f32 %v2274, %v2034
  %v2276 = vadd.f32 %v2275, %v2037
  %v2277 = vadd.f32 %v2276, %v2042
  %v2278 = vadd.f32 %v2277, %v2045
  %v2279 = vadd.f32 %v2278, %v2050
  %v2280 = vadd.f32 %v2279, %v2053
  %v2281 = vadd.f32 %v2280, %v2058
  %v2282 = vadd.f32 %v2281, %v2061
  %v2283 = vadd.f32 %v2282, %v2066
  %v2284 = vadd.f32 %v2283, %v2069
  %v2285 = vadd.f32 %v2284, %v2074
  %v2286 = vadd.f32 %v2285, %v2077
  %v2287 = vadd.f32 %v2286, %v2082
  %v2288 = vadd.f32 %v2287, %v2085
  %v2289 = vadd.f32 %v2288, %v2090
  %v2290 = vadd.f32 %v2289, %v2093
  %v2291 = vadd.f32 %v2290, %v2098
  %v2292 = vadd.f32 %v2291, %v2101
  %v2293 = vadd.f32 %v2292, %v2106
  %v2294 = vadd.f32 %v2293, %v2109
  %v2295 = vadd.f32 %v2294, %v2114
  %v2296 = vadd.f32 %v2295, %v2117
  %v2297 = vadd.f32 %v2296, %v2122
  %v2298 = vadd.f32 %v2297, %v2125
  %v2299 = vadd.f32 %v2298, %v2130
  %v2300 = vadd.f32 %v2299, %v2133
  %v2301 = vadd.f32 %v2300, %v2138
  %v2302 = vadd.f32 %v2301, %v2141
  %v2303 = vadd.f32 %v2302, %v2146
  %v2304 = vadd.f32 %v2303, %v2149
  %v2305 = vadd.f32 %v2304, %v2154
  %v2306 = vadd.f32 %v2305, %v2157
  %v2307 = vadd.f32 %v2306, %v2162
  %v2308 = vadd.f32 %v2307, %v2165
  %v2309 = vadd.f32 %v2308, %v2170
  %v2310 = vadd.f32 %v2309, %v2173
  %v2311 = vadd.f32 %v2310, %v2178
  %v2312 = vadd.f32 %v2311, %v2181
  %v2313 = vadd.f32 %v2312, %v2186
  %v2314 = vadd.f32 %v2313, %v2189
  %v2315 = vadd.f32 %v2314, %v2194
  %v2316 = vadd.f32 %v2315, %v2197
  %v2317 = vadd.f32 %v2316, %v2202
  %v2318 = vadd.f32 %v2317, %v2205
  %v2319 = vadd.f32 %v2318, %v2210
  %v2320 = vadd.f32 %v2319, %v2213
  %v2321 = vadd.f32 %v2320, %v2218
  %v2322 = vadd.f32 %v2321, %v2221
  %v2323 = vadd.f32 %v2322, %v2226
  %v2324 = vadd.f32 %v2323, %v2229
  %v2325 = vadd.f32 %v2324, %v2234
  %v2326 = vadd.f32 %v2325, %v2237
  %v2327 = vadd.f32 %v2326, %v2242
  %v2328 = vadd.f32 %v2327, %v2245
  %v2329 = vadd.f32 %v2328, %v2250
  %v2330 = vadd.f32 %v2329, %v2253
  %v2331 = vadd.f32 %v2330, %v2258
  %v2332 = vadd.f32 %v2331, %v2261
  %v2333 = vadd.f32 %v2332, %v2266
  %v2334 = vadd.f32 %v2333, %v2269
  %v2335 = vrot.slane %v2334, 4
  %v2336 = vadd.f32 %v2334, %v2335
  %v2337 = vrot.slane %v2336, 2
  %v2338 = vadd.f32 %v2336, %v2337
  %v2339 = vrot.slane %v2338, 1
  %v2340 = vadd.f32 %v2338, %v2339
  %v2341 = vmul.f32 %v2018, %v2018
  %v2342 = vmul.f32 %v2021, %v2021
  %v2343 = vmul.f32 %v2026, %v2026
  %v2344 = vmul.f32 %v2029, %v2029
  %v2345 = vmul.f32 %v2034, %v2034
  %v2346 = vmul.f32 %v2037, %v2037
  %v2347 = vmul.f32 %v2042, %v2042
  %v2348 = vmul.f32 %v2045, %v2045
  %v2349 = vmul.f32 %v2050, %v2050
  %v2350 = vmul.f32 %v2053, %v2053
  %v2351 = vmul.f32 %v2058, %v2058
  %v2352 = vmul.f32 %v2061, %v2061
  %v2353 = vmul.f32 %v2066, %v2066
  %v2354 = vmul.f32 %v2069, %v2069
  %v2355 = vmul.f32 %v2074, %v2074
  %v2356 = vmul.f32 %v2077, %v2077
  %v2357 = vmul.f32 %v2082, %v2082
  %v2358 = vmul.f32 %v2085, %v2085
  %v2359 = vmul.f32 %v2090, %v2090
  %v2360 = vmul.f32 %v2093, %v2093
  %v2361 = vmul.f32 %v2098, %v2098
  %v2362 = vmul.f32 %v2101, %v2101
  %v2363 = vmul.f32 %v2106, %v2106
  %v2364 = vmul.f32 %v2109, %v2109
  %v2365 = vmul.f32 %v2114, %v2114
  %v2366 = vmul.f32 %v2117, %v2117
  %v2367 = vmul.f32 %v2122, %v2122
  %v2368 = vmul.f32 %v2125, %v2125
  %v2369 = vmul.f32 %v2130, %v2130
  %v2370 = vmul.f32 %v2133, %v2133
  %v2371 = vmul.f32 %v2138, %v2138
  %v2372 = vmul.f32 %v2141, %v2141
  %v2373 = vmul.f32 %v2146, %v2146
  %v2374 = vmul.f32 %v2149, %v2149
  %v2375 = vmul.f32 %v2154, %v2154
  %v2376 = vmul.f32 %v2157, %v2157
  %v2377 = vmul.f32 %v2162, %v2162
  %v2378 = vmul.f32 %v2165, %v2165
  %v2379 = vmul.f32 %v2170, %v2170
  %v2380 = vmul.f32 %v2173, %v2173
  %v2381 = vmul.f32 %v2178, %v2178
  %v2382 = vmul.f32 %v2181, %v2181
  %v2383 = vmul.f32 %v2186, %v2186
  %v2384 = vmul.f32 %v2189, %v2189
  %v2385 = vmul.f32 %v2194, %v2194
  %v2386 = vmul.f32 %v2197, %v2197
  %v2387 = vmul.f32 %v2202, %v2202
  %v2388 = vmul.f32 %v2205, %v2205
  %v2389 = vmul.f32 %v2210, %v2210
  %v2390 = vmul.f32 %v2213, %v2213
  %v2391 = vmul.f32 %v2218, %v2218
  %v2392 = vmul.f32 %v2221, %v2221
  %v2393 = vmul.f32 %v2226, %v2226
  %v2394 = vmul.f32 %v2229, %v2229
  %v2395 = vmul.f32 %v2234, %v2234
  %v2396 = vmul.f32 %v2237, %v2237
  %v2397 = vmul.f32 %v2242, %v2242
  %v2398 = vmul.f32 %v2245, %v2245
  %v2399 = vmul.f32 %v2250, %v2250
  %v2400 = vmul.f32 %v2253, %v2253
  %v2401 = vmul.f32 %v2258, %v2258
  %v2402 = vmul.f32 %v2261, %v2261
  %v2403 = vmul.f32 %v2266, %v2266
  %v2404 = vmul.f32 %v2269, %v2269
  %v2405 = vadd.f32 %v2341, %v2342
  %v2406 = vadd.f32 %v2405, %v2343
  %v2407 = vadd.f32 %v2406, %v2344
  %v2408 = vadd.f32 %v2407, %v2345
  %v2409 = vadd.f32 %v2408, %v2346
  %v2410 = vadd.f32 %v2409, %v2347
  %v2411 = vadd.f32 %v2410, %v2348
  %v2412 = vadd.f32 %v2411, %v2349
  %v2413 = vadd.f32 %v2412, %v2350
  %v2414 = vadd.f32 %v2413, %v2351
  %v2415 = vadd.f32 %v2414, %v2352
  %v2416 = vadd.f32 %v2415, %v2353
  %v2417 = vadd.f32 %v2416, %v2354
  %v2418 = vadd.f32 %v2417, %v2355
  %v2419 = vadd.f32 %v2418, %v2356
  %v2420 = vadd.f32 %v2419, %v2357
  %v2421 = vadd.f32 %v2420, %v2358
  %v2422 = vadd.f32 %v2421, %v2359
  %v2423 = vadd.f32 %v2422, %v2360
  %v2424 = vadd.f32 %v2423, %v2361
  %v2425 = vadd.f32 %v2424, %v2362
  %v2426 = vadd.f32 %v2425, %v2363
  %v2427 = vadd.f32 %v2426, %v2364
  %v2428 = vadd.f32 %v2427, %v2365
  %v2429 = vadd.f32 %v2428, %v2366
  %v2430 = vadd.f32 %v2429, %v2367
  %v2431 = vadd.f32 %v2430, %v2368
  %v2432 = vadd.f32 %v2431, %v2369
  %v2433 = vadd.f32 %v2432, %v2370
  %v2434 = vadd.f32 %v2433, %v2371
  %v2435 = vadd.f32 %v2434, %v2372
  %v2436 = vadd.f32 %v2435, %v2373
  %v2437 = vadd.f32 %v2436, %v2374
  %v2438 = vadd.f32 %v2437, %v2375
  %v2439 = vadd.f32 %v2438, %v2376
  %v2440 = vadd.f32 %v2439, %v2377
  %v2441 = vadd.f32 %v2440, %v2378
  %v2442 = vadd.f32 %v2441, %v2379
  %v2443 = vadd.f32 %v2442, %v2380
  %v2444 = vadd.f32 %v2443, %v2381
  %v2445 = vadd.f32 %v2444, %v2382
  %v2446 = vadd.f32 %v2445, %v2383
  %v2447 = vadd.f32 %v2446, %v2384
  %v2448 = vadd.f32 %v2447, %v2385
  %v2449 = vadd.f32 %v2448, %v2386
  %v2450 = vadd.f32 %v2449, %v2387
  %v2451 = vadd.f32 %v2450, %v2388
  %v2452 = vadd.f32 %v2451, %v2389
  %v2453 = vadd.f32 %v2452, %v2390
  %v2454 = vadd.f32 %v2453, %v2391
  %v2455 = vadd.f32 %v2454, %v2392
  %v2456 = vadd.f32 %v2455, %v2393
  %v2457 = vadd.f32 %v2456, %v2394
  %v2458 = vadd.f32 %v2457, %v2395
  %v2459 = vadd.f32 %v2458, %v2396
  %v2460 = vadd.f32 %v2459, %v2397
  %v2461 = vadd.f32 %v2460, %v2398
  %v2462 = vadd.f32 %v2461, %v2399
  %v2463 = vadd.f32 %v2462, %v2400
  %v2464 = vadd.f32 %v2463, %v2401
  %v2465 = vadd.f32 %v2464, %v2402
  %v2466 = vadd.f32 %v2465, %v2403
  %v2467 = vadd.f32 %v2466, %v2404
  %v2468 = vrot.slane %v2467, 4
  %v2469 = vadd.f32 %v2467, %v2468
  %v2470 = vrot.slane %v2469, 2
  %v2471 = vadd.f32 %v2469, %v2470
  %v2472 = vrot.slane %v2471, 1
  %v2473 = vadd.f32 %v2471, %v2472
  %v2474 = vmul.f32 %v2340, 0.001953125
  %v2475 = vmul.f32 %v2473, 0.001953125
  %v2476 = vmul.f32 %v2474, %v2474
  %v2477 = vsub.f32 %v2475, %v2476
  %v2478 = vmax.f32 %v2477, 0.0
  %v2479 = vadd.f32 %v2478, 0.001
  %v2480 = vrsqrt.pop %v2479
  %v2481 = vmul.f32 %v32, %v2480
  %v2482 = vmul.f32 %v2474, %v2481
  %v2483 = vsub.f32 %v33, %v2482
  %v2484 = vlaneseq
  %v2485 = vshrl.u32 %v2484, 7
  %v2486 = vsub.s32 2, %v2485
  %v2487 = vrot.slane %v2481, %v2486
  %v2488 = vmul.f32 %v2018, %v2487
  %v2489 = vmul.f32 %v2021, %v2487
  %v2490 = vmul.f32 %v2026, %v2487
  %v2491 = vmul.f32 %v2029, %v2487
  %v2492 = vmul.f32 %v2034, %v2487
  %v2493 = vmul.f32 %v2037, %v2487
  %v2494 = vmul.f32 %v2042, %v2487
  %v2495 = vmul.f32 %v2045, %v2487
  %v2496 = vmul.f32 %v2050, %v2487
  %v2497 = vmul.f32 %v2053, %v2487
  %v2498 = vmul.f32 %v2058, %v2487
  %v2499 = vmul.f32 %v2061, %v2487
  %v2500 = vmul.f32 %v2066, %v2487
  %v2501 = vmul.f32 %v2069, %v2487
  %v2502 = vmul.f32 %v2074, %v2487
  %v2503 = vmul.f32 %v2077, %v2487
  %v2504 = vmul.f32 %v2082, %v2487
  %v2505 = vmul.f32 %v2085, %v2487
  %v2506 = vmul.f32 %v2090, %v2487
  %v2507 = vmul.f32 %v2093, %v2487
  %v2508 = vmul.f32 %v2098, %v2487
  %v2509 = vmul.f32 %v2101, %v2487
  %v2510 = vmul.f32 %v2106, %v2487
  %v2511 = vmul.f32 %v2109, %v2487
  %v2512 = vmul.f32 %v2114, %v2487
  %v2513 = vmul.f32 %v2117, %v2487
  %v2514 = vmul.f32 %v2122, %v2487
  %v2515 = vmul.f32 %v2125, %v2487
  %v2516 = vmul.f32 %v2130, %v2487
  %v2517 = vmul.f32 %v2133, %v2487
  %v2518 = vmul.f32 %v2138, %v2487
  %v2519 = vmul.f32 %v2141, %v2487
  %v2520 = vmul.f32 %v2146, %v2487
  %v2521 = vmul.f32 %v2149, %v2487
  %v2522 = vmul.f32 %v2154, %v2487
  %v2523 = vmul.f32 %v2157, %v2487
  %v2524 = vmul.f32 %v2162, %v2487
  %v2525 = vmul.f32 %v2165, %v2487
  %v2526 = vmul.f32 %v2170, %v2487
  %v2527 = vmul.f32 %v2173, %v2487
  %v2528 = vmul.f32 %v2178, %v2487
  %v2529 = vmul.f32 %v2181, %v2487
  %v2530 = vmul.f32 %v2186, %v2487
  %v2531 = vmul.f32 %v2189, %v2487
  %v2532 = vmul.f32 %v2194, %v2487
  %v2533 = vmul.f32 %v2197, %v2487
  %v2534 = vmul.f32 %v2202, %v2487
  %v2535 = vmul.f32 %v2205, %v2487
  %v2536 = vmul.f32 %v2210, %v2487
  %v2537 = vmul.f32 %v2213, %v2487
  %v2538 = vmul.f32 %v2218, %v2487
  %v2539 = vmul.f32 %v2221, %v2487
  %v2540 = vmul.f32 %v2226, %v2487
  %v2541 = vmul.f32 %v2229, %v2487
  %v2542 = vmul.f32 %v2234, %v2487
  %v2543 = vmul.f32 %v2237, %v2487
  %v2544 = vmul.f32 %v2242, %v2487
  %v2545 = vmul.f32 %v2245, %v2487
  %v2546 = vmul.f32 %v2250, %v2487
  %v2547 = vmul.f32 %v2253, %v2487
  %v2548 = vmul.f32 %v2258, %v2487
  %v2549 = vmul.f32 %v2261, %v2487
  %v2550 = vmul.f32 %v2266, %v2487
  %v2551 = vmul.f32 %v2269, %v2487
  %v2552 = vlaneseq
  %v2553 = vshrl.u32 %v2552, 7
  %v2554 = vsub.s32 2, %v2553
  %v2555 = vrot.slane %v2483, %v2554
  %v2556 = vadd.f32 %v2488, %v2555
  %v2557 = vadd.f32 %v2489, %v2555
  %v2558 = vadd.f32 %v2490, %v2555
  %v2559 = vadd.f32 %v2491, %v2555
  %v2560 = vadd.f32 %v2492, %v2555
  %v2561 = vadd.f32 %v2493, %v2555
  %v2562 = vadd.f32 %v2494, %v2555
  %v2563 = vadd.f32 %v2495, %v2555
  %v2564 = vadd.f32 %v2496, %v2555
  %v2565 = vadd.f32 %v2497, %v2555
  %v2566 = vadd.f32 %v2498, %v2555
  %v2567 = vadd.f32 %v2499, %v2555
  %v2568 = vadd.f32 %v2500, %v2555
  %v2569 = vadd.f32 %v2501, %v2555
  %v2570 = vadd.f32 %v2502, %v2555
  %v2571 = vadd.f32 %v2503, %v2555
  %v2572 = vadd.f32 %v2504, %v2555
  %v2573 = vadd.f32 %v2505, %v2555
  %v2574 = vadd.f32 %v2506, %v2555
  %v2575 = vadd.f32 %v2507, %v2555
  %v2576 = vadd.f32 %v2508, %v2555
  %v2577 = vadd.f32 %v2509, %v2555
  %v2578 = vadd.f32 %v2510, %v2555
  %v2579 = vadd.f32 %v2511, %v2555
  %v2580 = vadd.f32 %v2512, %v2555
  %v2581 = vadd.f32 %v2513, %v2555
  %v2582 = vadd.f32 %v2514, %v2555
  %v2583 = vadd.f32 %v2515, %v2555
  %v2584 = vadd.f32 %v2516, %v2555
  %v2585 = vadd.f32 %v2517, %v2555
  %v2586 = vadd.f32 %v2518, %v2555
  %v2587 = vadd.f32 %v2519, %v2555
  %v2588 = vadd.f32 %v2520, %v2555
  %v2589 = vadd.f32 %v2521, %v2555
  %v2590 = vadd.f32 %v2522, %v2555
  %v2591 = vadd.f32 %v2523, %v2555
  %v2592 = vadd.f32 %v2524, %v2555
  %v2593 = vadd.f32 %v2525, %v2555
  %v2594 = vadd.f32 %v2526, %v2555
  %v2595 = vadd.f32 %v2527, %v2555
  %v2596 = vadd.f32 %v2528, %v2555
  %v2597 = vadd.f32 %v2529, %v2555
  %v2598 = vadd.f32 %v2530, %v2555
  %v2599 = vadd.f32 %v2531, %v2555
  %v2600 = vadd.f32 %v2532, %v2555
  %v2601 = vadd.f32 %v2533, %v2555
  %v2602 = vadd.f32 %v2534, %v2555
  %v2603 = vadd.f32 %v2535, %v2555
  %v2604 = vadd.f32 %v2536, %v2555
  %v2605 = vadd.f32 %v2537, %v2555
  %v2606 = vadd.f32 %v2538, %v2555
  %v2607 = vadd.f32 %v2539, %v2555
  %v2608 = vadd.f32 %v2540, %v2555
  %v2609 = vadd.f32 %v2541, %v2555
  %v2610 = vadd.f32 %v2542, %v2555
  %v2611 = vadd.f32 %v2543, %v2555
  %v2612 = vadd.f32 %v2544, %v2555
  %v2613 = vadd.f32 %v2545, %v2555
  %v2614 = vadd.f32 %v2546, %v2555
  %v2615 = vadd.f32 %v2547, %v2555
  %v2616 = vadd.f32 %v2548, %v2555
  %v2617 = vadd.f32 %v2549, %v2555
  %v2618 = vadd.f32 %v2550, %v2555
  %v2619 = vadd.f32 %v2551, %v2555
  %v2620 = vmax.f32 %v2556, 0.0
  %v2621 = vmax.f32 %v2557, 0.0
  %v2622 = vmax.f32 %v2558, 0.0
  %v2623 = vmax.f32 %v2559, 0.0
  %v2624 = vmax.f32 %v2560, 0.0
  %v2625 = vmax.f32 %v2561, 0.0
  %v2626 = vmax.f32 %v2562, 0.0
  %v2627 = vmax.f32 %v2563, 0.0
  %v2628 = vmax.f32 %v2564, 0.0
  %v2629 = vmax.f32 %v2565, 0.0
  %v2630 = vmax.f32 %v2566, 0.0
  %v2631 = vmax.f32 %v2567, 0.0
  %v2632 = vmax.f32 %v2568, 0.0
  %v2633 = vmax.f32 %v2569, 0.0
  %v2634 = vmax.f32 %v2570, 0.0
  %v2635 = vmax.f32 %v2571, 0.0
  %v2636 = vmax.f32 %v2572, 0.0
  %v2637 = vmax.f32 %v2573, 0.0
  %v2638 = vmax.f32 %v2574, 0.0
  %v2639 = vmax.f32 %v2575, 0.0
  %v2640 = vmax.f32 %v2576, 0.0
  %v2641 = vmax.f32 %v2577, 0.0
  %v2642 = vmax.f32 %v2578, 0.0
  %v2643 = vmax.f32 %v2579, 0.0
  %v2644 = vmax.f32 %v2580, 0.0
  %v2645 = vmax.f32 %v2581, 0.0
  %v2646 = vmax.f32 %v2582, 0.0
  %v2647 = vmax.f32 %v2583, 0.0
  %v2648 = vmax.f32 %v2584, 0.0
  %v2649 = vmax.f32 %v2585, 0.0
  %v2650 = vmax.f32 %v2586, 0.0
  %v2651 = vmax.f32 %v2587, 0.0
  %v2652 = vmax.f32 %v2588, 0.0
  %v2653 = vmax.f32 %v2589, 0.0
  %v2654 = vmax.f32 %v2590, 0.0
  %v2655 = vmax.f32 %v2591, 0.0
  %v2656 = vmax.f32 %v2592, 0.0
  %v2657 = vmax.f32 %v2593, 0.0
  %v2658 = vmax.f32 %v2594, 0.0
  %v2659 = vmax.f32 %v2595, 0.0
  %v2660 = vmax.f32 %v2596, 0.0
  %v2661 = vmax.f32 %v2597, 0.0
  %v2662 = vmax.f32 %v2598, 0.0
  %v2663 = vmax.f32 %v2599, 0.0
  %v2664 = vmax.f32 %v2600, 0.0
  %v2665 = vmax.f32 %v2601, 0.0
  %v2666 = vmax.f32 %v2602, 0.0
  %v2667 = vmax.f32 %v2603, 0.0
  %v2668 = vmax.f32 %v2604, 0.0
  %v2669 = vmax.f32 %v2605, 0.0
  %v2670 = vmax.f32 %v2606, 0.0
  %v2671 = vmax.f32 %v2607, 0.0
  %v2672 = vmax.f32 %v2608, 0.0
  %v2673 = vmax.f32 %v2609, 0.0
  %v2674 = vmax.f32 %v2610, 0.0
  %v2675 = vmax.f32 %v2611, 0.0
  %v2676 = vmax.f32 %v2612, 0.0
  %v2677 = vmax.f32 %v2613, 0.0
  %v2678 = vmax.f32 %v2614, 0.0
  %v2679 = vmax.f32 %v2615, 0.0
  %v2680 = vmax.f32 %v2616, 0.0
  %v2681 = vmax.f32 %v2617, 0.0
  %v2682 = vmax.f32 %v2618, 0.0
  %v2683 = vmax.f32 %v2619, 0.0
  %v2684 = vpack.c.bf16 %v2621, %v2620
  %v2685 = vpack.c.bf16 %v2623, %v2622
  %v2686 = vpack.c.bf16 %v2625, %v2624
  %v2687 = vpack.c.bf16 %v2627, %v2626
  %v2688 = vpack.c.bf16 %v2629, %v2628
  %v2689 = vpack.c.bf16 %v2631, %v2630
  %v2690 = vpack.c.bf16 %v2633, %v2632
  %v2691 = vpack.c.bf16 %v2635, %v2634
  %v2692 = vpack.c.bf16 %v2637, %v2636
  %v2693 = vpack.c.bf16 %v2639, %v2638
  %v2694 = vpack.c.bf16 %v2641, %v2640
  %v2695 = vpack.c.bf16 %v2643, %v2642
  %v2696 = vpack.c.bf16 %v2645, %v2644
  %v2697 = vpack.c.bf16 %v2647, %v2646
  %v2698 = vpack.c.bf16 %v2649, %v2648
  %v2699 = vpack.c.bf16 %v2651, %v2650
  %v2700 = vpack.c.bf16 %v2653, %v2652
  %v2701 = vpack.c.bf16 %v2655, %v2654
  %v2702 = vpack.c.bf16 %v2657, %v2656
  %v2703 = vpack.c.bf16 %v2659, %v2658
  %v2704 = vpack.c.bf16 %v2661, %v2660
  %v2705 = vpack.c.bf16 %v2663, %v2662
  %v2706 = vpack.c.bf16 %v2665, %v2664
  %v2707 = vpack.c.bf16 %v2667, %v2666
  %v2708 = vpack.c.bf16 %v2669, %v2668
  %v2709 = vpack.c.bf16 %v2671, %v2670
  %v2710 = vpack.c.bf16 %v2673, %v2672
  %v2711 = vpack.c.bf16 %v2675, %v2674
  %v2712 = vpack.c.bf16 %v2677, %v2676
  %v2713 = vpack.c.bf16 %v2679, %v2678
  %v2714 = vpack.c.bf16 %v2681, %v2680
  %v2715 = vpack.c.bf16 %v2683, %v2682
  %s2716 = scalar_lea.vmem %s3, 128
  %v2717 = vld [vmem:[%s2716] sm:$0xf]
  %v2718 = vld [vmem:[%s2716 + $0x4] sm:$0xf]
  %v2719 = vld [vmem:[%s2716 + $0x8] sm:$0xf]
  %v2720 = vld [vmem:[%s2716 + $0xc] sm:$0xf]
  %v2721 = vld [vmem:[%s2716 + $0x10] sm:$0xf]
  %v2722 = vld [vmem:[%s2716 + $0x14] sm:$0xf]
  %v2723 = vld [vmem:[%s2716 + $0x18] sm:$0xf]
  %v2724 = vld [vmem:[%s2716 + $0x1c] sm:$0xf]
  %v2725 = vld [vmem:[%s2716 + $0x20] sm:$0xf]
  %v2726 = vld [vmem:[%s2716 + $0x24] sm:$0xf]
  %v2727 = vld [vmem:[%s2716 + $0x28] sm:$0xf]
  %v2728 = vld [vmem:[%s2716 + $0x2c] sm:$0xf]
  %v2729 = vld [vmem:[%s2716 + $0x30] sm:$0xf]
  %v2730 = vld [vmem:[%s2716 + $0x34] sm:$0xf]
  %v2731 = vld [vmem:[%s2716 + $0x38] sm:$0xf]
  %v2732 = vld [vmem:[%s2716 + $0x3c] sm:$0xf]
  %v2749 = vunpack.c.l.b16 %v2717
  %v2750 = vunpack.c.l.b16 %v2718
  %v2751 = vunpack.c.l.b16 %v2719
  %v2752 = vunpack.c.l.b16 %v2720
  %v2753 = vunpack.c.l.b16 %v2721
  %v2754 = vunpack.c.l.b16 %v2722
  %v2755 = vunpack.c.l.b16 %v2723
  %v2756 = vunpack.c.l.b16 %v2724
  %v2757 = vunpack.c.l.b16 %v2725
  %v2758 = vunpack.c.l.b16 %v2726
  %v2759 = vunpack.c.l.b16 %v2727
  %v2760 = vunpack.c.l.b16 %v2728
  %v2761 = vunpack.c.l.b16 %v2729
  %v2762 = vunpack.c.l.b16 %v2730
  %v2763 = vunpack.c.l.b16 %v2731
  %v2764 = vunpack.c.l.b16 %v2732
  %v2765 = vpack.c.b16 %v2750, %v2749
  %v2766 = vpack.c.b16 %v2752, %v2751
  %v2767 = vpack.c.b16 %v2754, %v2753
  %v2768 = vpack.c.b16 %v2756, %v2755
  %v2769 = vpack.c.b16 %v2758, %v2757
  %v2770 = vpack.c.b16 %v2760, %v2759
  %v2771 = vpack.c.b16 %v2762, %v2761
  %v2772 = vpack.c.b16 %v2764, %v2763
  %2781 = vmatprep.subr.bf16.mxu0 0
  %2782 = vmatpush1.bf16.msra.mxu0 %v2765
  %2783 = vmatprep.subr.bf16.mxu0 0
  %2784 = vmatpush1.bf16.msra.mxu0 %v2766
  %2785 = vmatprep.subr.bf16.mxu0 0
  %2786 = vmatpush1.bf16.msra.mxu0 %v2767
  %2787 = vmatprep.subr.bf16.mxu0 0
  %2788 = vmatpush1.bf16.msra.mxu0 %v2768
  %2789 = vmatprep.subr.bf16.mxu0 0
  %2790 = vmatpush1.bf16.msra.mxu0 %v2769
  %2791 = vmatprep.subr.bf16.mxu0 0
  %2792 = vmatpush1.bf16.msra.mxu0 %v2770
  %2793 = vmatprep.subr.bf16.mxu0 0
  %2794 = vmatpush1.bf16.msra.mxu0 %v2771
  %2795 = vmatprep.subr.bf16.mxu0 0
  %2796 = vmatpush1.bf16.msra.mxu0 %v2772
  %2797 = vmatprep.subr.bf16.mxu0 0
  %2798 = vmatpush1.bf16.msra.mxu0 0
  %2799 = vmatprep.subr.bf16.mxu0 0
  %2800 = vmatpush1.bf16.msra.mxu0 0
  %2801 = vmatprep.subr.bf16.mxu0 0
  %2802 = vmatpush1.bf16.msra.mxu0 0
  %2803 = vmatprep.subr.bf16.mxu0 0
  %2804 = vmatpush1.bf16.msra.mxu0 0
  %2805 = vmatprep.subr.bf16.mxu0 0
  %2806 = vmatpush1.bf16.msra.mxu0 0
  %2807 = vmatprep.subr.bf16.mxu0 0
  %2808 = vmatpush1.bf16.msra.mxu0 0
  %2809 = vmatprep.subr.bf16.mxu0 0
  %2810 = vmatpush1.bf16.msra.mxu0 0
  %2811 = vmatprep.subr.bf16.mxu0 0
  %2812 = vmatpush1.bf16.msra.mxu0 0
  %2813 = vmatprep.mubr.bf16.mxu0 0
  %2814 = vmatmul.mubr.bf16.gmra.mrb[0].mxu0 %v2684
  %v2815 = vpop.f32.mrb[0].mxu0
  %v2816 = vadd.f32 0.0, %v2815
  %v2817 = vpop.f32.mrb[0].mxu0
  %v2818 = vpop.f32.mrb[0].mxu0
  %v2819 = vadd.f32 0.0, %v2818
  %v2820 = vpop.f32.mrb[0].mxu0
  %2821 = vmatprep.mubr.bf16.mxu0 0
  %2822 = vmatmul.mubr.bf16.gmra.mrb[0].mxu0 %v2685
  %v2823 = vpop.f32.mrb[0].mxu0
  %v2824 = vadd.f32 0.0, %v2823
  %v2825 = vpop.f32.mrb[0].mxu0
  %v2826 = vpop.f32.mrb[0].mxu0
  %v2827 = vadd.f32 0.0, %v2826
  %v2828 = vpop.f32.mrb[0].mxu0
  %2829 = vmatprep.mubr.bf16.mxu0 0
  %2830 = vmatmul.mubr.bf16.gmra.mrb[0].mxu0 %v2686
  %v2831 = vpop.f32.mrb[0].mxu0
  %v2832 = vadd.f32 0.0, %v2831
  %v2833 = vpop.f32.mrb[0].mxu0
  %v2834 = vpop.f32.mrb[0].mxu0
  %v2835 = vadd.f32 0.0, %v2834
  %v2836 = vpop.f32.mrb[0].mxu0
  %2837 = vmatprep.mubr.bf16.mxu0 0
  %2838 = vmatmul.mubr.bf16.gmra.mrb[0].mxu0 %v2687
  %v2839 = vpop.f32.mrb[0].mxu0
  %v2840 = vadd.f32 0.0, %v2839
  %v2841 = vpop.f32.mrb[0].mxu0
  %v2842 = vpop.f32.mrb[0].mxu0
  %v2843 = vadd.f32 0.0, %v2842
  %v2844 = vpop.f32.mrb[0].mxu0
  %2845 = vmatprep.mubr.bf16.mxu0 0
  %2846 = vmatmul.mubr.bf16.gmra.mrb[0].mxu0 %v2688
  %v2847 = vpop.f32.mrb[0].mxu0
  %v2848 = vadd.f32 0.0, %v2847
  %v2849 = vpop.f32.mrb[0].mxu0
  %v2850 = vpop.f32.mrb[0].mxu0
  %v2851 = vadd.f32 0.0, %v2850
  %v2852 = vpop.f32.mrb[0].mxu0
  %2853 = vmatprep.mubr.bf16.mxu0 0
  %2854 = vmatmul.mubr.bf16.gmra.mrb[0].mxu0 %v2689
  %v2855 = vpop.f32.mrb[0].mxu0
  %v2856 = vadd.f32 0.0, %v2855
  %v2857 = vpop.f32.mrb[0].mxu0
  %v2858 = vpop.f32.mrb[0].mxu0
  %v2859 = vadd.f32 0.0, %v2858
  %v2860 = vpop.f32.mrb[0].mxu0
  %2861 = vmatprep.mubr.bf16.mxu0 0
  %2862 = vmatmul.mubr.bf16.gmra.mrb[0].mxu0 %v2690
  %v2863 = vpop.f32.mrb[0].mxu0
  %v2864 = vadd.f32 0.0, %v2863
  %v2865 = vpop.f32.mrb[0].mxu0
  %v2866 = vpop.f32.mrb[0].mxu0
  %v2867 = vadd.f32 0.0, %v2866
  %v2868 = vpop.f32.mrb[0].mxu0
  %2869 = vmatprep.mubr.bf16.mxu0 0
  %2870 = vmatmul.mubr.bf16.gmra.mrb[0].mxu0 %v2691
  %v2871 = vpop.f32.mrb[0].mxu0
  %v2872 = vadd.f32 0.0, %v2871
  %v2873 = vpop.f32.mrb[0].mxu0
  %v2874 = vpop.f32.mrb[0].mxu0
  %v2875 = vadd.f32 0.0, %v2874
  %v2876 = vpop.f32.mrb[0].mxu0
  %2877 = vmatprep.mubr.bf16.mxu0 0
  %2878 = vmatmul.mubr.bf16.gmra.mrb[0].mxu0 %v2692
  %v2879 = vpop.f32.mrb[0].mxu0
  %v2880 = vadd.f32 0.0, %v2879
  %v2881 = vpop.f32.mrb[0].mxu0
  %v2882 = vpop.f32.mrb[0].mxu0
  %v2883 = vadd.f32 0.0, %v2882
  %v2884 = vpop.f32.mrb[0].mxu0
  %2885 = vmatprep.mubr.bf16.mxu0 0
  %2886 = vmatmul.mubr.bf16.gmra.mrb[0].mxu0 %v2693
  %v2887 = vpop.f32.mrb[0].mxu0
  %v2888 = vadd.f32 0.0, %v2887
  %v2889 = vpop.f32.mrb[0].mxu0
  %v2890 = vpop.f32.mrb[0].mxu0
  %v2891 = vadd.f32 0.0, %v2890
  %v2892 = vpop.f32.mrb[0].mxu0
  %2893 = vmatprep.mubr.bf16.mxu0 0
  %2894 = vmatmul.mubr.bf16.gmra.mrb[0].mxu0 %v2694
  %v2895 = vpop.f32.mrb[0].mxu0
  %v2896 = vadd.f32 0.0, %v2895
  %v2897 = vpop.f32.mrb[0].mxu0
  %v2898 = vpop.f32.mrb[0].mxu0
  %v2899 = vadd.f32 0.0, %v2898
  %v2900 = vpop.f32.mrb[0].mxu0
  %2901 = vmatprep.mubr.bf16.mxu0 0
  %2902 = vmatmul.mubr.bf16.gmra.mrb[0].mxu0 %v2695
  %v2903 = vpop.f32.mrb[0].mxu0
  %v2904 = vadd.f32 0.0, %v2903
  %v2905 = vpop.f32.mrb[0].mxu0
  %v2906 = vpop.f32.mrb[0].mxu0
  %v2907 = vadd.f32 0.0, %v2906
  %v2908 = vpop.f32.mrb[0].mxu0
  %2909 = vmatprep.mubr.bf16.mxu0 0
  %2910 = vmatmul.mubr.bf16.gmra.mrb[0].mxu0 %v2696
  %v2911 = vpop.f32.mrb[0].mxu0
  %v2912 = vadd.f32 0.0, %v2911
  %v2913 = vpop.f32.mrb[0].mxu0
  %v2914 = vpop.f32.mrb[0].mxu0
  %v2915 = vadd.f32 0.0, %v2914
  %v2916 = vpop.f32.mrb[0].mxu0
  %2917 = vmatprep.mubr.bf16.mxu0 0
  %2918 = vmatmul.mubr.bf16.gmra.mrb[0].mxu0 %v2697
  %v2919 = vpop.f32.mrb[0].mxu0
  %v2920 = vadd.f32 0.0, %v2919
  %v2921 = vpop.f32.mrb[0].mxu0
  %v2922 = vpop.f32.mrb[0].mxu0
  %v2923 = vadd.f32 0.0, %v2922
  %v2924 = vpop.f32.mrb[0].mxu0
  %2925 = vmatprep.mubr.bf16.mxu0 0
  %2926 = vmatmul.mubr.bf16.gmra.mrb[0].mxu0 %v2698
  %v2927 = vpop.f32.mrb[0].mxu0
  %v2928 = vadd.f32 0.0, %v2927
  %v2929 = vpop.f32.mrb[0].mxu0
  %v2930 = vpop.f32.mrb[0].mxu0
  %v2931 = vadd.f32 0.0, %v2930
  %v2932 = vpop.f32.mrb[0].mxu0
  %2933 = vmatprep.mubr.bf16.mxu0 0
  %2934 = vmatmul.mubr.bf16.gmra.mrb[0].mxu0 %v2699
  %v2935 = vpop.f32.mrb[0].mxu0
  %v2936 = vadd.f32 0.0, %v2935
  %v2937 = vpop.f32.mrb[0].mxu0
  %v2938 = vpop.f32.mrb[0].mxu0
  %v2939 = vadd.f32 0.0, %v2938
  %v2940 = vpop.f32.mrb[0].mxu0
  %2941 = vmatprep.mubr.bf16.mxu0 0
  %2942 = vmatmul.mubr.bf16.gmra.mrb[0].mxu0 %v2700
  %v2943 = vpop.f32.mrb[0].mxu0
  %v2944 = vadd.f32 0.0, %v2943
  %v2945 = vpop.f32.mrb[0].mxu0
  %v2946 = vpop.f32.mrb[0].mxu0
  %v2947 = vadd.f32 0.0, %v2946
  %v2948 = vpop.f32.mrb[0].mxu0
  %2949 = vmatprep.mubr.bf16.mxu0 0
  %2950 = vmatmul.mubr.bf16.gmra.mrb[0].mxu0 %v2701
  %v2951 = vpop.f32.mrb[0].mxu0
  %v2952 = vadd.f32 0.0, %v2951
  %v2953 = vpop.f32.mrb[0].mxu0
  %v2954 = vpop.f32.mrb[0].mxu0
  %v2955 = vadd.f32 0.0, %v2954
  %v2956 = vpop.f32.mrb[0].mxu0
  %2957 = vmatprep.mubr.bf16.mxu0 0
  %2958 = vmatmul.mubr.bf16.gmra.mrb[0].mxu0 %v2702
  %v2959 = vpop.f32.mrb[0].mxu0
  %v2960 = vadd.f32 0.0, %v2959
  %v2961 = vpop.f32.mrb[0].mxu0
  %v2962 = vpop.f32.mrb[0].mxu0
  %v2963 = vadd.f32 0.0, %v2962
  %v2964 = vpop.f32.mrb[0].mxu0
  %2965 = vmatprep.mubr.bf16.mxu0 0
  %2966 = vmatmul.mubr.bf16.gmra.mrb[0].mxu0 %v2703
  %v2967 = vpop.f32.mrb[0].mxu0
  %v2968 = vadd.f32 0.0, %v2967
  %v2969 = vpop.f32.mrb[0].mxu0
  %v2970 = vpop.f32.mrb[0].mxu0
  %v2971 = vadd.f32 0.0, %v2970
  %v2972 = vpop.f32.mrb[0].mxu0
  %2973 = vmatprep.mubr.bf16.mxu0 0
  %2974 = vmatmul.mubr.bf16.gmra.mrb[0].mxu0 %v2704
  %v2975 = vpop.f32.mrb[0].mxu0
  %v2976 = vadd.f32 0.0, %v2975
  %v2977 = vpop.f32.mrb[0].mxu0
  %v2978 = vpop.f32.mrb[0].mxu0
  %v2979 = vadd.f32 0.0, %v2978
  %v2980 = vpop.f32.mrb[0].mxu0
  %2981 = vmatprep.mubr.bf16.mxu0 0
  %2982 = vmatmul.mubr.bf16.gmra.mrb[0].mxu0 %v2705
  %v2983 = vpop.f32.mrb[0].mxu0
  %v2984 = vadd.f32 0.0, %v2983
  %v2985 = vpop.f32.mrb[0].mxu0
  %v2986 = vpop.f32.mrb[0].mxu0
  %v2987 = vadd.f32 0.0, %v2986
  %v2988 = vpop.f32.mrb[0].mxu0
  %2989 = vmatprep.mubr.bf16.mxu0 0
  %2990 = vmatmul.mubr.bf16.gmra.mrb[0].mxu0 %v2706
  %v2991 = vpop.f32.mrb[0].mxu0
  %v2992 = vadd.f32 0.0, %v2991
  %v2993 = vpop.f32.mrb[0].mxu0
  %v2994 = vpop.f32.mrb[0].mxu0
  %v2995 = vadd.f32 0.0, %v2994
  %v2996 = vpop.f32.mrb[0].mxu0
  %2997 = vmatprep.mubr.bf16.mxu0 0
  %2998 = vmatmul.mubr.bf16.gmra.mrb[0].mxu0 %v2707
  %v2999 = vpop.f32.mrb[0].mxu0
  %v3000 = vadd.f32 0.0, %v2999
  %v3001 = vpop.f32.mrb[0].mxu0
  %v3002 = vpop.f32.mrb[0].mxu0
  %v3003 = vadd.f32 0.0, %v3002
  %v3004 = vpop.f32.mrb[0].mxu0
  %3005 = vmatprep.mubr.bf16.mxu0 0
  %3006 = vmatmul.mubr.bf16.gmra.mrb[0].mxu0 %v2708
  %v3007 = vpop.f32.mrb[0].mxu0
  %v3008 = vadd.f32 0.0, %v3007
  %v3009 = vpop.f32.mrb[0].mxu0
  %v3010 = vpop.f32.mrb[0].mxu0
  %v3011 = vadd.f32 0.0, %v3010
  %v3012 = vpop.f32.mrb[0].mxu0
  %3013 = vmatprep.mubr.bf16.mxu0 0
  %3014 = vmatmul.mubr.bf16.gmra.mrb[0].mxu0 %v2709
  %v3015 = vpop.f32.mrb[0].mxu0
  %v3016 = vadd.f32 0.0, %v3015
  %v3017 = vpop.f32.mrb[0].mxu0
  %v3018 = vpop.f32.mrb[0].mxu0
  %v3019 = vadd.f32 0.0, %v3018
  %v3020 = vpop.f32.mrb[0].mxu0
  %3021 = vmatprep.mubr.bf16.mxu0 0
  %3022 = vmatmul.mubr.bf16.gmra.mrb[0].mxu0 %v2710
  %v3023 = vpop.f32.mrb[0].mxu0
  %v3024 = vadd.f32 0.0, %v3023
  %v3025 = vpop.f32.mrb[0].mxu0
  %v3026 = vpop.f32.mrb[0].mxu0
  %v3027 = vadd.f32 0.0, %v3026
  %v3028 = vpop.f32.mrb[0].mxu0
  %3029 = vmatprep.mubr.bf16.mxu0 0
  %3030 = vmatmul.mubr.bf16.gmra.mrb[0].mxu0 %v2711
  %v3031 = vpop.f32.mrb[0].mxu0
  %v3032 = vadd.f32 0.0, %v3031
  %v3033 = vpop.f32.mrb[0].mxu0
  %v3034 = vpop.f32.mrb[0].mxu0
  %v3035 = vadd.f32 0.0, %v3034
  %v3036 = vpop.f32.mrb[0].mxu0
  %3037 = vmatprep.mubr.bf16.mxu0 0
  %3038 = vmatmul.mubr.bf16.gmra.mrb[0].mxu0 %v2712
  %v3039 = vpop.f32.mrb[0].mxu0
  %v3040 = vadd.f32 0.0, %v3039
  %v3041 = vpop.f32.mrb[0].mxu0
  %v3042 = vpop.f32.mrb[0].mxu0
  %v3043 = vadd.f32 0.0, %v3042
  %v3044 = vpop.f32.mrb[0].mxu0
  %3045 = vmatprep.mubr.bf16.mxu0 0
  %3046 = vmatmul.mubr.bf16.gmra.mrb[0].mxu0 %v2713
  %v3047 = vpop.f32.mrb[0].mxu0
  %v3048 = vadd.f32 0.0, %v3047
  %v3049 = vpop.f32.mrb[0].mxu0
  %v3050 = vpop.f32.mrb[0].mxu0
  %v3051 = vadd.f32 0.0, %v3050
  %v3052 = vpop.f32.mrb[0].mxu0
  %3053 = vmatprep.mubr.bf16.mxu0 0
  %3054 = vmatmul.mubr.bf16.gmra.mrb[0].mxu0 %v2714
  %v3055 = vpop.f32.mrb[0].mxu0
  %v3056 = vadd.f32 0.0, %v3055
  %v3057 = vpop.f32.mrb[0].mxu0
  %v3058 = vpop.f32.mrb[0].mxu0
  %v3059 = vadd.f32 0.0, %v3058
  %v3060 = vpop.f32.mrb[0].mxu0
  %3061 = vmatprep.mubr.bf16.mxu0 0
  %3062 = vmatmul.mubr.bf16.gmra.mrb[0].mxu0 %v2715
  %v3063 = vpop.f32.mrb[0].mxu0
  %v3064 = vadd.f32 0.0, %v3063
  %v3065 = vpop.f32.mrb[0].mxu0
  %v3066 = vpop.f32.mrb[0].mxu0
  %v3067 = vadd.f32 0.0, %v3066
  %v3068 = vpop.f32.mrb[0].mxu0
  %3069 = vdwg.mxu0
  %v3070 = vadd.f32 %v2816, %v2819
  %v3071 = vadd.f32 %v3070, %v2824
  %v3072 = vadd.f32 %v3071, %v2827
  %v3073 = vadd.f32 %v3072, %v2832
  %v3074 = vadd.f32 %v3073, %v2835
  %v3075 = vadd.f32 %v3074, %v2840
  %v3076 = vadd.f32 %v3075, %v2843
  %v3077 = vadd.f32 %v3076, %v2848
  %v3078 = vadd.f32 %v3077, %v2851
  %v3079 = vadd.f32 %v3078, %v2856
  %v3080 = vadd.f32 %v3079, %v2859
  %v3081 = vadd.f32 %v3080, %v2864
  %v3082 = vadd.f32 %v3081, %v2867
  %v3083 = vadd.f32 %v3082, %v2872
  %v3084 = vadd.f32 %v3083, %v2875
  %v3085 = vadd.f32 %v3084, %v2880
  %v3086 = vadd.f32 %v3085, %v2883
  %v3087 = vadd.f32 %v3086, %v2888
  %v3088 = vadd.f32 %v3087, %v2891
  %v3089 = vadd.f32 %v3088, %v2896
  %v3090 = vadd.f32 %v3089, %v2899
  %v3091 = vadd.f32 %v3090, %v2904
  %v3092 = vadd.f32 %v3091, %v2907
  %v3093 = vadd.f32 %v3092, %v2912
  %v3094 = vadd.f32 %v3093, %v2915
  %v3095 = vadd.f32 %v3094, %v2920
  %v3096 = vadd.f32 %v3095, %v2923
  %v3097 = vadd.f32 %v3096, %v2928
  %v3098 = vadd.f32 %v3097, %v2931
  %v3099 = vadd.f32 %v3098, %v2936
  %v3100 = vadd.f32 %v3099, %v2939
  %v3101 = vadd.f32 %v3100, %v2944
  %v3102 = vadd.f32 %v3101, %v2947
  %v3103 = vadd.f32 %v3102, %v2952
  %v3104 = vadd.f32 %v3103, %v2955
  %v3105 = vadd.f32 %v3104, %v2960
  %v3106 = vadd.f32 %v3105, %v2963
  %v3107 = vadd.f32 %v3106, %v2968
  %v3108 = vadd.f32 %v3107, %v2971
  %v3109 = vadd.f32 %v3108, %v2976
  %v3110 = vadd.f32 %v3109, %v2979
  %v3111 = vadd.f32 %v3110, %v2984
  %v3112 = vadd.f32 %v3111, %v2987
  %v3113 = vadd.f32 %v3112, %v2992
  %v3114 = vadd.f32 %v3113, %v2995
  %v3115 = vadd.f32 %v3114, %v3000
  %v3116 = vadd.f32 %v3115, %v3003
  %v3117 = vadd.f32 %v3116, %v3008
  %v3118 = vadd.f32 %v3117, %v3011
  %v3119 = vadd.f32 %v3118, %v3016
  %v3120 = vadd.f32 %v3119, %v3019
  %v3121 = vadd.f32 %v3120, %v3024
  %v3122 = vadd.f32 %v3121, %v3027
  %v3123 = vadd.f32 %v3122, %v3032
  %v3124 = vadd.f32 %v3123, %v3035
  %v3125 = vadd.f32 %v3124, %v3040
  %v3126 = vadd.f32 %v3125, %v3043
  %v3127 = vadd.f32 %v3126, %v3048
  %v3128 = vadd.f32 %v3127, %v3051
  %v3129 = vadd.f32 %v3128, %v3056
  %v3130 = vadd.f32 %v3129, %v3059
  %v3131 = vadd.f32 %v3130, %v3064
  %v3132 = vadd.f32 %v3131, %v3067
  %v3133 = vrot.slane %v3132, 4
  %v3134 = vadd.f32 %v3132, %v3133
  %v3135 = vrot.slane %v3134, 2
  %v3136 = vadd.f32 %v3134, %v3135
  %v3137 = vrot.slane %v3136, 1
  %v3138 = vadd.f32 %v3136, %v3137
  %v3139 = vmul.f32 %v2816, %v2816
  %v3140 = vmul.f32 %v2819, %v2819
  %v3141 = vmul.f32 %v2824, %v2824
  %v3142 = vmul.f32 %v2827, %v2827
  %v3143 = vmul.f32 %v2832, %v2832
  %v3144 = vmul.f32 %v2835, %v2835
  %v3145 = vmul.f32 %v2840, %v2840
  %v3146 = vmul.f32 %v2843, %v2843
  %v3147 = vmul.f32 %v2848, %v2848
  %v3148 = vmul.f32 %v2851, %v2851
  %v3149 = vmul.f32 %v2856, %v2856
  %v3150 = vmul.f32 %v2859, %v2859
  %v3151 = vmul.f32 %v2864, %v2864
  %v3152 = vmul.f32 %v2867, %v2867
  %v3153 = vmul.f32 %v2872, %v2872
  %v3154 = vmul.f32 %v2875, %v2875
  %v3155 = vmul.f32 %v2880, %v2880
  %v3156 = vmul.f32 %v2883, %v2883
  %v3157 = vmul.f32 %v2888, %v2888
  %v3158 = vmul.f32 %v2891, %v2891
  %v3159 = vmul.f32 %v2896, %v2896
  %v3160 = vmul.f32 %v2899, %v2899
  %v3161 = vmul.f32 %v2904, %v2904
  %v3162 = vmul.f32 %v2907, %v2907
  %v3163 = vmul.f32 %v2912, %v2912
  %v3164 = vmul.f32 %v2915, %v2915
  %v3165 = vmul.f32 %v2920, %v2920
  %v3166 = vmul.f32 %v2923, %v2923
  %v3167 = vmul.f32 %v2928, %v2928
  %v3168 = vmul.f32 %v2931, %v2931
  %v3169 = vmul.f32 %v2936, %v2936
  %v3170 = vmul.f32 %v2939, %v2939
  %v3171 = vmul.f32 %v2944, %v2944
  %v3172 = vmul.f32 %v2947, %v2947
  %v3173 = vmul.f32 %v2952, %v2952
  %v3174 = vmul.f32 %v2955, %v2955
  %v3175 = vmul.f32 %v2960, %v2960
  %v3176 = vmul.f32 %v2963, %v2963
  %v3177 = vmul.f32 %v2968, %v2968
  %v3178 = vmul.f32 %v2971, %v2971
  %v3179 = vmul.f32 %v2976, %v2976
  %v3180 = vmul.f32 %v2979, %v2979
  %v3181 = vmul.f32 %v2984, %v2984
  %v3182 = vmul.f32 %v2987, %v2987
  %v3183 = vmul.f32 %v2992, %v2992
  %v3184 = vmul.f32 %v2995, %v2995
  %v3185 = vmul.f32 %v3000, %v3000
  %v3186 = vmul.f32 %v3003, %v3003
  %v3187 = vmul.f32 %v3008, %v3008
  %v3188 = vmul.f32 %v3011, %v3011
  %v3189 = vmul.f32 %v3016, %v3016
  %v3190 = vmul.f32 %v3019, %v3019
  %v3191 = vmul.f32 %v3024, %v3024
  %v3192 = vmul.f32 %v3027, %v3027
  %v3193 = vmul.f32 %v3032, %v3032
  %v3194 = vmul.f32 %v3035, %v3035
  %v3195 = vmul.f32 %v3040, %v3040
  %v3196 = vmul.f32 %v3043, %v3043
  %v3197 = vmul.f32 %v3048, %v3048
  %v3198 = vmul.f32 %v3051, %v3051
  %v3199 = vmul.f32 %v3056, %v3056
  %v3200 = vmul.f32 %v3059, %v3059
  %v3201 = vmul.f32 %v3064, %v3064
  %v3202 = vmul.f32 %v3067, %v3067
  %v3203 = vadd.f32 %v3139, %v3140
  %v3204 = vadd.f32 %v3203, %v3141
  %v3205 = vadd.f32 %v3204, %v3142
  %v3206 = vadd.f32 %v3205, %v3143
  %v3207 = vadd.f32 %v3206, %v3144
  %v3208 = vadd.f32 %v3207, %v3145
  %v3209 = vadd.f32 %v3208, %v3146
  %v3210 = vadd.f32 %v3209, %v3147
  %v3211 = vadd.f32 %v3210, %v3148
  %v3212 = vadd.f32 %v3211, %v3149
  %v3213 = vadd.f32 %v3212, %v3150
  %v3214 = vadd.f32 %v3213, %v3151
  %v3215 = vadd.f32 %v3214, %v3152
  %v3216 = vadd.f32 %v3215, %v3153
  %v3217 = vadd.f32 %v3216, %v3154
  %v3218 = vadd.f32 %v3217, %v3155
  %v3219 = vadd.f32 %v3218, %v3156
  %v3220 = vadd.f32 %v3219, %v3157
  %v3221 = vadd.f32 %v3220, %v3158
  %v3222 = vadd.f32 %v3221, %v3159
  %v3223 = vadd.f32 %v3222, %v3160
  %v3224 = vadd.f32 %v3223, %v3161
  %v3225 = vadd.f32 %v3224, %v3162
  %v3226 = vadd.f32 %v3225, %v3163
  %v3227 = vadd.f32 %v3226, %v3164
  %v3228 = vadd.f32 %v3227, %v3165
  %v3229 = vadd.f32 %v3228, %v3166
  %v3230 = vadd.f32 %v3229, %v3167
  %v3231 = vadd.f32 %v3230, %v3168
  %v3232 = vadd.f32 %v3231, %v3169
  %v3233 = vadd.f32 %v3232, %v3170
  %v3234 = vadd.f32 %v3233, %v3171
  %v3235 = vadd.f32 %v3234, %v3172
  %v3236 = vadd.f32 %v3235, %v3173
  %v3237 = vadd.f32 %v3236, %v3174
  %v3238 = vadd.f32 %v3237, %v3175
  %v3239 = vadd.f32 %v3238, %v3176
  %v3240 = vadd.f32 %v3239, %v3177
  %v3241 = vadd.f32 %v3240, %v3178
  %v3242 = vadd.f32 %v3241, %v3179
  %v3243 = vadd.f32 %v3242, %v3180
  %v3244 = vadd.f32 %v3243, %v3181
  %v3245 = vadd.f32 %v3244, %v3182
  %v3246 = vadd.f32 %v3245, %v3183
  %v3247 = vadd.f32 %v3246, %v3184
  %v3248 = vadd.f32 %v3247, %v3185
  %v3249 = vadd.f32 %v3248, %v3186
  %v3250 = vadd.f32 %v3249, %v3187
  %v3251 = vadd.f32 %v3250, %v3188
  %v3252 = vadd.f32 %v3251, %v3189
  %v3253 = vadd.f32 %v3252, %v3190
  %v3254 = vadd.f32 %v3253, %v3191
  %v3255 = vadd.f32 %v3254, %v3192
  %v3256 = vadd.f32 %v3255, %v3193
  %v3257 = vadd.f32 %v3256, %v3194
  %v3258 = vadd.f32 %v3257, %v3195
  %v3259 = vadd.f32 %v3258, %v3196
  %v3260 = vadd.f32 %v3259, %v3197
  %v3261 = vadd.f32 %v3260, %v3198
  %v3262 = vadd.f32 %v3261, %v3199
  %v3263 = vadd.f32 %v3262, %v3200
  %v3264 = vadd.f32 %v3263, %v3201
  %v3265 = vadd.f32 %v3264, %v3202
  %v3266 = vrot.slane %v3265, 4
  %v3267 = vadd.f32 %v3265, %v3266
  %v3268 = vrot.slane %v3267, 2
  %v3269 = vadd.f32 %v3267, %v3268
  %v3270 = vrot.slane %v3269, 1
  %v3271 = vadd.f32 %v3269, %v3270
  %v3272 = vmul.f32 %v3138, 0.001953125
  %v3273 = vmul.f32 %v3271, 0.001953125
  %v3274 = vmul.f32 %v3272, %v3272
  %v3275 = vsub.f32 %v3273, %v3274
  %v3276 = vmax.f32 %v3275, 0.0
  %v3277 = vadd.f32 %v3276, 0.001
  %v3278 = vrsqrt.pop %v3277
  %v3279 = vmul.f32 %v32, %v3278
  %v3280 = vmul.f32 %v3272, %v3279
  %v3281 = vsub.f32 %v33, %v3280
  %v3282 = vlaneseq
  %v3283 = vshrl.u32 %v3282, 7
  %v3284 = vsub.s32 3, %v3283
  %v3285 = vrot.slane %v3279, %v3284
  %v3286 = vmul.f32 %v2816, %v3285
  %v3287 = vmul.f32 %v2819, %v3285
  %v3288 = vmul.f32 %v2824, %v3285
  %v3289 = vmul.f32 %v2827, %v3285
  %v3290 = vmul.f32 %v2832, %v3285
  %v3291 = vmul.f32 %v2835, %v3285
  %v3292 = vmul.f32 %v2840, %v3285
  %v3293 = vmul.f32 %v2843, %v3285
  %v3294 = vmul.f32 %v2848, %v3285
  %v3295 = vmul.f32 %v2851, %v3285
  %v3296 = vmul.f32 %v2856, %v3285
  %v3297 = vmul.f32 %v2859, %v3285
  %v3298 = vmul.f32 %v2864, %v3285
  %v3299 = vmul.f32 %v2867, %v3285
  %v3300 = vmul.f32 %v2872, %v3285
  %v3301 = vmul.f32 %v2875, %v3285
  %v3302 = vmul.f32 %v2880, %v3285
  %v3303 = vmul.f32 %v2883, %v3285
  %v3304 = vmul.f32 %v2888, %v3285
  %v3305 = vmul.f32 %v2891, %v3285
  %v3306 = vmul.f32 %v2896, %v3285
  %v3307 = vmul.f32 %v2899, %v3285
  %v3308 = vmul.f32 %v2904, %v3285
  %v3309 = vmul.f32 %v2907, %v3285
  %v3310 = vmul.f32 %v2912, %v3285
  %v3311 = vmul.f32 %v2915, %v3285
  %v3312 = vmul.f32 %v2920, %v3285
  %v3313 = vmul.f32 %v2923, %v3285
  %v3314 = vmul.f32 %v2928, %v3285
  %v3315 = vmul.f32 %v2931, %v3285
  %v3316 = vmul.f32 %v2936, %v3285
  %v3317 = vmul.f32 %v2939, %v3285
  %v3318 = vmul.f32 %v2944, %v3285
  %v3319 = vmul.f32 %v2947, %v3285
  %v3320 = vmul.f32 %v2952, %v3285
  %v3321 = vmul.f32 %v2955, %v3285
  %v3322 = vmul.f32 %v2960, %v3285
  %v3323 = vmul.f32 %v2963, %v3285
  %v3324 = vmul.f32 %v2968, %v3285
  %v3325 = vmul.f32 %v2971, %v3285
  %v3326 = vmul.f32 %v2976, %v3285
  %v3327 = vmul.f32 %v2979, %v3285
  %v3328 = vmul.f32 %v2984, %v3285
  %v3329 = vmul.f32 %v2987, %v3285
  %v3330 = vmul.f32 %v2992, %v3285
  %v3331 = vmul.f32 %v2995, %v3285
  %v3332 = vmul.f32 %v3000, %v3285
  %v3333 = vmul.f32 %v3003, %v3285
  %v3334 = vmul.f32 %v3008, %v3285
  %v3335 = vmul.f32 %v3011, %v3285
  %v3336 = vmul.f32 %v3016, %v3285
  %v3337 = vmul.f32 %v3019, %v3285
  %v3338 = vmul.f32 %v3024, %v3285
  %v3339 = vmul.f32 %v3027, %v3285
  %v3340 = vmul.f32 %v3032, %v3285
  %v3341 = vmul.f32 %v3035, %v3285
  %v3342 = vmul.f32 %v3040, %v3285
  %v3343 = vmul.f32 %v3043, %v3285
  %v3344 = vmul.f32 %v3048, %v3285
  %v3345 = vmul.f32 %v3051, %v3285
  %v3346 = vmul.f32 %v3056, %v3285
  %v3347 = vmul.f32 %v3059, %v3285
  %v3348 = vmul.f32 %v3064, %v3285
  %v3349 = vmul.f32 %v3067, %v3285
  %v3350 = vlaneseq
  %v3351 = vshrl.u32 %v3350, 7
  %v3352 = vsub.s32 3, %v3351
  %v3353 = vrot.slane %v3281, %v3352
  %v3354 = vadd.f32 %v3286, %v3353
  %v3355 = vadd.f32 %v3287, %v3353
  %v3356 = vadd.f32 %v3288, %v3353
  %v3357 = vadd.f32 %v3289, %v3353
  %v3358 = vadd.f32 %v3290, %v3353
  %v3359 = vadd.f32 %v3291, %v3353
  %v3360 = vadd.f32 %v3292, %v3353
  %v3361 = vadd.f32 %v3293, %v3353
  %v3362 = vadd.f32 %v3294, %v3353
  %v3363 = vadd.f32 %v3295, %v3353
  %v3364 = vadd.f32 %v3296, %v3353
  %v3365 = vadd.f32 %v3297, %v3353
  %v3366 = vadd.f32 %v3298, %v3353
  %v3367 = vadd.f32 %v3299, %v3353
  %v3368 = vadd.f32 %v3300, %v3353
  %v3369 = vadd.f32 %v3301, %v3353
  %v3370 = vadd.f32 %v3302, %v3353
  %v3371 = vadd.f32 %v3303, %v3353
  %v3372 = vadd.f32 %v3304, %v3353
  %v3373 = vadd.f32 %v3305, %v3353
  %v3374 = vadd.f32 %v3306, %v3353
  %v3375 = vadd.f32 %v3307, %v3353
  %v3376 = vadd.f32 %v3308, %v3353
  %v3377 = vadd.f32 %v3309, %v3353
  %v3378 = vadd.f32 %v3310, %v3353
  %v3379 = vadd.f32 %v3311, %v3353
  %v3380 = vadd.f32 %v3312, %v3353
  %v3381 = vadd.f32 %v3313, %v3353
  %v3382 = vadd.f32 %v3314, %v3353
  %v3383 = vadd.f32 %v3315, %v3353
  %v3384 = vadd.f32 %v3316, %v3353
  %v3385 = vadd.f32 %v3317, %v3353
  %v3386 = vadd.f32 %v3318, %v3353
  %v3387 = vadd.f32 %v3319, %v3353
  %v3388 = vadd.f32 %v3320, %v3353
  %v3389 = vadd.f32 %v3321, %v3353
  %v3390 = vadd.f32 %v3322, %v3353
  %v3391 = vadd.f32 %v3323, %v3353
  %v3392 = vadd.f32 %v3324, %v3353
  %v3393 = vadd.f32 %v3325, %v3353
  %v3394 = vadd.f32 %v3326, %v3353
  %v3395 = vadd.f32 %v3327, %v3353
  %v3396 = vadd.f32 %v3328, %v3353
  %v3397 = vadd.f32 %v3329, %v3353
  %v3398 = vadd.f32 %v3330, %v3353
  %v3399 = vadd.f32 %v3331, %v3353
  %v3400 = vadd.f32 %v3332, %v3353
  %v3401 = vadd.f32 %v3333, %v3353
  %v3402 = vadd.f32 %v3334, %v3353
  %v3403 = vadd.f32 %v3335, %v3353
  %v3404 = vadd.f32 %v3336, %v3353
  %v3405 = vadd.f32 %v3337, %v3353
  %v3406 = vadd.f32 %v3338, %v3353
  %v3407 = vadd.f32 %v3339, %v3353
  %v3408 = vadd.f32 %v3340, %v3353
  %v3409 = vadd.f32 %v3341, %v3353
  %v3410 = vadd.f32 %v3342, %v3353
  %v3411 = vadd.f32 %v3343, %v3353
  %v3412 = vadd.f32 %v3344, %v3353
  %v3413 = vadd.f32 %v3345, %v3353
  %v3414 = vadd.f32 %v3346, %v3353
  %v3415 = vadd.f32 %v3347, %v3353
  %v3416 = vadd.f32 %v3348, %v3353
  %v3417 = vadd.f32 %v3349, %v3353
  %v3418 = vmax.f32 %v3354, 0.0
  %v3419 = vmax.f32 %v3355, 0.0
  %v3420 = vmax.f32 %v3356, 0.0
  %v3421 = vmax.f32 %v3357, 0.0
  %v3422 = vmax.f32 %v3358, 0.0
  %v3423 = vmax.f32 %v3359, 0.0
  %v3424 = vmax.f32 %v3360, 0.0
  %v3425 = vmax.f32 %v3361, 0.0
  %v3426 = vmax.f32 %v3362, 0.0
  %v3427 = vmax.f32 %v3363, 0.0
  %v3428 = vmax.f32 %v3364, 0.0
  %v3429 = vmax.f32 %v3365, 0.0
  %v3430 = vmax.f32 %v3366, 0.0
  %v3431 = vmax.f32 %v3367, 0.0
  %v3432 = vmax.f32 %v3368, 0.0
  %v3433 = vmax.f32 %v3369, 0.0
  %v3434 = vmax.f32 %v3370, 0.0
  %v3435 = vmax.f32 %v3371, 0.0
  %v3436 = vmax.f32 %v3372, 0.0
  %v3437 = vmax.f32 %v3373, 0.0
  %v3438 = vmax.f32 %v3374, 0.0
  %v3439 = vmax.f32 %v3375, 0.0
  %v3440 = vmax.f32 %v3376, 0.0
  %v3441 = vmax.f32 %v3377, 0.0
  %v3442 = vmax.f32 %v3378, 0.0
  %v3443 = vmax.f32 %v3379, 0.0
  %v3444 = vmax.f32 %v3380, 0.0
  %v3445 = vmax.f32 %v3381, 0.0
  %v3446 = vmax.f32 %v3382, 0.0
  %v3447 = vmax.f32 %v3383, 0.0
  %v3448 = vmax.f32 %v3384, 0.0
  %v3449 = vmax.f32 %v3385, 0.0
  %v3450 = vmax.f32 %v3386, 0.0
  %v3451 = vmax.f32 %v3387, 0.0
  %v3452 = vmax.f32 %v3388, 0.0
  %v3453 = vmax.f32 %v3389, 0.0
  %v3454 = vmax.f32 %v3390, 0.0
  %v3455 = vmax.f32 %v3391, 0.0
  %v3456 = vmax.f32 %v3392, 0.0
  %v3457 = vmax.f32 %v3393, 0.0
  %v3458 = vmax.f32 %v3394, 0.0
  %v3459 = vmax.f32 %v3395, 0.0
  %v3460 = vmax.f32 %v3396, 0.0
  %v3461 = vmax.f32 %v3397, 0.0
  %v3462 = vmax.f32 %v3398, 0.0
  %v3463 = vmax.f32 %v3399, 0.0
  %v3464 = vmax.f32 %v3400, 0.0
  %v3465 = vmax.f32 %v3401, 0.0
  %v3466 = vmax.f32 %v3402, 0.0
  %v3467 = vmax.f32 %v3403, 0.0
  %v3468 = vmax.f32 %v3404, 0.0
  %v3469 = vmax.f32 %v3405, 0.0
  %v3470 = vmax.f32 %v3406, 0.0
  %v3471 = vmax.f32 %v3407, 0.0
  %v3472 = vmax.f32 %v3408, 0.0
  %v3473 = vmax.f32 %v3409, 0.0
  %v3474 = vmax.f32 %v3410, 0.0
  %v3475 = vmax.f32 %v3411, 0.0
  %v3476 = vmax.f32 %v3412, 0.0
  %v3477 = vmax.f32 %v3413, 0.0
  %v3478 = vmax.f32 %v3414, 0.0
  %v3479 = vmax.f32 %v3415, 0.0
  %v3480 = vmax.f32 %v3416, 0.0
  %v3481 = vmax.f32 %v3417, 0.0
  %v3482 = vpack.c.bf16 %v3419, %v3418
  %v3483 = vpack.c.bf16 %v3421, %v3420
  %v3484 = vpack.c.bf16 %v3423, %v3422
  %v3485 = vpack.c.bf16 %v3425, %v3424
  %v3486 = vpack.c.bf16 %v3427, %v3426
  %v3487 = vpack.c.bf16 %v3429, %v3428
  %v3488 = vpack.c.bf16 %v3431, %v3430
  %v3489 = vpack.c.bf16 %v3433, %v3432
  %v3490 = vpack.c.bf16 %v3435, %v3434
  %v3491 = vpack.c.bf16 %v3437, %v3436
  %v3492 = vpack.c.bf16 %v3439, %v3438
  %v3493 = vpack.c.bf16 %v3441, %v3440
  %v3494 = vpack.c.bf16 %v3443, %v3442
  %v3495 = vpack.c.bf16 %v3445, %v3444
  %v3496 = vpack.c.bf16 %v3447, %v3446
  %v3497 = vpack.c.bf16 %v3449, %v3448
  %v3498 = vpack.c.bf16 %v3451, %v3450
  %v3499 = vpack.c.bf16 %v3453, %v3452
  %v3500 = vpack.c.bf16 %v3455, %v3454
  %v3501 = vpack.c.bf16 %v3457, %v3456
  %v3502 = vpack.c.bf16 %v3459, %v3458
  %v3503 = vpack.c.bf16 %v3461, %v3460
  %v3504 = vpack.c.bf16 %v3463, %v3462
  %v3505 = vpack.c.bf16 %v3465, %v3464
  %v3506 = vpack.c.bf16 %v3467, %v3466
  %v3507 = vpack.c.bf16 %v3469, %v3468
  %v3508 = vpack.c.bf16 %v3471, %v3470
  %v3509 = vpack.c.bf16 %v3473, %v3472
  %v3510 = vpack.c.bf16 %v3475, %v3474
  %v3511 = vpack.c.bf16 %v3477, %v3476
  %v3512 = vpack.c.bf16 %v3479, %v3478
  %v3513 = vpack.c.bf16 %v3481, %v3480
  %s3514 = scalar_lea.vmem %s3, 384
  %v3515 = vld [vmem:[%s3514] sm:$0xf]
  %v3516 = vld [vmem:[%s3514 + $0x4] sm:$0xf]
  %v3517 = vld [vmem:[%s3514 + $0x8] sm:$0xf]
  %v3518 = vld [vmem:[%s3514 + $0xc] sm:$0xf]
  %v3519 = vld [vmem:[%s3514 + $0x10] sm:$0xf]
  %v3520 = vld [vmem:[%s3514 + $0x14] sm:$0xf]
  %v3521 = vld [vmem:[%s3514 + $0x18] sm:$0xf]
  %v3522 = vld [vmem:[%s3514 + $0x1c] sm:$0xf]
  %v3523 = vld [vmem:[%s3514 + $0x20] sm:$0xf]
  %v3524 = vld [vmem:[%s3514 + $0x24] sm:$0xf]
  %v3525 = vld [vmem:[%s3514 + $0x28] sm:$0xf]
  %v3526 = vld [vmem:[%s3514 + $0x2c] sm:$0xf]
  %v3527 = vld [vmem:[%s3514 + $0x30] sm:$0xf]
  %v3528 = vld [vmem:[%s3514 + $0x34] sm:$0xf]
  %v3529 = vld [vmem:[%s3514 + $0x38] sm:$0xf]
  %v3530 = vld [vmem:[%s3514 + $0x3c] sm:$0xf]
  %v3531 = vlaneseq
  %v3532 = vshrl.u32 %v3531, 7
  %v3533 = vsub.s32 0, %v3532
  %v3534 = vrot.slane %v34, %v3533
  %v3551 = vunpack.c.l.b16 %v3515
  %v3552 = vunpack.c.l.b16 %v3516
  %v3553 = vunpack.c.l.b16 %v3517
  %v3554 = vunpack.c.l.b16 %v3518
  %v3555 = vunpack.c.l.b16 %v3519
  %v3556 = vunpack.c.l.b16 %v3520
  %v3557 = vunpack.c.l.b16 %v3521
  %v3558 = vunpack.c.l.b16 %v3522
  %v3559 = vunpack.c.l.b16 %v3523
  %v3560 = vunpack.c.l.b16 %v3524
  %v3561 = vunpack.c.l.b16 %v3525
  %v3562 = vunpack.c.l.b16 %v3526
  %v3563 = vunpack.c.l.b16 %v3527
  %v3564 = vunpack.c.l.b16 %v3528
  %v3565 = vunpack.c.l.b16 %v3529
  %v3566 = vunpack.c.l.b16 %v3530
  %v3567 = vpack.c.b16 %v3552, %v3551
  %v3568 = vpack.c.b16 %v3554, %v3553
  %v3569 = vpack.c.b16 %v3556, %v3555
  %v3570 = vpack.c.b16 %v3558, %v3557
  %v3571 = vpack.c.b16 %v3560, %v3559
  %v3572 = vpack.c.b16 %v3562, %v3561
  %v3573 = vpack.c.b16 %v3564, %v3563
  %v3574 = vpack.c.b16 %v3566, %v3565
  %3583 = vmatprep.subr.bf16.mxu0 0
  %3584 = vmatpush1.bf16.msra.mxu0 %v3567
  %3585 = vmatprep.subr.bf16.mxu0 0
  %3586 = vmatpush1.bf16.msra.mxu0 %v3568
  %3587 = vmatprep.subr.bf16.mxu0 0
  %3588 = vmatpush1.bf16.msra.mxu0 %v3569
  %3589 = vmatprep.subr.bf16.mxu0 0
  %3590 = vmatpush1.bf16.msra.mxu0 %v3570
  %3591 = vmatprep.subr.bf16.mxu0 0
  %3592 = vmatpush1.bf16.msra.mxu0 %v3571
  %3593 = vmatprep.subr.bf16.mxu0 0
  %3594 = vmatpush1.bf16.msra.mxu0 %v3572
  %3595 = vmatprep.subr.bf16.mxu0 0
  %3596 = vmatpush1.bf16.msra.mxu0 %v3573
  %3597 = vmatprep.subr.bf16.mxu0 0
  %3598 = vmatpush1.bf16.msra.mxu0 %v3574
  %3599 = vmatprep.subr.bf16.mxu0 0
  %3600 = vmatpush1.bf16.msra.mxu0 0
  %3601 = vmatprep.subr.bf16.mxu0 0
  %3602 = vmatpush1.bf16.msra.mxu0 0
  %3603 = vmatprep.subr.bf16.mxu0 0
  %3604 = vmatpush1.bf16.msra.mxu0 0
  %3605 = vmatprep.subr.bf16.mxu0 0
  %3606 = vmatpush1.bf16.msra.mxu0 0
  %3607 = vmatprep.subr.bf16.mxu0 0
  %3608 = vmatpush1.bf16.msra.mxu0 0
  %3609 = vmatprep.subr.bf16.mxu0 0
  %3610 = vmatpush1.bf16.msra.mxu0 0
  %3611 = vmatprep.subr.bf16.mxu0 0
  %3612 = vmatpush1.bf16.msra.mxu0 0
  %3613 = vmatprep.subr.bf16.mxu0 0
  %3614 = vmatpush1.bf16.msra.mxu0 0
  %3615 = vmatprep.mubr.bf16.mxu0 0
  %3616 = vmatmul.mubr.bf16.gmra.mrb[0].mxu0 %v3482
  %v3617 = vpop.f32.mrb[0].mxu0
  %v3618 = vadd.f32 %v3534, %v3617
  %v3619 = vpop.f32.mrb[0].mxu0
  %v3620 = vpop.f32.mrb[0].mxu0
  %v3621 = vadd.f32 %v3534, %v3620
  %v3622 = vpop.f32.mrb[0].mxu0
  %3623 = vmatprep.mubr.bf16.mxu0 0
  %3624 = vmatmul.mubr.bf16.gmra.mrb[0].mxu0 %v3483
  %v3625 = vpop.f32.mrb[0].mxu0
  %v3626 = vadd.f32 %v3534, %v3625
  %v3627 = vpop.f32.mrb[0].mxu0
  %v3628 = vpop.f32.mrb[0].mxu0
  %v3629 = vadd.f32 %v3534, %v3628
  %v3630 = vpop.f32.mrb[0].mxu0
  %3631 = vmatprep.mubr.bf16.mxu0 0
  %3632 = vmatmul.mubr.bf16.gmra.mrb[0].mxu0 %v3484
  %v3633 = vpop.f32.mrb[0].mxu0
  %v3634 = vadd.f32 %v3534, %v3633
  %v3635 = vpop.f32.mrb[0].mxu0
  %v3636 = vpop.f32.mrb[0].mxu0
  %v3637 = vadd.f32 %v3534, %v3636
  %v3638 = vpop.f32.mrb[0].mxu0
  %3639 = vmatprep.mubr.bf16.mxu0 0
  %3640 = vmatmul.mubr.bf16.gmra.mrb[0].mxu0 %v3485
  %v3641 = vpop.f32.mrb[0].mxu0
  %v3642 = vadd.f32 %v3534, %v3641
  %v3643 = vpop.f32.mrb[0].mxu0
  %v3644 = vpop.f32.mrb[0].mxu0
  %v3645 = vadd.f32 %v3534, %v3644
  %v3646 = vpop.f32.mrb[0].mxu0
  %3647 = vmatprep.mubr.bf16.mxu0 0
  %3648 = vmatmul.mubr.bf16.gmra.mrb[0].mxu0 %v3486
  %v3649 = vpop.f32.mrb[0].mxu0
  %v3650 = vadd.f32 %v3534, %v3649
  %v3651 = vpop.f32.mrb[0].mxu0
  %v3652 = vpop.f32.mrb[0].mxu0
  %v3653 = vadd.f32 %v3534, %v3652
  %v3654 = vpop.f32.mrb[0].mxu0
  %3655 = vmatprep.mubr.bf16.mxu0 0
  %3656 = vmatmul.mubr.bf16.gmra.mrb[0].mxu0 %v3487
  %v3657 = vpop.f32.mrb[0].mxu0
  %v3658 = vadd.f32 %v3534, %v3657
  %v3659 = vpop.f32.mrb[0].mxu0
  %v3660 = vpop.f32.mrb[0].mxu0
  %v3661 = vadd.f32 %v3534, %v3660
  %v3662 = vpop.f32.mrb[0].mxu0
  %3663 = vmatprep.mubr.bf16.mxu0 0
  %3664 = vmatmul.mubr.bf16.gmra.mrb[0].mxu0 %v3488
  %v3665 = vpop.f32.mrb[0].mxu0
  %v3666 = vadd.f32 %v3534, %v3665
  %v3667 = vpop.f32.mrb[0].mxu0
  %v3668 = vpop.f32.mrb[0].mxu0
  %v3669 = vadd.f32 %v3534, %v3668
  %v3670 = vpop.f32.mrb[0].mxu0
  %3671 = vmatprep.mubr.bf16.mxu0 0
  %3672 = vmatmul.mubr.bf16.gmra.mrb[0].mxu0 %v3489
  %v3673 = vpop.f32.mrb[0].mxu0
  %v3674 = vadd.f32 %v3534, %v3673
  %v3675 = vpop.f32.mrb[0].mxu0
  %v3676 = vpop.f32.mrb[0].mxu0
  %v3677 = vadd.f32 %v3534, %v3676
  %v3678 = vpop.f32.mrb[0].mxu0
  %3679 = vmatprep.mubr.bf16.mxu0 0
  %3680 = vmatmul.mubr.bf16.gmra.mrb[0].mxu0 %v3490
  %v3681 = vpop.f32.mrb[0].mxu0
  %v3682 = vadd.f32 %v3534, %v3681
  %v3683 = vpop.f32.mrb[0].mxu0
  %v3684 = vpop.f32.mrb[0].mxu0
  %v3685 = vadd.f32 %v3534, %v3684
  %v3686 = vpop.f32.mrb[0].mxu0
  %3687 = vmatprep.mubr.bf16.mxu0 0
  %3688 = vmatmul.mubr.bf16.gmra.mrb[0].mxu0 %v3491
  %v3689 = vpop.f32.mrb[0].mxu0
  %v3690 = vadd.f32 %v3534, %v3689
  %v3691 = vpop.f32.mrb[0].mxu0
  %v3692 = vpop.f32.mrb[0].mxu0
  %v3693 = vadd.f32 %v3534, %v3692
  %v3694 = vpop.f32.mrb[0].mxu0
  %3695 = vmatprep.mubr.bf16.mxu0 0
  %3696 = vmatmul.mubr.bf16.gmra.mrb[0].mxu0 %v3492
  %v3697 = vpop.f32.mrb[0].mxu0
  %v3698 = vadd.f32 %v3534, %v3697
  %v3699 = vpop.f32.mrb[0].mxu0
  %v3700 = vpop.f32.mrb[0].mxu0
  %v3701 = vadd.f32 %v3534, %v3700
  %v3702 = vpop.f32.mrb[0].mxu0
  %3703 = vmatprep.mubr.bf16.mxu0 0
  %3704 = vmatmul.mubr.bf16.gmra.mrb[0].mxu0 %v3493
  %v3705 = vpop.f32.mrb[0].mxu0
  %v3706 = vadd.f32 %v3534, %v3705
  %v3707 = vpop.f32.mrb[0].mxu0
  %v3708 = vpop.f32.mrb[0].mxu0
  %v3709 = vadd.f32 %v3534, %v3708
  %v3710 = vpop.f32.mrb[0].mxu0
  %3711 = vmatprep.mubr.bf16.mxu0 0
  %3712 = vmatmul.mubr.bf16.gmra.mrb[0].mxu0 %v3494
  %v3713 = vpop.f32.mrb[0].mxu0
  %v3714 = vadd.f32 %v3534, %v3713
  %v3715 = vpop.f32.mrb[0].mxu0
  %v3716 = vpop.f32.mrb[0].mxu0
  %v3717 = vadd.f32 %v3534, %v3716
  %v3718 = vpop.f32.mrb[0].mxu0
  %3719 = vmatprep.mubr.bf16.mxu0 0
  %3720 = vmatmul.mubr.bf16.gmra.mrb[0].mxu0 %v3495
  %v3721 = vpop.f32.mrb[0].mxu0
  %v3722 = vadd.f32 %v3534, %v3721
  %v3723 = vpop.f32.mrb[0].mxu0
  %v3724 = vpop.f32.mrb[0].mxu0
  %v3725 = vadd.f32 %v3534, %v3724
  %v3726 = vpop.f32.mrb[0].mxu0
  %3727 = vmatprep.mubr.bf16.mxu0 0
  %3728 = vmatmul.mubr.bf16.gmra.mrb[0].mxu0 %v3496
  %v3729 = vpop.f32.mrb[0].mxu0
  %v3730 = vadd.f32 %v3534, %v3729
  %v3731 = vpop.f32.mrb[0].mxu0
  %v3732 = vpop.f32.mrb[0].mxu0
  %v3733 = vadd.f32 %v3534, %v3732
  %v3734 = vpop.f32.mrb[0].mxu0
  %3735 = vmatprep.mubr.bf16.mxu0 0
  %3736 = vmatmul.mubr.bf16.gmra.mrb[0].mxu0 %v3497
  %v3737 = vpop.f32.mrb[0].mxu0
  %v3738 = vadd.f32 %v3534, %v3737
  %v3739 = vpop.f32.mrb[0].mxu0
  %v3740 = vpop.f32.mrb[0].mxu0
  %v3741 = vadd.f32 %v3534, %v3740
  %v3742 = vpop.f32.mrb[0].mxu0
  %3743 = vmatprep.mubr.bf16.mxu0 0
  %3744 = vmatmul.mubr.bf16.gmra.mrb[0].mxu0 %v3498
  %v3745 = vpop.f32.mrb[0].mxu0
  %v3746 = vadd.f32 %v3534, %v3745
  %v3747 = vpop.f32.mrb[0].mxu0
  %v3748 = vpop.f32.mrb[0].mxu0
  %v3749 = vadd.f32 %v3534, %v3748
  %v3750 = vpop.f32.mrb[0].mxu0
  %3751 = vmatprep.mubr.bf16.mxu0 0
  %3752 = vmatmul.mubr.bf16.gmra.mrb[0].mxu0 %v3499
  %v3753 = vpop.f32.mrb[0].mxu0
  %v3754 = vadd.f32 %v3534, %v3753
  %v3755 = vpop.f32.mrb[0].mxu0
  %v3756 = vpop.f32.mrb[0].mxu0
  %v3757 = vadd.f32 %v3534, %v3756
  %v3758 = vpop.f32.mrb[0].mxu0
  %3759 = vmatprep.mubr.bf16.mxu0 0
  %3760 = vmatmul.mubr.bf16.gmra.mrb[0].mxu0 %v3500
  %v3761 = vpop.f32.mrb[0].mxu0
  %v3762 = vadd.f32 %v3534, %v3761
  %v3763 = vpop.f32.mrb[0].mxu0
  %v3764 = vpop.f32.mrb[0].mxu0
  %v3765 = vadd.f32 %v3534, %v3764
  %v3766 = vpop.f32.mrb[0].mxu0
  %3767 = vmatprep.mubr.bf16.mxu0 0
  %3768 = vmatmul.mubr.bf16.gmra.mrb[0].mxu0 %v3501
  %v3769 = vpop.f32.mrb[0].mxu0
  %v3770 = vadd.f32 %v3534, %v3769
  %v3771 = vpop.f32.mrb[0].mxu0
  %v3772 = vpop.f32.mrb[0].mxu0
  %v3773 = vadd.f32 %v3534, %v3772
  %v3774 = vpop.f32.mrb[0].mxu0
  %3775 = vmatprep.mubr.bf16.mxu0 0
  %3776 = vmatmul.mubr.bf16.gmra.mrb[0].mxu0 %v3502
  %v3777 = vpop.f32.mrb[0].mxu0
  %v3778 = vadd.f32 %v3534, %v3777
  %v3779 = vpop.f32.mrb[0].mxu0
  %v3780 = vpop.f32.mrb[0].mxu0
  %v3781 = vadd.f32 %v3534, %v3780
  %v3782 = vpop.f32.mrb[0].mxu0
  %3783 = vmatprep.mubr.bf16.mxu0 0
  %3784 = vmatmul.mubr.bf16.gmra.mrb[0].mxu0 %v3503
  %v3785 = vpop.f32.mrb[0].mxu0
  %v3786 = vadd.f32 %v3534, %v3785
  %v3787 = vpop.f32.mrb[0].mxu0
  %v3788 = vpop.f32.mrb[0].mxu0
  %v3789 = vadd.f32 %v3534, %v3788
  %v3790 = vpop.f32.mrb[0].mxu0
  %3791 = vmatprep.mubr.bf16.mxu0 0
  %3792 = vmatmul.mubr.bf16.gmra.mrb[0].mxu0 %v3504
  %v3793 = vpop.f32.mrb[0].mxu0
  %v3794 = vadd.f32 %v3534, %v3793
  %v3795 = vpop.f32.mrb[0].mxu0
  %v3796 = vpop.f32.mrb[0].mxu0
  %v3797 = vadd.f32 %v3534, %v3796
  %v3798 = vpop.f32.mrb[0].mxu0
  %3799 = vmatprep.mubr.bf16.mxu0 0
  %3800 = vmatmul.mubr.bf16.gmra.mrb[0].mxu0 %v3505
  %v3801 = vpop.f32.mrb[0].mxu0
  %v3802 = vadd.f32 %v3534, %v3801
  %v3803 = vpop.f32.mrb[0].mxu0
  %v3804 = vpop.f32.mrb[0].mxu0
  %v3805 = vadd.f32 %v3534, %v3804
  %v3806 = vpop.f32.mrb[0].mxu0
  %3807 = vmatprep.mubr.bf16.mxu0 0
  %3808 = vmatmul.mubr.bf16.gmra.mrb[0].mxu0 %v3506
  %v3809 = vpop.f32.mrb[0].mxu0
  %v3810 = vadd.f32 %v3534, %v3809
  %v3811 = vpop.f32.mrb[0].mxu0
  %v3812 = vpop.f32.mrb[0].mxu0
  %v3813 = vadd.f32 %v3534, %v3812
  %v3814 = vpop.f32.mrb[0].mxu0
  %3815 = vmatprep.mubr.bf16.mxu0 0
  %3816 = vmatmul.mubr.bf16.gmra.mrb[0].mxu0 %v3507
  %v3817 = vpop.f32.mrb[0].mxu0
  %v3818 = vadd.f32 %v3534, %v3817
  %v3819 = vpop.f32.mrb[0].mxu0
  %v3820 = vpop.f32.mrb[0].mxu0
  %v3821 = vadd.f32 %v3534, %v3820
  %v3822 = vpop.f32.mrb[0].mxu0
  %3823 = vmatprep.mubr.bf16.mxu0 0
  %3824 = vmatmul.mubr.bf16.gmra.mrb[0].mxu0 %v3508
  %v3825 = vpop.f32.mrb[0].mxu0
  %v3826 = vadd.f32 %v3534, %v3825
  %v3827 = vpop.f32.mrb[0].mxu0
  %v3828 = vpop.f32.mrb[0].mxu0
  %v3829 = vadd.f32 %v3534, %v3828
  %v3830 = vpop.f32.mrb[0].mxu0
  %3831 = vmatprep.mubr.bf16.mxu0 0
  %3832 = vmatmul.mubr.bf16.gmra.mrb[0].mxu0 %v3509
  %v3833 = vpop.f32.mrb[0].mxu0
  %v3834 = vadd.f32 %v3534, %v3833
  %v3835 = vpop.f32.mrb[0].mxu0
  %v3836 = vpop.f32.mrb[0].mxu0
  %v3837 = vadd.f32 %v3534, %v3836
  %v3838 = vpop.f32.mrb[0].mxu0
  %3839 = vmatprep.mubr.bf16.mxu0 0
  %3840 = vmatmul.mubr.bf16.gmra.mrb[0].mxu0 %v3510
  %v3841 = vpop.f32.mrb[0].mxu0
  %v3842 = vadd.f32 %v3534, %v3841
  %v3843 = vpop.f32.mrb[0].mxu0
  %v3844 = vpop.f32.mrb[0].mxu0
  %v3845 = vadd.f32 %v3534, %v3844
  %v3846 = vpop.f32.mrb[0].mxu0
  %3847 = vmatprep.mubr.bf16.mxu0 0
  %3848 = vmatmul.mubr.bf16.gmra.mrb[0].mxu0 %v3511
  %v3849 = vpop.f32.mrb[0].mxu0
  %v3850 = vadd.f32 %v3534, %v3849
  %v3851 = vpop.f32.mrb[0].mxu0
  %v3852 = vpop.f32.mrb[0].mxu0
  %v3853 = vadd.f32 %v3534, %v3852
  %v3854 = vpop.f32.mrb[0].mxu0
  %3855 = vmatprep.mubr.bf16.mxu0 0
  %3856 = vmatmul.mubr.bf16.gmra.mrb[0].mxu0 %v3512
  %v3857 = vpop.f32.mrb[0].mxu0
  %v3858 = vadd.f32 %v3534, %v3857
  %v3859 = vpop.f32.mrb[0].mxu0
  %v3860 = vpop.f32.mrb[0].mxu0
  %v3861 = vadd.f32 %v3534, %v3860
  %v3862 = vpop.f32.mrb[0].mxu0
  %3863 = vmatprep.mubr.bf16.mxu0 0
  %3864 = vmatmul.mubr.bf16.gmra.mrb[0].mxu0 %v3513
  %v3865 = vpop.f32.mrb[0].mxu0
  %v3866 = vadd.f32 %v3534, %v3865
  %v3867 = vpop.f32.mrb[0].mxu0
  %v3868 = vpop.f32.mrb[0].mxu0
  %v3869 = vadd.f32 %v3534, %v3868
  %v3870 = vpop.f32.mrb[0].mxu0
  %3871 = vdwg.mxu0
  %3872 = vst [vmem:[%s9] sm:$0xff] %v3618
  %3873 = vst [vmem:[%s9 + $0x8] sm:$0xff] %v3621
  %3874 = vst [vmem:[%s9 + $0x10] sm:$0xff] %v3626
  %3875 = vst [vmem:[%s9 + $0x18] sm:$0xff] %v3629
  %3876 = vst [vmem:[%s9 + $0x20] sm:$0xff] %v3634
  %3877 = vst [vmem:[%s9 + $0x28] sm:$0xff] %v3637
  %3878 = vst [vmem:[%s9 + $0x30] sm:$0xff] %v3642
  %3879 = vst [vmem:[%s9 + $0x38] sm:$0xff] %v3645
  %3880 = vst [vmem:[%s9 + $0x40] sm:$0xff] %v3650
  %3881 = vst [vmem:[%s9 + $0x48] sm:$0xff] %v3653
  %3882 = vst [vmem:[%s9 + $0x50] sm:$0xff] %v3658
  %3883 = vst [vmem:[%s9 + $0x58] sm:$0xff] %v3661
  %3884 = vst [vmem:[%s9 + $0x60] sm:$0xff] %v3666
  %3885 = vst [vmem:[%s9 + $0x68] sm:$0xff] %v3669
  %3886 = vst [vmem:[%s9 + $0x70] sm:$0xff] %v3674
  %3887 = vst [vmem:[%s9 + $0x78] sm:$0xff] %v3677
  %3888 = vst [vmem:[%s9 + $0x80] sm:$0xff] %v3682
  %3889 = vst [vmem:[%s9 + $0x88] sm:$0xff] %v3685
  %3890 = vst [vmem:[%s9 + $0x90] sm:$0xff] %v3690
  %3891 = vst [vmem:[%s9 + $0x98] sm:$0xff] %v3693
  %3892 = vst [vmem:[%s9 + $0xa0] sm:$0xff] %v3698
  %3893 = vst [vmem:[%s9 + $0xa8] sm:$0xff] %v3701
  %3894 = vst [vmem:[%s9 + $0xb0] sm:$0xff] %v3706
  %3895 = vst [vmem:[%s9 + $0xb8] sm:$0xff] %v3709
  %3896 = vst [vmem:[%s9 + $0xc0] sm:$0xff] %v3714
  %3897 = vst [vmem:[%s9 + $0xc8] sm:$0xff] %v3717
  %3898 = vst [vmem:[%s9 + $0xd0] sm:$0xff] %v3722
  %3899 = vst [vmem:[%s9 + $0xd8] sm:$0xff] %v3725
  %3900 = vst [vmem:[%s9 + $0xe0] sm:$0xff] %v3730
  %3901 = vst [vmem:[%s9 + $0xe8] sm:$0xff] %v3733
  %3902 = vst [vmem:[%s9 + $0xf0] sm:$0xff] %v3738
  %3903 = vst [vmem:[%s9 + $0xf8] sm:$0xff] %v3741
  %3904 = vst [vmem:[%s9 + $0x100] sm:$0xff] %v3746
  %3905 = vst [vmem:[%s9 + $0x108] sm:$0xff] %v3749
  %3906 = vst [vmem:[%s9 + $0x110] sm:$0xff] %v3754
  %3907 = vst [vmem:[%s9 + $0x118] sm:$0xff] %v3757
  %3908 = vst [vmem:[%s9 + $0x120] sm:$0xff] %v3762
  %3909 = vst [vmem:[%s9 + $0x128] sm:$0xff] %v3765
  %3910 = vst [vmem:[%s9 + $0x130] sm:$0xff] %v3770
  %3911 = vst [vmem:[%s9 + $0x138] sm:$0xff] %v3773
  %3912 = vst [vmem:[%s9 + $0x140] sm:$0xff] %v3778
  %3913 = vst [vmem:[%s9 + $0x148] sm:$0xff] %v3781
  %3914 = vst [vmem:[%s9 + $0x150] sm:$0xff] %v3786
  %3915 = vst [vmem:[%s9 + $0x158] sm:$0xff] %v3789
  %3916 = vst [vmem:[%s9 + $0x160] sm:$0xff] %v3794
  %3917 = vst [vmem:[%s9 + $0x168] sm:$0xff] %v3797
  %3918 = vst [vmem:[%s9 + $0x170] sm:$0xff] %v3802
  %3919 = vst [vmem:[%s9 + $0x178] sm:$0xff] %v3805
  %3920 = vst [vmem:[%s9 + $0x180] sm:$0xff] %v3810
  %3921 = vst [vmem:[%s9 + $0x188] sm:$0xff] %v3813
  %3922 = vst [vmem:[%s9 + $0x190] sm:$0xff] %v3818
  %3923 = vst [vmem:[%s9 + $0x198] sm:$0xff] %v3821
  %3924 = vst [vmem:[%s9 + $0x1a0] sm:$0xff] %v3826
  %3925 = vst [vmem:[%s9 + $0x1a8] sm:$0xff] %v3829
  %3926 = vst [vmem:[%s9 + $0x1b0] sm:$0xff] %v3834
  %3927 = vst [vmem:[%s9 + $0x1b8] sm:$0xff] %v3837
  %3928 = vst [vmem:[%s9 + $0x1c0] sm:$0xff] %v3842
  %3929 = vst [vmem:[%s9 + $0x1c8] sm:$0xff] %v3845
  %3930 = vst [vmem:[%s9 + $0x1d0] sm:$0xff] %v3850
  %3931 = vst [vmem:[%s9 + $0x1d8] sm:$0xff] %v3853
  %3932 = vst [vmem:[%s9 + $0x1e0] sm:$0xff] %v3858
  %3933 = vst [vmem:[%s9 + $0x1e8] sm:$0xff] %v3861
  %3934 = vst [vmem:[%s9 + $0x1f0] sm:$0xff] %v3866
  %3935 = vst [vmem:[%s9 + $0x1f8] sm:$0xff] %v3869
  %v3936 = vld [vmem:[%s1] sm:$0xff]
  %v3937 = vld [vmem:[%s1 + $0x8] sm:$0xff]
  %v3938 = vld [vmem:[%s1 + $0x10] sm:$0xff]
  %v3939 = vld [vmem:[%s1 + $0x18] sm:$0xff]
  %v3940 = vld [vmem:[%s1 + $0x20] sm:$0xff]
  %v3941 = vld [vmem:[%s1 + $0x28] sm:$0xff]
  %v3942 = vld [vmem:[%s1 + $0x30] sm:$0xff]
  %v3943 = vld [vmem:[%s1 + $0x38] sm:$0xff]
  %v3944 = vld [vmem:[%s1 + $0x40] sm:$0xff]
  %v3945 = vld [vmem:[%s1 + $0x48] sm:$0xff]
  %v3946 = vld [vmem:[%s1 + $0x50] sm:$0xff]
  %v3947 = vld [vmem:[%s1 + $0x58] sm:$0xff]
  %v3948 = vld [vmem:[%s1 + $0x60] sm:$0xff]
  %v3949 = vld [vmem:[%s1 + $0x68] sm:$0xff]
  %v3950 = vld [vmem:[%s1 + $0x70] sm:$0xff]
  %v3951 = vld [vmem:[%s1 + $0x78] sm:$0xff]
  %v3952 = vld [vmem:[%s1 + $0x80] sm:$0xff]
  %v3953 = vld [vmem:[%s1 + $0x88] sm:$0xff]
  %v3954 = vld [vmem:[%s1 + $0x90] sm:$0xff]
  %v3955 = vld [vmem:[%s1 + $0x98] sm:$0xff]
  %v3956 = vld [vmem:[%s1 + $0xa0] sm:$0xff]
  %v3957 = vld [vmem:[%s1 + $0xa8] sm:$0xff]
  %v3958 = vld [vmem:[%s1 + $0xb0] sm:$0xff]
  %v3959 = vld [vmem:[%s1 + $0xb8] sm:$0xff]
  %v3960 = vld [vmem:[%s1 + $0xc0] sm:$0xff]
  %v3961 = vld [vmem:[%s1 + $0xc8] sm:$0xff]
  %v3962 = vld [vmem:[%s1 + $0xd0] sm:$0xff]
  %v3963 = vld [vmem:[%s1 + $0xd8] sm:$0xff]
  %v3964 = vld [vmem:[%s1 + $0xe0] sm:$0xff]
  %v3965 = vld [vmem:[%s1 + $0xe8] sm:$0xff]
  %v3966 = vld [vmem:[%s1 + $0xf0] sm:$0xff]
  %v3967 = vld [vmem:[%s1 + $0xf8] sm:$0xff]
  %v3968 = vld [vmem:[%s1 + $0x100] sm:$0xff]
  %v3969 = vld [vmem:[%s1 + $0x108] sm:$0xff]
  %v3970 = vld [vmem:[%s1 + $0x110] sm:$0xff]
  %v3971 = vld [vmem:[%s1 + $0x118] sm:$0xff]
  %v3972 = vld [vmem:[%s1 + $0x120] sm:$0xff]
  %v3973 = vld [vmem:[%s1 + $0x128] sm:$0xff]
  %v3974 = vld [vmem:[%s1 + $0x130] sm:$0xff]
  %v3975 = vld [vmem:[%s1 + $0x138] sm:$0xff]
  %v3976 = vld [vmem:[%s1 + $0x140] sm:$0xff]
  %v3977 = vld [vmem:[%s1 + $0x148] sm:$0xff]
  %v3978 = vld [vmem:[%s1 + $0x150] sm:$0xff]
  %v3979 = vld [vmem:[%s1 + $0x158] sm:$0xff]
  %v3980 = vld [vmem:[%s1 + $0x160] sm:$0xff]
  %v3981 = vld [vmem:[%s1 + $0x168] sm:$0xff]
  %v3982 = vld [vmem:[%s1 + $0x170] sm:$0xff]
  %v3983 = vld [vmem:[%s1 + $0x178] sm:$0xff]
  %v3984 = vld [vmem:[%s1 + $0x180] sm:$0xff]
  %v3985 = vld [vmem:[%s1 + $0x188] sm:$0xff]
  %v3986 = vld [vmem:[%s1 + $0x190] sm:$0xff]
  %v3987 = vld [vmem:[%s1 + $0x198] sm:$0xff]
  %v3988 = vld [vmem:[%s1 + $0x1a0] sm:$0xff]
  %v3989 = vld [vmem:[%s1 + $0x1a8] sm:$0xff]
  %v3990 = vld [vmem:[%s1 + $0x1b0] sm:$0xff]
  %v3991 = vld [vmem:[%s1 + $0x1b8] sm:$0xff]
  %v3992 = vld [vmem:[%s1 + $0x1c0] sm:$0xff]
  %v3993 = vld [vmem:[%s1 + $0x1c8] sm:$0xff]
  %v3994 = vld [vmem:[%s1 + $0x1d0] sm:$0xff]
  %v3995 = vld [vmem:[%s1 + $0x1d8] sm:$0xff]
  %v3996 = vld [vmem:[%s1 + $0x1e0] sm:$0xff]
  %v3997 = vld [vmem:[%s1 + $0x1e8] sm:$0xff]
  %v3998 = vld [vmem:[%s1 + $0x1f0] sm:$0xff]
  %v3999 = vld [vmem:[%s1 + $0x1f8] sm:$0xff]
  %v4000 = vmul.f32 %v3618, 0.5
  %v4001 = vmul.f32 %v3621, 0.5
  %v4002 = vmul.f32 %v3626, 0.5
  %v4003 = vmul.f32 %v3629, 0.5
  %v4004 = vmul.f32 %v3634, 0.5
  %v4005 = vmul.f32 %v3637, 0.5
  %v4006 = vmul.f32 %v3642, 0.5
  %v4007 = vmul.f32 %v3645, 0.5
  %v4008 = vmul.f32 %v3650, 0.5
  %v4009 = vmul.f32 %v3653, 0.5
  %v4010 = vmul.f32 %v3658, 0.5
  %v4011 = vmul.f32 %v3661, 0.5
  %v4012 = vmul.f32 %v3666, 0.5
  %v4013 = vmul.f32 %v3669, 0.5
  %v4014 = vmul.f32 %v3674, 0.5
  %v4015 = vmul.f32 %v3677, 0.5
  %v4016 = vmul.f32 %v3682, 0.5
  %v4017 = vmul.f32 %v3685, 0.5
  %v4018 = vmul.f32 %v3690, 0.5
  %v4019 = vmul.f32 %v3693, 0.5
  %v4020 = vmul.f32 %v3698, 0.5
  %v4021 = vmul.f32 %v3701, 0.5
  %v4022 = vmul.f32 %v3706, 0.5
  %v4023 = vmul.f32 %v3709, 0.5
  %v4024 = vmul.f32 %v3714, 0.5
  %v4025 = vmul.f32 %v3717, 0.5
  %v4026 = vmul.f32 %v3722, 0.5
  %v4027 = vmul.f32 %v3725, 0.5
  %v4028 = vmul.f32 %v3730, 0.5
  %v4029 = vmul.f32 %v3733, 0.5
  %v4030 = vmul.f32 %v3738, 0.5
  %v4031 = vmul.f32 %v3741, 0.5
  %v4032 = vmul.f32 %v3746, 0.5
  %v4033 = vmul.f32 %v3749, 0.5
  %v4034 = vmul.f32 %v3754, 0.5
  %v4035 = vmul.f32 %v3757, 0.5
  %v4036 = vmul.f32 %v3762, 0.5
  %v4037 = vmul.f32 %v3765, 0.5
  %v4038 = vmul.f32 %v3770, 0.5
  %v4039 = vmul.f32 %v3773, 0.5
  %v4040 = vmul.f32 %v3778, 0.5
  %v4041 = vmul.f32 %v3781, 0.5
  %v4042 = vmul.f32 %v3786, 0.5
  %v4043 = vmul.f32 %v3789, 0.5
  %v4044 = vmul.f32 %v3794, 0.5
  %v4045 = vmul.f32 %v3797, 0.5
  %v4046 = vmul.f32 %v3802, 0.5
  %v4047 = vmul.f32 %v3805, 0.5
  %v4048 = vmul.f32 %v3810, 0.5
  %v4049 = vmul.f32 %v3813, 0.5
  %v4050 = vmul.f32 %v3818, 0.5
  %v4051 = vmul.f32 %v3821, 0.5
  %v4052 = vmul.f32 %v3826, 0.5
  %v4053 = vmul.f32 %v3829, 0.5
  %v4054 = vmul.f32 %v3834, 0.5
  %v4055 = vmul.f32 %v3837, 0.5
  %v4056 = vmul.f32 %v3842, 0.5
  %v4057 = vmul.f32 %v3845, 0.5
  %v4058 = vmul.f32 %v3850, 0.5
  %v4059 = vmul.f32 %v3853, 0.5
  %v4060 = vmul.f32 %v3858, 0.5
  %v4061 = vmul.f32 %v3861, 0.5
  %v4062 = vmul.f32 %v3866, 0.5
  %v4063 = vmul.f32 %v3869, 0.5
  %v4064 = vmul.f32 %v4000, 1.442695
  %v4065 = vpow.pop %v4064
  %v4066 = vmul.f32 %v4001, 1.442695
  %v4067 = vpow.pop %v4066
  %v4068 = vmul.f32 %v4002, 1.442695
  %v4069 = vpow.pop %v4068
  %v4070 = vmul.f32 %v4003, 1.442695
  %v4071 = vpow.pop %v4070
  %v4072 = vmul.f32 %v4004, 1.442695
  %v4073 = vpow.pop %v4072
  %v4074 = vmul.f32 %v4005, 1.442695
  %v4075 = vpow.pop %v4074
  %v4076 = vmul.f32 %v4006, 1.442695
  %v4077 = vpow.pop %v4076
  %v4078 = vmul.f32 %v4007, 1.442695
  %v4079 = vpow.pop %v4078
  %v4080 = vmul.f32 %v4008, 1.442695
  %v4081 = vpow.pop %v4080
  %v4082 = vmul.f32 %v4009, 1.442695
  %v4083 = vpow.pop %v4082
  %v4084 = vmul.f32 %v4010, 1.442695
  %v4085 = vpow.pop %v4084
  %v4086 = vmul.f32 %v4011, 1.442695
  %v4087 = vpow.pop %v4086
  %v4088 = vmul.f32 %v4012, 1.442695
  %v4089 = vpow.pop %v4088
  %v4090 = vmul.f32 %v4013, 1.442695
  %v4091 = vpow.pop %v4090
  %v4092 = vmul.f32 %v4014, 1.442695
  %v4093 = vpow.pop %v4092
  %v4094 = vmul.f32 %v4015, 1.442695
  %v4095 = vpow.pop %v4094
  %v4096 = vmul.f32 %v4016, 1.442695
  %v4097 = vpow.pop %v4096
  %v4098 = vmul.f32 %v4017, 1.442695
  %v4099 = vpow.pop %v4098
  %v4100 = vmul.f32 %v4018, 1.442695
  %v4101 = vpow.pop %v4100
  %v4102 = vmul.f32 %v4019, 1.442695
  %v4103 = vpow.pop %v4102
  %v4104 = vmul.f32 %v4020, 1.442695
  %v4105 = vpow.pop %v4104
  %v4106 = vmul.f32 %v4021, 1.442695
  %v4107 = vpow.pop %v4106
  %v4108 = vmul.f32 %v4022, 1.442695
  %v4109 = vpow.pop %v4108
  %v4110 = vmul.f32 %v4023, 1.442695
  %v4111 = vpow.pop %v4110
  %v4112 = vmul.f32 %v4024, 1.442695
  %v4113 = vpow.pop %v4112
  %v4114 = vmul.f32 %v4025, 1.442695
  %v4115 = vpow.pop %v4114
  %v4116 = vmul.f32 %v4026, 1.442695
  %v4117 = vpow.pop %v4116
  %v4118 = vmul.f32 %v4027, 1.442695
  %v4119 = vpow.pop %v4118
  %v4120 = vmul.f32 %v4028, 1.442695
  %v4121 = vpow.pop %v4120
  %v4122 = vmul.f32 %v4029, 1.442695
  %v4123 = vpow.pop %v4122
  %v4124 = vmul.f32 %v4030, 1.442695
  %v4125 = vpow.pop %v4124
  %v4126 = vmul.f32 %v4031, 1.442695
  %v4127 = vpow.pop %v4126
  %v4128 = vmul.f32 %v4032, 1.442695
  %v4129 = vpow.pop %v4128
  %v4130 = vmul.f32 %v4033, 1.442695
  %v4131 = vpow.pop %v4130
  %v4132 = vmul.f32 %v4034, 1.442695
  %v4133 = vpow.pop %v4132
  %v4134 = vmul.f32 %v4035, 1.442695
  %v4135 = vpow.pop %v4134
  %v4136 = vmul.f32 %v4036, 1.442695
  %v4137 = vpow.pop %v4136
  %v4138 = vmul.f32 %v4037, 1.442695
  %v4139 = vpow.pop %v4138
  %v4140 = vmul.f32 %v4038, 1.442695
  %v4141 = vpow.pop %v4140
  %v4142 = vmul.f32 %v4039, 1.442695
  %v4143 = vpow.pop %v4142
  %v4144 = vmul.f32 %v4040, 1.442695
  %v4145 = vpow.pop %v4144
  %v4146 = vmul.f32 %v4041, 1.442695
  %v4147 = vpow.pop %v4146
  %v4148 = vmul.f32 %v4042, 1.442695
  %v4149 = vpow.pop %v4148
  %v4150 = vmul.f32 %v4043, 1.442695
  %v4151 = vpow.pop %v4150
  %v4152 = vmul.f32 %v4044, 1.442695
  %v4153 = vpow.pop %v4152
  %v4154 = vmul.f32 %v4045, 1.442695
  %v4155 = vpow.pop %v4154
  %v4156 = vmul.f32 %v4046, 1.442695
  %v4157 = vpow.pop %v4156
  %v4158 = vmul.f32 %v4047, 1.442695
  %v4159 = vpow.pop %v4158
  %v4160 = vmul.f32 %v4048, 1.442695
  %v4161 = vpow.pop %v4160
  %v4162 = vmul.f32 %v4049, 1.442695
  %v4163 = vpow.pop %v4162
  %v4164 = vmul.f32 %v4050, 1.442695
  %v4165 = vpow.pop %v4164
  %v4166 = vmul.f32 %v4051, 1.442695
  %v4167 = vpow.pop %v4166
  %v4168 = vmul.f32 %v4052, 1.442695
  %v4169 = vpow.pop %v4168
  %v4170 = vmul.f32 %v4053, 1.442695
  %v4171 = vpow.pop %v4170
  %v4172 = vmul.f32 %v4054, 1.442695
  %v4173 = vpow.pop %v4172
  %v4174 = vmul.f32 %v4055, 1.442695
  %v4175 = vpow.pop %v4174
  %v4176 = vmul.f32 %v4056, 1.442695
  %v4177 = vpow.pop %v4176
  %v4178 = vmul.f32 %v4057, 1.442695
  %v4179 = vpow.pop %v4178
  %v4180 = vmul.f32 %v4058, 1.442695
  %v4181 = vpow.pop %v4180
  %v4182 = vmul.f32 %v4059, 1.442695
  %v4183 = vpow.pop %v4182
  %v4184 = vmul.f32 %v4060, 1.442695
  %v4185 = vpow.pop %v4184
  %v4186 = vmul.f32 %v4061, 1.442695
  %v4187 = vpow.pop %v4186
  %v4188 = vmul.f32 %v4062, 1.442695
  %v4189 = vpow.pop %v4188
  %v4190 = vmul.f32 %v4063, 1.442695
  %v4191 = vpow.pop %v4190
  %4256 = vrot.lane.b32.xlu0 %v4065, 120
  %v4257 = vpop.permute.xlu0 %4256
  %4258 = vrot.lane.b32.xlu0 %v4067, 120
  %v4259 = vpop.permute.xlu0 %4258
  %4260 = vrot.lane.b32.xlu0 %v4069, 120
  %v4261 = vpop.permute.xlu0 %4260
  %4262 = vrot.lane.b32.xlu0 %v4071, 120
  %v4263 = vpop.permute.xlu0 %4262
  %4264 = vrot.lane.b32.xlu0 %v4073, 120
  %v4265 = vpop.permute.xlu0 %4264
  %4266 = vrot.lane.b32.xlu0 %v4075, 120
  %v4267 = vpop.permute.xlu0 %4266
  %4268 = vrot.lane.b32.xlu0 %v4077, 120
  %v4269 = vpop.permute.xlu0 %4268
  %4270 = vrot.lane.b32.xlu0 %v4079, 120
  %v4271 = vpop.permute.xlu0 %4270
  %4272 = vrot.lane.b32.xlu0 %v4081, 120
  %v4273 = vpop.permute.xlu0 %4272
  %4274 = vrot.lane.b32.xlu0 %v4083, 120
  %v4275 = vpop.permute.xlu0 %4274
  %4276 = vrot.lane.b32.xlu0 %v4085, 120
  %v4277 = vpop.permute.xlu0 %4276
  %4278 = vrot.lane.b32.xlu0 %v4087, 120
  %v4279 = vpop.permute.xlu0 %4278
  %4280 = vrot.lane.b32.xlu0 %v4089, 120
  %v4281 = vpop.permute.xlu0 %4280
  %4282 = vrot.lane.b32.xlu0 %v4091, 120
  %v4283 = vpop.permute.xlu0 %4282
  %4284 = vrot.lane.b32.xlu0 %v4093, 120
  %v4285 = vpop.permute.xlu0 %4284
  %4286 = vrot.lane.b32.xlu0 %v4095, 120
  %v4287 = vpop.permute.xlu0 %4286
  %4288 = vrot.lane.b32.xlu0 %v4097, 120
  %v4289 = vpop.permute.xlu0 %4288
  %4290 = vrot.lane.b32.xlu0 %v4099, 120
  %v4291 = vpop.permute.xlu0 %4290
  %4292 = vrot.lane.b32.xlu0 %v4101, 120
  %v4293 = vpop.permute.xlu0 %4292
  %4294 = vrot.lane.b32.xlu0 %v4103, 120
  %v4295 = vpop.permute.xlu0 %4294
  %4296 = vrot.lane.b32.xlu0 %v4105, 120
  %v4297 = vpop.permute.xlu0 %4296
  %4298 = vrot.lane.b32.xlu0 %v4107, 120
  %v4299 = vpop.permute.xlu0 %4298
  %4300 = vrot.lane.b32.xlu0 %v4109, 120
  %v4301 = vpop.permute.xlu0 %4300
  %4302 = vrot.lane.b32.xlu0 %v4111, 120
  %v4303 = vpop.permute.xlu0 %4302
  %4304 = vrot.lane.b32.xlu0 %v4113, 120
  %v4305 = vpop.permute.xlu0 %4304
  %4306 = vrot.lane.b32.xlu0 %v4115, 120
  %v4307 = vpop.permute.xlu0 %4306
  %4308 = vrot.lane.b32.xlu0 %v4117, 120
  %v4309 = vpop.permute.xlu0 %4308
  %4310 = vrot.lane.b32.xlu0 %v4119, 120
  %v4311 = vpop.permute.xlu0 %4310
  %4312 = vrot.lane.b32.xlu0 %v4121, 120
  %v4313 = vpop.permute.xlu0 %4312
  %4314 = vrot.lane.b32.xlu0 %v4123, 120
  %v4315 = vpop.permute.xlu0 %4314
  %4316 = vrot.lane.b32.xlu0 %v4125, 120
  %v4317 = vpop.permute.xlu0 %4316
  %4318 = vrot.lane.b32.xlu0 %v4127, 120
  %v4319 = vpop.permute.xlu0 %4318
  %4320 = vrot.lane.b32.xlu0 %v4129, 120
  %v4321 = vpop.permute.xlu0 %4320
  %4322 = vrot.lane.b32.xlu0 %v4131, 120
  %v4323 = vpop.permute.xlu0 %4322
  %4324 = vrot.lane.b32.xlu0 %v4133, 120
  %v4325 = vpop.permute.xlu0 %4324
  %4326 = vrot.lane.b32.xlu0 %v4135, 120
  %v4327 = vpop.permute.xlu0 %4326
  %4328 = vrot.lane.b32.xlu0 %v4137, 120
  %v4329 = vpop.permute.xlu0 %4328
  %4330 = vrot.lane.b32.xlu0 %v4139, 120
  %v4331 = vpop.permute.xlu0 %4330
  %4332 = vrot.lane.b32.xlu0 %v4141, 120
  %v4333 = vpop.permute.xlu0 %4332
  %4334 = vrot.lane.b32.xlu0 %v4143, 120
  %v4335 = vpop.permute.xlu0 %4334
  %4336 = vrot.lane.b32.xlu0 %v4145, 120
  %v4337 = vpop.permute.xlu0 %4336
  %4338 = vrot.lane.b32.xlu0 %v4147, 120
  %v4339 = vpop.permute.xlu0 %4338
  %4340 = vrot.lane.b32.xlu0 %v4149, 120
  %v4341 = vpop.permute.xlu0 %4340
  %4342 = vrot.lane.b32.xlu0 %v4151, 120
  %v4343 = vpop.permute.xlu0 %4342
  %4344 = vrot.lane.b32.xlu0 %v4153, 120
  %v4345 = vpop.permute.xlu0 %4344
  %4346 = vrot.lane.b32.xlu0 %v4155, 120
  %v4347 = vpop.permute.xlu0 %4346
  %4348 = vrot.lane.b32.xlu0 %v4157, 120
  %v4349 = vpop.permute.xlu0 %4348
  %4350 = vrot.lane.b32.xlu0 %v4159, 120
  %v4351 = vpop.permute.xlu0 %4350
  %4352 = vrot.lane.b32.xlu0 %v4161, 120
  %v4353 = vpop.permute.xlu0 %4352
  %4354 = vrot.lane.b32.xlu0 %v4163, 120
  %v4355 = vpop.permute.xlu0 %4354
  %4356 = vrot.lane.b32.xlu0 %v4165, 120
  %v4357 = vpop.permute.xlu0 %4356
  %4358 = vrot.lane.b32.xlu0 %v4167, 120
  %v4359 = vpop.permute.xlu0 %4358
  %4360 = vrot.lane.b32.xlu0 %v4169, 120
  %v4361 = vpop.permute.xlu0 %4360
  %4362 = vrot.lane.b32.xlu0 %v4171, 120
  %v4363 = vpop.permute.xlu0 %4362
  %4364 = vrot.lane.b32.xlu0 %v4173, 120
  %v4365 = vpop.permute.xlu0 %4364
  %4366 = vrot.lane.b32.xlu0 %v4175, 120
  %v4367 = vpop.permute.xlu0 %4366
  %4368 = vrot.lane.b32.xlu0 %v4177, 120
  %v4369 = vpop.permute.xlu0 %4368
  %4370 = vrot.lane.b32.xlu0 %v4179, 120
  %v4371 = vpop.permute.xlu0 %4370
  %4372 = vrot.lane.b32.xlu0 %v4181, 120
  %v4373 = vpop.permute.xlu0 %4372
  %4374 = vrot.lane.b32.xlu0 %v4183, 120
  %v4375 = vpop.permute.xlu0 %4374
  %4376 = vrot.lane.b32.xlu0 %v4185, 120
  %v4377 = vpop.permute.xlu0 %4376
  %4378 = vrot.lane.b32.xlu0 %v4187, 120
  %v4379 = vpop.permute.xlu0 %4378
  %4380 = vrot.lane.b32.xlu0 %v4189, 120
  %v4381 = vpop.permute.xlu0 %4380
  %4382 = vrot.lane.b32.xlu0 %v4191, 120
  %v4383 = vpop.permute.xlu0 %4382
  %v4448 = vmul.f32 %v3936, %v4257
  %v4449 = vmul.f32 %v3937, %v4259
  %v4450 = vmul.f32 %v3938, %v4261
  %v4451 = vmul.f32 %v3939, %v4263
  %v4452 = vmul.f32 %v3940, %v4265
  %v4453 = vmul.f32 %v3941, %v4267
  %v4454 = vmul.f32 %v3942, %v4269
  %v4455 = vmul.f32 %v3943, %v4271
  %v4456 = vmul.f32 %v3944, %v4273
  %v4457 = vmul.f32 %v3945, %v4275
  %v4458 = vmul.f32 %v3946, %v4277
  %v4459 = vmul.f32 %v3947, %v4279
  %v4460 = vmul.f32 %v3948, %v4281
  %v4461 = vmul.f32 %v3949, %v4283
  %v4462 = vmul.f32 %v3950, %v4285
  %v4463 = vmul.f32 %v3951, %v4287
  %v4464 = vmul.f32 %v3952, %v4289
  %v4465 = vmul.f32 %v3953, %v4291
  %v4466 = vmul.f32 %v3954, %v4293
  %v4467 = vmul.f32 %v3955, %v4295
  %v4468 = vmul.f32 %v3956, %v4297
  %v4469 = vmul.f32 %v3957, %v4299
  %v4470 = vmul.f32 %v3958, %v4301
  %v4471 = vmul.f32 %v3959, %v4303
  %v4472 = vmul.f32 %v3960, %v4305
  %v4473 = vmul.f32 %v3961, %v4307
  %v4474 = vmul.f32 %v3962, %v4309
  %v4475 = vmul.f32 %v3963, %v4311
  %v4476 = vmul.f32 %v3964, %v4313
  %v4477 = vmul.f32 %v3965, %v4315
  %v4478 = vmul.f32 %v3966, %v4317
  %v4479 = vmul.f32 %v3967, %v4319
  %v4480 = vmul.f32 %v3968, %v4321
  %v4481 = vmul.f32 %v3969, %v4323
  %v4482 = vmul.f32 %v3970, %v4325
  %v4483 = vmul.f32 %v3971, %v4327
  %v4484 = vmul.f32 %v3972, %v4329
  %v4485 = vmul.f32 %v3973, %v4331
  %v4486 = vmul.f32 %v3974, %v4333
  %v4487 = vmul.f32 %v3975, %v4335
  %v4488 = vmul.f32 %v3976, %v4337
  %v4489 = vmul.f32 %v3977, %v4339
  %v4490 = vmul.f32 %v3978, %v4341
  %v4491 = vmul.f32 %v3979, %v4343
  %v4492 = vmul.f32 %v3980, %v4345
  %v4493 = vmul.f32 %v3981, %v4347
  %v4494 = vmul.f32 %v3982, %v4349
  %v4495 = vmul.f32 %v3983, %v4351
  %v4496 = vmul.f32 %v3984, %v4353
  %v4497 = vmul.f32 %v3985, %v4355
  %v4498 = vmul.f32 %v3986, %v4357
  %v4499 = vmul.f32 %v3987, %v4359
  %v4500 = vmul.f32 %v3988, %v4361
  %v4501 = vmul.f32 %v3989, %v4363
  %v4502 = vmul.f32 %v3990, %v4365
  %v4503 = vmul.f32 %v3991, %v4367
  %v4504 = vmul.f32 %v3992, %v4369
  %v4505 = vmul.f32 %v3993, %v4371
  %v4506 = vmul.f32 %v3994, %v4373
  %v4507 = vmul.f32 %v3995, %v4375
  %v4508 = vmul.f32 %v3996, %v4377
  %v4509 = vmul.f32 %v3997, %v4379
  %v4510 = vmul.f32 %v3998, %v4381
  %v4511 = vmul.f32 %v3999, %v4383
  %v4512 = vadd.f32 %v3618, %v4448
  %v4513 = vadd.f32 %v3621, %v4449
  %v4514 = vadd.f32 %v3626, %v4450
  %v4515 = vadd.f32 %v3629, %v4451
  %v4516 = vadd.f32 %v3634, %v4452
  %v4517 = vadd.f32 %v3637, %v4453
  %v4518 = vadd.f32 %v3642, %v4454
  %v4519 = vadd.f32 %v3645, %v4455
  %v4520 = vadd.f32 %v3650, %v4456
  %v4521 = vadd.f32 %v3653, %v4457
  %v4522 = vadd.f32 %v3658, %v4458
  %v4523 = vadd.f32 %v3661, %v4459
  %v4524 = vadd.f32 %v3666, %v4460
  %v4525 = vadd.f32 %v3669, %v4461
  %v4526 = vadd.f32 %v3674, %v4462
  %v4527 = vadd.f32 %v3677, %v4463
  %v4528 = vadd.f32 %v3682, %v4464
  %v4529 = vadd.f32 %v3685, %v4465
  %v4530 = vadd.f32 %v3690, %v4466
  %v4531 = vadd.f32 %v3693, %v4467
  %v4532 = vadd.f32 %v3698, %v4468
  %v4533 = vadd.f32 %v3701, %v4469
  %v4534 = vadd.f32 %v3706, %v4470
  %v4535 = vadd.f32 %v3709, %v4471
  %v4536 = vadd.f32 %v3714, %v4472
  %v4537 = vadd.f32 %v3717, %v4473
  %v4538 = vadd.f32 %v3722, %v4474
  %v4539 = vadd.f32 %v3725, %v4475
  %v4540 = vadd.f32 %v3730, %v4476
  %v4541 = vadd.f32 %v3733, %v4477
  %v4542 = vadd.f32 %v3738, %v4478
  %v4543 = vadd.f32 %v3741, %v4479
  %v4544 = vadd.f32 %v3746, %v4480
  %v4545 = vadd.f32 %v3749, %v4481
  %v4546 = vadd.f32 %v3754, %v4482
  %v4547 = vadd.f32 %v3757, %v4483
  %v4548 = vadd.f32 %v3762, %v4484
  %v4549 = vadd.f32 %v3765, %v4485
  %v4550 = vadd.f32 %v3770, %v4486
  %v4551 = vadd.f32 %v3773, %v4487
  %v4552 = vadd.f32 %v3778, %v4488
  %v4553 = vadd.f32 %v3781, %v4489
  %v4554 = vadd.f32 %v3786, %v4490
  %v4555 = vadd.f32 %v3789, %v4491
  %v4556 = vadd.f32 %v3794, %v4492
  %v4557 = vadd.f32 %v3797, %v4493
  %v4558 = vadd.f32 %v3802, %v4494
  %v4559 = vadd.f32 %v3805, %v4495
  %v4560 = vadd.f32 %v3810, %v4496
  %v4561 = vadd.f32 %v3813, %v4497
  %v4562 = vadd.f32 %v3818, %v4498
  %v4563 = vadd.f32 %v3821, %v4499
  %v4564 = vadd.f32 %v3826, %v4500
  %v4565 = vadd.f32 %v3829, %v4501
  %v4566 = vadd.f32 %v3834, %v4502
  %v4567 = vadd.f32 %v3837, %v4503
  %v4568 = vadd.f32 %v3842, %v4504
  %v4569 = vadd.f32 %v3845, %v4505
  %v4570 = vadd.f32 %v3850, %v4506
  %v4571 = vadd.f32 %v3853, %v4507
  %v4572 = vadd.f32 %v3858, %v4508
  %v4573 = vadd.f32 %v3861, %v4509
  %v4574 = vadd.f32 %v3866, %v4510
  %v4575 = vadd.f32 %v3869, %v4511
  %v4576 = vpack.c.bf16 %v4513, %v4512
  %v4577 = vpack.c.bf16 %v4515, %v4514
  %v4578 = vpack.c.bf16 %v4517, %v4516
  %v4579 = vpack.c.bf16 %v4519, %v4518
  %v4580 = vpack.c.bf16 %v4521, %v4520
  %v4581 = vpack.c.bf16 %v4523, %v4522
  %v4582 = vpack.c.bf16 %v4525, %v4524
  %v4583 = vpack.c.bf16 %v4527, %v4526
  %v4584 = vpack.c.bf16 %v4529, %v4528
  %v4585 = vpack.c.bf16 %v4531, %v4530
  %v4586 = vpack.c.bf16 %v4533, %v4532
  %v4587 = vpack.c.bf16 %v4535, %v4534
  %v4588 = vpack.c.bf16 %v4537, %v4536
  %v4589 = vpack.c.bf16 %v4539, %v4538
  %v4590 = vpack.c.bf16 %v4541, %v4540
  %v4591 = vpack.c.bf16 %v4543, %v4542
  %v4592 = vpack.c.bf16 %v4545, %v4544
  %v4593 = vpack.c.bf16 %v4547, %v4546
  %v4594 = vpack.c.bf16 %v4549, %v4548
  %v4595 = vpack.c.bf16 %v4551, %v4550
  %v4596 = vpack.c.bf16 %v4553, %v4552
  %v4597 = vpack.c.bf16 %v4555, %v4554
  %v4598 = vpack.c.bf16 %v4557, %v4556
  %v4599 = vpack.c.bf16 %v4559, %v4558
  %v4600 = vpack.c.bf16 %v4561, %v4560
  %v4601 = vpack.c.bf16 %v4563, %v4562
  %v4602 = vpack.c.bf16 %v4565, %v4564
  %v4603 = vpack.c.bf16 %v4567, %v4566
  %v4604 = vpack.c.bf16 %v4569, %v4568
  %v4605 = vpack.c.bf16 %v4571, %v4570
  %v4606 = vpack.c.bf16 %v4573, %v4572
  %v4607 = vpack.c.bf16 %v4575, %v4574
  %v4608 = vld [vmem:[%s4] sm:$0xf]
  %vm4609 = vcmask 64512
  %v4611 = vsel %vm4609, %v4576, 0
  %v4614 = vsel %vm4609, %v4577, 0
  %v4617 = vsel %vm4609, %v4578, 0
  %v4620 = vsel %vm4609, %v4579, 0
  %v4623 = vsel %vm4609, %v4580, 0
  %v4626 = vsel %vm4609, %v4581, 0
  %v4629 = vsel %vm4609, %v4582, 0
  %v4632 = vsel %vm4609, %v4583, 0
  %v4635 = vsel %vm4609, %v4584, 0
  %v4638 = vsel %vm4609, %v4585, 0
  %v4641 = vsel %vm4609, %v4586, 0
  %v4644 = vsel %vm4609, %v4587, 0
  %v4647 = vsel %vm4609, %v4588, 0
  %v4650 = vsel %vm4609, %v4589, 0
  %v4653 = vsel %vm4609, %v4590, 0
  %v4656 = vsel %vm4609, %v4591, 0
  %v4659 = vsel %vm4609, %v4592, 0
  %v4662 = vsel %vm4609, %v4593, 0
  %v4665 = vsel %vm4609, %v4594, 0
  %v4668 = vsel %vm4609, %v4595, 0
  %v4671 = vsel %vm4609, %v4596, 0
  %v4674 = vsel %vm4609, %v4597, 0
  %v4677 = vsel %vm4609, %v4598, 0
  %v4680 = vsel %vm4609, %v4599, 0
  %v4683 = vsel %vm4609, %v4600, 0
  %v4686 = vsel %vm4609, %v4601, 0
  %v4689 = vsel %vm4609, %v4602, 0
  %v4692 = vsel %vm4609, %v4603, 0
  %v4695 = vsel %vm4609, %v4604, 0
  %v4698 = vsel %vm4609, %v4605, 0
  %v4701 = vsel %vm4609, %v4606, 0
  %v4704 = vsel %vm4609, %v4607, 0
  %vm4706 = vcmask 1043456
  %v4708 = vsel %vm4706, %v4608, 0
  %4710 = vmatprep.subr.bf16.mxu0 0
  %4711 = vmatpush1.bf16.msra.mxu0 %v4708
  %4712 = vmatprep.subr.bf16.mxu0 0
  %4713 = vmatpush1.bf16.msra.mxu0 0
  %4714 = vmatprep.subr.bf16.mxu0 0
  %4715 = vmatpush1.bf16.msra.mxu0 0
  %4716 = vmatprep.subr.bf16.mxu0 0
  %4717 = vmatpush1.bf16.msra.mxu0 0
  %4718 = vmatprep.subr.bf16.mxu0 0
  %4719 = vmatpush1.bf16.msra.mxu0 0
  %4720 = vmatprep.subr.bf16.mxu0 0
  %4721 = vmatpush1.bf16.msra.mxu0 0
  %4722 = vmatprep.subr.bf16.mxu0 0
  %4723 = vmatpush1.bf16.msra.mxu0 0
  %4724 = vmatprep.subr.bf16.mxu0 0
  %4725 = vmatpush1.bf16.msra.mxu0 0
  %4726 = vmatprep.subr.bf16.mxu0 0
  %4727 = vmatpush1.bf16.msra.mxu0 0
  %4728 = vmatprep.subr.bf16.mxu0 0
  %4729 = vmatpush1.bf16.msra.mxu0 0
  %4730 = vmatprep.subr.bf16.mxu0 0
  %4731 = vmatpush1.bf16.msra.mxu0 0
  %4732 = vmatprep.subr.bf16.mxu0 0
  %4733 = vmatpush1.bf16.msra.mxu0 0
  %4734 = vmatprep.subr.bf16.mxu0 0
  %4735 = vmatpush1.bf16.msra.mxu0 0
  %4736 = vmatprep.subr.bf16.mxu0 0
  %4737 = vmatpush1.bf16.msra.mxu0 0
  %4738 = vmatprep.subr.bf16.mxu0 0
  %4739 = vmatpush1.bf16.msra.mxu0 0
  %4740 = vmatprep.subr.bf16.mxu0 0
  %4741 = vmatpush1.bf16.msra.mxu0 0
  %4742 = vmatprep.mubr.bf16.mxu0 0
  %4743 = vmatmul.mubr.bf16.gmra.mrb[0].mxu0 %v4611
  %v4744 = vpop.f32.mrb[0].mxu0
  %v4745 = vadd.f32 0.0, %v4744
  %v4746 = vpop.f32.mrb[0].mxu0
  %v4747 = vpop.f32.mrb[0].mxu0
  %v4748 = vadd.f32 0.0, %v4747
  %v4749 = vpop.f32.mrb[0].mxu0
  %4750 = vmatprep.mubr.bf16.mxu0 0
  %4751 = vmatmul.mubr.bf16.gmra.mrb[0].mxu0 %v4614
  %v4752 = vpop.f32.mrb[0].mxu0
  %v4753 = vadd.f32 0.0, %v4752
  %v4754 = vpop.f32.mrb[0].mxu0
  %v4755 = vpop.f32.mrb[0].mxu0
  %v4756 = vadd.f32 0.0, %v4755
  %v4757 = vpop.f32.mrb[0].mxu0
  %4758 = vmatprep.mubr.bf16.mxu0 0
  %4759 = vmatmul.mubr.bf16.gmra.mrb[0].mxu0 %v4617
  %v4760 = vpop.f32.mrb[0].mxu0
  %v4761 = vadd.f32 0.0, %v4760
  %v4762 = vpop.f32.mrb[0].mxu0
  %v4763 = vpop.f32.mrb[0].mxu0
  %v4764 = vadd.f32 0.0, %v4763
  %v4765 = vpop.f32.mrb[0].mxu0
  %4766 = vmatprep.mubr.bf16.mxu0 0
  %4767 = vmatmul.mubr.bf16.gmra.mrb[0].mxu0 %v4620
  %v4768 = vpop.f32.mrb[0].mxu0
  %v4769 = vadd.f32 0.0, %v4768
  %v4770 = vpop.f32.mrb[0].mxu0
  %v4771 = vpop.f32.mrb[0].mxu0
  %v4772 = vadd.f32 0.0, %v4771
  %v4773 = vpop.f32.mrb[0].mxu0
  %4774 = vmatprep.mubr.bf16.mxu0 0
  %4775 = vmatmul.mubr.bf16.gmra.mrb[0].mxu0 %v4623
  %v4776 = vpop.f32.mrb[0].mxu0
  %v4777 = vadd.f32 0.0, %v4776
  %v4778 = vpop.f32.mrb[0].mxu0
  %v4779 = vpop.f32.mrb[0].mxu0
  %v4780 = vadd.f32 0.0, %v4779
  %v4781 = vpop.f32.mrb[0].mxu0
  %4782 = vmatprep.mubr.bf16.mxu0 0
  %4783 = vmatmul.mubr.bf16.gmra.mrb[0].mxu0 %v4626
  %v4784 = vpop.f32.mrb[0].mxu0
  %v4785 = vadd.f32 0.0, %v4784
  %v4786 = vpop.f32.mrb[0].mxu0
  %v4787 = vpop.f32.mrb[0].mxu0
  %v4788 = vadd.f32 0.0, %v4787
  %v4789 = vpop.f32.mrb[0].mxu0
  %4790 = vmatprep.mubr.bf16.mxu0 0
  %4791 = vmatmul.mubr.bf16.gmra.mrb[0].mxu0 %v4629
  %v4792 = vpop.f32.mrb[0].mxu0
  %v4793 = vadd.f32 0.0, %v4792
  %v4794 = vpop.f32.mrb[0].mxu0
  %v4795 = vpop.f32.mrb[0].mxu0
  %v4796 = vadd.f32 0.0, %v4795
  %v4797 = vpop.f32.mrb[0].mxu0
  %4798 = vmatprep.mubr.bf16.mxu0 0
  %4799 = vmatmul.mubr.bf16.gmra.mrb[0].mxu0 %v4632
  %v4800 = vpop.f32.mrb[0].mxu0
  %v4801 = vadd.f32 0.0, %v4800
  %v4802 = vpop.f32.mrb[0].mxu0
  %v4803 = vpop.f32.mrb[0].mxu0
  %v4804 = vadd.f32 0.0, %v4803
  %v4805 = vpop.f32.mrb[0].mxu0
  %4806 = vmatprep.mubr.bf16.mxu0 0
  %4807 = vmatmul.mubr.bf16.gmra.mrb[0].mxu0 %v4635
  %v4808 = vpop.f32.mrb[0].mxu0
  %v4809 = vadd.f32 0.0, %v4808
  %v4810 = vpop.f32.mrb[0].mxu0
  %v4811 = vpop.f32.mrb[0].mxu0
  %v4812 = vadd.f32 0.0, %v4811
  %v4813 = vpop.f32.mrb[0].mxu0
  %4814 = vmatprep.mubr.bf16.mxu0 0
  %4815 = vmatmul.mubr.bf16.gmra.mrb[0].mxu0 %v4638
  %v4816 = vpop.f32.mrb[0].mxu0
  %v4817 = vadd.f32 0.0, %v4816
  %v4818 = vpop.f32.mrb[0].mxu0
  %v4819 = vpop.f32.mrb[0].mxu0
  %v4820 = vadd.f32 0.0, %v4819
  %v4821 = vpop.f32.mrb[0].mxu0
  %4822 = vmatprep.mubr.bf16.mxu0 0
  %4823 = vmatmul.mubr.bf16.gmra.mrb[0].mxu0 %v4641
  %v4824 = vpop.f32.mrb[0].mxu0
  %v4825 = vadd.f32 0.0, %v4824
  %v4826 = vpop.f32.mrb[0].mxu0
  %v4827 = vpop.f32.mrb[0].mxu0
  %v4828 = vadd.f32 0.0, %v4827
  %v4829 = vpop.f32.mrb[0].mxu0
  %4830 = vmatprep.mubr.bf16.mxu0 0
  %4831 = vmatmul.mubr.bf16.gmra.mrb[0].mxu0 %v4644
  %v4832 = vpop.f32.mrb[0].mxu0
  %v4833 = vadd.f32 0.0, %v4832
  %v4834 = vpop.f32.mrb[0].mxu0
  %v4835 = vpop.f32.mrb[0].mxu0
  %v4836 = vadd.f32 0.0, %v4835
  %v4837 = vpop.f32.mrb[0].mxu0
  %4838 = vmatprep.mubr.bf16.mxu0 0
  %4839 = vmatmul.mubr.bf16.gmra.mrb[0].mxu0 %v4647
  %v4840 = vpop.f32.mrb[0].mxu0
  %v4841 = vadd.f32 0.0, %v4840
  %v4842 = vpop.f32.mrb[0].mxu0
  %v4843 = vpop.f32.mrb[0].mxu0
  %v4844 = vadd.f32 0.0, %v4843
  %v4845 = vpop.f32.mrb[0].mxu0
  %4846 = vmatprep.mubr.bf16.mxu0 0
  %4847 = vmatmul.mubr.bf16.gmra.mrb[0].mxu0 %v4650
  %v4848 = vpop.f32.mrb[0].mxu0
  %v4849 = vadd.f32 0.0, %v4848
  %v4850 = vpop.f32.mrb[0].mxu0
  %v4851 = vpop.f32.mrb[0].mxu0
  %v4852 = vadd.f32 0.0, %v4851
  %v4853 = vpop.f32.mrb[0].mxu0
  %4854 = vmatprep.mubr.bf16.mxu0 0
  %4855 = vmatmul.mubr.bf16.gmra.mrb[0].mxu0 %v4653
  %v4856 = vpop.f32.mrb[0].mxu0
  %v4857 = vadd.f32 0.0, %v4856
  %v4858 = vpop.f32.mrb[0].mxu0
  %v4859 = vpop.f32.mrb[0].mxu0
  %v4860 = vadd.f32 0.0, %v4859
  %v4861 = vpop.f32.mrb[0].mxu0
  %4862 = vmatprep.mubr.bf16.mxu0 0
  %4863 = vmatmul.mubr.bf16.gmra.mrb[0].mxu0 %v4656
  %v4864 = vpop.f32.mrb[0].mxu0
  %v4865 = vadd.f32 0.0, %v4864
  %v4866 = vpop.f32.mrb[0].mxu0
  %v4867 = vpop.f32.mrb[0].mxu0
  %v4868 = vadd.f32 0.0, %v4867
  %v4869 = vpop.f32.mrb[0].mxu0
  %4870 = vmatprep.mubr.bf16.mxu0 0
  %4871 = vmatmul.mubr.bf16.gmra.mrb[0].mxu0 %v4659
  %v4872 = vpop.f32.mrb[0].mxu0
  %v4873 = vadd.f32 0.0, %v4872
  %v4874 = vpop.f32.mrb[0].mxu0
  %v4875 = vpop.f32.mrb[0].mxu0
  %v4876 = vadd.f32 0.0, %v4875
  %v4877 = vpop.f32.mrb[0].mxu0
  %4878 = vmatprep.mubr.bf16.mxu0 0
  %4879 = vmatmul.mubr.bf16.gmra.mrb[0].mxu0 %v4662
  %v4880 = vpop.f32.mrb[0].mxu0
  %v4881 = vadd.f32 0.0, %v4880
  %v4882 = vpop.f32.mrb[0].mxu0
  %v4883 = vpop.f32.mrb[0].mxu0
  %v4884 = vadd.f32 0.0, %v4883
  %v4885 = vpop.f32.mrb[0].mxu0
  %4886 = vmatprep.mubr.bf16.mxu0 0
  %4887 = vmatmul.mubr.bf16.gmra.mrb[0].mxu0 %v4665
  %v4888 = vpop.f32.mrb[0].mxu0
  %v4889 = vadd.f32 0.0, %v4888
  %v4890 = vpop.f32.mrb[0].mxu0
  %v4891 = vpop.f32.mrb[0].mxu0
  %v4892 = vadd.f32 0.0, %v4891
  %v4893 = vpop.f32.mrb[0].mxu0
  %4894 = vmatprep.mubr.bf16.mxu0 0
  %4895 = vmatmul.mubr.bf16.gmra.mrb[0].mxu0 %v4668
  %v4896 = vpop.f32.mrb[0].mxu0
  %v4897 = vadd.f32 0.0, %v4896
  %v4898 = vpop.f32.mrb[0].mxu0
  %v4899 = vpop.f32.mrb[0].mxu0
  %v4900 = vadd.f32 0.0, %v4899
  %v4901 = vpop.f32.mrb[0].mxu0
  %4902 = vmatprep.mubr.bf16.mxu0 0
  %4903 = vmatmul.mubr.bf16.gmra.mrb[0].mxu0 %v4671
  %v4904 = vpop.f32.mrb[0].mxu0
  %v4905 = vadd.f32 0.0, %v4904
  %v4906 = vpop.f32.mrb[0].mxu0
  %v4907 = vpop.f32.mrb[0].mxu0
  %v4908 = vadd.f32 0.0, %v4907
  %v4909 = vpop.f32.mrb[0].mxu0
  %4910 = vmatprep.mubr.bf16.mxu0 0
  %4911 = vmatmul.mubr.bf16.gmra.mrb[0].mxu0 %v4674
  %v4912 = vpop.f32.mrb[0].mxu0
  %v4913 = vadd.f32 0.0, %v4912
  %v4914 = vpop.f32.mrb[0].mxu0
  %v4915 = vpop.f32.mrb[0].mxu0
  %v4916 = vadd.f32 0.0, %v4915
  %v4917 = vpop.f32.mrb[0].mxu0
  %4918 = vmatprep.mubr.bf16.mxu0 0
  %4919 = vmatmul.mubr.bf16.gmra.mrb[0].mxu0 %v4677
  %v4920 = vpop.f32.mrb[0].mxu0
  %v4921 = vadd.f32 0.0, %v4920
  %v4922 = vpop.f32.mrb[0].mxu0
  %v4923 = vpop.f32.mrb[0].mxu0
  %v4924 = vadd.f32 0.0, %v4923
  %v4925 = vpop.f32.mrb[0].mxu0
  %4926 = vmatprep.mubr.bf16.mxu0 0
  %4927 = vmatmul.mubr.bf16.gmra.mrb[0].mxu0 %v4680
  %v4928 = vpop.f32.mrb[0].mxu0
  %v4929 = vadd.f32 0.0, %v4928
  %v4930 = vpop.f32.mrb[0].mxu0
  %v4931 = vpop.f32.mrb[0].mxu0
  %v4932 = vadd.f32 0.0, %v4931
  %v4933 = vpop.f32.mrb[0].mxu0
  %4934 = vmatprep.mubr.bf16.mxu0 0
  %4935 = vmatmul.mubr.bf16.gmra.mrb[0].mxu0 %v4683
  %v4936 = vpop.f32.mrb[0].mxu0
  %v4937 = vadd.f32 0.0, %v4936
  %v4938 = vpop.f32.mrb[0].mxu0
  %v4939 = vpop.f32.mrb[0].mxu0
  %v4940 = vadd.f32 0.0, %v4939
  %v4941 = vpop.f32.mrb[0].mxu0
  %4942 = vmatprep.mubr.bf16.mxu0 0
  %4943 = vmatmul.mubr.bf16.gmra.mrb[0].mxu0 %v4686
  %v4944 = vpop.f32.mrb[0].mxu0
  %v4945 = vadd.f32 0.0, %v4944
  %v4946 = vpop.f32.mrb[0].mxu0
  %v4947 = vpop.f32.mrb[0].mxu0
  %v4948 = vadd.f32 0.0, %v4947
  %v4949 = vpop.f32.mrb[0].mxu0
  %4950 = vmatprep.mubr.bf16.mxu0 0
  %4951 = vmatmul.mubr.bf16.gmra.mrb[0].mxu0 %v4689
  %v4952 = vpop.f32.mrb[0].mxu0
  %v4953 = vadd.f32 0.0, %v4952
  %v4954 = vpop.f32.mrb[0].mxu0
  %v4955 = vpop.f32.mrb[0].mxu0
  %v4956 = vadd.f32 0.0, %v4955
  %v4957 = vpop.f32.mrb[0].mxu0
  %4958 = vmatprep.mubr.bf16.mxu0 0
  %4959 = vmatmul.mubr.bf16.gmra.mrb[0].mxu0 %v4692
  %v4960 = vpop.f32.mrb[0].mxu0
  %v4961 = vadd.f32 0.0, %v4960
  %v4962 = vpop.f32.mrb[0].mxu0
  %v4963 = vpop.f32.mrb[0].mxu0
  %v4964 = vadd.f32 0.0, %v4963
  %v4965 = vpop.f32.mrb[0].mxu0
  %4966 = vmatprep.mubr.bf16.mxu0 0
  %4967 = vmatmul.mubr.bf16.gmra.mrb[0].mxu0 %v4695
  %v4968 = vpop.f32.mrb[0].mxu0
  %v4969 = vadd.f32 0.0, %v4968
  %v4970 = vpop.f32.mrb[0].mxu0
  %v4971 = vpop.f32.mrb[0].mxu0
  %v4972 = vadd.f32 0.0, %v4971
  %v4973 = vpop.f32.mrb[0].mxu0
  %4974 = vmatprep.mubr.bf16.mxu0 0
  %4975 = vmatmul.mubr.bf16.gmra.mrb[0].mxu0 %v4698
  %v4976 = vpop.f32.mrb[0].mxu0
  %v4977 = vadd.f32 0.0, %v4976
  %v4978 = vpop.f32.mrb[0].mxu0
  %v4979 = vpop.f32.mrb[0].mxu0
  %v4980 = vadd.f32 0.0, %v4979
  %v4981 = vpop.f32.mrb[0].mxu0
  %4982 = vmatprep.mubr.bf16.mxu0 0
  %4983 = vmatmul.mubr.bf16.gmra.mrb[0].mxu0 %v4701
  %v4984 = vpop.f32.mrb[0].mxu0
  %v4985 = vadd.f32 0.0, %v4984
  %v4986 = vpop.f32.mrb[0].mxu0
  %v4987 = vpop.f32.mrb[0].mxu0
  %v4988 = vadd.f32 0.0, %v4987
  %v4989 = vpop.f32.mrb[0].mxu0
  %4990 = vmatprep.mubr.bf16.mxu0 0
  %4991 = vmatmul.mubr.bf16.gmra.mrb[0].mxu0 %v4704
  %v4992 = vpop.f32.mrb[0].mxu0
  %v4993 = vadd.f32 0.0, %v4992
  %v4994 = vpop.f32.mrb[0].mxu0
  %v4995 = vpop.f32.mrb[0].mxu0
  %v4996 = vadd.f32 0.0, %v4995
  %v4997 = vpop.f32.mrb[0].mxu0
  %4998 = vdwg.mxu0
  %v4999 = vadd.f32 %v4745, %v4748
  %v5000 = vadd.f32 %v4999, %v4753
  %v5001 = vadd.f32 %v5000, %v4756
  %v5002 = vadd.f32 %v5001, %v4761
  %v5003 = vadd.f32 %v5002, %v4764
  %v5004 = vadd.f32 %v5003, %v4769
  %v5005 = vadd.f32 %v5004, %v4772
  %v5006 = vadd.f32 %v5005, %v4777
  %v5007 = vadd.f32 %v5006, %v4780
  %v5008 = vadd.f32 %v5007, %v4785
  %v5009 = vadd.f32 %v5008, %v4788
  %v5010 = vadd.f32 %v5009, %v4793
  %v5011 = vadd.f32 %v5010, %v4796
  %v5012 = vadd.f32 %v5011, %v4801
  %v5013 = vadd.f32 %v5012, %v4804
  %v5014 = vadd.f32 %v5013, %v4809
  %v5015 = vadd.f32 %v5014, %v4812
  %v5016 = vadd.f32 %v5015, %v4817
  %v5017 = vadd.f32 %v5016, %v4820
  %v5018 = vadd.f32 %v5017, %v4825
  %v5019 = vadd.f32 %v5018, %v4828
  %v5020 = vadd.f32 %v5019, %v4833
  %v5021 = vadd.f32 %v5020, %v4836
  %v5022 = vadd.f32 %v5021, %v4841
  %v5023 = vadd.f32 %v5022, %v4844
  %v5024 = vadd.f32 %v5023, %v4849
  %v5025 = vadd.f32 %v5024, %v4852
  %v5026 = vadd.f32 %v5025, %v4857
  %v5027 = vadd.f32 %v5026, %v4860
  %v5028 = vadd.f32 %v5027, %v4865
  %v5029 = vadd.f32 %v5028, %v4868
  %v5030 = vadd.f32 %v5029, %v4873
  %v5031 = vadd.f32 %v5030, %v4876
  %v5032 = vadd.f32 %v5031, %v4881
  %v5033 = vadd.f32 %v5032, %v4884
  %v5034 = vadd.f32 %v5033, %v4889
  %v5035 = vadd.f32 %v5034, %v4892
  %v5036 = vadd.f32 %v5035, %v4897
  %v5037 = vadd.f32 %v5036, %v4900
  %v5038 = vadd.f32 %v5037, %v4905
  %v5039 = vadd.f32 %v5038, %v4908
  %v5040 = vadd.f32 %v5039, %v4913
  %v5041 = vadd.f32 %v5040, %v4916
  %v5042 = vadd.f32 %v5041, %v4921
  %v5043 = vadd.f32 %v5042, %v4924
  %v5044 = vadd.f32 %v5043, %v4929
  %v5045 = vadd.f32 %v5044, %v4932
  %v5046 = vadd.f32 %v5045, %v4937
  %v5047 = vadd.f32 %v5046, %v4940
  %v5048 = vadd.f32 %v5047, %v4945
  %v5049 = vadd.f32 %v5048, %v4948
  %v5050 = vadd.f32 %v5049, %v4953
  %v5051 = vadd.f32 %v5050, %v4956
  %v5052 = vadd.f32 %v5051, %v4961
  %v5053 = vadd.f32 %v5052, %v4964
  %v5054 = vadd.f32 %v5053, %v4969
  %v5055 = vadd.f32 %v5054, %v4972
  %v5056 = vadd.f32 %v5055, %v4977
  %v5057 = vadd.f32 %v5056, %v4980
  %v5058 = vadd.f32 %v5057, %v4985
  %v5059 = vadd.f32 %v5058, %v4988
  %v5060 = vadd.f32 %v5059, %v4993
  %v5061 = vadd.f32 %v5060, %v4996
  %v5062 = vrot.slane %v5061, 4
  %v5063 = vadd.f32 %v5061, %v5062
  %v5064 = vrot.slane %v5063, 2
  %v5065 = vadd.f32 %v5063, %v5064
  %v5066 = vrot.slane %v5065, 1
  %v5067 = vadd.f32 %v5065, %v5066
  %v5068 = vmul.f32 %v4745, %v4745
  %v5069 = vmul.f32 %v4748, %v4748
  %v5070 = vmul.f32 %v4753, %v4753
  %v5071 = vmul.f32 %v4756, %v4756
  %v5072 = vmul.f32 %v4761, %v4761
  %v5073 = vmul.f32 %v4764, %v4764
  %v5074 = vmul.f32 %v4769, %v4769
  %v5075 = vmul.f32 %v4772, %v4772
  %v5076 = vmul.f32 %v4777, %v4777
  %v5077 = vmul.f32 %v4780, %v4780
  %v5078 = vmul.f32 %v4785, %v4785
  %v5079 = vmul.f32 %v4788, %v4788
  %v5080 = vmul.f32 %v4793, %v4793
  %v5081 = vmul.f32 %v4796, %v4796
  %v5082 = vmul.f32 %v4801, %v4801
  %v5083 = vmul.f32 %v4804, %v4804
  %v5084 = vmul.f32 %v4809, %v4809
  %v5085 = vmul.f32 %v4812, %v4812
  %v5086 = vmul.f32 %v4817, %v4817
  %v5087 = vmul.f32 %v4820, %v4820
  %v5088 = vmul.f32 %v4825, %v4825
  %v5089 = vmul.f32 %v4828, %v4828
  %v5090 = vmul.f32 %v4833, %v4833
  %v5091 = vmul.f32 %v4836, %v4836
  %v5092 = vmul.f32 %v4841, %v4841
  %v5093 = vmul.f32 %v4844, %v4844
  %v5094 = vmul.f32 %v4849, %v4849
  %v5095 = vmul.f32 %v4852, %v4852
  %v5096 = vmul.f32 %v4857, %v4857
  %v5097 = vmul.f32 %v4860, %v4860
  %v5098 = vmul.f32 %v4865, %v4865
  %v5099 = vmul.f32 %v4868, %v4868
  %v5100 = vmul.f32 %v4873, %v4873
  %v5101 = vmul.f32 %v4876, %v4876
  %v5102 = vmul.f32 %v4881, %v4881
  %v5103 = vmul.f32 %v4884, %v4884
  %v5104 = vmul.f32 %v4889, %v4889
  %v5105 = vmul.f32 %v4892, %v4892
  %v5106 = vmul.f32 %v4897, %v4897
  %v5107 = vmul.f32 %v4900, %v4900
  %v5108 = vmul.f32 %v4905, %v4905
  %v5109 = vmul.f32 %v4908, %v4908
  %v5110 = vmul.f32 %v4913, %v4913
  %v5111 = vmul.f32 %v4916, %v4916
  %v5112 = vmul.f32 %v4921, %v4921
  %v5113 = vmul.f32 %v4924, %v4924
  %v5114 = vmul.f32 %v4929, %v4929
  %v5115 = vmul.f32 %v4932, %v4932
  %v5116 = vmul.f32 %v4937, %v4937
  %v5117 = vmul.f32 %v4940, %v4940
  %v5118 = vmul.f32 %v4945, %v4945
  %v5119 = vmul.f32 %v4948, %v4948
  %v5120 = vmul.f32 %v4953, %v4953
  %v5121 = vmul.f32 %v4956, %v4956
  %v5122 = vmul.f32 %v4961, %v4961
  %v5123 = vmul.f32 %v4964, %v4964
  %v5124 = vmul.f32 %v4969, %v4969
  %v5125 = vmul.f32 %v4972, %v4972
  %v5126 = vmul.f32 %v4977, %v4977
  %v5127 = vmul.f32 %v4980, %v4980
  %v5128 = vmul.f32 %v4985, %v4985
  %v5129 = vmul.f32 %v4988, %v4988
  %v5130 = vmul.f32 %v4993, %v4993
  %v5131 = vmul.f32 %v4996, %v4996
  %v5132 = vadd.f32 %v5068, %v5069
  %v5133 = vadd.f32 %v5132, %v5070
  %v5134 = vadd.f32 %v5133, %v5071
  %v5135 = vadd.f32 %v5134, %v5072
  %v5136 = vadd.f32 %v5135, %v5073
  %v5137 = vadd.f32 %v5136, %v5074
  %v5138 = vadd.f32 %v5137, %v5075
  %v5139 = vadd.f32 %v5138, %v5076
  %v5140 = vadd.f32 %v5139, %v5077
  %v5141 = vadd.f32 %v5140, %v5078
  %v5142 = vadd.f32 %v5141, %v5079
  %v5143 = vadd.f32 %v5142, %v5080
  %v5144 = vadd.f32 %v5143, %v5081
  %v5145 = vadd.f32 %v5144, %v5082
  %v5146 = vadd.f32 %v5145, %v5083
  %v5147 = vadd.f32 %v5146, %v5084
  %v5148 = vadd.f32 %v5147, %v5085
  %v5149 = vadd.f32 %v5148, %v5086
  %v5150 = vadd.f32 %v5149, %v5087
  %v5151 = vadd.f32 %v5150, %v5088
  %v5152 = vadd.f32 %v5151, %v5089
  %v5153 = vadd.f32 %v5152, %v5090
  %v5154 = vadd.f32 %v5153, %v5091
  %v5155 = vadd.f32 %v5154, %v5092
  %v5156 = vadd.f32 %v5155, %v5093
  %v5157 = vadd.f32 %v5156, %v5094
  %v5158 = vadd.f32 %v5157, %v5095
  %v5159 = vadd.f32 %v5158, %v5096
  %v5160 = vadd.f32 %v5159, %v5097
  %v5161 = vadd.f32 %v5160, %v5098
  %v5162 = vadd.f32 %v5161, %v5099
  %v5163 = vadd.f32 %v5162, %v5100
  %v5164 = vadd.f32 %v5163, %v5101
  %v5165 = vadd.f32 %v5164, %v5102
  %v5166 = vadd.f32 %v5165, %v5103
  %v5167 = vadd.f32 %v5166, %v5104
  %v5168 = vadd.f32 %v5167, %v5105
  %v5169 = vadd.f32 %v5168, %v5106
  %v5170 = vadd.f32 %v5169, %v5107
  %v5171 = vadd.f32 %v5170, %v5108
  %v5172 = vadd.f32 %v5171, %v5109
  %v5173 = vadd.f32 %v5172, %v5110
  %v5174 = vadd.f32 %v5173, %v5111
  %v5175 = vadd.f32 %v5174, %v5112
  %v5176 = vadd.f32 %v5175, %v5113
  %v5177 = vadd.f32 %v5176, %v5114
  %v5178 = vadd.f32 %v5177, %v5115
  %v5179 = vadd.f32 %v5178, %v5116
  %v5180 = vadd.f32 %v5179, %v5117
  %v5181 = vadd.f32 %v5180, %v5118
  %v5182 = vadd.f32 %v5181, %v5119
  %v5183 = vadd.f32 %v5182, %v5120
  %v5184 = vadd.f32 %v5183, %v5121
  %v5185 = vadd.f32 %v5184, %v5122
  %v5186 = vadd.f32 %v5185, %v5123
  %v5187 = vadd.f32 %v5186, %v5124
  %v5188 = vadd.f32 %v5187, %v5125
  %v5189 = vadd.f32 %v5188, %v5126
  %v5190 = vadd.f32 %v5189, %v5127
  %v5191 = vadd.f32 %v5190, %v5128
  %v5192 = vadd.f32 %v5191, %v5129
  %v5193 = vadd.f32 %v5192, %v5130
  %v5194 = vadd.f32 %v5193, %v5131
  %v5195 = vrot.slane %v5194, 4
  %v5196 = vadd.f32 %v5194, %v5195
  %v5197 = vrot.slane %v5196, 2
  %v5198 = vadd.f32 %v5196, %v5197
  %v5199 = vrot.slane %v5198, 1
  %v5200 = vadd.f32 %v5198, %v5199
  %v5201 = vmul.f32 %v5067, 0.001953125
  %v5202 = vmul.f32 %v5200, 0.001953125
  %v5203 = vmul.f32 %v5201, %v5201
  %v5204 = vsub.f32 %v5202, %v5203
  %v5205 = vmax.f32 %v5204, 0.0
  %v5206 = vadd.f32 %v5205, 0.001
  %v5207 = vrsqrt.pop %v5206
  %v5208 = vmul.f32 %v32, %v5207
  %v5209 = vmul.f32 %v5201, %v5208
  %v5210 = vsub.f32 %v33, %v5209
  %v5211 = vlaneseq
  %v5212 = vshrl.u32 %v5211, 7
  %v5213 = vsub.s32 4, %v5212
  %v5214 = vrot.slane %v5208, %v5213
  %v5215 = vmul.f32 %v4745, %v5214
  %v5216 = vmul.f32 %v4748, %v5214
  %v5217 = vmul.f32 %v4753, %v5214
  %v5218 = vmul.f32 %v4756, %v5214
  %v5219 = vmul.f32 %v4761, %v5214
  %v5220 = vmul.f32 %v4764, %v5214
  %v5221 = vmul.f32 %v4769, %v5214
  %v5222 = vmul.f32 %v4772, %v5214
  %v5223 = vmul.f32 %v4777, %v5214
  %v5224 = vmul.f32 %v4780, %v5214
  %v5225 = vmul.f32 %v4785, %v5214
  %v5226 = vmul.f32 %v4788, %v5214
  %v5227 = vmul.f32 %v4793, %v5214
  %v5228 = vmul.f32 %v4796, %v5214
  %v5229 = vmul.f32 %v4801, %v5214
  %v5230 = vmul.f32 %v4804, %v5214
  %v5231 = vmul.f32 %v4809, %v5214
  %v5232 = vmul.f32 %v4812, %v5214
  %v5233 = vmul.f32 %v4817, %v5214
  %v5234 = vmul.f32 %v4820, %v5214
  %v5235 = vmul.f32 %v4825, %v5214
  %v5236 = vmul.f32 %v4828, %v5214
  %v5237 = vmul.f32 %v4833, %v5214
  %v5238 = vmul.f32 %v4836, %v5214
  %v5239 = vmul.f32 %v4841, %v5214
  %v5240 = vmul.f32 %v4844, %v5214
  %v5241 = vmul.f32 %v4849, %v5214
  %v5242 = vmul.f32 %v4852, %v5214
  %v5243 = vmul.f32 %v4857, %v5214
  %v5244 = vmul.f32 %v4860, %v5214
  %v5245 = vmul.f32 %v4865, %v5214
  %v5246 = vmul.f32 %v4868, %v5214
  %v5247 = vmul.f32 %v4873, %v5214
  %v5248 = vmul.f32 %v4876, %v5214
  %v5249 = vmul.f32 %v4881, %v5214
  %v5250 = vmul.f32 %v4884, %v5214
  %v5251 = vmul.f32 %v4889, %v5214
  %v5252 = vmul.f32 %v4892, %v5214
  %v5253 = vmul.f32 %v4897, %v5214
  %v5254 = vmul.f32 %v4900, %v5214
  %v5255 = vmul.f32 %v4905, %v5214
  %v5256 = vmul.f32 %v4908, %v5214
  %v5257 = vmul.f32 %v4913, %v5214
  %v5258 = vmul.f32 %v4916, %v5214
  %v5259 = vmul.f32 %v4921, %v5214
  %v5260 = vmul.f32 %v4924, %v5214
  %v5261 = vmul.f32 %v4929, %v5214
  %v5262 = vmul.f32 %v4932, %v5214
  %v5263 = vmul.f32 %v4937, %v5214
  %v5264 = vmul.f32 %v4940, %v5214
  %v5265 = vmul.f32 %v4945, %v5214
  %v5266 = vmul.f32 %v4948, %v5214
  %v5267 = vmul.f32 %v4953, %v5214
  %v5268 = vmul.f32 %v4956, %v5214
  %v5269 = vmul.f32 %v4961, %v5214
  %v5270 = vmul.f32 %v4964, %v5214
  %v5271 = vmul.f32 %v4969, %v5214
  %v5272 = vmul.f32 %v4972, %v5214
  %v5273 = vmul.f32 %v4977, %v5214
  %v5274 = vmul.f32 %v4980, %v5214
  %v5275 = vmul.f32 %v4985, %v5214
  %v5276 = vmul.f32 %v4988, %v5214
  %v5277 = vmul.f32 %v4993, %v5214
  %v5278 = vmul.f32 %v4996, %v5214
  %v5279 = vlaneseq
  %v5280 = vshrl.u32 %v5279, 7
  %v5281 = vsub.s32 4, %v5280
  %v5282 = vrot.slane %v5210, %v5281
  %v5283 = vadd.f32 %v5215, %v5282
  %v5284 = vadd.f32 %v5216, %v5282
  %v5285 = vadd.f32 %v5217, %v5282
  %v5286 = vadd.f32 %v5218, %v5282
  %v5287 = vadd.f32 %v5219, %v5282
  %v5288 = vadd.f32 %v5220, %v5282
  %v5289 = vadd.f32 %v5221, %v5282
  %v5290 = vadd.f32 %v5222, %v5282
  %v5291 = vadd.f32 %v5223, %v5282
  %v5292 = vadd.f32 %v5224, %v5282
  %v5293 = vadd.f32 %v5225, %v5282
  %v5294 = vadd.f32 %v5226, %v5282
  %v5295 = vadd.f32 %v5227, %v5282
  %v5296 = vadd.f32 %v5228, %v5282
  %v5297 = vadd.f32 %v5229, %v5282
  %v5298 = vadd.f32 %v5230, %v5282
  %v5299 = vadd.f32 %v5231, %v5282
  %v5300 = vadd.f32 %v5232, %v5282
  %v5301 = vadd.f32 %v5233, %v5282
  %v5302 = vadd.f32 %v5234, %v5282
  %v5303 = vadd.f32 %v5235, %v5282
  %v5304 = vadd.f32 %v5236, %v5282
  %v5305 = vadd.f32 %v5237, %v5282
  %v5306 = vadd.f32 %v5238, %v5282
  %v5307 = vadd.f32 %v5239, %v5282
  %v5308 = vadd.f32 %v5240, %v5282
  %v5309 = vadd.f32 %v5241, %v5282
  %v5310 = vadd.f32 %v5242, %v5282
  %v5311 = vadd.f32 %v5243, %v5282
  %v5312 = vadd.f32 %v5244, %v5282
  %v5313 = vadd.f32 %v5245, %v5282
  %v5314 = vadd.f32 %v5246, %v5282
  %v5315 = vadd.f32 %v5247, %v5282
  %v5316 = vadd.f32 %v5248, %v5282
  %v5317 = vadd.f32 %v5249, %v5282
  %v5318 = vadd.f32 %v5250, %v5282
  %v5319 = vadd.f32 %v5251, %v5282
  %v5320 = vadd.f32 %v5252, %v5282
  %v5321 = vadd.f32 %v5253, %v5282
  %v5322 = vadd.f32 %v5254, %v5282
  %v5323 = vadd.f32 %v5255, %v5282
  %v5324 = vadd.f32 %v5256, %v5282
  %v5325 = vadd.f32 %v5257, %v5282
  %v5326 = vadd.f32 %v5258, %v5282
  %v5327 = vadd.f32 %v5259, %v5282
  %v5328 = vadd.f32 %v5260, %v5282
  %v5329 = vadd.f32 %v5261, %v5282
  %v5330 = vadd.f32 %v5262, %v5282
  %v5331 = vadd.f32 %v5263, %v5282
  %v5332 = vadd.f32 %v5264, %v5282
  %v5333 = vadd.f32 %v5265, %v5282
  %v5334 = vadd.f32 %v5266, %v5282
  %v5335 = vadd.f32 %v5267, %v5282
  %v5336 = vadd.f32 %v5268, %v5282
  %v5337 = vadd.f32 %v5269, %v5282
  %v5338 = vadd.f32 %v5270, %v5282
  %v5339 = vadd.f32 %v5271, %v5282
  %v5340 = vadd.f32 %v5272, %v5282
  %v5341 = vadd.f32 %v5273, %v5282
  %v5342 = vadd.f32 %v5274, %v5282
  %v5343 = vadd.f32 %v5275, %v5282
  %v5344 = vadd.f32 %v5276, %v5282
  %v5345 = vadd.f32 %v5277, %v5282
  %v5346 = vadd.f32 %v5278, %v5282
  %v5347 = vmax.f32 %v5283, 0.0
  %v5348 = vmax.f32 %v5284, 0.0
  %v5349 = vmax.f32 %v5285, 0.0
  %v5350 = vmax.f32 %v5286, 0.0
  %v5351 = vmax.f32 %v5287, 0.0
  %v5352 = vmax.f32 %v5288, 0.0
  %v5353 = vmax.f32 %v5289, 0.0
  %v5354 = vmax.f32 %v5290, 0.0
  %v5355 = vmax.f32 %v5291, 0.0
  %v5356 = vmax.f32 %v5292, 0.0
  %v5357 = vmax.f32 %v5293, 0.0
  %v5358 = vmax.f32 %v5294, 0.0
  %v5359 = vmax.f32 %v5295, 0.0
  %v5360 = vmax.f32 %v5296, 0.0
  %v5361 = vmax.f32 %v5297, 0.0
  %v5362 = vmax.f32 %v5298, 0.0
  %v5363 = vmax.f32 %v5299, 0.0
  %v5364 = vmax.f32 %v5300, 0.0
  %v5365 = vmax.f32 %v5301, 0.0
  %v5366 = vmax.f32 %v5302, 0.0
  %v5367 = vmax.f32 %v5303, 0.0
  %v5368 = vmax.f32 %v5304, 0.0
  %v5369 = vmax.f32 %v5305, 0.0
  %v5370 = vmax.f32 %v5306, 0.0
  %v5371 = vmax.f32 %v5307, 0.0
  %v5372 = vmax.f32 %v5308, 0.0
  %v5373 = vmax.f32 %v5309, 0.0
  %v5374 = vmax.f32 %v5310, 0.0
  %v5375 = vmax.f32 %v5311, 0.0
  %v5376 = vmax.f32 %v5312, 0.0
  %v5377 = vmax.f32 %v5313, 0.0
  %v5378 = vmax.f32 %v5314, 0.0
  %v5379 = vmax.f32 %v5315, 0.0
  %v5380 = vmax.f32 %v5316, 0.0
  %v5381 = vmax.f32 %v5317, 0.0
  %v5382 = vmax.f32 %v5318, 0.0
  %v5383 = vmax.f32 %v5319, 0.0
  %v5384 = vmax.f32 %v5320, 0.0
  %v5385 = vmax.f32 %v5321, 0.0
  %v5386 = vmax.f32 %v5322, 0.0
  %v5387 = vmax.f32 %v5323, 0.0
  %v5388 = vmax.f32 %v5324, 0.0
  %v5389 = vmax.f32 %v5325, 0.0
  %v5390 = vmax.f32 %v5326, 0.0
  %v5391 = vmax.f32 %v5327, 0.0
  %v5392 = vmax.f32 %v5328, 0.0
  %v5393 = vmax.f32 %v5329, 0.0
  %v5394 = vmax.f32 %v5330, 0.0
  %v5395 = vmax.f32 %v5331, 0.0
  %v5396 = vmax.f32 %v5332, 0.0
  %v5397 = vmax.f32 %v5333, 0.0
  %v5398 = vmax.f32 %v5334, 0.0
  %v5399 = vmax.f32 %v5335, 0.0
  %v5400 = vmax.f32 %v5336, 0.0
  %v5401 = vmax.f32 %v5337, 0.0
  %v5402 = vmax.f32 %v5338, 0.0
  %v5403 = vmax.f32 %v5339, 0.0
  %v5404 = vmax.f32 %v5340, 0.0
  %v5405 = vmax.f32 %v5341, 0.0
  %v5406 = vmax.f32 %v5342, 0.0
  %v5407 = vmax.f32 %v5343, 0.0
  %v5408 = vmax.f32 %v5344, 0.0
  %v5409 = vmax.f32 %v5345, 0.0
  %v5410 = vmax.f32 %v5346, 0.0
  %v5411 = vpack.c.bf16 %v5348, %v5347
  %v5412 = vpack.c.bf16 %v5350, %v5349
  %v5413 = vpack.c.bf16 %v5352, %v5351
  %v5414 = vpack.c.bf16 %v5354, %v5353
  %v5415 = vpack.c.bf16 %v5356, %v5355
  %v5416 = vpack.c.bf16 %v5358, %v5357
  %v5417 = vpack.c.bf16 %v5360, %v5359
  %v5418 = vpack.c.bf16 %v5362, %v5361
  %v5419 = vpack.c.bf16 %v5364, %v5363
  %v5420 = vpack.c.bf16 %v5366, %v5365
  %v5421 = vpack.c.bf16 %v5368, %v5367
  %v5422 = vpack.c.bf16 %v5370, %v5369
  %v5423 = vpack.c.bf16 %v5372, %v5371
  %v5424 = vpack.c.bf16 %v5374, %v5373
  %v5425 = vpack.c.bf16 %v5376, %v5375
  %v5426 = vpack.c.bf16 %v5378, %v5377
  %v5427 = vpack.c.bf16 %v5380, %v5379
  %v5428 = vpack.c.bf16 %v5382, %v5381
  %v5429 = vpack.c.bf16 %v5384, %v5383
  %v5430 = vpack.c.bf16 %v5386, %v5385
  %v5431 = vpack.c.bf16 %v5388, %v5387
  %v5432 = vpack.c.bf16 %v5390, %v5389
  %v5433 = vpack.c.bf16 %v5392, %v5391
  %v5434 = vpack.c.bf16 %v5394, %v5393
  %v5435 = vpack.c.bf16 %v5396, %v5395
  %v5436 = vpack.c.bf16 %v5398, %v5397
  %v5437 = vpack.c.bf16 %v5400, %v5399
  %v5438 = vpack.c.bf16 %v5402, %v5401
  %v5439 = vpack.c.bf16 %v5404, %v5403
  %v5440 = vpack.c.bf16 %v5406, %v5405
  %v5441 = vpack.c.bf16 %v5408, %v5407
  %v5442 = vpack.c.bf16 %v5410, %v5409
  %s5443 = scalar_lea.vmem %s3, 192
  %v5444 = vld [vmem:[%s5443] sm:$0xf]
  %v5445 = vld [vmem:[%s5443 + $0x4] sm:$0xf]
  %v5446 = vld [vmem:[%s5443 + $0x8] sm:$0xf]
  %v5447 = vld [vmem:[%s5443 + $0xc] sm:$0xf]
  %v5448 = vld [vmem:[%s5443 + $0x10] sm:$0xf]
  %v5449 = vld [vmem:[%s5443 + $0x14] sm:$0xf]
  %v5450 = vld [vmem:[%s5443 + $0x18] sm:$0xf]
  %v5451 = vld [vmem:[%s5443 + $0x1c] sm:$0xf]
  %v5452 = vld [vmem:[%s5443 + $0x20] sm:$0xf]
  %v5453 = vld [vmem:[%s5443 + $0x24] sm:$0xf]
  %v5454 = vld [vmem:[%s5443 + $0x28] sm:$0xf]
  %v5455 = vld [vmem:[%s5443 + $0x2c] sm:$0xf]
  %v5456 = vld [vmem:[%s5443 + $0x30] sm:$0xf]
  %v5457 = vld [vmem:[%s5443 + $0x34] sm:$0xf]
  %v5458 = vld [vmem:[%s5443 + $0x38] sm:$0xf]
  %v5459 = vld [vmem:[%s5443 + $0x3c] sm:$0xf]
  %v5476 = vunpack.c.l.b16 %v5444
  %v5477 = vunpack.c.l.b16 %v5445
  %v5478 = vunpack.c.l.b16 %v5446
  %v5479 = vunpack.c.l.b16 %v5447
  %v5480 = vunpack.c.l.b16 %v5448
  %v5481 = vunpack.c.l.b16 %v5449
  %v5482 = vunpack.c.l.b16 %v5450
  %v5483 = vunpack.c.l.b16 %v5451
  %v5484 = vunpack.c.l.b16 %v5452
  %v5485 = vunpack.c.l.b16 %v5453
  %v5486 = vunpack.c.l.b16 %v5454
  %v5487 = vunpack.c.l.b16 %v5455
  %v5488 = vunpack.c.l.b16 %v5456
  %v5489 = vunpack.c.l.b16 %v5457
  %v5490 = vunpack.c.l.b16 %v5458
  %v5491 = vunpack.c.l.b16 %v5459
  %v5492 = vpack.c.b16 %v5477, %v5476
  %v5493 = vpack.c.b16 %v5479, %v5478
  %v5494 = vpack.c.b16 %v5481, %v5480
  %v5495 = vpack.c.b16 %v5483, %v5482
  %v5496 = vpack.c.b16 %v5485, %v5484
  %v5497 = vpack.c.b16 %v5487, %v5486
  %v5498 = vpack.c.b16 %v5489, %v5488
  %v5499 = vpack.c.b16 %v5491, %v5490
  %5508 = vmatprep.subr.bf16.mxu0 0
  %5509 = vmatpush1.bf16.msra.mxu0 %v5492
  %5510 = vmatprep.subr.bf16.mxu0 0
  %5511 = vmatpush1.bf16.msra.mxu0 %v5493
  %5512 = vmatprep.subr.bf16.mxu0 0
  %5513 = vmatpush1.bf16.msra.mxu0 %v5494
  %5514 = vmatprep.subr.bf16.mxu0 0
  %5515 = vmatpush1.bf16.msra.mxu0 %v5495
  %5516 = vmatprep.subr.bf16.mxu0 0
  %5517 = vmatpush1.bf16.msra.mxu0 %v5496
  %5518 = vmatprep.subr.bf16.mxu0 0
  %5519 = vmatpush1.bf16.msra.mxu0 %v5497
  %5520 = vmatprep.subr.bf16.mxu0 0
  %5521 = vmatpush1.bf16.msra.mxu0 %v5498
  %5522 = vmatprep.subr.bf16.mxu0 0
  %5523 = vmatpush1.bf16.msra.mxu0 %v5499
  %5524 = vmatprep.subr.bf16.mxu0 0
  %5525 = vmatpush1.bf16.msra.mxu0 0
  %5526 = vmatprep.subr.bf16.mxu0 0
  %5527 = vmatpush1.bf16.msra.mxu0 0
  %5528 = vmatprep.subr.bf16.mxu0 0
  %5529 = vmatpush1.bf16.msra.mxu0 0
  %5530 = vmatprep.subr.bf16.mxu0 0
  %5531 = vmatpush1.bf16.msra.mxu0 0
  %5532 = vmatprep.subr.bf16.mxu0 0
  %5533 = vmatpush1.bf16.msra.mxu0 0
  %5534 = vmatprep.subr.bf16.mxu0 0
  %5535 = vmatpush1.bf16.msra.mxu0 0
  %5536 = vmatprep.subr.bf16.mxu0 0
  %5537 = vmatpush1.bf16.msra.mxu0 0
  %5538 = vmatprep.subr.bf16.mxu0 0
  %5539 = vmatpush1.bf16.msra.mxu0 0
  %5540 = vmatprep.mubr.bf16.mxu0 0
  %5541 = vmatmul.mubr.bf16.gmra.mrb[0].mxu0 %v5411
  %v5542 = vpop.f32.mrb[0].mxu0
  %v5543 = vadd.f32 0.0, %v5542
  %v5544 = vpop.f32.mrb[0].mxu0
  %v5545 = vpop.f32.mrb[0].mxu0
  %v5546 = vadd.f32 0.0, %v5545
  %v5547 = vpop.f32.mrb[0].mxu0
  %5548 = vmatprep.mubr.bf16.mxu0 0
  %5549 = vmatmul.mubr.bf16.gmra.mrb[0].mxu0 %v5412
  %v5550 = vpop.f32.mrb[0].mxu0
  %v5551 = vadd.f32 0.0, %v5550
  %v5552 = vpop.f32.mrb[0].mxu0
  %v5553 = vpop.f32.mrb[0].mxu0
  %v5554 = vadd.f32 0.0, %v5553
  %v5555 = vpop.f32.mrb[0].mxu0
  %5556 = vmatprep.mubr.bf16.mxu0 0
  %5557 = vmatmul.mubr.bf16.gmra.mrb[0].mxu0 %v5413
  %v5558 = vpop.f32.mrb[0].mxu0
  %v5559 = vadd.f32 0.0, %v5558
  %v5560 = vpop.f32.mrb[0].mxu0
  %v5561 = vpop.f32.mrb[0].mxu0
  %v5562 = vadd.f32 0.0, %v5561
  %v5563 = vpop.f32.mrb[0].mxu0
  %5564 = vmatprep.mubr.bf16.mxu0 0
  %5565 = vmatmul.mubr.bf16.gmra.mrb[0].mxu0 %v5414
  %v5566 = vpop.f32.mrb[0].mxu0
  %v5567 = vadd.f32 0.0, %v5566
  %v5568 = vpop.f32.mrb[0].mxu0
  %v5569 = vpop.f32.mrb[0].mxu0
  %v5570 = vadd.f32 0.0, %v5569
  %v5571 = vpop.f32.mrb[0].mxu0
  %5572 = vmatprep.mubr.bf16.mxu0 0
  %5573 = vmatmul.mubr.bf16.gmra.mrb[0].mxu0 %v5415
  %v5574 = vpop.f32.mrb[0].mxu0
  %v5575 = vadd.f32 0.0, %v5574
  %v5576 = vpop.f32.mrb[0].mxu0
  %v5577 = vpop.f32.mrb[0].mxu0
  %v5578 = vadd.f32 0.0, %v5577
  %v5579 = vpop.f32.mrb[0].mxu0
  %5580 = vmatprep.mubr.bf16.mxu0 0
  %5581 = vmatmul.mubr.bf16.gmra.mrb[0].mxu0 %v5416
  %v5582 = vpop.f32.mrb[0].mxu0
  %v5583 = vadd.f32 0.0, %v5582
  %v5584 = vpop.f32.mrb[0].mxu0
  %v5585 = vpop.f32.mrb[0].mxu0
  %v5586 = vadd.f32 0.0, %v5585
  %v5587 = vpop.f32.mrb[0].mxu0
  %5588 = vmatprep.mubr.bf16.mxu0 0
  %5589 = vmatmul.mubr.bf16.gmra.mrb[0].mxu0 %v5417
  %v5590 = vpop.f32.mrb[0].mxu0
  %v5591 = vadd.f32 0.0, %v5590
  %v5592 = vpop.f32.mrb[0].mxu0
  %v5593 = vpop.f32.mrb[0].mxu0
  %v5594 = vadd.f32 0.0, %v5593
  %v5595 = vpop.f32.mrb[0].mxu0
  %5596 = vmatprep.mubr.bf16.mxu0 0
  %5597 = vmatmul.mubr.bf16.gmra.mrb[0].mxu0 %v5418
  %v5598 = vpop.f32.mrb[0].mxu0
  %v5599 = vadd.f32 0.0, %v5598
  %v5600 = vpop.f32.mrb[0].mxu0
  %v5601 = vpop.f32.mrb[0].mxu0
  %v5602 = vadd.f32 0.0, %v5601
  %v5603 = vpop.f32.mrb[0].mxu0
  %5604 = vmatprep.mubr.bf16.mxu0 0
  %5605 = vmatmul.mubr.bf16.gmra.mrb[0].mxu0 %v5419
  %v5606 = vpop.f32.mrb[0].mxu0
  %v5607 = vadd.f32 0.0, %v5606
  %v5608 = vpop.f32.mrb[0].mxu0
  %v5609 = vpop.f32.mrb[0].mxu0
  %v5610 = vadd.f32 0.0, %v5609
  %v5611 = vpop.f32.mrb[0].mxu0
  %5612 = vmatprep.mubr.bf16.mxu0 0
  %5613 = vmatmul.mubr.bf16.gmra.mrb[0].mxu0 %v5420
  %v5614 = vpop.f32.mrb[0].mxu0
  %v5615 = vadd.f32 0.0, %v5614
  %v5616 = vpop.f32.mrb[0].mxu0
  %v5617 = vpop.f32.mrb[0].mxu0
  %v5618 = vadd.f32 0.0, %v5617
  %v5619 = vpop.f32.mrb[0].mxu0
  %5620 = vmatprep.mubr.bf16.mxu0 0
  %5621 = vmatmul.mubr.bf16.gmra.mrb[0].mxu0 %v5421
  %v5622 = vpop.f32.mrb[0].mxu0
  %v5623 = vadd.f32 0.0, %v5622
  %v5624 = vpop.f32.mrb[0].mxu0
  %v5625 = vpop.f32.mrb[0].mxu0
  %v5626 = vadd.f32 0.0, %v5625
  %v5627 = vpop.f32.mrb[0].mxu0
  %5628 = vmatprep.mubr.bf16.mxu0 0
  %5629 = vmatmul.mubr.bf16.gmra.mrb[0].mxu0 %v5422
  %v5630 = vpop.f32.mrb[0].mxu0
  %v5631 = vadd.f32 0.0, %v5630
  %v5632 = vpop.f32.mrb[0].mxu0
  %v5633 = vpop.f32.mrb[0].mxu0
  %v5634 = vadd.f32 0.0, %v5633
  %v5635 = vpop.f32.mrb[0].mxu0
  %5636 = vmatprep.mubr.bf16.mxu0 0
  %5637 = vmatmul.mubr.bf16.gmra.mrb[0].mxu0 %v5423
  %v5638 = vpop.f32.mrb[0].mxu0
  %v5639 = vadd.f32 0.0, %v5638
  %v5640 = vpop.f32.mrb[0].mxu0
  %v5641 = vpop.f32.mrb[0].mxu0
  %v5642 = vadd.f32 0.0, %v5641
  %v5643 = vpop.f32.mrb[0].mxu0
  %5644 = vmatprep.mubr.bf16.mxu0 0
  %5645 = vmatmul.mubr.bf16.gmra.mrb[0].mxu0 %v5424
  %v5646 = vpop.f32.mrb[0].mxu0
  %v5647 = vadd.f32 0.0, %v5646
  %v5648 = vpop.f32.mrb[0].mxu0
  %v5649 = vpop.f32.mrb[0].mxu0
  %v5650 = vadd.f32 0.0, %v5649
  %v5651 = vpop.f32.mrb[0].mxu0
  %5652 = vmatprep.mubr.bf16.mxu0 0
  %5653 = vmatmul.mubr.bf16.gmra.mrb[0].mxu0 %v5425
  %v5654 = vpop.f32.mrb[0].mxu0
  %v5655 = vadd.f32 0.0, %v5654
  %v5656 = vpop.f32.mrb[0].mxu0
  %v5657 = vpop.f32.mrb[0].mxu0
  %v5658 = vadd.f32 0.0, %v5657
  %v5659 = vpop.f32.mrb[0].mxu0
  %5660 = vmatprep.mubr.bf16.mxu0 0
  %5661 = vmatmul.mubr.bf16.gmra.mrb[0].mxu0 %v5426
  %v5662 = vpop.f32.mrb[0].mxu0
  %v5663 = vadd.f32 0.0, %v5662
  %v5664 = vpop.f32.mrb[0].mxu0
  %v5665 = vpop.f32.mrb[0].mxu0
  %v5666 = vadd.f32 0.0, %v5665
  %v5667 = vpop.f32.mrb[0].mxu0
  %5668 = vmatprep.mubr.bf16.mxu0 0
  %5669 = vmatmul.mubr.bf16.gmra.mrb[0].mxu0 %v5427
  %v5670 = vpop.f32.mrb[0].mxu0
  %v5671 = vadd.f32 0.0, %v5670
  %v5672 = vpop.f32.mrb[0].mxu0
  %v5673 = vpop.f32.mrb[0].mxu0
  %v5674 = vadd.f32 0.0, %v5673
  %v5675 = vpop.f32.mrb[0].mxu0
  %5676 = vmatprep.mubr.bf16.mxu0 0
  %5677 = vmatmul.mubr.bf16.gmra.mrb[0].mxu0 %v5428
  %v5678 = vpop.f32.mrb[0].mxu0
  %v5679 = vadd.f32 0.0, %v5678
  %v5680 = vpop.f32.mrb[0].mxu0
  %v5681 = vpop.f32.mrb[0].mxu0
  %v5682 = vadd.f32 0.0, %v5681
  %v5683 = vpop.f32.mrb[0].mxu0
  %5684 = vmatprep.mubr.bf16.mxu0 0
  %5685 = vmatmul.mubr.bf16.gmra.mrb[0].mxu0 %v5429
  %v5686 = vpop.f32.mrb[0].mxu0
  %v5687 = vadd.f32 0.0, %v5686
  %v5688 = vpop.f32.mrb[0].mxu0
  %v5689 = vpop.f32.mrb[0].mxu0
  %v5690 = vadd.f32 0.0, %v5689
  %v5691 = vpop.f32.mrb[0].mxu0
  %5692 = vmatprep.mubr.bf16.mxu0 0
  %5693 = vmatmul.mubr.bf16.gmra.mrb[0].mxu0 %v5430
  %v5694 = vpop.f32.mrb[0].mxu0
  %v5695 = vadd.f32 0.0, %v5694
  %v5696 = vpop.f32.mrb[0].mxu0
  %v5697 = vpop.f32.mrb[0].mxu0
  %v5698 = vadd.f32 0.0, %v5697
  %v5699 = vpop.f32.mrb[0].mxu0
  %5700 = vmatprep.mubr.bf16.mxu0 0
  %5701 = vmatmul.mubr.bf16.gmra.mrb[0].mxu0 %v5431
  %v5702 = vpop.f32.mrb[0].mxu0
  %v5703 = vadd.f32 0.0, %v5702
  %v5704 = vpop.f32.mrb[0].mxu0
  %v5705 = vpop.f32.mrb[0].mxu0
  %v5706 = vadd.f32 0.0, %v5705
  %v5707 = vpop.f32.mrb[0].mxu0
  %5708 = vmatprep.mubr.bf16.mxu0 0
  %5709 = vmatmul.mubr.bf16.gmra.mrb[0].mxu0 %v5432
  %v5710 = vpop.f32.mrb[0].mxu0
  %v5711 = vadd.f32 0.0, %v5710
  %v5712 = vpop.f32.mrb[0].mxu0
  %v5713 = vpop.f32.mrb[0].mxu0
  %v5714 = vadd.f32 0.0, %v5713
  %v5715 = vpop.f32.mrb[0].mxu0
  %5716 = vmatprep.mubr.bf16.mxu0 0
  %5717 = vmatmul.mubr.bf16.gmra.mrb[0].mxu0 %v5433
  %v5718 = vpop.f32.mrb[0].mxu0
  %v5719 = vadd.f32 0.0, %v5718
  %v5720 = vpop.f32.mrb[0].mxu0
  %v5721 = vpop.f32.mrb[0].mxu0
  %v5722 = vadd.f32 0.0, %v5721
  %v5723 = vpop.f32.mrb[0].mxu0
  %5724 = vmatprep.mubr.bf16.mxu0 0
  %5725 = vmatmul.mubr.bf16.gmra.mrb[0].mxu0 %v5434
  %v5726 = vpop.f32.mrb[0].mxu0
  %v5727 = vadd.f32 0.0, %v5726
  %v5728 = vpop.f32.mrb[0].mxu0
  %v5729 = vpop.f32.mrb[0].mxu0
  %v5730 = vadd.f32 0.0, %v5729
  %v5731 = vpop.f32.mrb[0].mxu0
  %5732 = vmatprep.mubr.bf16.mxu0 0
  %5733 = vmatmul.mubr.bf16.gmra.mrb[0].mxu0 %v5435
  %v5734 = vpop.f32.mrb[0].mxu0
  %v5735 = vadd.f32 0.0, %v5734
  %v5736 = vpop.f32.mrb[0].mxu0
  %v5737 = vpop.f32.mrb[0].mxu0
  %v5738 = vadd.f32 0.0, %v5737
  %v5739 = vpop.f32.mrb[0].mxu0
  %5740 = vmatprep.mubr.bf16.mxu0 0
  %5741 = vmatmul.mubr.bf16.gmra.mrb[0].mxu0 %v5436
  %v5742 = vpop.f32.mrb[0].mxu0
  %v5743 = vadd.f32 0.0, %v5742
  %v5744 = vpop.f32.mrb[0].mxu0
  %v5745 = vpop.f32.mrb[0].mxu0
  %v5746 = vadd.f32 0.0, %v5745
  %v5747 = vpop.f32.mrb[0].mxu0
  %5748 = vmatprep.mubr.bf16.mxu0 0
  %5749 = vmatmul.mubr.bf16.gmra.mrb[0].mxu0 %v5437
  %v5750 = vpop.f32.mrb[0].mxu0
  %v5751 = vadd.f32 0.0, %v5750
  %v5752 = vpop.f32.mrb[0].mxu0
  %v5753 = vpop.f32.mrb[0].mxu0
  %v5754 = vadd.f32 0.0, %v5753
  %v5755 = vpop.f32.mrb[0].mxu0
  %5756 = vmatprep.mubr.bf16.mxu0 0
  %5757 = vmatmul.mubr.bf16.gmra.mrb[0].mxu0 %v5438
  %v5758 = vpop.f32.mrb[0].mxu0
  %v5759 = vadd.f32 0.0, %v5758
  %v5760 = vpop.f32.mrb[0].mxu0
  %v5761 = vpop.f32.mrb[0].mxu0
  %v5762 = vadd.f32 0.0, %v5761
  %v5763 = vpop.f32.mrb[0].mxu0
  %5764 = vmatprep.mubr.bf16.mxu0 0
  %5765 = vmatmul.mubr.bf16.gmra.mrb[0].mxu0 %v5439
  %v5766 = vpop.f32.mrb[0].mxu0
  %v5767 = vadd.f32 0.0, %v5766
  %v5768 = vpop.f32.mrb[0].mxu0
  %v5769 = vpop.f32.mrb[0].mxu0
  %v5770 = vadd.f32 0.0, %v5769
  %v5771 = vpop.f32.mrb[0].mxu0
  %5772 = vmatprep.mubr.bf16.mxu0 0
  %5773 = vmatmul.mubr.bf16.gmra.mrb[0].mxu0 %v5440
  %v5774 = vpop.f32.mrb[0].mxu0
  %v5775 = vadd.f32 0.0, %v5774
  %v5776 = vpop.f32.mrb[0].mxu0
  %v5777 = vpop.f32.mrb[0].mxu0
  %v5778 = vadd.f32 0.0, %v5777
  %v5779 = vpop.f32.mrb[0].mxu0
  %5780 = vmatprep.mubr.bf16.mxu0 0
  %5781 = vmatmul.mubr.bf16.gmra.mrb[0].mxu0 %v5441
  %v5782 = vpop.f32.mrb[0].mxu0
  %v5783 = vadd.f32 0.0, %v5782
  %v5784 = vpop.f32.mrb[0].mxu0
  %v5785 = vpop.f32.mrb[0].mxu0
  %v5786 = vadd.f32 0.0, %v5785
  %v5787 = vpop.f32.mrb[0].mxu0
  %5788 = vmatprep.mubr.bf16.mxu0 0
  %5789 = vmatmul.mubr.bf16.gmra.mrb[0].mxu0 %v5442
  %v5790 = vpop.f32.mrb[0].mxu0
  %v5791 = vadd.f32 0.0, %v5790
  %v5792 = vpop.f32.mrb[0].mxu0
  %v5793 = vpop.f32.mrb[0].mxu0
  %v5794 = vadd.f32 0.0, %v5793
  %v5795 = vpop.f32.mrb[0].mxu0
  %5796 = vdwg.mxu0
  %v5797 = vadd.f32 %v5543, %v5546
  %v5798 = vadd.f32 %v5797, %v5551
  %v5799 = vadd.f32 %v5798, %v5554
  %v5800 = vadd.f32 %v5799, %v5559
  %v5801 = vadd.f32 %v5800, %v5562
  %v5802 = vadd.f32 %v5801, %v5567
  %v5803 = vadd.f32 %v5802, %v5570
  %v5804 = vadd.f32 %v5803, %v5575
  %v5805 = vadd.f32 %v5804, %v5578
  %v5806 = vadd.f32 %v5805, %v5583
  %v5807 = vadd.f32 %v5806, %v5586
  %v5808 = vadd.f32 %v5807, %v5591
  %v5809 = vadd.f32 %v5808, %v5594
  %v5810 = vadd.f32 %v5809, %v5599
  %v5811 = vadd.f32 %v5810, %v5602
  %v5812 = vadd.f32 %v5811, %v5607
  %v5813 = vadd.f32 %v5812, %v5610
  %v5814 = vadd.f32 %v5813, %v5615
  %v5815 = vadd.f32 %v5814, %v5618
  %v5816 = vadd.f32 %v5815, %v5623
  %v5817 = vadd.f32 %v5816, %v5626
  %v5818 = vadd.f32 %v5817, %v5631
  %v5819 = vadd.f32 %v5818, %v5634
  %v5820 = vadd.f32 %v5819, %v5639
  %v5821 = vadd.f32 %v5820, %v5642
  %v5822 = vadd.f32 %v5821, %v5647
  %v5823 = vadd.f32 %v5822, %v5650
  %v5824 = vadd.f32 %v5823, %v5655
  %v5825 = vadd.f32 %v5824, %v5658
  %v5826 = vadd.f32 %v5825, %v5663
  %v5827 = vadd.f32 %v5826, %v5666
  %v5828 = vadd.f32 %v5827, %v5671
  %v5829 = vadd.f32 %v5828, %v5674
  %v5830 = vadd.f32 %v5829, %v5679
  %v5831 = vadd.f32 %v5830, %v5682
  %v5832 = vadd.f32 %v5831, %v5687
  %v5833 = vadd.f32 %v5832, %v5690
  %v5834 = vadd.f32 %v5833, %v5695
  %v5835 = vadd.f32 %v5834, %v5698
  %v5836 = vadd.f32 %v5835, %v5703
  %v5837 = vadd.f32 %v5836, %v5706
  %v5838 = vadd.f32 %v5837, %v5711
  %v5839 = vadd.f32 %v5838, %v5714
  %v5840 = vadd.f32 %v5839, %v5719
  %v5841 = vadd.f32 %v5840, %v5722
  %v5842 = vadd.f32 %v5841, %v5727
  %v5843 = vadd.f32 %v5842, %v5730
  %v5844 = vadd.f32 %v5843, %v5735
  %v5845 = vadd.f32 %v5844, %v5738
  %v5846 = vadd.f32 %v5845, %v5743
  %v5847 = vadd.f32 %v5846, %v5746
  %v5848 = vadd.f32 %v5847, %v5751
  %v5849 = vadd.f32 %v5848, %v5754
  %v5850 = vadd.f32 %v5849, %v5759
  %v5851 = vadd.f32 %v5850, %v5762
  %v5852 = vadd.f32 %v5851, %v5767
  %v5853 = vadd.f32 %v5852, %v5770
  %v5854 = vadd.f32 %v5853, %v5775
  %v5855 = vadd.f32 %v5854, %v5778
  %v5856 = vadd.f32 %v5855, %v5783
  %v5857 = vadd.f32 %v5856, %v5786
  %v5858 = vadd.f32 %v5857, %v5791
  %v5859 = vadd.f32 %v5858, %v5794
  %v5860 = vrot.slane %v5859, 4
  %v5861 = vadd.f32 %v5859, %v5860
  %v5862 = vrot.slane %v5861, 2
  %v5863 = vadd.f32 %v5861, %v5862
  %v5864 = vrot.slane %v5863, 1
  %v5865 = vadd.f32 %v5863, %v5864
  %v5866 = vmul.f32 %v5543, %v5543
  %v5867 = vmul.f32 %v5546, %v5546
  %v5868 = vmul.f32 %v5551, %v5551
  %v5869 = vmul.f32 %v5554, %v5554
  %v5870 = vmul.f32 %v5559, %v5559
  %v5871 = vmul.f32 %v5562, %v5562
  %v5872 = vmul.f32 %v5567, %v5567
  %v5873 = vmul.f32 %v5570, %v5570
  %v5874 = vmul.f32 %v5575, %v5575
  %v5875 = vmul.f32 %v5578, %v5578
  %v5876 = vmul.f32 %v5583, %v5583
  %v5877 = vmul.f32 %v5586, %v5586
  %v5878 = vmul.f32 %v5591, %v5591
  %v5879 = vmul.f32 %v5594, %v5594
  %v5880 = vmul.f32 %v5599, %v5599
  %v5881 = vmul.f32 %v5602, %v5602
  %v5882 = vmul.f32 %v5607, %v5607
  %v5883 = vmul.f32 %v5610, %v5610
  %v5884 = vmul.f32 %v5615, %v5615
  %v5885 = vmul.f32 %v5618, %v5618
  %v5886 = vmul.f32 %v5623, %v5623
  %v5887 = vmul.f32 %v5626, %v5626
  %v5888 = vmul.f32 %v5631, %v5631
  %v5889 = vmul.f32 %v5634, %v5634
  %v5890 = vmul.f32 %v5639, %v5639
  %v5891 = vmul.f32 %v5642, %v5642
  %v5892 = vmul.f32 %v5647, %v5647
  %v5893 = vmul.f32 %v5650, %v5650
  %v5894 = vmul.f32 %v5655, %v5655
  %v5895 = vmul.f32 %v5658, %v5658
  %v5896 = vmul.f32 %v5663, %v5663
  %v5897 = vmul.f32 %v5666, %v5666
  %v5898 = vmul.f32 %v5671, %v5671
  %v5899 = vmul.f32 %v5674, %v5674
  %v5900 = vmul.f32 %v5679, %v5679
  %v5901 = vmul.f32 %v5682, %v5682
  %v5902 = vmul.f32 %v5687, %v5687
  %v5903 = vmul.f32 %v5690, %v5690
  %v5904 = vmul.f32 %v5695, %v5695
  %v5905 = vmul.f32 %v5698, %v5698
  %v5906 = vmul.f32 %v5703, %v5703
  %v5907 = vmul.f32 %v5706, %v5706
  %v5908 = vmul.f32 %v5711, %v5711
  %v5909 = vmul.f32 %v5714, %v5714
  %v5910 = vmul.f32 %v5719, %v5719
  %v5911 = vmul.f32 %v5722, %v5722
  %v5912 = vmul.f32 %v5727, %v5727
  %v5913 = vmul.f32 %v5730, %v5730
  %v5914 = vmul.f32 %v5735, %v5735
  %v5915 = vmul.f32 %v5738, %v5738
  %v5916 = vmul.f32 %v5743, %v5743
  %v5917 = vmul.f32 %v5746, %v5746
  %v5918 = vmul.f32 %v5751, %v5751
  %v5919 = vmul.f32 %v5754, %v5754
  %v5920 = vmul.f32 %v5759, %v5759
  %v5921 = vmul.f32 %v5762, %v5762
  %v5922 = vmul.f32 %v5767, %v5767
  %v5923 = vmul.f32 %v5770, %v5770
  %v5924 = vmul.f32 %v5775, %v5775
  %v5925 = vmul.f32 %v5778, %v5778
  %v5926 = vmul.f32 %v5783, %v5783
  %v5927 = vmul.f32 %v5786, %v5786
  %v5928 = vmul.f32 %v5791, %v5791
  %v5929 = vmul.f32 %v5794, %v5794
  %v5930 = vadd.f32 %v5866, %v5867
  %v5931 = vadd.f32 %v5930, %v5868
  %v5932 = vadd.f32 %v5931, %v5869
  %v5933 = vadd.f32 %v5932, %v5870
  %v5934 = vadd.f32 %v5933, %v5871
  %v5935 = vadd.f32 %v5934, %v5872
  %v5936 = vadd.f32 %v5935, %v5873
  %v5937 = vadd.f32 %v5936, %v5874
  %v5938 = vadd.f32 %v5937, %v5875
  %v5939 = vadd.f32 %v5938, %v5876
  %v5940 = vadd.f32 %v5939, %v5877
  %v5941 = vadd.f32 %v5940, %v5878
  %v5942 = vadd.f32 %v5941, %v5879
  %v5943 = vadd.f32 %v5942, %v5880
  %v5944 = vadd.f32 %v5943, %v5881
  %v5945 = vadd.f32 %v5944, %v5882
  %v5946 = vadd.f32 %v5945, %v5883
  %v5947 = vadd.f32 %v5946, %v5884
  %v5948 = vadd.f32 %v5947, %v5885
  %v5949 = vadd.f32 %v5948, %v5886
  %v5950 = vadd.f32 %v5949, %v5887
  %v5951 = vadd.f32 %v5950, %v5888
  %v5952 = vadd.f32 %v5951, %v5889
  %v5953 = vadd.f32 %v5952, %v5890
  %v5954 = vadd.f32 %v5953, %v5891
  %v5955 = vadd.f32 %v5954, %v5892
  %v5956 = vadd.f32 %v5955, %v5893
  %v5957 = vadd.f32 %v5956, %v5894
  %v5958 = vadd.f32 %v5957, %v5895
  %v5959 = vadd.f32 %v5958, %v5896
  %v5960 = vadd.f32 %v5959, %v5897
  %v5961 = vadd.f32 %v5960, %v5898
  %v5962 = vadd.f32 %v5961, %v5899
  %v5963 = vadd.f32 %v5962, %v5900
  %v5964 = vadd.f32 %v5963, %v5901
  %v5965 = vadd.f32 %v5964, %v5902
  %v5966 = vadd.f32 %v5965, %v5903
  %v5967 = vadd.f32 %v5966, %v5904
  %v5968 = vadd.f32 %v5967, %v5905
  %v5969 = vadd.f32 %v5968, %v5906
  %v5970 = vadd.f32 %v5969, %v5907
  %v5971 = vadd.f32 %v5970, %v5908
  %v5972 = vadd.f32 %v5971, %v5909
  %v5973 = vadd.f32 %v5972, %v5910
  %v5974 = vadd.f32 %v5973, %v5911
  %v5975 = vadd.f32 %v5974, %v5912
  %v5976 = vadd.f32 %v5975, %v5913
  %v5977 = vadd.f32 %v5976, %v5914
  %v5978 = vadd.f32 %v5977, %v5915
  %v5979 = vadd.f32 %v5978, %v5916
  %v5980 = vadd.f32 %v5979, %v5917
  %v5981 = vadd.f32 %v5980, %v5918
  %v5982 = vadd.f32 %v5981, %v5919
  %v5983 = vadd.f32 %v5982, %v5920
  %v5984 = vadd.f32 %v5983, %v5921
  %v5985 = vadd.f32 %v5984, %v5922
  %v5986 = vadd.f32 %v5985, %v5923
  %v5987 = vadd.f32 %v5986, %v5924
  %v5988 = vadd.f32 %v5987, %v5925
  %v5989 = vadd.f32 %v5988, %v5926
  %v5990 = vadd.f32 %v5989, %v5927
  %v5991 = vadd.f32 %v5990, %v5928
  %v5992 = vadd.f32 %v5991, %v5929
  %v5993 = vrot.slane %v5992, 4
  %v5994 = vadd.f32 %v5992, %v5993
  %v5995 = vrot.slane %v5994, 2
  %v5996 = vadd.f32 %v5994, %v5995
  %v5997 = vrot.slane %v5996, 1
  %v5998 = vadd.f32 %v5996, %v5997
  %v5999 = vmul.f32 %v5865, 0.001953125
  %v6000 = vmul.f32 %v5998, 0.001953125
  %v6001 = vmul.f32 %v5999, %v5999
  %v6002 = vsub.f32 %v6000, %v6001
  %v6003 = vmax.f32 %v6002, 0.0
  %v6004 = vadd.f32 %v6003, 0.001
  %v6005 = vrsqrt.pop %v6004
  %v6006 = vmul.f32 %v32, %v6005
  %v6007 = vmul.f32 %v5999, %v6006
  %v6008 = vsub.f32 %v33, %v6007
  %v6009 = vlaneseq
  %v6010 = vshrl.u32 %v6009, 7
  %v6011 = vsub.s32 5, %v6010
  %v6012 = vrot.slane %v6006, %v6011
  %v6013 = vmul.f32 %v5543, %v6012
  %v6014 = vmul.f32 %v5546, %v6012
  %v6015 = vmul.f32 %v5551, %v6012
  %v6016 = vmul.f32 %v5554, %v6012
  %v6017 = vmul.f32 %v5559, %v6012
  %v6018 = vmul.f32 %v5562, %v6012
  %v6019 = vmul.f32 %v5567, %v6012
  %v6020 = vmul.f32 %v5570, %v6012
  %v6021 = vmul.f32 %v5575, %v6012
  %v6022 = vmul.f32 %v5578, %v6012
  %v6023 = vmul.f32 %v5583, %v6012
  %v6024 = vmul.f32 %v5586, %v6012
  %v6025 = vmul.f32 %v5591, %v6012
  %v6026 = vmul.f32 %v5594, %v6012
  %v6027 = vmul.f32 %v5599, %v6012
  %v6028 = vmul.f32 %v5602, %v6012
  %v6029 = vmul.f32 %v5607, %v6012
  %v6030 = vmul.f32 %v5610, %v6012
  %v6031 = vmul.f32 %v5615, %v6012
  %v6032 = vmul.f32 %v5618, %v6012
  %v6033 = vmul.f32 %v5623, %v6012
  %v6034 = vmul.f32 %v5626, %v6012
  %v6035 = vmul.f32 %v5631, %v6012
  %v6036 = vmul.f32 %v5634, %v6012
  %v6037 = vmul.f32 %v5639, %v6012
  %v6038 = vmul.f32 %v5642, %v6012
  %v6039 = vmul.f32 %v5647, %v6012
  %v6040 = vmul.f32 %v5650, %v6012
  %v6041 = vmul.f32 %v5655, %v6012
  %v6042 = vmul.f32 %v5658, %v6012
  %v6043 = vmul.f32 %v5663, %v6012
  %v6044 = vmul.f32 %v5666, %v6012
  %v6045 = vmul.f32 %v5671, %v6012
  %v6046 = vmul.f32 %v5674, %v6012
  %v6047 = vmul.f32 %v5679, %v6012
  %v6048 = vmul.f32 %v5682, %v6012
  %v6049 = vmul.f32 %v5687, %v6012
  %v6050 = vmul.f32 %v5690, %v6012
  %v6051 = vmul.f32 %v5695, %v6012
  %v6052 = vmul.f32 %v5698, %v6012
  %v6053 = vmul.f32 %v5703, %v6012
  %v6054 = vmul.f32 %v5706, %v6012
  %v6055 = vmul.f32 %v5711, %v6012
  %v6056 = vmul.f32 %v5714, %v6012
  %v6057 = vmul.f32 %v5719, %v6012
  %v6058 = vmul.f32 %v5722, %v6012
  %v6059 = vmul.f32 %v5727, %v6012
  %v6060 = vmul.f32 %v5730, %v6012
  %v6061 = vmul.f32 %v5735, %v6012
  %v6062 = vmul.f32 %v5738, %v6012
  %v6063 = vmul.f32 %v5743, %v6012
  %v6064 = vmul.f32 %v5746, %v6012
  %v6065 = vmul.f32 %v5751, %v6012
  %v6066 = vmul.f32 %v5754, %v6012
  %v6067 = vmul.f32 %v5759, %v6012
  %v6068 = vmul.f32 %v5762, %v6012
  %v6069 = vmul.f32 %v5767, %v6012
  %v6070 = vmul.f32 %v5770, %v6012
  %v6071 = vmul.f32 %v5775, %v6012
  %v6072 = vmul.f32 %v5778, %v6012
  %v6073 = vmul.f32 %v5783, %v6012
  %v6074 = vmul.f32 %v5786, %v6012
  %v6075 = vmul.f32 %v5791, %v6012
  %v6076 = vmul.f32 %v5794, %v6012
  %v6077 = vlaneseq
  %v6078 = vshrl.u32 %v6077, 7
  %v6079 = vsub.s32 5, %v6078
  %v6080 = vrot.slane %v6008, %v6079
  %v6081 = vadd.f32 %v6013, %v6080
  %v6082 = vadd.f32 %v6014, %v6080
  %v6083 = vadd.f32 %v6015, %v6080
  %v6084 = vadd.f32 %v6016, %v6080
  %v6085 = vadd.f32 %v6017, %v6080
  %v6086 = vadd.f32 %v6018, %v6080
  %v6087 = vadd.f32 %v6019, %v6080
  %v6088 = vadd.f32 %v6020, %v6080
  %v6089 = vadd.f32 %v6021, %v6080
  %v6090 = vadd.f32 %v6022, %v6080
  %v6091 = vadd.f32 %v6023, %v6080
  %v6092 = vadd.f32 %v6024, %v6080
  %v6093 = vadd.f32 %v6025, %v6080
  %v6094 = vadd.f32 %v6026, %v6080
  %v6095 = vadd.f32 %v6027, %v6080
  %v6096 = vadd.f32 %v6028, %v6080
  %v6097 = vadd.f32 %v6029, %v6080
  %v6098 = vadd.f32 %v6030, %v6080
  %v6099 = vadd.f32 %v6031, %v6080
  %v6100 = vadd.f32 %v6032, %v6080
  %v6101 = vadd.f32 %v6033, %v6080
  %v6102 = vadd.f32 %v6034, %v6080
  %v6103 = vadd.f32 %v6035, %v6080
  %v6104 = vadd.f32 %v6036, %v6080
  %v6105 = vadd.f32 %v6037, %v6080
  %v6106 = vadd.f32 %v6038, %v6080
  %v6107 = vadd.f32 %v6039, %v6080
  %v6108 = vadd.f32 %v6040, %v6080
  %v6109 = vadd.f32 %v6041, %v6080
  %v6110 = vadd.f32 %v6042, %v6080
  %v6111 = vadd.f32 %v6043, %v6080
  %v6112 = vadd.f32 %v6044, %v6080
  %v6113 = vadd.f32 %v6045, %v6080
  %v6114 = vadd.f32 %v6046, %v6080
  %v6115 = vadd.f32 %v6047, %v6080
  %v6116 = vadd.f32 %v6048, %v6080
  %v6117 = vadd.f32 %v6049, %v6080
  %v6118 = vadd.f32 %v6050, %v6080
  %v6119 = vadd.f32 %v6051, %v6080
  %v6120 = vadd.f32 %v6052, %v6080
  %v6121 = vadd.f32 %v6053, %v6080
  %v6122 = vadd.f32 %v6054, %v6080
  %v6123 = vadd.f32 %v6055, %v6080
  %v6124 = vadd.f32 %v6056, %v6080
  %v6125 = vadd.f32 %v6057, %v6080
  %v6126 = vadd.f32 %v6058, %v6080
  %v6127 = vadd.f32 %v6059, %v6080
  %v6128 = vadd.f32 %v6060, %v6080
  %v6129 = vadd.f32 %v6061, %v6080
  %v6130 = vadd.f32 %v6062, %v6080
  %v6131 = vadd.f32 %v6063, %v6080
  %v6132 = vadd.f32 %v6064, %v6080
  %v6133 = vadd.f32 %v6065, %v6080
  %v6134 = vadd.f32 %v6066, %v6080
  %v6135 = vadd.f32 %v6067, %v6080
  %v6136 = vadd.f32 %v6068, %v6080
  %v6137 = vadd.f32 %v6069, %v6080
  %v6138 = vadd.f32 %v6070, %v6080
  %v6139 = vadd.f32 %v6071, %v6080
  %v6140 = vadd.f32 %v6072, %v6080
  %v6141 = vadd.f32 %v6073, %v6080
  %v6142 = vadd.f32 %v6074, %v6080
  %v6143 = vadd.f32 %v6075, %v6080
  %v6144 = vadd.f32 %v6076, %v6080
  %v6145 = vmax.f32 %v6081, 0.0
  %v6146 = vmax.f32 %v6082, 0.0
  %v6147 = vmax.f32 %v6083, 0.0
  %v6148 = vmax.f32 %v6084, 0.0
  %v6149 = vmax.f32 %v6085, 0.0
  %v6150 = vmax.f32 %v6086, 0.0
  %v6151 = vmax.f32 %v6087, 0.0
  %v6152 = vmax.f32 %v6088, 0.0
  %v6153 = vmax.f32 %v6089, 0.0
  %v6154 = vmax.f32 %v6090, 0.0
  %v6155 = vmax.f32 %v6091, 0.0
  %v6156 = vmax.f32 %v6092, 0.0
  %v6157 = vmax.f32 %v6093, 0.0
  %v6158 = vmax.f32 %v6094, 0.0
  %v6159 = vmax.f32 %v6095, 0.0
  %v6160 = vmax.f32 %v6096, 0.0
  %v6161 = vmax.f32 %v6097, 0.0
  %v6162 = vmax.f32 %v6098, 0.0
  %v6163 = vmax.f32 %v6099, 0.0
  %v6164 = vmax.f32 %v6100, 0.0
  %v6165 = vmax.f32 %v6101, 0.0
  %v6166 = vmax.f32 %v6102, 0.0
  %v6167 = vmax.f32 %v6103, 0.0
  %v6168 = vmax.f32 %v6104, 0.0
  %v6169 = vmax.f32 %v6105, 0.0
  %v6170 = vmax.f32 %v6106, 0.0
  %v6171 = vmax.f32 %v6107, 0.0
  %v6172 = vmax.f32 %v6108, 0.0
  %v6173 = vmax.f32 %v6109, 0.0
  %v6174 = vmax.f32 %v6110, 0.0
  %v6175 = vmax.f32 %v6111, 0.0
  %v6176 = vmax.f32 %v6112, 0.0
  %v6177 = vmax.f32 %v6113, 0.0
  %v6178 = vmax.f32 %v6114, 0.0
  %v6179 = vmax.f32 %v6115, 0.0
  %v6180 = vmax.f32 %v6116, 0.0
  %v6181 = vmax.f32 %v6117, 0.0
  %v6182 = vmax.f32 %v6118, 0.0
  %v6183 = vmax.f32 %v6119, 0.0
  %v6184 = vmax.f32 %v6120, 0.0
  %v6185 = vmax.f32 %v6121, 0.0
  %v6186 = vmax.f32 %v6122, 0.0
  %v6187 = vmax.f32 %v6123, 0.0
  %v6188 = vmax.f32 %v6124, 0.0
  %v6189 = vmax.f32 %v6125, 0.0
  %v6190 = vmax.f32 %v6126, 0.0
  %v6191 = vmax.f32 %v6127, 0.0
  %v6192 = vmax.f32 %v6128, 0.0
  %v6193 = vmax.f32 %v6129, 0.0
  %v6194 = vmax.f32 %v6130, 0.0
  %v6195 = vmax.f32 %v6131, 0.0
  %v6196 = vmax.f32 %v6132, 0.0
  %v6197 = vmax.f32 %v6133, 0.0
  %v6198 = vmax.f32 %v6134, 0.0
  %v6199 = vmax.f32 %v6135, 0.0
  %v6200 = vmax.f32 %v6136, 0.0
  %v6201 = vmax.f32 %v6137, 0.0
  %v6202 = vmax.f32 %v6138, 0.0
  %v6203 = vmax.f32 %v6139, 0.0
  %v6204 = vmax.f32 %v6140, 0.0
  %v6205 = vmax.f32 %v6141, 0.0
  %v6206 = vmax.f32 %v6142, 0.0
  %v6207 = vmax.f32 %v6143, 0.0
  %v6208 = vmax.f32 %v6144, 0.0
  %v6209 = vpack.c.bf16 %v6146, %v6145
  %v6210 = vpack.c.bf16 %v6148, %v6147
  %v6211 = vpack.c.bf16 %v6150, %v6149
  %v6212 = vpack.c.bf16 %v6152, %v6151
  %v6213 = vpack.c.bf16 %v6154, %v6153
  %v6214 = vpack.c.bf16 %v6156, %v6155
  %v6215 = vpack.c.bf16 %v6158, %v6157
  %v6216 = vpack.c.bf16 %v6160, %v6159
  %v6217 = vpack.c.bf16 %v6162, %v6161
  %v6218 = vpack.c.bf16 %v6164, %v6163
  %v6219 = vpack.c.bf16 %v6166, %v6165
  %v6220 = vpack.c.bf16 %v6168, %v6167
  %v6221 = vpack.c.bf16 %v6170, %v6169
  %v6222 = vpack.c.bf16 %v6172, %v6171
  %v6223 = vpack.c.bf16 %v6174, %v6173
  %v6224 = vpack.c.bf16 %v6176, %v6175
  %v6225 = vpack.c.bf16 %v6178, %v6177
  %v6226 = vpack.c.bf16 %v6180, %v6179
  %v6227 = vpack.c.bf16 %v6182, %v6181
  %v6228 = vpack.c.bf16 %v6184, %v6183
  %v6229 = vpack.c.bf16 %v6186, %v6185
  %v6230 = vpack.c.bf16 %v6188, %v6187
  %v6231 = vpack.c.bf16 %v6190, %v6189
  %v6232 = vpack.c.bf16 %v6192, %v6191
  %v6233 = vpack.c.bf16 %v6194, %v6193
  %v6234 = vpack.c.bf16 %v6196, %v6195
  %v6235 = vpack.c.bf16 %v6198, %v6197
  %v6236 = vpack.c.bf16 %v6200, %v6199
  %v6237 = vpack.c.bf16 %v6202, %v6201
  %v6238 = vpack.c.bf16 %v6204, %v6203
  %v6239 = vpack.c.bf16 %v6206, %v6205
  %v6240 = vpack.c.bf16 %v6208, %v6207
  %s6241 = scalar_lea.vmem %s3, 256
  %v6242 = vld [vmem:[%s6241] sm:$0xf]
  %v6243 = vld [vmem:[%s6241 + $0x4] sm:$0xf]
  %v6244 = vld [vmem:[%s6241 + $0x8] sm:$0xf]
  %v6245 = vld [vmem:[%s6241 + $0xc] sm:$0xf]
  %v6246 = vld [vmem:[%s6241 + $0x10] sm:$0xf]
  %v6247 = vld [vmem:[%s6241 + $0x14] sm:$0xf]
  %v6248 = vld [vmem:[%s6241 + $0x18] sm:$0xf]
  %v6249 = vld [vmem:[%s6241 + $0x1c] sm:$0xf]
  %v6250 = vld [vmem:[%s6241 + $0x20] sm:$0xf]
  %v6251 = vld [vmem:[%s6241 + $0x24] sm:$0xf]
  %v6252 = vld [vmem:[%s6241 + $0x28] sm:$0xf]
  %v6253 = vld [vmem:[%s6241 + $0x2c] sm:$0xf]
  %v6254 = vld [vmem:[%s6241 + $0x30] sm:$0xf]
  %v6255 = vld [vmem:[%s6241 + $0x34] sm:$0xf]
  %v6256 = vld [vmem:[%s6241 + $0x38] sm:$0xf]
  %v6257 = vld [vmem:[%s6241 + $0x3c] sm:$0xf]
  %v6274 = vunpack.c.l.b16 %v6242
  %v6275 = vunpack.c.l.b16 %v6243
  %v6276 = vunpack.c.l.b16 %v6244
  %v6277 = vunpack.c.l.b16 %v6245
  %v6278 = vunpack.c.l.b16 %v6246
  %v6279 = vunpack.c.l.b16 %v6247
  %v6280 = vunpack.c.l.b16 %v6248
  %v6281 = vunpack.c.l.b16 %v6249
  %v6282 = vunpack.c.l.b16 %v6250
  %v6283 = vunpack.c.l.b16 %v6251
  %v6284 = vunpack.c.l.b16 %v6252
  %v6285 = vunpack.c.l.b16 %v6253
  %v6286 = vunpack.c.l.b16 %v6254
  %v6287 = vunpack.c.l.b16 %v6255
  %v6288 = vunpack.c.l.b16 %v6256
  %v6289 = vunpack.c.l.b16 %v6257
  %v6290 = vpack.c.b16 %v6275, %v6274
  %v6291 = vpack.c.b16 %v6277, %v6276
  %v6292 = vpack.c.b16 %v6279, %v6278
  %v6293 = vpack.c.b16 %v6281, %v6280
  %v6294 = vpack.c.b16 %v6283, %v6282
  %v6295 = vpack.c.b16 %v6285, %v6284
  %v6296 = vpack.c.b16 %v6287, %v6286
  %v6297 = vpack.c.b16 %v6289, %v6288
  %6306 = vmatprep.subr.bf16.mxu0 0
  %6307 = vmatpush1.bf16.msra.mxu0 %v6290
  %6308 = vmatprep.subr.bf16.mxu0 0
  %6309 = vmatpush1.bf16.msra.mxu0 %v6291
  %6310 = vmatprep.subr.bf16.mxu0 0
  %6311 = vmatpush1.bf16.msra.mxu0 %v6292
  %6312 = vmatprep.subr.bf16.mxu0 0
  %6313 = vmatpush1.bf16.msra.mxu0 %v6293
  %6314 = vmatprep.subr.bf16.mxu0 0
  %6315 = vmatpush1.bf16.msra.mxu0 %v6294
  %6316 = vmatprep.subr.bf16.mxu0 0
  %6317 = vmatpush1.bf16.msra.mxu0 %v6295
  %6318 = vmatprep.subr.bf16.mxu0 0
  %6319 = vmatpush1.bf16.msra.mxu0 %v6296
  %6320 = vmatprep.subr.bf16.mxu0 0
  %6321 = vmatpush1.bf16.msra.mxu0 %v6297
  %6322 = vmatprep.subr.bf16.mxu0 0
  %6323 = vmatpush1.bf16.msra.mxu0 0
  %6324 = vmatprep.subr.bf16.mxu0 0
  %6325 = vmatpush1.bf16.msra.mxu0 0
  %6326 = vmatprep.subr.bf16.mxu0 0
  %6327 = vmatpush1.bf16.msra.mxu0 0
  %6328 = vmatprep.subr.bf16.mxu0 0
  %6329 = vmatpush1.bf16.msra.mxu0 0
  %6330 = vmatprep.subr.bf16.mxu0 0
  %6331 = vmatpush1.bf16.msra.mxu0 0
  %6332 = vmatprep.subr.bf16.mxu0 0
  %6333 = vmatpush1.bf16.msra.mxu0 0
  %6334 = vmatprep.subr.bf16.mxu0 0
  %6335 = vmatpush1.bf16.msra.mxu0 0
  %6336 = vmatprep.subr.bf16.mxu0 0
  %6337 = vmatpush1.bf16.msra.mxu0 0
  %6338 = vmatprep.mubr.bf16.mxu0 0
  %6339 = vmatmul.mubr.bf16.gmra.mrb[0].mxu0 %v6209
  %v6340 = vpop.f32.mrb[0].mxu0
  %v6341 = vadd.f32 0.0, %v6340
  %v6342 = vpop.f32.mrb[0].mxu0
  %v6343 = vpop.f32.mrb[0].mxu0
  %v6344 = vadd.f32 0.0, %v6343
  %v6345 = vpop.f32.mrb[0].mxu0
  %6346 = vmatprep.mubr.bf16.mxu0 0
  %6347 = vmatmul.mubr.bf16.gmra.mrb[0].mxu0 %v6210
  %v6348 = vpop.f32.mrb[0].mxu0
  %v6349 = vadd.f32 0.0, %v6348
  %v6350 = vpop.f32.mrb[0].mxu0
  %v6351 = vpop.f32.mrb[0].mxu0
  %v6352 = vadd.f32 0.0, %v6351
  %v6353 = vpop.f32.mrb[0].mxu0
  %6354 = vmatprep.mubr.bf16.mxu0 0
  %6355 = vmatmul.mubr.bf16.gmra.mrb[0].mxu0 %v6211
  %v6356 = vpop.f32.mrb[0].mxu0
  %v6357 = vadd.f32 0.0, %v6356
  %v6358 = vpop.f32.mrb[0].mxu0
  %v6359 = vpop.f32.mrb[0].mxu0
  %v6360 = vadd.f32 0.0, %v6359
  %v6361 = vpop.f32.mrb[0].mxu0
  %6362 = vmatprep.mubr.bf16.mxu0 0
  %6363 = vmatmul.mubr.bf16.gmra.mrb[0].mxu0 %v6212
  %v6364 = vpop.f32.mrb[0].mxu0
  %v6365 = vadd.f32 0.0, %v6364
  %v6366 = vpop.f32.mrb[0].mxu0
  %v6367 = vpop.f32.mrb[0].mxu0
  %v6368 = vadd.f32 0.0, %v6367
  %v6369 = vpop.f32.mrb[0].mxu0
  %6370 = vmatprep.mubr.bf16.mxu0 0
  %6371 = vmatmul.mubr.bf16.gmra.mrb[0].mxu0 %v6213
  %v6372 = vpop.f32.mrb[0].mxu0
  %v6373 = vadd.f32 0.0, %v6372
  %v6374 = vpop.f32.mrb[0].mxu0
  %v6375 = vpop.f32.mrb[0].mxu0
  %v6376 = vadd.f32 0.0, %v6375
  %v6377 = vpop.f32.mrb[0].mxu0
  %6378 = vmatprep.mubr.bf16.mxu0 0
  %6379 = vmatmul.mubr.bf16.gmra.mrb[0].mxu0 %v6214
  %v6380 = vpop.f32.mrb[0].mxu0
  %v6381 = vadd.f32 0.0, %v6380
  %v6382 = vpop.f32.mrb[0].mxu0
  %v6383 = vpop.f32.mrb[0].mxu0
  %v6384 = vadd.f32 0.0, %v6383
  %v6385 = vpop.f32.mrb[0].mxu0
  %6386 = vmatprep.mubr.bf16.mxu0 0
  %6387 = vmatmul.mubr.bf16.gmra.mrb[0].mxu0 %v6215
  %v6388 = vpop.f32.mrb[0].mxu0
  %v6389 = vadd.f32 0.0, %v6388
  %v6390 = vpop.f32.mrb[0].mxu0
  %v6391 = vpop.f32.mrb[0].mxu0
  %v6392 = vadd.f32 0.0, %v6391
  %v6393 = vpop.f32.mrb[0].mxu0
  %6394 = vmatprep.mubr.bf16.mxu0 0
  %6395 = vmatmul.mubr.bf16.gmra.mrb[0].mxu0 %v6216
  %v6396 = vpop.f32.mrb[0].mxu0
  %v6397 = vadd.f32 0.0, %v6396
  %v6398 = vpop.f32.mrb[0].mxu0
  %v6399 = vpop.f32.mrb[0].mxu0
  %v6400 = vadd.f32 0.0, %v6399
  %v6401 = vpop.f32.mrb[0].mxu0
  %6402 = vmatprep.mubr.bf16.mxu0 0
  %6403 = vmatmul.mubr.bf16.gmra.mrb[0].mxu0 %v6217
  %v6404 = vpop.f32.mrb[0].mxu0
  %v6405 = vadd.f32 0.0, %v6404
  %v6406 = vpop.f32.mrb[0].mxu0
  %v6407 = vpop.f32.mrb[0].mxu0
  %v6408 = vadd.f32 0.0, %v6407
  %v6409 = vpop.f32.mrb[0].mxu0
  %6410 = vmatprep.mubr.bf16.mxu0 0
  %6411 = vmatmul.mubr.bf16.gmra.mrb[0].mxu0 %v6218
  %v6412 = vpop.f32.mrb[0].mxu0
  %v6413 = vadd.f32 0.0, %v6412
  %v6414 = vpop.f32.mrb[0].mxu0
  %v6415 = vpop.f32.mrb[0].mxu0
  %v6416 = vadd.f32 0.0, %v6415
  %v6417 = vpop.f32.mrb[0].mxu0
  %6418 = vmatprep.mubr.bf16.mxu0 0
  %6419 = vmatmul.mubr.bf16.gmra.mrb[0].mxu0 %v6219
  %v6420 = vpop.f32.mrb[0].mxu0
  %v6421 = vadd.f32 0.0, %v6420
  %v6422 = vpop.f32.mrb[0].mxu0
  %v6423 = vpop.f32.mrb[0].mxu0
  %v6424 = vadd.f32 0.0, %v6423
  %v6425 = vpop.f32.mrb[0].mxu0
  %6426 = vmatprep.mubr.bf16.mxu0 0
  %6427 = vmatmul.mubr.bf16.gmra.mrb[0].mxu0 %v6220
  %v6428 = vpop.f32.mrb[0].mxu0
  %v6429 = vadd.f32 0.0, %v6428
  %v6430 = vpop.f32.mrb[0].mxu0
  %v6431 = vpop.f32.mrb[0].mxu0
  %v6432 = vadd.f32 0.0, %v6431
  %v6433 = vpop.f32.mrb[0].mxu0
  %6434 = vmatprep.mubr.bf16.mxu0 0
  %6435 = vmatmul.mubr.bf16.gmra.mrb[0].mxu0 %v6221
  %v6436 = vpop.f32.mrb[0].mxu0
  %v6437 = vadd.f32 0.0, %v6436
  %v6438 = vpop.f32.mrb[0].mxu0
  %v6439 = vpop.f32.mrb[0].mxu0
  %v6440 = vadd.f32 0.0, %v6439
  %v6441 = vpop.f32.mrb[0].mxu0
  %6442 = vmatprep.mubr.bf16.mxu0 0
  %6443 = vmatmul.mubr.bf16.gmra.mrb[0].mxu0 %v6222
  %v6444 = vpop.f32.mrb[0].mxu0
  %v6445 = vadd.f32 0.0, %v6444
  %v6446 = vpop.f32.mrb[0].mxu0
  %v6447 = vpop.f32.mrb[0].mxu0
  %v6448 = vadd.f32 0.0, %v6447
  %v6449 = vpop.f32.mrb[0].mxu0
  %6450 = vmatprep.mubr.bf16.mxu0 0
  %6451 = vmatmul.mubr.bf16.gmra.mrb[0].mxu0 %v6223
  %v6452 = vpop.f32.mrb[0].mxu0
  %v6453 = vadd.f32 0.0, %v6452
  %v6454 = vpop.f32.mrb[0].mxu0
  %v6455 = vpop.f32.mrb[0].mxu0
  %v6456 = vadd.f32 0.0, %v6455
  %v6457 = vpop.f32.mrb[0].mxu0
  %6458 = vmatprep.mubr.bf16.mxu0 0
  %6459 = vmatmul.mubr.bf16.gmra.mrb[0].mxu0 %v6224
  %v6460 = vpop.f32.mrb[0].mxu0
  %v6461 = vadd.f32 0.0, %v6460
  %v6462 = vpop.f32.mrb[0].mxu0
  %v6463 = vpop.f32.mrb[0].mxu0
  %v6464 = vadd.f32 0.0, %v6463
  %v6465 = vpop.f32.mrb[0].mxu0
  %6466 = vmatprep.mubr.bf16.mxu0 0
  %6467 = vmatmul.mubr.bf16.gmra.mrb[0].mxu0 %v6225
  %v6468 = vpop.f32.mrb[0].mxu0
  %v6469 = vadd.f32 0.0, %v6468
  %v6470 = vpop.f32.mrb[0].mxu0
  %v6471 = vpop.f32.mrb[0].mxu0
  %v6472 = vadd.f32 0.0, %v6471
  %v6473 = vpop.f32.mrb[0].mxu0
  %6474 = vmatprep.mubr.bf16.mxu0 0
  %6475 = vmatmul.mubr.bf16.gmra.mrb[0].mxu0 %v6226
  %v6476 = vpop.f32.mrb[0].mxu0
  %v6477 = vadd.f32 0.0, %v6476
  %v6478 = vpop.f32.mrb[0].mxu0
  %v6479 = vpop.f32.mrb[0].mxu0
  %v6480 = vadd.f32 0.0, %v6479
  %v6481 = vpop.f32.mrb[0].mxu0
  %6482 = vmatprep.mubr.bf16.mxu0 0
  %6483 = vmatmul.mubr.bf16.gmra.mrb[0].mxu0 %v6227
  %v6484 = vpop.f32.mrb[0].mxu0
  %v6485 = vadd.f32 0.0, %v6484
  %v6486 = vpop.f32.mrb[0].mxu0
  %v6487 = vpop.f32.mrb[0].mxu0
  %v6488 = vadd.f32 0.0, %v6487
  %v6489 = vpop.f32.mrb[0].mxu0
  %6490 = vmatprep.mubr.bf16.mxu0 0
  %6491 = vmatmul.mubr.bf16.gmra.mrb[0].mxu0 %v6228
  %v6492 = vpop.f32.mrb[0].mxu0
  %v6493 = vadd.f32 0.0, %v6492
  %v6494 = vpop.f32.mrb[0].mxu0
  %v6495 = vpop.f32.mrb[0].mxu0
  %v6496 = vadd.f32 0.0, %v6495
  %v6497 = vpop.f32.mrb[0].mxu0
  %6498 = vmatprep.mubr.bf16.mxu0 0
  %6499 = vmatmul.mubr.bf16.gmra.mrb[0].mxu0 %v6229
  %v6500 = vpop.f32.mrb[0].mxu0
  %v6501 = vadd.f32 0.0, %v6500
  %v6502 = vpop.f32.mrb[0].mxu0
  %v6503 = vpop.f32.mrb[0].mxu0
  %v6504 = vadd.f32 0.0, %v6503
  %v6505 = vpop.f32.mrb[0].mxu0
  %6506 = vmatprep.mubr.bf16.mxu0 0
  %6507 = vmatmul.mubr.bf16.gmra.mrb[0].mxu0 %v6230
  %v6508 = vpop.f32.mrb[0].mxu0
  %v6509 = vadd.f32 0.0, %v6508
  %v6510 = vpop.f32.mrb[0].mxu0
  %v6511 = vpop.f32.mrb[0].mxu0
  %v6512 = vadd.f32 0.0, %v6511
  %v6513 = vpop.f32.mrb[0].mxu0
  %6514 = vmatprep.mubr.bf16.mxu0 0
  %6515 = vmatmul.mubr.bf16.gmra.mrb[0].mxu0 %v6231
  %v6516 = vpop.f32.mrb[0].mxu0
  %v6517 = vadd.f32 0.0, %v6516
  %v6518 = vpop.f32.mrb[0].mxu0
  %v6519 = vpop.f32.mrb[0].mxu0
  %v6520 = vadd.f32 0.0, %v6519
  %v6521 = vpop.f32.mrb[0].mxu0
  %6522 = vmatprep.mubr.bf16.mxu0 0
  %6523 = vmatmul.mubr.bf16.gmra.mrb[0].mxu0 %v6232
  %v6524 = vpop.f32.mrb[0].mxu0
  %v6525 = vadd.f32 0.0, %v6524
  %v6526 = vpop.f32.mrb[0].mxu0
  %v6527 = vpop.f32.mrb[0].mxu0
  %v6528 = vadd.f32 0.0, %v6527
  %v6529 = vpop.f32.mrb[0].mxu0
  %6530 = vmatprep.mubr.bf16.mxu0 0
  %6531 = vmatmul.mubr.bf16.gmra.mrb[0].mxu0 %v6233
  %v6532 = vpop.f32.mrb[0].mxu0
  %v6533 = vadd.f32 0.0, %v6532
  %v6534 = vpop.f32.mrb[0].mxu0
  %v6535 = vpop.f32.mrb[0].mxu0
  %v6536 = vadd.f32 0.0, %v6535
  %v6537 = vpop.f32.mrb[0].mxu0
  %6538 = vmatprep.mubr.bf16.mxu0 0
  %6539 = vmatmul.mubr.bf16.gmra.mrb[0].mxu0 %v6234
  %v6540 = vpop.f32.mrb[0].mxu0
  %v6541 = vadd.f32 0.0, %v6540
  %v6542 = vpop.f32.mrb[0].mxu0
  %v6543 = vpop.f32.mrb[0].mxu0
  %v6544 = vadd.f32 0.0, %v6543
  %v6545 = vpop.f32.mrb[0].mxu0
  %6546 = vmatprep.mubr.bf16.mxu0 0
  %6547 = vmatmul.mubr.bf16.gmra.mrb[0].mxu0 %v6235
  %v6548 = vpop.f32.mrb[0].mxu0
  %v6549 = vadd.f32 0.0, %v6548
  %v6550 = vpop.f32.mrb[0].mxu0
  %v6551 = vpop.f32.mrb[0].mxu0
  %v6552 = vadd.f32 0.0, %v6551
  %v6553 = vpop.f32.mrb[0].mxu0
  %6554 = vmatprep.mubr.bf16.mxu0 0
  %6555 = vmatmul.mubr.bf16.gmra.mrb[0].mxu0 %v6236
  %v6556 = vpop.f32.mrb[0].mxu0
  %v6557 = vadd.f32 0.0, %v6556
  %v6558 = vpop.f32.mrb[0].mxu0
  %v6559 = vpop.f32.mrb[0].mxu0
  %v6560 = vadd.f32 0.0, %v6559
  %v6561 = vpop.f32.mrb[0].mxu0
  %6562 = vmatprep.mubr.bf16.mxu0 0
  %6563 = vmatmul.mubr.bf16.gmra.mrb[0].mxu0 %v6237
  %v6564 = vpop.f32.mrb[0].mxu0
  %v6565 = vadd.f32 0.0, %v6564
  %v6566 = vpop.f32.mrb[0].mxu0
  %v6567 = vpop.f32.mrb[0].mxu0
  %v6568 = vadd.f32 0.0, %v6567
  %v6569 = vpop.f32.mrb[0].mxu0
  %6570 = vmatprep.mubr.bf16.mxu0 0
  %6571 = vmatmul.mubr.bf16.gmra.mrb[0].mxu0 %v6238
  %v6572 = vpop.f32.mrb[0].mxu0
  %v6573 = vadd.f32 0.0, %v6572
  %v6574 = vpop.f32.mrb[0].mxu0
  %v6575 = vpop.f32.mrb[0].mxu0
  %v6576 = vadd.f32 0.0, %v6575
  %v6577 = vpop.f32.mrb[0].mxu0
  %6578 = vmatprep.mubr.bf16.mxu0 0
  %6579 = vmatmul.mubr.bf16.gmra.mrb[0].mxu0 %v6239
  %v6580 = vpop.f32.mrb[0].mxu0
  %v6581 = vadd.f32 0.0, %v6580
  %v6582 = vpop.f32.mrb[0].mxu0
  %v6583 = vpop.f32.mrb[0].mxu0
  %v6584 = vadd.f32 0.0, %v6583
  %v6585 = vpop.f32.mrb[0].mxu0
  %6586 = vmatprep.mubr.bf16.mxu0 0
  %6587 = vmatmul.mubr.bf16.gmra.mrb[0].mxu0 %v6240
  %v6588 = vpop.f32.mrb[0].mxu0
  %v6589 = vadd.f32 0.0, %v6588
  %v6590 = vpop.f32.mrb[0].mxu0
  %v6591 = vpop.f32.mrb[0].mxu0
  %v6592 = vadd.f32 0.0, %v6591
  %v6593 = vpop.f32.mrb[0].mxu0
  %6594 = vdwg.mxu0
  %v6595 = vadd.f32 %v6341, %v6344
  %v6596 = vadd.f32 %v6595, %v6349
  %v6597 = vadd.f32 %v6596, %v6352
  %v6598 = vadd.f32 %v6597, %v6357
  %v6599 = vadd.f32 %v6598, %v6360
  %v6600 = vadd.f32 %v6599, %v6365
  %v6601 = vadd.f32 %v6600, %v6368
  %v6602 = vadd.f32 %v6601, %v6373
  %v6603 = vadd.f32 %v6602, %v6376
  %v6604 = vadd.f32 %v6603, %v6381
  %v6605 = vadd.f32 %v6604, %v6384
  %v6606 = vadd.f32 %v6605, %v6389
  %v6607 = vadd.f32 %v6606, %v6392
  %v6608 = vadd.f32 %v6607, %v6397
  %v6609 = vadd.f32 %v6608, %v6400
  %v6610 = vadd.f32 %v6609, %v6405
  %v6611 = vadd.f32 %v6610, %v6408
  %v6612 = vadd.f32 %v6611, %v6413
  %v6613 = vadd.f32 %v6612, %v6416
  %v6614 = vadd.f32 %v6613, %v6421
  %v6615 = vadd.f32 %v6614, %v6424
  %v6616 = vadd.f32 %v6615, %v6429
  %v6617 = vadd.f32 %v6616, %v6432
  %v6618 = vadd.f32 %v6617, %v6437
  %v6619 = vadd.f32 %v6618, %v6440
  %v6620 = vadd.f32 %v6619, %v6445
  %v6621 = vadd.f32 %v6620, %v6448
  %v6622 = vadd.f32 %v6621, %v6453
  %v6623 = vadd.f32 %v6622, %v6456
  %v6624 = vadd.f32 %v6623, %v6461
  %v6625 = vadd.f32 %v6624, %v6464
  %v6626 = vadd.f32 %v6625, %v6469
  %v6627 = vadd.f32 %v6626, %v6472
  %v6628 = vadd.f32 %v6627, %v6477
  %v6629 = vadd.f32 %v6628, %v6480
  %v6630 = vadd.f32 %v6629, %v6485
  %v6631 = vadd.f32 %v6630, %v6488
  %v6632 = vadd.f32 %v6631, %v6493
  %v6633 = vadd.f32 %v6632, %v6496
  %v6634 = vadd.f32 %v6633, %v6501
  %v6635 = vadd.f32 %v6634, %v6504
  %v6636 = vadd.f32 %v6635, %v6509
  %v6637 = vadd.f32 %v6636, %v6512
  %v6638 = vadd.f32 %v6637, %v6517
  %v6639 = vadd.f32 %v6638, %v6520
  %v6640 = vadd.f32 %v6639, %v6525
  %v6641 = vadd.f32 %v6640, %v6528
  %v6642 = vadd.f32 %v6641, %v6533
  %v6643 = vadd.f32 %v6642, %v6536
  %v6644 = vadd.f32 %v6643, %v6541
  %v6645 = vadd.f32 %v6644, %v6544
  %v6646 = vadd.f32 %v6645, %v6549
  %v6647 = vadd.f32 %v6646, %v6552
  %v6648 = vadd.f32 %v6647, %v6557
  %v6649 = vadd.f32 %v6648, %v6560
  %v6650 = vadd.f32 %v6649, %v6565
  %v6651 = vadd.f32 %v6650, %v6568
  %v6652 = vadd.f32 %v6651, %v6573
  %v6653 = vadd.f32 %v6652, %v6576
  %v6654 = vadd.f32 %v6653, %v6581
  %v6655 = vadd.f32 %v6654, %v6584
  %v6656 = vadd.f32 %v6655, %v6589
  %v6657 = vadd.f32 %v6656, %v6592
  %v6658 = vrot.slane %v6657, 4
  %v6659 = vadd.f32 %v6657, %v6658
  %v6660 = vrot.slane %v6659, 2
  %v6661 = vadd.f32 %v6659, %v6660
  %v6662 = vrot.slane %v6661, 1
  %v6663 = vadd.f32 %v6661, %v6662
  %v6664 = vmul.f32 %v6341, %v6341
  %v6665 = vmul.f32 %v6344, %v6344
  %v6666 = vmul.f32 %v6349, %v6349
  %v6667 = vmul.f32 %v6352, %v6352
  %v6668 = vmul.f32 %v6357, %v6357
  %v6669 = vmul.f32 %v6360, %v6360
  %v6670 = vmul.f32 %v6365, %v6365
  %v6671 = vmul.f32 %v6368, %v6368
  %v6672 = vmul.f32 %v6373, %v6373
  %v6673 = vmul.f32 %v6376, %v6376
  %v6674 = vmul.f32 %v6381, %v6381
  %v6675 = vmul.f32 %v6384, %v6384
  %v6676 = vmul.f32 %v6389, %v6389
  %v6677 = vmul.f32 %v6392, %v6392
  %v6678 = vmul.f32 %v6397, %v6397
  %v6679 = vmul.f32 %v6400, %v6400
  %v6680 = vmul.f32 %v6405, %v6405
  %v6681 = vmul.f32 %v6408, %v6408
  %v6682 = vmul.f32 %v6413, %v6413
  %v6683 = vmul.f32 %v6416, %v6416
  %v6684 = vmul.f32 %v6421, %v6421
  %v6685 = vmul.f32 %v6424, %v6424
  %v6686 = vmul.f32 %v6429, %v6429
  %v6687 = vmul.f32 %v6432, %v6432
  %v6688 = vmul.f32 %v6437, %v6437
  %v6689 = vmul.f32 %v6440, %v6440
  %v6690 = vmul.f32 %v6445, %v6445
  %v6691 = vmul.f32 %v6448, %v6448
  %v6692 = vmul.f32 %v6453, %v6453
  %v6693 = vmul.f32 %v6456, %v6456
  %v6694 = vmul.f32 %v6461, %v6461
  %v6695 = vmul.f32 %v6464, %v6464
  %v6696 = vmul.f32 %v6469, %v6469
  %v6697 = vmul.f32 %v6472, %v6472
  %v6698 = vmul.f32 %v6477, %v6477
  %v6699 = vmul.f32 %v6480, %v6480
  %v6700 = vmul.f32 %v6485, %v6485
  %v6701 = vmul.f32 %v6488, %v6488
  %v6702 = vmul.f32 %v6493, %v6493
  %v6703 = vmul.f32 %v6496, %v6496
  %v6704 = vmul.f32 %v6501, %v6501
  %v6705 = vmul.f32 %v6504, %v6504
  %v6706 = vmul.f32 %v6509, %v6509
  %v6707 = vmul.f32 %v6512, %v6512
  %v6708 = vmul.f32 %v6517, %v6517
  %v6709 = vmul.f32 %v6520, %v6520
  %v6710 = vmul.f32 %v6525, %v6525
  %v6711 = vmul.f32 %v6528, %v6528
  %v6712 = vmul.f32 %v6533, %v6533
  %v6713 = vmul.f32 %v6536, %v6536
  %v6714 = vmul.f32 %v6541, %v6541
  %v6715 = vmul.f32 %v6544, %v6544
  %v6716 = vmul.f32 %v6549, %v6549
  %v6717 = vmul.f32 %v6552, %v6552
  %v6718 = vmul.f32 %v6557, %v6557
  %v6719 = vmul.f32 %v6560, %v6560
  %v6720 = vmul.f32 %v6565, %v6565
  %v6721 = vmul.f32 %v6568, %v6568
  %v6722 = vmul.f32 %v6573, %v6573
  %v6723 = vmul.f32 %v6576, %v6576
  %v6724 = vmul.f32 %v6581, %v6581
  %v6725 = vmul.f32 %v6584, %v6584
  %v6726 = vmul.f32 %v6589, %v6589
  %v6727 = vmul.f32 %v6592, %v6592
  %v6728 = vadd.f32 %v6664, %v6665
  %v6729 = vadd.f32 %v6728, %v6666
  %v6730 = vadd.f32 %v6729, %v6667
  %v6731 = vadd.f32 %v6730, %v6668
  %v6732 = vadd.f32 %v6731, %v6669
  %v6733 = vadd.f32 %v6732, %v6670
  %v6734 = vadd.f32 %v6733, %v6671
  %v6735 = vadd.f32 %v6734, %v6672
  %v6736 = vadd.f32 %v6735, %v6673
  %v6737 = vadd.f32 %v6736, %v6674
  %v6738 = vadd.f32 %v6737, %v6675
  %v6739 = vadd.f32 %v6738, %v6676
  %v6740 = vadd.f32 %v6739, %v6677
  %v6741 = vadd.f32 %v6740, %v6678
  %v6742 = vadd.f32 %v6741, %v6679
  %v6743 = vadd.f32 %v6742, %v6680
  %v6744 = vadd.f32 %v6743, %v6681
  %v6745 = vadd.f32 %v6744, %v6682
  %v6746 = vadd.f32 %v6745, %v6683
  %v6747 = vadd.f32 %v6746, %v6684
  %v6748 = vadd.f32 %v6747, %v6685
  %v6749 = vadd.f32 %v6748, %v6686
  %v6750 = vadd.f32 %v6749, %v6687
  %v6751 = vadd.f32 %v6750, %v6688
  %v6752 = vadd.f32 %v6751, %v6689
  %v6753 = vadd.f32 %v6752, %v6690
  %v6754 = vadd.f32 %v6753, %v6691
  %v6755 = vadd.f32 %v6754, %v6692
  %v6756 = vadd.f32 %v6755, %v6693
  %v6757 = vadd.f32 %v6756, %v6694
  %v6758 = vadd.f32 %v6757, %v6695
  %v6759 = vadd.f32 %v6758, %v6696
  %v6760 = vadd.f32 %v6759, %v6697
  %v6761 = vadd.f32 %v6760, %v6698
  %v6762 = vadd.f32 %v6761, %v6699
  %v6763 = vadd.f32 %v6762, %v6700
  %v6764 = vadd.f32 %v6763, %v6701
  %v6765 = vadd.f32 %v6764, %v6702
  %v6766 = vadd.f32 %v6765, %v6703
  %v6767 = vadd.f32 %v6766, %v6704
  %v6768 = vadd.f32 %v6767, %v6705
  %v6769 = vadd.f32 %v6768, %v6706
  %v6770 = vadd.f32 %v6769, %v6707
  %v6771 = vadd.f32 %v6770, %v6708
  %v6772 = vadd.f32 %v6771, %v6709
  %v6773 = vadd.f32 %v6772, %v6710
  %v6774 = vadd.f32 %v6773, %v6711
  %v6775 = vadd.f32 %v6774, %v6712
  %v6776 = vadd.f32 %v6775, %v6713
  %v6777 = vadd.f32 %v6776, %v6714
  %v6778 = vadd.f32 %v6777, %v6715
  %v6779 = vadd.f32 %v6778, %v6716
  %v6780 = vadd.f32 %v6779, %v6717
  %v6781 = vadd.f32 %v6780, %v6718
  %v6782 = vadd.f32 %v6781, %v6719
  %v6783 = vadd.f32 %v6782, %v6720
  %v6784 = vadd.f32 %v6783, %v6721
  %v6785 = vadd.f32 %v6784, %v6722
  %v6786 = vadd.f32 %v6785, %v6723
  %v6787 = vadd.f32 %v6786, %v6724
  %v6788 = vadd.f32 %v6787, %v6725
  %v6789 = vadd.f32 %v6788, %v6726
  %v6790 = vadd.f32 %v6789, %v6727
  %v6791 = vrot.slane %v6790, 4
  %v6792 = vadd.f32 %v6790, %v6791
  %v6793 = vrot.slane %v6792, 2
  %v6794 = vadd.f32 %v6792, %v6793
  %v6795 = vrot.slane %v6794, 1
  %v6796 = vadd.f32 %v6794, %v6795
  %v6797 = vmul.f32 %v6663, 0.001953125
  %v6798 = vmul.f32 %v6796, 0.001953125
  %v6799 = vmul.f32 %v6797, %v6797
  %v6800 = vsub.f32 %v6798, %v6799
  %v6801 = vmax.f32 %v6800, 0.0
  %v6802 = vadd.f32 %v6801, 0.001
  %v6803 = vrsqrt.pop %v6802
  %v6804 = vmul.f32 %v32, %v6803
  %v6805 = vmul.f32 %v6797, %v6804
  %v6806 = vsub.f32 %v33, %v6805
  %v6807 = vlaneseq
  %v6808 = vshrl.u32 %v6807, 7
  %v6809 = vsub.s32 6, %v6808
  %v6810 = vrot.slane %v6804, %v6809
  %v6811 = vmul.f32 %v6341, %v6810
  %v6812 = vmul.f32 %v6344, %v6810
  %v6813 = vmul.f32 %v6349, %v6810
  %v6814 = vmul.f32 %v6352, %v6810
  %v6815 = vmul.f32 %v6357, %v6810
  %v6816 = vmul.f32 %v6360, %v6810
  %v6817 = vmul.f32 %v6365, %v6810
  %v6818 = vmul.f32 %v6368, %v6810
  %v6819 = vmul.f32 %v6373, %v6810
  %v6820 = vmul.f32 %v6376, %v6810
  %v6821 = vmul.f32 %v6381, %v6810
  %v6822 = vmul.f32 %v6384, %v6810
  %v6823 = vmul.f32 %v6389, %v6810
  %v6824 = vmul.f32 %v6392, %v6810
  %v6825 = vmul.f32 %v6397, %v6810
  %v6826 = vmul.f32 %v6400, %v6810
  %v6827 = vmul.f32 %v6405, %v6810
  %v6828 = vmul.f32 %v6408, %v6810
  %v6829 = vmul.f32 %v6413, %v6810
  %v6830 = vmul.f32 %v6416, %v6810
  %v6831 = vmul.f32 %v6421, %v6810
  %v6832 = vmul.f32 %v6424, %v6810
  %v6833 = vmul.f32 %v6429, %v6810
  %v6834 = vmul.f32 %v6432, %v6810
  %v6835 = vmul.f32 %v6437, %v6810
  %v6836 = vmul.f32 %v6440, %v6810
  %v6837 = vmul.f32 %v6445, %v6810
  %v6838 = vmul.f32 %v6448, %v6810
  %v6839 = vmul.f32 %v6453, %v6810
  %v6840 = vmul.f32 %v6456, %v6810
  %v6841 = vmul.f32 %v6461, %v6810
  %v6842 = vmul.f32 %v6464, %v6810
  %v6843 = vmul.f32 %v6469, %v6810
  %v6844 = vmul.f32 %v6472, %v6810
  %v6845 = vmul.f32 %v6477, %v6810
  %v6846 = vmul.f32 %v6480, %v6810
  %v6847 = vmul.f32 %v6485, %v6810
  %v6848 = vmul.f32 %v6488, %v6810
  %v6849 = vmul.f32 %v6493, %v6810
  %v6850 = vmul.f32 %v6496, %v6810
  %v6851 = vmul.f32 %v6501, %v6810
  %v6852 = vmul.f32 %v6504, %v6810
  %v6853 = vmul.f32 %v6509, %v6810
  %v6854 = vmul.f32 %v6512, %v6810
  %v6855 = vmul.f32 %v6517, %v6810
  %v6856 = vmul.f32 %v6520, %v6810
  %v6857 = vmul.f32 %v6525, %v6810
  %v6858 = vmul.f32 %v6528, %v6810
  %v6859 = vmul.f32 %v6533, %v6810
  %v6860 = vmul.f32 %v6536, %v6810
  %v6861 = vmul.f32 %v6541, %v6810
  %v6862 = vmul.f32 %v6544, %v6810
  %v6863 = vmul.f32 %v6549, %v6810
  %v6864 = vmul.f32 %v6552, %v6810
  %v6865 = vmul.f32 %v6557, %v6810
  %v6866 = vmul.f32 %v6560, %v6810
  %v6867 = vmul.f32 %v6565, %v6810
  %v6868 = vmul.f32 %v6568, %v6810
  %v6869 = vmul.f32 %v6573, %v6810
  %v6870 = vmul.f32 %v6576, %v6810
  %v6871 = vmul.f32 %v6581, %v6810
  %v6872 = vmul.f32 %v6584, %v6810
  %v6873 = vmul.f32 %v6589, %v6810
  %v6874 = vmul.f32 %v6592, %v6810
  %v6875 = vlaneseq
  %v6876 = vshrl.u32 %v6875, 7
  %v6877 = vsub.s32 6, %v6876
  %v6878 = vrot.slane %v6806, %v6877
  %v6879 = vadd.f32 %v6811, %v6878
  %v6880 = vadd.f32 %v6812, %v6878
  %v6881 = vadd.f32 %v6813, %v6878
  %v6882 = vadd.f32 %v6814, %v6878
  %v6883 = vadd.f32 %v6815, %v6878
  %v6884 = vadd.f32 %v6816, %v6878
  %v6885 = vadd.f32 %v6817, %v6878
  %v6886 = vadd.f32 %v6818, %v6878
  %v6887 = vadd.f32 %v6819, %v6878
  %v6888 = vadd.f32 %v6820, %v6878
  %v6889 = vadd.f32 %v6821, %v6878
  %v6890 = vadd.f32 %v6822, %v6878
  %v6891 = vadd.f32 %v6823, %v6878
  %v6892 = vadd.f32 %v6824, %v6878
  %v6893 = vadd.f32 %v6825, %v6878
  %v6894 = vadd.f32 %v6826, %v6878
  %v6895 = vadd.f32 %v6827, %v6878
  %v6896 = vadd.f32 %v6828, %v6878
  %v6897 = vadd.f32 %v6829, %v6878
  %v6898 = vadd.f32 %v6830, %v6878
  %v6899 = vadd.f32 %v6831, %v6878
  %v6900 = vadd.f32 %v6832, %v6878
  %v6901 = vadd.f32 %v6833, %v6878
  %v6902 = vadd.f32 %v6834, %v6878
  %v6903 = vadd.f32 %v6835, %v6878
  %v6904 = vadd.f32 %v6836, %v6878
  %v6905 = vadd.f32 %v6837, %v6878
  %v6906 = vadd.f32 %v6838, %v6878
  %v6907 = vadd.f32 %v6839, %v6878
  %v6908 = vadd.f32 %v6840, %v6878
  %v6909 = vadd.f32 %v6841, %v6878
  %v6910 = vadd.f32 %v6842, %v6878
  %v6911 = vadd.f32 %v6843, %v6878
  %v6912 = vadd.f32 %v6844, %v6878
  %v6913 = vadd.f32 %v6845, %v6878
  %v6914 = vadd.f32 %v6846, %v6878
  %v6915 = vadd.f32 %v6847, %v6878
  %v6916 = vadd.f32 %v6848, %v6878
  %v6917 = vadd.f32 %v6849, %v6878
  %v6918 = vadd.f32 %v6850, %v6878
  %v6919 = vadd.f32 %v6851, %v6878
  %v6920 = vadd.f32 %v6852, %v6878
  %v6921 = vadd.f32 %v6853, %v6878
  %v6922 = vadd.f32 %v6854, %v6878
  %v6923 = vadd.f32 %v6855, %v6878
  %v6924 = vadd.f32 %v6856, %v6878
  %v6925 = vadd.f32 %v6857, %v6878
  %v6926 = vadd.f32 %v6858, %v6878
  %v6927 = vadd.f32 %v6859, %v6878
  %v6928 = vadd.f32 %v6860, %v6878
  %v6929 = vadd.f32 %v6861, %v6878
  %v6930 = vadd.f32 %v6862, %v6878
  %v6931 = vadd.f32 %v6863, %v6878
  %v6932 = vadd.f32 %v6864, %v6878
  %v6933 = vadd.f32 %v6865, %v6878
  %v6934 = vadd.f32 %v6866, %v6878
  %v6935 = vadd.f32 %v6867, %v6878
  %v6936 = vadd.f32 %v6868, %v6878
  %v6937 = vadd.f32 %v6869, %v6878
  %v6938 = vadd.f32 %v6870, %v6878
  %v6939 = vadd.f32 %v6871, %v6878
  %v6940 = vadd.f32 %v6872, %v6878
  %v6941 = vadd.f32 %v6873, %v6878
  %v6942 = vadd.f32 %v6874, %v6878
  %v6943 = vmax.f32 %v6879, 0.0
  %v6944 = vmax.f32 %v6880, 0.0
  %v6945 = vmax.f32 %v6881, 0.0
  %v6946 = vmax.f32 %v6882, 0.0
  %v6947 = vmax.f32 %v6883, 0.0
  %v6948 = vmax.f32 %v6884, 0.0
  %v6949 = vmax.f32 %v6885, 0.0
  %v6950 = vmax.f32 %v6886, 0.0
  %v6951 = vmax.f32 %v6887, 0.0
  %v6952 = vmax.f32 %v6888, 0.0
  %v6953 = vmax.f32 %v6889, 0.0
  %v6954 = vmax.f32 %v6890, 0.0
  %v6955 = vmax.f32 %v6891, 0.0
  %v6956 = vmax.f32 %v6892, 0.0
  %v6957 = vmax.f32 %v6893, 0.0
  %v6958 = vmax.f32 %v6894, 0.0
  %v6959 = vmax.f32 %v6895, 0.0
  %v6960 = vmax.f32 %v6896, 0.0
  %v6961 = vmax.f32 %v6897, 0.0
  %v6962 = vmax.f32 %v6898, 0.0
  %v6963 = vmax.f32 %v6899, 0.0
  %v6964 = vmax.f32 %v6900, 0.0
  %v6965 = vmax.f32 %v6901, 0.0
  %v6966 = vmax.f32 %v6902, 0.0
  %v6967 = vmax.f32 %v6903, 0.0
  %v6968 = vmax.f32 %v6904, 0.0
  %v6969 = vmax.f32 %v6905, 0.0
  %v6970 = vmax.f32 %v6906, 0.0
  %v6971 = vmax.f32 %v6907, 0.0
  %v6972 = vmax.f32 %v6908, 0.0
  %v6973 = vmax.f32 %v6909, 0.0
  %v6974 = vmax.f32 %v6910, 0.0
  %v6975 = vmax.f32 %v6911, 0.0
  %v6976 = vmax.f32 %v6912, 0.0
  %v6977 = vmax.f32 %v6913, 0.0
  %v6978 = vmax.f32 %v6914, 0.0
  %v6979 = vmax.f32 %v6915, 0.0
  %v6980 = vmax.f32 %v6916, 0.0
  %v6981 = vmax.f32 %v6917, 0.0
  %v6982 = vmax.f32 %v6918, 0.0
  %v6983 = vmax.f32 %v6919, 0.0
  %v6984 = vmax.f32 %v6920, 0.0
  %v6985 = vmax.f32 %v6921, 0.0
  %v6986 = vmax.f32 %v6922, 0.0
  %v6987 = vmax.f32 %v6923, 0.0
  %v6988 = vmax.f32 %v6924, 0.0
  %v6989 = vmax.f32 %v6925, 0.0
  %v6990 = vmax.f32 %v6926, 0.0
  %v6991 = vmax.f32 %v6927, 0.0
  %v6992 = vmax.f32 %v6928, 0.0
  %v6993 = vmax.f32 %v6929, 0.0
  %v6994 = vmax.f32 %v6930, 0.0
  %v6995 = vmax.f32 %v6931, 0.0
  %v6996 = vmax.f32 %v6932, 0.0
  %v6997 = vmax.f32 %v6933, 0.0
  %v6998 = vmax.f32 %v6934, 0.0
  %v6999 = vmax.f32 %v6935, 0.0
  %v7000 = vmax.f32 %v6936, 0.0
  %v7001 = vmax.f32 %v6937, 0.0
  %v7002 = vmax.f32 %v6938, 0.0
  %v7003 = vmax.f32 %v6939, 0.0
  %v7004 = vmax.f32 %v6940, 0.0
  %v7005 = vmax.f32 %v6941, 0.0
  %v7006 = vmax.f32 %v6942, 0.0
  %v7007 = vpack.c.bf16 %v6944, %v6943
  %v7008 = vpack.c.bf16 %v6946, %v6945
  %v7009 = vpack.c.bf16 %v6948, %v6947
  %v7010 = vpack.c.bf16 %v6950, %v6949
  %v7011 = vpack.c.bf16 %v6952, %v6951
  %v7012 = vpack.c.bf16 %v6954, %v6953
  %v7013 = vpack.c.bf16 %v6956, %v6955
  %v7014 = vpack.c.bf16 %v6958, %v6957
  %v7015 = vpack.c.bf16 %v6960, %v6959
  %v7016 = vpack.c.bf16 %v6962, %v6961
  %v7017 = vpack.c.bf16 %v6964, %v6963
  %v7018 = vpack.c.bf16 %v6966, %v6965
  %v7019 = vpack.c.bf16 %v6968, %v6967
  %v7020 = vpack.c.bf16 %v6970, %v6969
  %v7021 = vpack.c.bf16 %v6972, %v6971
  %v7022 = vpack.c.bf16 %v6974, %v6973
  %v7023 = vpack.c.bf16 %v6976, %v6975
  %v7024 = vpack.c.bf16 %v6978, %v6977
  %v7025 = vpack.c.bf16 %v6980, %v6979
  %v7026 = vpack.c.bf16 %v6982, %v6981
  %v7027 = vpack.c.bf16 %v6984, %v6983
  %v7028 = vpack.c.bf16 %v6986, %v6985
  %v7029 = vpack.c.bf16 %v6988, %v6987
  %v7030 = vpack.c.bf16 %v6990, %v6989
  %v7031 = vpack.c.bf16 %v6992, %v6991
  %v7032 = vpack.c.bf16 %v6994, %v6993
  %v7033 = vpack.c.bf16 %v6996, %v6995
  %v7034 = vpack.c.bf16 %v6998, %v6997
  %v7035 = vpack.c.bf16 %v7000, %v6999
  %v7036 = vpack.c.bf16 %v7002, %v7001
  %v7037 = vpack.c.bf16 %v7004, %v7003
  %v7038 = vpack.c.bf16 %v7006, %v7005
  %s7039 = scalar_lea.vmem %s3, 320
  %v7040 = vld [vmem:[%s7039] sm:$0xf]
  %v7041 = vld [vmem:[%s7039 + $0x4] sm:$0xf]
  %v7042 = vld [vmem:[%s7039 + $0x8] sm:$0xf]
  %v7043 = vld [vmem:[%s7039 + $0xc] sm:$0xf]
  %v7044 = vld [vmem:[%s7039 + $0x10] sm:$0xf]
  %v7045 = vld [vmem:[%s7039 + $0x14] sm:$0xf]
  %v7046 = vld [vmem:[%s7039 + $0x18] sm:$0xf]
  %v7047 = vld [vmem:[%s7039 + $0x1c] sm:$0xf]
  %v7048 = vld [vmem:[%s7039 + $0x20] sm:$0xf]
  %v7049 = vld [vmem:[%s7039 + $0x24] sm:$0xf]
  %v7050 = vld [vmem:[%s7039 + $0x28] sm:$0xf]
  %v7051 = vld [vmem:[%s7039 + $0x2c] sm:$0xf]
  %v7052 = vld [vmem:[%s7039 + $0x30] sm:$0xf]
  %v7053 = vld [vmem:[%s7039 + $0x34] sm:$0xf]
  %v7054 = vld [vmem:[%s7039 + $0x38] sm:$0xf]
  %v7055 = vld [vmem:[%s7039 + $0x3c] sm:$0xf]
  %v7072 = vunpack.c.l.b16 %v7040
  %v7073 = vunpack.c.l.b16 %v7041
  %v7074 = vunpack.c.l.b16 %v7042
  %v7075 = vunpack.c.l.b16 %v7043
  %v7076 = vunpack.c.l.b16 %v7044
  %v7077 = vunpack.c.l.b16 %v7045
  %v7078 = vunpack.c.l.b16 %v7046
  %v7079 = vunpack.c.l.b16 %v7047
  %v7080 = vunpack.c.l.b16 %v7048
  %v7081 = vunpack.c.l.b16 %v7049
  %v7082 = vunpack.c.l.b16 %v7050
  %v7083 = vunpack.c.l.b16 %v7051
  %v7084 = vunpack.c.l.b16 %v7052
  %v7085 = vunpack.c.l.b16 %v7053
  %v7086 = vunpack.c.l.b16 %v7054
  %v7087 = vunpack.c.l.b16 %v7055
  %v7088 = vpack.c.b16 %v7073, %v7072
  %v7089 = vpack.c.b16 %v7075, %v7074
  %v7090 = vpack.c.b16 %v7077, %v7076
  %v7091 = vpack.c.b16 %v7079, %v7078
  %v7092 = vpack.c.b16 %v7081, %v7080
  %v7093 = vpack.c.b16 %v7083, %v7082
  %v7094 = vpack.c.b16 %v7085, %v7084
  %v7095 = vpack.c.b16 %v7087, %v7086
  %7104 = vmatprep.subr.bf16.mxu0 0
  %7105 = vmatpush1.bf16.msra.mxu0 %v7088
  %7106 = vmatprep.subr.bf16.mxu0 0
  %7107 = vmatpush1.bf16.msra.mxu0 %v7089
  %7108 = vmatprep.subr.bf16.mxu0 0
  %7109 = vmatpush1.bf16.msra.mxu0 %v7090
  %7110 = vmatprep.subr.bf16.mxu0 0
  %7111 = vmatpush1.bf16.msra.mxu0 %v7091
  %7112 = vmatprep.subr.bf16.mxu0 0
  %7113 = vmatpush1.bf16.msra.mxu0 %v7092
  %7114 = vmatprep.subr.bf16.mxu0 0
  %7115 = vmatpush1.bf16.msra.mxu0 %v7093
  %7116 = vmatprep.subr.bf16.mxu0 0
  %7117 = vmatpush1.bf16.msra.mxu0 %v7094
  %7118 = vmatprep.subr.bf16.mxu0 0
  %7119 = vmatpush1.bf16.msra.mxu0 %v7095
  %7120 = vmatprep.subr.bf16.mxu0 0
  %7121 = vmatpush1.bf16.msra.mxu0 0
  %7122 = vmatprep.subr.bf16.mxu0 0
  %7123 = vmatpush1.bf16.msra.mxu0 0
  %7124 = vmatprep.subr.bf16.mxu0 0
  %7125 = vmatpush1.bf16.msra.mxu0 0
  %7126 = vmatprep.subr.bf16.mxu0 0
  %7127 = vmatpush1.bf16.msra.mxu0 0
  %7128 = vmatprep.subr.bf16.mxu0 0
  %7129 = vmatpush1.bf16.msra.mxu0 0
  %7130 = vmatprep.subr.bf16.mxu0 0
  %7131 = vmatpush1.bf16.msra.mxu0 0
  %7132 = vmatprep.subr.bf16.mxu0 0
  %7133 = vmatpush1.bf16.msra.mxu0 0
  %7134 = vmatprep.subr.bf16.mxu0 0
  %7135 = vmatpush1.bf16.msra.mxu0 0
  %7136 = vmatprep.mubr.bf16.mxu0 0
  %7137 = vmatmul.mubr.bf16.gmra.mrb[0].mxu0 %v7007
  %v7138 = vpop.f32.mrb[0].mxu0
  %v7139 = vadd.f32 0.0, %v7138
  %v7140 = vpop.f32.mrb[0].mxu0
  %v7141 = vpop.f32.mrb[0].mxu0
  %v7142 = vadd.f32 0.0, %v7141
  %v7143 = vpop.f32.mrb[0].mxu0
  %7144 = vmatprep.mubr.bf16.mxu0 0
  %7145 = vmatmul.mubr.bf16.gmra.mrb[0].mxu0 %v7008
  %v7146 = vpop.f32.mrb[0].mxu0
  %v7147 = vadd.f32 0.0, %v7146
  %v7148 = vpop.f32.mrb[0].mxu0
  %v7149 = vpop.f32.mrb[0].mxu0
  %v7150 = vadd.f32 0.0, %v7149
  %v7151 = vpop.f32.mrb[0].mxu0
  %7152 = vmatprep.mubr.bf16.mxu0 0
  %7153 = vmatmul.mubr.bf16.gmra.mrb[0].mxu0 %v7009
  %v7154 = vpop.f32.mrb[0].mxu0
  %v7155 = vadd.f32 0.0, %v7154
  %v7156 = vpop.f32.mrb[0].mxu0
  %v7157 = vpop.f32.mrb[0].mxu0
  %v7158 = vadd.f32 0.0, %v7157
  %v7159 = vpop.f32.mrb[0].mxu0
  %7160 = vmatprep.mubr.bf16.mxu0 0
  %7161 = vmatmul.mubr.bf16.gmra.mrb[0].mxu0 %v7010
  %v7162 = vpop.f32.mrb[0].mxu0
  %v7163 = vadd.f32 0.0, %v7162
  %v7164 = vpop.f32.mrb[0].mxu0
  %v7165 = vpop.f32.mrb[0].mxu0
  %v7166 = vadd.f32 0.0, %v7165
  %v7167 = vpop.f32.mrb[0].mxu0
  %7168 = vmatprep.mubr.bf16.mxu0 0
  %7169 = vmatmul.mubr.bf16.gmra.mrb[0].mxu0 %v7011
  %v7170 = vpop.f32.mrb[0].mxu0
  %v7171 = vadd.f32 0.0, %v7170
  %v7172 = vpop.f32.mrb[0].mxu0
  %v7173 = vpop.f32.mrb[0].mxu0
  %v7174 = vadd.f32 0.0, %v7173
  %v7175 = vpop.f32.mrb[0].mxu0
  %7176 = vmatprep.mubr.bf16.mxu0 0
  %7177 = vmatmul.mubr.bf16.gmra.mrb[0].mxu0 %v7012
  %v7178 = vpop.f32.mrb[0].mxu0
  %v7179 = vadd.f32 0.0, %v7178
  %v7180 = vpop.f32.mrb[0].mxu0
  %v7181 = vpop.f32.mrb[0].mxu0
  %v7182 = vadd.f32 0.0, %v7181
  %v7183 = vpop.f32.mrb[0].mxu0
  %7184 = vmatprep.mubr.bf16.mxu0 0
  %7185 = vmatmul.mubr.bf16.gmra.mrb[0].mxu0 %v7013
  %v7186 = vpop.f32.mrb[0].mxu0
  %v7187 = vadd.f32 0.0, %v7186
  %v7188 = vpop.f32.mrb[0].mxu0
  %v7189 = vpop.f32.mrb[0].mxu0
  %v7190 = vadd.f32 0.0, %v7189
  %v7191 = vpop.f32.mrb[0].mxu0
  %7192 = vmatprep.mubr.bf16.mxu0 0
  %7193 = vmatmul.mubr.bf16.gmra.mrb[0].mxu0 %v7014
  %v7194 = vpop.f32.mrb[0].mxu0
  %v7195 = vadd.f32 0.0, %v7194
  %v7196 = vpop.f32.mrb[0].mxu0
  %v7197 = vpop.f32.mrb[0].mxu0
  %v7198 = vadd.f32 0.0, %v7197
  %v7199 = vpop.f32.mrb[0].mxu0
  %7200 = vmatprep.mubr.bf16.mxu0 0
  %7201 = vmatmul.mubr.bf16.gmra.mrb[0].mxu0 %v7015
  %v7202 = vpop.f32.mrb[0].mxu0
  %v7203 = vadd.f32 0.0, %v7202
  %v7204 = vpop.f32.mrb[0].mxu0
  %v7205 = vpop.f32.mrb[0].mxu0
  %v7206 = vadd.f32 0.0, %v7205
  %v7207 = vpop.f32.mrb[0].mxu0
  %7208 = vmatprep.mubr.bf16.mxu0 0
  %7209 = vmatmul.mubr.bf16.gmra.mrb[0].mxu0 %v7016
  %v7210 = vpop.f32.mrb[0].mxu0
  %v7211 = vadd.f32 0.0, %v7210
  %v7212 = vpop.f32.mrb[0].mxu0
  %v7213 = vpop.f32.mrb[0].mxu0
  %v7214 = vadd.f32 0.0, %v7213
  %v7215 = vpop.f32.mrb[0].mxu0
  %7216 = vmatprep.mubr.bf16.mxu0 0
  %7217 = vmatmul.mubr.bf16.gmra.mrb[0].mxu0 %v7017
  %v7218 = vpop.f32.mrb[0].mxu0
  %v7219 = vadd.f32 0.0, %v7218
  %v7220 = vpop.f32.mrb[0].mxu0
  %v7221 = vpop.f32.mrb[0].mxu0
  %v7222 = vadd.f32 0.0, %v7221
  %v7223 = vpop.f32.mrb[0].mxu0
  %7224 = vmatprep.mubr.bf16.mxu0 0
  %7225 = vmatmul.mubr.bf16.gmra.mrb[0].mxu0 %v7018
  %v7226 = vpop.f32.mrb[0].mxu0
  %v7227 = vadd.f32 0.0, %v7226
  %v7228 = vpop.f32.mrb[0].mxu0
  %v7229 = vpop.f32.mrb[0].mxu0
  %v7230 = vadd.f32 0.0, %v7229
  %v7231 = vpop.f32.mrb[0].mxu0
  %7232 = vmatprep.mubr.bf16.mxu0 0
  %7233 = vmatmul.mubr.bf16.gmra.mrb[0].mxu0 %v7019
  %v7234 = vpop.f32.mrb[0].mxu0
  %v7235 = vadd.f32 0.0, %v7234
  %v7236 = vpop.f32.mrb[0].mxu0
  %v7237 = vpop.f32.mrb[0].mxu0
  %v7238 = vadd.f32 0.0, %v7237
  %v7239 = vpop.f32.mrb[0].mxu0
  %7240 = vmatprep.mubr.bf16.mxu0 0
  %7241 = vmatmul.mubr.bf16.gmra.mrb[0].mxu0 %v7020
  %v7242 = vpop.f32.mrb[0].mxu0
  %v7243 = vadd.f32 0.0, %v7242
  %v7244 = vpop.f32.mrb[0].mxu0
  %v7245 = vpop.f32.mrb[0].mxu0
  %v7246 = vadd.f32 0.0, %v7245
  %v7247 = vpop.f32.mrb[0].mxu0
  %7248 = vmatprep.mubr.bf16.mxu0 0
  %7249 = vmatmul.mubr.bf16.gmra.mrb[0].mxu0 %v7021
  %v7250 = vpop.f32.mrb[0].mxu0
  %v7251 = vadd.f32 0.0, %v7250
  %v7252 = vpop.f32.mrb[0].mxu0
  %v7253 = vpop.f32.mrb[0].mxu0
  %v7254 = vadd.f32 0.0, %v7253
  %v7255 = vpop.f32.mrb[0].mxu0
  %7256 = vmatprep.mubr.bf16.mxu0 0
  %7257 = vmatmul.mubr.bf16.gmra.mrb[0].mxu0 %v7022
  %v7258 = vpop.f32.mrb[0].mxu0
  %v7259 = vadd.f32 0.0, %v7258
  %v7260 = vpop.f32.mrb[0].mxu0
  %v7261 = vpop.f32.mrb[0].mxu0
  %v7262 = vadd.f32 0.0, %v7261
  %v7263 = vpop.f32.mrb[0].mxu0
  %7264 = vmatprep.mubr.bf16.mxu0 0
  %7265 = vmatmul.mubr.bf16.gmra.mrb[0].mxu0 %v7023
  %v7266 = vpop.f32.mrb[0].mxu0
  %v7267 = vadd.f32 0.0, %v7266
  %v7268 = vpop.f32.mrb[0].mxu0
  %v7269 = vpop.f32.mrb[0].mxu0
  %v7270 = vadd.f32 0.0, %v7269
  %v7271 = vpop.f32.mrb[0].mxu0
  %7272 = vmatprep.mubr.bf16.mxu0 0
  %7273 = vmatmul.mubr.bf16.gmra.mrb[0].mxu0 %v7024
  %v7274 = vpop.f32.mrb[0].mxu0
  %v7275 = vadd.f32 0.0, %v7274
  %v7276 = vpop.f32.mrb[0].mxu0
  %v7277 = vpop.f32.mrb[0].mxu0
  %v7278 = vadd.f32 0.0, %v7277
  %v7279 = vpop.f32.mrb[0].mxu0
  %7280 = vmatprep.mubr.bf16.mxu0 0
  %7281 = vmatmul.mubr.bf16.gmra.mrb[0].mxu0 %v7025
  %v7282 = vpop.f32.mrb[0].mxu0
  %v7283 = vadd.f32 0.0, %v7282
  %v7284 = vpop.f32.mrb[0].mxu0
  %v7285 = vpop.f32.mrb[0].mxu0
  %v7286 = vadd.f32 0.0, %v7285
  %v7287 = vpop.f32.mrb[0].mxu0
  %7288 = vmatprep.mubr.bf16.mxu0 0
  %7289 = vmatmul.mubr.bf16.gmra.mrb[0].mxu0 %v7026
  %v7290 = vpop.f32.mrb[0].mxu0
  %v7291 = vadd.f32 0.0, %v7290
  %v7292 = vpop.f32.mrb[0].mxu0
  %v7293 = vpop.f32.mrb[0].mxu0
  %v7294 = vadd.f32 0.0, %v7293
  %v7295 = vpop.f32.mrb[0].mxu0
  %7296 = vmatprep.mubr.bf16.mxu0 0
  %7297 = vmatmul.mubr.bf16.gmra.mrb[0].mxu0 %v7027
  %v7298 = vpop.f32.mrb[0].mxu0
  %v7299 = vadd.f32 0.0, %v7298
  %v7300 = vpop.f32.mrb[0].mxu0
  %v7301 = vpop.f32.mrb[0].mxu0
  %v7302 = vadd.f32 0.0, %v7301
  %v7303 = vpop.f32.mrb[0].mxu0
  %7304 = vmatprep.mubr.bf16.mxu0 0
  %7305 = vmatmul.mubr.bf16.gmra.mrb[0].mxu0 %v7028
  %v7306 = vpop.f32.mrb[0].mxu0
  %v7307 = vadd.f32 0.0, %v7306
  %v7308 = vpop.f32.mrb[0].mxu0
  %v7309 = vpop.f32.mrb[0].mxu0
  %v7310 = vadd.f32 0.0, %v7309
  %v7311 = vpop.f32.mrb[0].mxu0
  %7312 = vmatprep.mubr.bf16.mxu0 0
  %7313 = vmatmul.mubr.bf16.gmra.mrb[0].mxu0 %v7029
  %v7314 = vpop.f32.mrb[0].mxu0
  %v7315 = vadd.f32 0.0, %v7314
  %v7316 = vpop.f32.mrb[0].mxu0
  %v7317 = vpop.f32.mrb[0].mxu0
  %v7318 = vadd.f32 0.0, %v7317
  %v7319 = vpop.f32.mrb[0].mxu0
  %7320 = vmatprep.mubr.bf16.mxu0 0
  %7321 = vmatmul.mubr.bf16.gmra.mrb[0].mxu0 %v7030
  %v7322 = vpop.f32.mrb[0].mxu0
  %v7323 = vadd.f32 0.0, %v7322
  %v7324 = vpop.f32.mrb[0].mxu0
  %v7325 = vpop.f32.mrb[0].mxu0
  %v7326 = vadd.f32 0.0, %v7325
  %v7327 = vpop.f32.mrb[0].mxu0
  %7328 = vmatprep.mubr.bf16.mxu0 0
  %7329 = vmatmul.mubr.bf16.gmra.mrb[0].mxu0 %v7031
  %v7330 = vpop.f32.mrb[0].mxu0
  %v7331 = vadd.f32 0.0, %v7330
  %v7332 = vpop.f32.mrb[0].mxu0
  %v7333 = vpop.f32.mrb[0].mxu0
  %v7334 = vadd.f32 0.0, %v7333
  %v7335 = vpop.f32.mrb[0].mxu0
  %7336 = vmatprep.mubr.bf16.mxu0 0
  %7337 = vmatmul.mubr.bf16.gmra.mrb[0].mxu0 %v7032
  %v7338 = vpop.f32.mrb[0].mxu0
  %v7339 = vadd.f32 0.0, %v7338
  %v7340 = vpop.f32.mrb[0].mxu0
  %v7341 = vpop.f32.mrb[0].mxu0
  %v7342 = vadd.f32 0.0, %v7341
  %v7343 = vpop.f32.mrb[0].mxu0
  %7344 = vmatprep.mubr.bf16.mxu0 0
  %7345 = vmatmul.mubr.bf16.gmra.mrb[0].mxu0 %v7033
  %v7346 = vpop.f32.mrb[0].mxu0
  %v7347 = vadd.f32 0.0, %v7346
  %v7348 = vpop.f32.mrb[0].mxu0
  %v7349 = vpop.f32.mrb[0].mxu0
  %v7350 = vadd.f32 0.0, %v7349
  %v7351 = vpop.f32.mrb[0].mxu0
  %7352 = vmatprep.mubr.bf16.mxu0 0
  %7353 = vmatmul.mubr.bf16.gmra.mrb[0].mxu0 %v7034
  %v7354 = vpop.f32.mrb[0].mxu0
  %v7355 = vadd.f32 0.0, %v7354
  %v7356 = vpop.f32.mrb[0].mxu0
  %v7357 = vpop.f32.mrb[0].mxu0
  %v7358 = vadd.f32 0.0, %v7357
  %v7359 = vpop.f32.mrb[0].mxu0
  %7360 = vmatprep.mubr.bf16.mxu0 0
  %7361 = vmatmul.mubr.bf16.gmra.mrb[0].mxu0 %v7035
  %v7362 = vpop.f32.mrb[0].mxu0
  %v7363 = vadd.f32 0.0, %v7362
  %v7364 = vpop.f32.mrb[0].mxu0
  %v7365 = vpop.f32.mrb[0].mxu0
  %v7366 = vadd.f32 0.0, %v7365
  %v7367 = vpop.f32.mrb[0].mxu0
  %7368 = vmatprep.mubr.bf16.mxu0 0
  %7369 = vmatmul.mubr.bf16.gmra.mrb[0].mxu0 %v7036
  %v7370 = vpop.f32.mrb[0].mxu0
  %v7371 = vadd.f32 0.0, %v7370
  %v7372 = vpop.f32.mrb[0].mxu0
  %v7373 = vpop.f32.mrb[0].mxu0
  %v7374 = vadd.f32 0.0, %v7373
  %v7375 = vpop.f32.mrb[0].mxu0
  %7376 = vmatprep.mubr.bf16.mxu0 0
  %7377 = vmatmul.mubr.bf16.gmra.mrb[0].mxu0 %v7037
  %v7378 = vpop.f32.mrb[0].mxu0
  %v7379 = vadd.f32 0.0, %v7378
  %v7380 = vpop.f32.mrb[0].mxu0
  %v7381 = vpop.f32.mrb[0].mxu0
  %v7382 = vadd.f32 0.0, %v7381
  %v7383 = vpop.f32.mrb[0].mxu0
  %7384 = vmatprep.mubr.bf16.mxu0 0
  %7385 = vmatmul.mubr.bf16.gmra.mrb[0].mxu0 %v7038
  %v7386 = vpop.f32.mrb[0].mxu0
  %v7387 = vadd.f32 0.0, %v7386
  %v7388 = vpop.f32.mrb[0].mxu0
  %v7389 = vpop.f32.mrb[0].mxu0
  %v7390 = vadd.f32 0.0, %v7389
  %v7391 = vpop.f32.mrb[0].mxu0
  %7392 = vdwg.mxu0
  %v7393 = vadd.f32 %v7139, %v7142
  %v7394 = vadd.f32 %v7393, %v7147
  %v7395 = vadd.f32 %v7394, %v7150
  %v7396 = vadd.f32 %v7395, %v7155
  %v7397 = vadd.f32 %v7396, %v7158
  %v7398 = vadd.f32 %v7397, %v7163
  %v7399 = vadd.f32 %v7398, %v7166
  %v7400 = vadd.f32 %v7399, %v7171
  %v7401 = vadd.f32 %v7400, %v7174
  %v7402 = vadd.f32 %v7401, %v7179
  %v7403 = vadd.f32 %v7402, %v7182
  %v7404 = vadd.f32 %v7403, %v7187
  %v7405 = vadd.f32 %v7404, %v7190
  %v7406 = vadd.f32 %v7405, %v7195
  %v7407 = vadd.f32 %v7406, %v7198
  %v7408 = vadd.f32 %v7407, %v7203
  %v7409 = vadd.f32 %v7408, %v7206
  %v7410 = vadd.f32 %v7409, %v7211
  %v7411 = vadd.f32 %v7410, %v7214
  %v7412 = vadd.f32 %v7411, %v7219
  %v7413 = vadd.f32 %v7412, %v7222
  %v7414 = vadd.f32 %v7413, %v7227
  %v7415 = vadd.f32 %v7414, %v7230
  %v7416 = vadd.f32 %v7415, %v7235
  %v7417 = vadd.f32 %v7416, %v7238
  %v7418 = vadd.f32 %v7417, %v7243
  %v7419 = vadd.f32 %v7418, %v7246
  %v7420 = vadd.f32 %v7419, %v7251
  %v7421 = vadd.f32 %v7420, %v7254
  %v7422 = vadd.f32 %v7421, %v7259
  %v7423 = vadd.f32 %v7422, %v7262
  %v7424 = vadd.f32 %v7423, %v7267
  %v7425 = vadd.f32 %v7424, %v7270
  %v7426 = vadd.f32 %v7425, %v7275
  %v7427 = vadd.f32 %v7426, %v7278
  %v7428 = vadd.f32 %v7427, %v7283
  %v7429 = vadd.f32 %v7428, %v7286
  %v7430 = vadd.f32 %v7429, %v7291
  %v7431 = vadd.f32 %v7430, %v7294
  %v7432 = vadd.f32 %v7431, %v7299
  %v7433 = vadd.f32 %v7432, %v7302
  %v7434 = vadd.f32 %v7433, %v7307
  %v7435 = vadd.f32 %v7434, %v7310
  %v7436 = vadd.f32 %v7435, %v7315
  %v7437 = vadd.f32 %v7436, %v7318
  %v7438 = vadd.f32 %v7437, %v7323
  %v7439 = vadd.f32 %v7438, %v7326
  %v7440 = vadd.f32 %v7439, %v7331
  %v7441 = vadd.f32 %v7440, %v7334
  %v7442 = vadd.f32 %v7441, %v7339
  %v7443 = vadd.f32 %v7442, %v7342
  %v7444 = vadd.f32 %v7443, %v7347
  %v7445 = vadd.f32 %v7444, %v7350
  %v7446 = vadd.f32 %v7445, %v7355
  %v7447 = vadd.f32 %v7446, %v7358
  %v7448 = vadd.f32 %v7447, %v7363
  %v7449 = vadd.f32 %v7448, %v7366
  %v7450 = vadd.f32 %v7449, %v7371
  %v7451 = vadd.f32 %v7450, %v7374
  %v7452 = vadd.f32 %v7451, %v7379
  %v7453 = vadd.f32 %v7452, %v7382
  %v7454 = vadd.f32 %v7453, %v7387
  %v7455 = vadd.f32 %v7454, %v7390
  %v7456 = vrot.slane %v7455, 4
  %v7457 = vadd.f32 %v7455, %v7456
  %v7458 = vrot.slane %v7457, 2
  %v7459 = vadd.f32 %v7457, %v7458
  %v7460 = vrot.slane %v7459, 1
  %v7461 = vadd.f32 %v7459, %v7460
  %v7462 = vmul.f32 %v7139, %v7139
  %v7463 = vmul.f32 %v7142, %v7142
  %v7464 = vmul.f32 %v7147, %v7147
  %v7465 = vmul.f32 %v7150, %v7150
  %v7466 = vmul.f32 %v7155, %v7155
  %v7467 = vmul.f32 %v7158, %v7158
  %v7468 = vmul.f32 %v7163, %v7163
  %v7469 = vmul.f32 %v7166, %v7166
  %v7470 = vmul.f32 %v7171, %v7171
  %v7471 = vmul.f32 %v7174, %v7174
  %v7472 = vmul.f32 %v7179, %v7179
  %v7473 = vmul.f32 %v7182, %v7182
  %v7474 = vmul.f32 %v7187, %v7187
  %v7475 = vmul.f32 %v7190, %v7190
  %v7476 = vmul.f32 %v7195, %v7195
  %v7477 = vmul.f32 %v7198, %v7198
  %v7478 = vmul.f32 %v7203, %v7203
  %v7479 = vmul.f32 %v7206, %v7206
  %v7480 = vmul.f32 %v7211, %v7211
  %v7481 = vmul.f32 %v7214, %v7214
  %v7482 = vmul.f32 %v7219, %v7219
  %v7483 = vmul.f32 %v7222, %v7222
  %v7484 = vmul.f32 %v7227, %v7227
  %v7485 = vmul.f32 %v7230, %v7230
  %v7486 = vmul.f32 %v7235, %v7235
  %v7487 = vmul.f32 %v7238, %v7238
  %v7488 = vmul.f32 %v7243, %v7243
  %v7489 = vmul.f32 %v7246, %v7246
  %v7490 = vmul.f32 %v7251, %v7251
  %v7491 = vmul.f32 %v7254, %v7254
  %v7492 = vmul.f32 %v7259, %v7259
  %v7493 = vmul.f32 %v7262, %v7262
  %v7494 = vmul.f32 %v7267, %v7267
  %v7495 = vmul.f32 %v7270, %v7270
  %v7496 = vmul.f32 %v7275, %v7275
  %v7497 = vmul.f32 %v7278, %v7278
  %v7498 = vmul.f32 %v7283, %v7283
  %v7499 = vmul.f32 %v7286, %v7286
  %v7500 = vmul.f32 %v7291, %v7291
  %v7501 = vmul.f32 %v7294, %v7294
  %v7502 = vmul.f32 %v7299, %v7299
  %v7503 = vmul.f32 %v7302, %v7302
  %v7504 = vmul.f32 %v7307, %v7307
  %v7505 = vmul.f32 %v7310, %v7310
  %v7506 = vmul.f32 %v7315, %v7315
  %v7507 = vmul.f32 %v7318, %v7318
  %v7508 = vmul.f32 %v7323, %v7323
  %v7509 = vmul.f32 %v7326, %v7326
  %v7510 = vmul.f32 %v7331, %v7331
  %v7511 = vmul.f32 %v7334, %v7334
  %v7512 = vmul.f32 %v7339, %v7339
  %v7513 = vmul.f32 %v7342, %v7342
  %v7514 = vmul.f32 %v7347, %v7347
  %v7515 = vmul.f32 %v7350, %v7350
  %v7516 = vmul.f32 %v7355, %v7355
  %v7517 = vmul.f32 %v7358, %v7358
  %v7518 = vmul.f32 %v7363, %v7363
  %v7519 = vmul.f32 %v7366, %v7366
  %v7520 = vmul.f32 %v7371, %v7371
  %v7521 = vmul.f32 %v7374, %v7374
  %v7522 = vmul.f32 %v7379, %v7379
  %v7523 = vmul.f32 %v7382, %v7382
  %v7524 = vmul.f32 %v7387, %v7387
  %v7525 = vmul.f32 %v7390, %v7390
  %v7526 = vadd.f32 %v7462, %v7463
  %v7527 = vadd.f32 %v7526, %v7464
  %v7528 = vadd.f32 %v7527, %v7465
  %v7529 = vadd.f32 %v7528, %v7466
  %v7530 = vadd.f32 %v7529, %v7467
  %v7531 = vadd.f32 %v7530, %v7468
  %v7532 = vadd.f32 %v7531, %v7469
  %v7533 = vadd.f32 %v7532, %v7470
  %v7534 = vadd.f32 %v7533, %v7471
  %v7535 = vadd.f32 %v7534, %v7472
  %v7536 = vadd.f32 %v7535, %v7473
  %v7537 = vadd.f32 %v7536, %v7474
  %v7538 = vadd.f32 %v7537, %v7475
  %v7539 = vadd.f32 %v7538, %v7476
  %v7540 = vadd.f32 %v7539, %v7477
  %v7541 = vadd.f32 %v7540, %v7478
  %v7542 = vadd.f32 %v7541, %v7479
  %v7543 = vadd.f32 %v7542, %v7480
  %v7544 = vadd.f32 %v7543, %v7481
  %v7545 = vadd.f32 %v7544, %v7482
  %v7546 = vadd.f32 %v7545, %v7483
  %v7547 = vadd.f32 %v7546, %v7484
  %v7548 = vadd.f32 %v7547, %v7485
  %v7549 = vadd.f32 %v7548, %v7486
  %v7550 = vadd.f32 %v7549, %v7487
  %v7551 = vadd.f32 %v7550, %v7488
  %v7552 = vadd.f32 %v7551, %v7489
  %v7553 = vadd.f32 %v7552, %v7490
  %v7554 = vadd.f32 %v7553, %v7491
  %v7555 = vadd.f32 %v7554, %v7492
  %v7556 = vadd.f32 %v7555, %v7493
  %v7557 = vadd.f32 %v7556, %v7494
  %v7558 = vadd.f32 %v7557, %v7495
  %v7559 = vadd.f32 %v7558, %v7496
  %v7560 = vadd.f32 %v7559, %v7497
  %v7561 = vadd.f32 %v7560, %v7498
  %v7562 = vadd.f32 %v7561, %v7499
  %v7563 = vadd.f32 %v7562, %v7500
  %v7564 = vadd.f32 %v7563, %v7501
  %v7565 = vadd.f32 %v7564, %v7502
  %v7566 = vadd.f32 %v7565, %v7503
  %v7567 = vadd.f32 %v7566, %v7504
  %v7568 = vadd.f32 %v7567, %v7505
  %v7569 = vadd.f32 %v7568, %v7506
  %v7570 = vadd.f32 %v7569, %v7507
  %v7571 = vadd.f32 %v7570, %v7508
  %v7572 = vadd.f32 %v7571, %v7509
  %v7573 = vadd.f32 %v7572, %v7510
  %v7574 = vadd.f32 %v7573, %v7511
  %v7575 = vadd.f32 %v7574, %v7512
  %v7576 = vadd.f32 %v7575, %v7513
  %v7577 = vadd.f32 %v7576, %v7514
  %v7578 = vadd.f32 %v7577, %v7515
  %v7579 = vadd.f32 %v7578, %v7516
  %v7580 = vadd.f32 %v7579, %v7517
  %v7581 = vadd.f32 %v7580, %v7518
  %v7582 = vadd.f32 %v7581, %v7519
  %v7583 = vadd.f32 %v7582, %v7520
  %v7584 = vadd.f32 %v7583, %v7521
  %v7585 = vadd.f32 %v7584, %v7522
  %v7586 = vadd.f32 %v7585, %v7523
  %v7587 = vadd.f32 %v7586, %v7524
  %v7588 = vadd.f32 %v7587, %v7525
  %v7589 = vrot.slane %v7588, 4
  %v7590 = vadd.f32 %v7588, %v7589
  %v7591 = vrot.slane %v7590, 2
  %v7592 = vadd.f32 %v7590, %v7591
  %v7593 = vrot.slane %v7592, 1
  %v7594 = vadd.f32 %v7592, %v7593
  %v7595 = vmul.f32 %v7461, 0.001953125
  %v7596 = vmul.f32 %v7594, 0.001953125
  %v7597 = vmul.f32 %v7595, %v7595
  %v7598 = vsub.f32 %v7596, %v7597
  %v7599 = vmax.f32 %v7598, 0.0
  %v7600 = vadd.f32 %v7599, 0.001
  %v7601 = vrsqrt.pop %v7600
  %v7602 = vmul.f32 %v32, %v7601
  %v7603 = vmul.f32 %v7595, %v7602
  %v7604 = vsub.f32 %v33, %v7603
  %v7605 = vlaneseq
  %v7606 = vshrl.u32 %v7605, 7
  %v7607 = vsub.s32 7, %v7606
  %v7608 = vrot.slane %v7602, %v7607
  %v7609 = vmul.f32 %v7139, %v7608
  %v7610 = vmul.f32 %v7142, %v7608
  %v7611 = vmul.f32 %v7147, %v7608
  %v7612 = vmul.f32 %v7150, %v7608
  %v7613 = vmul.f32 %v7155, %v7608
  %v7614 = vmul.f32 %v7158, %v7608
  %v7615 = vmul.f32 %v7163, %v7608
  %v7616 = vmul.f32 %v7166, %v7608
  %v7617 = vmul.f32 %v7171, %v7608
  %v7618 = vmul.f32 %v7174, %v7608
  %v7619 = vmul.f32 %v7179, %v7608
  %v7620 = vmul.f32 %v7182, %v7608
  %v7621 = vmul.f32 %v7187, %v7608
  %v7622 = vmul.f32 %v7190, %v7608
  %v7623 = vmul.f32 %v7195, %v7608
  %v7624 = vmul.f32 %v7198, %v7608
  %v7625 = vmul.f32 %v7203, %v7608
  %v7626 = vmul.f32 %v7206, %v7608
  %v7627 = vmul.f32 %v7211, %v7608
  %v7628 = vmul.f32 %v7214, %v7608
  %v7629 = vmul.f32 %v7219, %v7608
  %v7630 = vmul.f32 %v7222, %v7608
  %v7631 = vmul.f32 %v7227, %v7608
  %v7632 = vmul.f32 %v7230, %v7608
  %v7633 = vmul.f32 %v7235, %v7608
  %v7634 = vmul.f32 %v7238, %v7608
  %v7635 = vmul.f32 %v7243, %v7608
  %v7636 = vmul.f32 %v7246, %v7608
  %v7637 = vmul.f32 %v7251, %v7608
  %v7638 = vmul.f32 %v7254, %v7608
  %v7639 = vmul.f32 %v7259, %v7608
  %v7640 = vmul.f32 %v7262, %v7608
  %v7641 = vmul.f32 %v7267, %v7608
  %v7642 = vmul.f32 %v7270, %v7608
  %v7643 = vmul.f32 %v7275, %v7608
  %v7644 = vmul.f32 %v7278, %v7608
  %v7645 = vmul.f32 %v7283, %v7608
  %v7646 = vmul.f32 %v7286, %v7608
  %v7647 = vmul.f32 %v7291, %v7608
  %v7648 = vmul.f32 %v7294, %v7608
  %v7649 = vmul.f32 %v7299, %v7608
  %v7650 = vmul.f32 %v7302, %v7608
  %v7651 = vmul.f32 %v7307, %v7608
  %v7652 = vmul.f32 %v7310, %v7608
  %v7653 = vmul.f32 %v7315, %v7608
  %v7654 = vmul.f32 %v7318, %v7608
  %v7655 = vmul.f32 %v7323, %v7608
  %v7656 = vmul.f32 %v7326, %v7608
  %v7657 = vmul.f32 %v7331, %v7608
  %v7658 = vmul.f32 %v7334, %v7608
  %v7659 = vmul.f32 %v7339, %v7608
  %v7660 = vmul.f32 %v7342, %v7608
  %v7661 = vmul.f32 %v7347, %v7608
  %v7662 = vmul.f32 %v7350, %v7608
  %v7663 = vmul.f32 %v7355, %v7608
  %v7664 = vmul.f32 %v7358, %v7608
  %v7665 = vmul.f32 %v7363, %v7608
  %v7666 = vmul.f32 %v7366, %v7608
  %v7667 = vmul.f32 %v7371, %v7608
  %v7668 = vmul.f32 %v7374, %v7608
  %v7669 = vmul.f32 %v7379, %v7608
  %v7670 = vmul.f32 %v7382, %v7608
  %v7671 = vmul.f32 %v7387, %v7608
  %v7672 = vmul.f32 %v7390, %v7608
  %v7673 = vlaneseq
  %v7674 = vshrl.u32 %v7673, 7
  %v7675 = vsub.s32 7, %v7674
  %v7676 = vrot.slane %v7604, %v7675
  %v7677 = vadd.f32 %v7609, %v7676
  %v7678 = vadd.f32 %v7610, %v7676
  %v7679 = vadd.f32 %v7611, %v7676
  %v7680 = vadd.f32 %v7612, %v7676
  %v7681 = vadd.f32 %v7613, %v7676
  %v7682 = vadd.f32 %v7614, %v7676
  %v7683 = vadd.f32 %v7615, %v7676
  %v7684 = vadd.f32 %v7616, %v7676
  %v7685 = vadd.f32 %v7617, %v7676
  %v7686 = vadd.f32 %v7618, %v7676
  %v7687 = vadd.f32 %v7619, %v7676
  %v7688 = vadd.f32 %v7620, %v7676
  %v7689 = vadd.f32 %v7621, %v7676
  %v7690 = vadd.f32 %v7622, %v7676
  %v7691 = vadd.f32 %v7623, %v7676
  %v7692 = vadd.f32 %v7624, %v7676
  %v7693 = vadd.f32 %v7625, %v7676
  %v7694 = vadd.f32 %v7626, %v7676
  %v7695 = vadd.f32 %v7627, %v7676
  %v7696 = vadd.f32 %v7628, %v7676
  %v7697 = vadd.f32 %v7629, %v7676
  %v7698 = vadd.f32 %v7630, %v7676
  %v7699 = vadd.f32 %v7631, %v7676
  %v7700 = vadd.f32 %v7632, %v7676
  %v7701 = vadd.f32 %v7633, %v7676
  %v7702 = vadd.f32 %v7634, %v7676
  %v7703 = vadd.f32 %v7635, %v7676
  %v7704 = vadd.f32 %v7636, %v7676
  %v7705 = vadd.f32 %v7637, %v7676
  %v7706 = vadd.f32 %v7638, %v7676
  %v7707 = vadd.f32 %v7639, %v7676
  %v7708 = vadd.f32 %v7640, %v7676
  %v7709 = vadd.f32 %v7641, %v7676
  %v7710 = vadd.f32 %v7642, %v7676
  %v7711 = vadd.f32 %v7643, %v7676
  %v7712 = vadd.f32 %v7644, %v7676
  %v7713 = vadd.f32 %v7645, %v7676
  %v7714 = vadd.f32 %v7646, %v7676
  %v7715 = vadd.f32 %v7647, %v7676
  %v7716 = vadd.f32 %v7648, %v7676
  %v7717 = vadd.f32 %v7649, %v7676
  %v7718 = vadd.f32 %v7650, %v7676
  %v7719 = vadd.f32 %v7651, %v7676
  %v7720 = vadd.f32 %v7652, %v7676
  %v7721 = vadd.f32 %v7653, %v7676
  %v7722 = vadd.f32 %v7654, %v7676
  %v7723 = vadd.f32 %v7655, %v7676
  %v7724 = vadd.f32 %v7656, %v7676
  %v7725 = vadd.f32 %v7657, %v7676
  %v7726 = vadd.f32 %v7658, %v7676
  %v7727 = vadd.f32 %v7659, %v7676
  %v7728 = vadd.f32 %v7660, %v7676
  %v7729 = vadd.f32 %v7661, %v7676
  %v7730 = vadd.f32 %v7662, %v7676
  %v7731 = vadd.f32 %v7663, %v7676
  %v7732 = vadd.f32 %v7664, %v7676
  %v7733 = vadd.f32 %v7665, %v7676
  %v7734 = vadd.f32 %v7666, %v7676
  %v7735 = vadd.f32 %v7667, %v7676
  %v7736 = vadd.f32 %v7668, %v7676
  %v7737 = vadd.f32 %v7669, %v7676
  %v7738 = vadd.f32 %v7670, %v7676
  %v7739 = vadd.f32 %v7671, %v7676
  %v7740 = vadd.f32 %v7672, %v7676
  %v7741 = vmax.f32 %v7677, 0.0
  %v7742 = vmax.f32 %v7678, 0.0
  %v7743 = vmax.f32 %v7679, 0.0
  %v7744 = vmax.f32 %v7680, 0.0
  %v7745 = vmax.f32 %v7681, 0.0
  %v7746 = vmax.f32 %v7682, 0.0
  %v7747 = vmax.f32 %v7683, 0.0
  %v7748 = vmax.f32 %v7684, 0.0
  %v7749 = vmax.f32 %v7685, 0.0
  %v7750 = vmax.f32 %v7686, 0.0
  %v7751 = vmax.f32 %v7687, 0.0
  %v7752 = vmax.f32 %v7688, 0.0
  %v7753 = vmax.f32 %v7689, 0.0
  %v7754 = vmax.f32 %v7690, 0.0
  %v7755 = vmax.f32 %v7691, 0.0
  %v7756 = vmax.f32 %v7692, 0.0
  %v7757 = vmax.f32 %v7693, 0.0
  %v7758 = vmax.f32 %v7694, 0.0
  %v7759 = vmax.f32 %v7695, 0.0
  %v7760 = vmax.f32 %v7696, 0.0
  %v7761 = vmax.f32 %v7697, 0.0
  %v7762 = vmax.f32 %v7698, 0.0
  %v7763 = vmax.f32 %v7699, 0.0
  %v7764 = vmax.f32 %v7700, 0.0
  %v7765 = vmax.f32 %v7701, 0.0
  %v7766 = vmax.f32 %v7702, 0.0
  %v7767 = vmax.f32 %v7703, 0.0
  %v7768 = vmax.f32 %v7704, 0.0
  %v7769 = vmax.f32 %v7705, 0.0
  %v7770 = vmax.f32 %v7706, 0.0
  %v7771 = vmax.f32 %v7707, 0.0
  %v7772 = vmax.f32 %v7708, 0.0
  %v7773 = vmax.f32 %v7709, 0.0
  %v7774 = vmax.f32 %v7710, 0.0
  %v7775 = vmax.f32 %v7711, 0.0
  %v7776 = vmax.f32 %v7712, 0.0
  %v7777 = vmax.f32 %v7713, 0.0
  %v7778 = vmax.f32 %v7714, 0.0
  %v7779 = vmax.f32 %v7715, 0.0
  %v7780 = vmax.f32 %v7716, 0.0
  %v7781 = vmax.f32 %v7717, 0.0
  %v7782 = vmax.f32 %v7718, 0.0
  %v7783 = vmax.f32 %v7719, 0.0
  %v7784 = vmax.f32 %v7720, 0.0
  %v7785 = vmax.f32 %v7721, 0.0
  %v7786 = vmax.f32 %v7722, 0.0
  %v7787 = vmax.f32 %v7723, 0.0
  %v7788 = vmax.f32 %v7724, 0.0
  %v7789 = vmax.f32 %v7725, 0.0
  %v7790 = vmax.f32 %v7726, 0.0
  %v7791 = vmax.f32 %v7727, 0.0
  %v7792 = vmax.f32 %v7728, 0.0
  %v7793 = vmax.f32 %v7729, 0.0
  %v7794 = vmax.f32 %v7730, 0.0
  %v7795 = vmax.f32 %v7731, 0.0
  %v7796 = vmax.f32 %v7732, 0.0
  %v7797 = vmax.f32 %v7733, 0.0
  %v7798 = vmax.f32 %v7734, 0.0
  %v7799 = vmax.f32 %v7735, 0.0
  %v7800 = vmax.f32 %v7736, 0.0
  %v7801 = vmax.f32 %v7737, 0.0
  %v7802 = vmax.f32 %v7738, 0.0
  %v7803 = vmax.f32 %v7739, 0.0
  %v7804 = vmax.f32 %v7740, 0.0
  %v7805 = vpack.c.bf16 %v7742, %v7741
  %v7806 = vpack.c.bf16 %v7744, %v7743
  %v7807 = vpack.c.bf16 %v7746, %v7745
  %v7808 = vpack.c.bf16 %v7748, %v7747
  %v7809 = vpack.c.bf16 %v7750, %v7749
  %v7810 = vpack.c.bf16 %v7752, %v7751
  %v7811 = vpack.c.bf16 %v7754, %v7753
  %v7812 = vpack.c.bf16 %v7756, %v7755
  %v7813 = vpack.c.bf16 %v7758, %v7757
  %v7814 = vpack.c.bf16 %v7760, %v7759
  %v7815 = vpack.c.bf16 %v7762, %v7761
  %v7816 = vpack.c.bf16 %v7764, %v7763
  %v7817 = vpack.c.bf16 %v7766, %v7765
  %v7818 = vpack.c.bf16 %v7768, %v7767
  %v7819 = vpack.c.bf16 %v7770, %v7769
  %v7820 = vpack.c.bf16 %v7772, %v7771
  %v7821 = vpack.c.bf16 %v7774, %v7773
  %v7822 = vpack.c.bf16 %v7776, %v7775
  %v7823 = vpack.c.bf16 %v7778, %v7777
  %v7824 = vpack.c.bf16 %v7780, %v7779
  %v7825 = vpack.c.bf16 %v7782, %v7781
  %v7826 = vpack.c.bf16 %v7784, %v7783
  %v7827 = vpack.c.bf16 %v7786, %v7785
  %v7828 = vpack.c.bf16 %v7788, %v7787
  %v7829 = vpack.c.bf16 %v7790, %v7789
  %v7830 = vpack.c.bf16 %v7792, %v7791
  %v7831 = vpack.c.bf16 %v7794, %v7793
  %v7832 = vpack.c.bf16 %v7796, %v7795
  %v7833 = vpack.c.bf16 %v7798, %v7797
  %v7834 = vpack.c.bf16 %v7800, %v7799
  %v7835 = vpack.c.bf16 %v7802, %v7801
  %v7836 = vpack.c.bf16 %v7804, %v7803
  %v7837 = vld [vmem:[%s6] sm:$0xf]
  %v7838 = vld [vmem:[%s6 + $0x4] sm:$0xf]
  %v7839 = vld [vmem:[%s6 + $0x8] sm:$0xf]
  %v7840 = vld [vmem:[%s6 + $0xc] sm:$0xf]
  %v7841 = vld [vmem:[%s6 + $0x10] sm:$0xf]
  %v7842 = vld [vmem:[%s6 + $0x14] sm:$0xf]
  %v7843 = vld [vmem:[%s6 + $0x18] sm:$0xf]
  %v7844 = vld [vmem:[%s6 + $0x1c] sm:$0xf]
  %v7845 = vld [vmem:[%s6 + $0x20] sm:$0xf]
  %v7846 = vld [vmem:[%s6 + $0x24] sm:$0xf]
  %v7847 = vld [vmem:[%s6 + $0x28] sm:$0xf]
  %v7848 = vld [vmem:[%s6 + $0x2c] sm:$0xf]
  %v7849 = vld [vmem:[%s6 + $0x30] sm:$0xf]
  %v7850 = vld [vmem:[%s6 + $0x34] sm:$0xf]
  %v7851 = vld [vmem:[%s6 + $0x38] sm:$0xf]
  %v7852 = vld [vmem:[%s6 + $0x3c] sm:$0xf]
  %v7853 = vld [vmem:[%s7] sm:$0x1]
  %v7855 = vlaneseq
  %v7856 = vshrl.u32 %v7855, 7
  %v7857 = vsub.s32 0, %v7856
  %v7858 = vrot.slane %v7853, %v7857
  %v7876 = vunpack.c.l.b16 %v7837
  %v7877 = vunpack.c.l.b16 %v7838
  %v7878 = vunpack.c.l.b16 %v7839
  %v7879 = vunpack.c.l.b16 %v7840
  %v7880 = vunpack.c.l.b16 %v7841
  %v7881 = vunpack.c.l.b16 %v7842
  %v7882 = vunpack.c.l.b16 %v7843
  %v7883 = vunpack.c.l.b16 %v7844
  %v7884 = vunpack.c.l.b16 %v7845
  %v7885 = vunpack.c.l.b16 %v7846
  %v7886 = vunpack.c.l.b16 %v7847
  %v7887 = vunpack.c.l.b16 %v7848
  %v7888 = vunpack.c.l.b16 %v7849
  %v7889 = vunpack.c.l.b16 %v7850
  %v7890 = vunpack.c.l.b16 %v7851
  %v7891 = vunpack.c.l.b16 %v7852
  %v7892 = vpack.c.b16 %v7877, %v7876
  %v7893 = vpack.c.b16 %v7879, %v7878
  %v7894 = vpack.c.b16 %v7881, %v7880
  %v7895 = vpack.c.b16 %v7883, %v7882
  %v7896 = vpack.c.b16 %v7885, %v7884
  %v7897 = vpack.c.b16 %v7887, %v7886
  %v7898 = vpack.c.b16 %v7889, %v7888
  %v7899 = vpack.c.b16 %v7891, %v7890
  %7908 = vmatprep.subr.bf16.mxu0 0
  %7909 = vmatpush1.bf16.msra.mxu0 %v7892
  %7910 = vmatprep.subr.bf16.mxu0 0
  %7911 = vmatpush1.bf16.msra.mxu0 %v7893
  %7912 = vmatprep.subr.bf16.mxu0 0
  %7913 = vmatpush1.bf16.msra.mxu0 %v7894
  %7914 = vmatprep.subr.bf16.mxu0 0
  %7915 = vmatpush1.bf16.msra.mxu0 %v7895
  %7916 = vmatprep.subr.bf16.mxu0 0
  %7917 = vmatpush1.bf16.msra.mxu0 %v7896
  %7918 = vmatprep.subr.bf16.mxu0 0
  %7919 = vmatpush1.bf16.msra.mxu0 %v7897
  %7920 = vmatprep.subr.bf16.mxu0 0
  %7921 = vmatpush1.bf16.msra.mxu0 %v7898
  %7922 = vmatprep.subr.bf16.mxu0 0
  %7923 = vmatpush1.bf16.msra.mxu0 %v7899
  %7924 = vmatprep.subr.bf16.mxu0 0
  %7925 = vmatpush1.bf16.msra.mxu0 0
  %7926 = vmatprep.subr.bf16.mxu0 0
  %7927 = vmatpush1.bf16.msra.mxu0 0
  %7928 = vmatprep.subr.bf16.mxu0 0
  %7929 = vmatpush1.bf16.msra.mxu0 0
  %7930 = vmatprep.subr.bf16.mxu0 0
  %7931 = vmatpush1.bf16.msra.mxu0 0
  %7932 = vmatprep.subr.bf16.mxu0 0
  %7933 = vmatpush1.bf16.msra.mxu0 0
  %7934 = vmatprep.subr.bf16.mxu0 0
  %7935 = vmatpush1.bf16.msra.mxu0 0
  %7936 = vmatprep.subr.bf16.mxu0 0
  %7937 = vmatpush1.bf16.msra.mxu0 0
  %7938 = vmatprep.subr.bf16.mxu0 0
  %7939 = vmatpush1.bf16.msra.mxu0 0
  %7940 = vmatprep.mubr.bf16.mxu0 0
  %7941 = vmatmul.mubr.bf16.gmra.mrb[0].mxu0 %v7805
  %v7942 = vpop.f32.mrb[0].mxu0
  %v7943 = vadd.f32 %v7858, %v7942
  %v7944 = vpop.f32.mrb[0].mxu0
  %v7945 = vpop.f32.mrb[0].mxu0
  %v7946 = vadd.f32 %v7858, %v7945
  %v7947 = vpop.f32.mrb[0].mxu0
  %7948 = vmatprep.mubr.bf16.mxu0 0
  %7949 = vmatmul.mubr.bf16.gmra.mrb[0].mxu0 %v7806
  %v7950 = vpop.f32.mrb[0].mxu0
  %v7951 = vadd.f32 %v7858, %v7950
  %v7952 = vpop.f32.mrb[0].mxu0
  %v7953 = vpop.f32.mrb[0].mxu0
  %v7954 = vadd.f32 %v7858, %v7953
  %v7955 = vpop.f32.mrb[0].mxu0
  %7956 = vmatprep.mubr.bf16.mxu0 0
  %7957 = vmatmul.mubr.bf16.gmra.mrb[0].mxu0 %v7807
  %v7958 = vpop.f32.mrb[0].mxu0
  %v7959 = vadd.f32 %v7858, %v7958
  %v7960 = vpop.f32.mrb[0].mxu0
  %v7961 = vpop.f32.mrb[0].mxu0
  %v7962 = vadd.f32 %v7858, %v7961
  %v7963 = vpop.f32.mrb[0].mxu0
  %7964 = vmatprep.mubr.bf16.mxu0 0
  %7965 = vmatmul.mubr.bf16.gmra.mrb[0].mxu0 %v7808
  %v7966 = vpop.f32.mrb[0].mxu0
  %v7967 = vadd.f32 %v7858, %v7966
  %v7968 = vpop.f32.mrb[0].mxu0
  %v7969 = vpop.f32.mrb[0].mxu0
  %v7970 = vadd.f32 %v7858, %v7969
  %v7971 = vpop.f32.mrb[0].mxu0
  %7972 = vmatprep.mubr.bf16.mxu0 0
  %7973 = vmatmul.mubr.bf16.gmra.mrb[0].mxu0 %v7809
  %v7974 = vpop.f32.mrb[0].mxu0
  %v7975 = vadd.f32 %v7858, %v7974
  %v7976 = vpop.f32.mrb[0].mxu0
  %v7977 = vpop.f32.mrb[0].mxu0
  %v7978 = vadd.f32 %v7858, %v7977
  %v7979 = vpop.f32.mrb[0].mxu0
  %7980 = vmatprep.mubr.bf16.mxu0 0
  %7981 = vmatmul.mubr.bf16.gmra.mrb[0].mxu0 %v7810
  %v7982 = vpop.f32.mrb[0].mxu0
  %v7983 = vadd.f32 %v7858, %v7982
  %v7984 = vpop.f32.mrb[0].mxu0
  %v7985 = vpop.f32.mrb[0].mxu0
  %v7986 = vadd.f32 %v7858, %v7985
  %v7987 = vpop.f32.mrb[0].mxu0
  %7988 = vmatprep.mubr.bf16.mxu0 0
  %7989 = vmatmul.mubr.bf16.gmra.mrb[0].mxu0 %v7811
  %v7990 = vpop.f32.mrb[0].mxu0
  %v7991 = vadd.f32 %v7858, %v7990
  %v7992 = vpop.f32.mrb[0].mxu0
  %v7993 = vpop.f32.mrb[0].mxu0
  %v7994 = vadd.f32 %v7858, %v7993
  %v7995 = vpop.f32.mrb[0].mxu0
  %7996 = vmatprep.mubr.bf16.mxu0 0
  %7997 = vmatmul.mubr.bf16.gmra.mrb[0].mxu0 %v7812
  %v7998 = vpop.f32.mrb[0].mxu0
  %v7999 = vadd.f32 %v7858, %v7998
  %v8000 = vpop.f32.mrb[0].mxu0
  %v8001 = vpop.f32.mrb[0].mxu0
  %v8002 = vadd.f32 %v7858, %v8001
  %v8003 = vpop.f32.mrb[0].mxu0
  %8004 = vmatprep.mubr.bf16.mxu0 0
  %8005 = vmatmul.mubr.bf16.gmra.mrb[0].mxu0 %v7813
  %v8006 = vpop.f32.mrb[0].mxu0
  %v8007 = vadd.f32 %v7858, %v8006
  %v8008 = vpop.f32.mrb[0].mxu0
  %v8009 = vpop.f32.mrb[0].mxu0
  %v8010 = vadd.f32 %v7858, %v8009
  %v8011 = vpop.f32.mrb[0].mxu0
  %8012 = vmatprep.mubr.bf16.mxu0 0
  %8013 = vmatmul.mubr.bf16.gmra.mrb[0].mxu0 %v7814
  %v8014 = vpop.f32.mrb[0].mxu0
  %v8015 = vadd.f32 %v7858, %v8014
  %v8016 = vpop.f32.mrb[0].mxu0
  %v8017 = vpop.f32.mrb[0].mxu0
  %v8018 = vadd.f32 %v7858, %v8017
  %v8019 = vpop.f32.mrb[0].mxu0
  %8020 = vmatprep.mubr.bf16.mxu0 0
  %8021 = vmatmul.mubr.bf16.gmra.mrb[0].mxu0 %v7815
  %v8022 = vpop.f32.mrb[0].mxu0
  %v8023 = vadd.f32 %v7858, %v8022
  %v8024 = vpop.f32.mrb[0].mxu0
  %v8025 = vpop.f32.mrb[0].mxu0
  %v8026 = vadd.f32 %v7858, %v8025
  %v8027 = vpop.f32.mrb[0].mxu0
  %8028 = vmatprep.mubr.bf16.mxu0 0
  %8029 = vmatmul.mubr.bf16.gmra.mrb[0].mxu0 %v7816
  %v8030 = vpop.f32.mrb[0].mxu0
  %v8031 = vadd.f32 %v7858, %v8030
  %v8032 = vpop.f32.mrb[0].mxu0
  %v8033 = vpop.f32.mrb[0].mxu0
  %v8034 = vadd.f32 %v7858, %v8033
  %v8035 = vpop.f32.mrb[0].mxu0
  %8036 = vmatprep.mubr.bf16.mxu0 0
  %8037 = vmatmul.mubr.bf16.gmra.mrb[0].mxu0 %v7817
  %v8038 = vpop.f32.mrb[0].mxu0
  %v8039 = vadd.f32 %v7858, %v8038
  %v8040 = vpop.f32.mrb[0].mxu0
  %v8041 = vpop.f32.mrb[0].mxu0
  %v8042 = vadd.f32 %v7858, %v8041
  %v8043 = vpop.f32.mrb[0].mxu0
  %8044 = vmatprep.mubr.bf16.mxu0 0
  %8045 = vmatmul.mubr.bf16.gmra.mrb[0].mxu0 %v7818
  %v8046 = vpop.f32.mrb[0].mxu0
  %v8047 = vadd.f32 %v7858, %v8046
  %v8048 = vpop.f32.mrb[0].mxu0
  %v8049 = vpop.f32.mrb[0].mxu0
  %v8050 = vadd.f32 %v7858, %v8049
  %v8051 = vpop.f32.mrb[0].mxu0
  %8052 = vmatprep.mubr.bf16.mxu0 0
  %8053 = vmatmul.mubr.bf16.gmra.mrb[0].mxu0 %v7819
  %v8054 = vpop.f32.mrb[0].mxu0
  %v8055 = vadd.f32 %v7858, %v8054
  %v8056 = vpop.f32.mrb[0].mxu0
  %v8057 = vpop.f32.mrb[0].mxu0
  %v8058 = vadd.f32 %v7858, %v8057
  %v8059 = vpop.f32.mrb[0].mxu0
  %8060 = vmatprep.mubr.bf16.mxu0 0
  %8061 = vmatmul.mubr.bf16.gmra.mrb[0].mxu0 %v7820
  %v8062 = vpop.f32.mrb[0].mxu0
  %v8063 = vadd.f32 %v7858, %v8062
  %v8064 = vpop.f32.mrb[0].mxu0
  %v8065 = vpop.f32.mrb[0].mxu0
  %v8066 = vadd.f32 %v7858, %v8065
  %v8067 = vpop.f32.mrb[0].mxu0
  %8068 = vmatprep.mubr.bf16.mxu0 0
  %8069 = vmatmul.mubr.bf16.gmra.mrb[0].mxu0 %v7821
  %v8070 = vpop.f32.mrb[0].mxu0
  %v8071 = vadd.f32 %v7858, %v8070
  %v8072 = vpop.f32.mrb[0].mxu0
  %v8073 = vpop.f32.mrb[0].mxu0
  %v8074 = vadd.f32 %v7858, %v8073
  %v8075 = vpop.f32.mrb[0].mxu0
  %8076 = vmatprep.mubr.bf16.mxu0 0
  %8077 = vmatmul.mubr.bf16.gmra.mrb[0].mxu0 %v7822
  %v8078 = vpop.f32.mrb[0].mxu0
  %v8079 = vadd.f32 %v7858, %v8078
  %v8080 = vpop.f32.mrb[0].mxu0
  %v8081 = vpop.f32.mrb[0].mxu0
  %v8082 = vadd.f32 %v7858, %v8081
  %v8083 = vpop.f32.mrb[0].mxu0
  %8084 = vmatprep.mubr.bf16.mxu0 0
  %8085 = vmatmul.mubr.bf16.gmra.mrb[0].mxu0 %v7823
  %v8086 = vpop.f32.mrb[0].mxu0
  %v8087 = vadd.f32 %v7858, %v8086
  %v8088 = vpop.f32.mrb[0].mxu0
  %v8089 = vpop.f32.mrb[0].mxu0
  %v8090 = vadd.f32 %v7858, %v8089
  %v8091 = vpop.f32.mrb[0].mxu0
  %8092 = vmatprep.mubr.bf16.mxu0 0
  %8093 = vmatmul.mubr.bf16.gmra.mrb[0].mxu0 %v7824
  %v8094 = vpop.f32.mrb[0].mxu0
  %v8095 = vadd.f32 %v7858, %v8094
  %v8096 = vpop.f32.mrb[0].mxu0
  %v8097 = vpop.f32.mrb[0].mxu0
  %v8098 = vadd.f32 %v7858, %v8097
  %v8099 = vpop.f32.mrb[0].mxu0
  %8100 = vmatprep.mubr.bf16.mxu0 0
  %8101 = vmatmul.mubr.bf16.gmra.mrb[0].mxu0 %v7825
  %v8102 = vpop.f32.mrb[0].mxu0
  %v8103 = vadd.f32 %v7858, %v8102
  %v8104 = vpop.f32.mrb[0].mxu0
  %v8105 = vpop.f32.mrb[0].mxu0
  %v8106 = vadd.f32 %v7858, %v8105
  %v8107 = vpop.f32.mrb[0].mxu0
  %8108 = vmatprep.mubr.bf16.mxu0 0
  %8109 = vmatmul.mubr.bf16.gmra.mrb[0].mxu0 %v7826
  %v8110 = vpop.f32.mrb[0].mxu0
  %v8111 = vadd.f32 %v7858, %v8110
  %v8112 = vpop.f32.mrb[0].mxu0
  %v8113 = vpop.f32.mrb[0].mxu0
  %v8114 = vadd.f32 %v7858, %v8113
  %v8115 = vpop.f32.mrb[0].mxu0
  %8116 = vmatprep.mubr.bf16.mxu0 0
  %8117 = vmatmul.mubr.bf16.gmra.mrb[0].mxu0 %v7827
  %v8118 = vpop.f32.mrb[0].mxu0
  %v8119 = vadd.f32 %v7858, %v8118
  %v8120 = vpop.f32.mrb[0].mxu0
  %v8121 = vpop.f32.mrb[0].mxu0
  %v8122 = vadd.f32 %v7858, %v8121
  %v8123 = vpop.f32.mrb[0].mxu0
  %8124 = vmatprep.mubr.bf16.mxu0 0
  %8125 = vmatmul.mubr.bf16.gmra.mrb[0].mxu0 %v7828
  %v8126 = vpop.f32.mrb[0].mxu0
  %v8127 = vadd.f32 %v7858, %v8126
  %v8128 = vpop.f32.mrb[0].mxu0
  %v8129 = vpop.f32.mrb[0].mxu0
  %v8130 = vadd.f32 %v7858, %v8129
  %v8131 = vpop.f32.mrb[0].mxu0
  %8132 = vmatprep.mubr.bf16.mxu0 0
  %8133 = vmatmul.mubr.bf16.gmra.mrb[0].mxu0 %v7829
  %v8134 = vpop.f32.mrb[0].mxu0
  %v8135 = vadd.f32 %v7858, %v8134
  %v8136 = vpop.f32.mrb[0].mxu0
  %v8137 = vpop.f32.mrb[0].mxu0
  %v8138 = vadd.f32 %v7858, %v8137
  %v8139 = vpop.f32.mrb[0].mxu0
  %8140 = vmatprep.mubr.bf16.mxu0 0
  %8141 = vmatmul.mubr.bf16.gmra.mrb[0].mxu0 %v7830
  %v8142 = vpop.f32.mrb[0].mxu0
  %v8143 = vadd.f32 %v7858, %v8142
  %v8144 = vpop.f32.mrb[0].mxu0
  %v8145 = vpop.f32.mrb[0].mxu0
  %v8146 = vadd.f32 %v7858, %v8145
  %v8147 = vpop.f32.mrb[0].mxu0
  %8148 = vmatprep.mubr.bf16.mxu0 0
  %8149 = vmatmul.mubr.bf16.gmra.mrb[0].mxu0 %v7831
  %v8150 = vpop.f32.mrb[0].mxu0
  %v8151 = vadd.f32 %v7858, %v8150
  %v8152 = vpop.f32.mrb[0].mxu0
  %v8153 = vpop.f32.mrb[0].mxu0
  %v8154 = vadd.f32 %v7858, %v8153
  %v8155 = vpop.f32.mrb[0].mxu0
  %8156 = vmatprep.mubr.bf16.mxu0 0
  %8157 = vmatmul.mubr.bf16.gmra.mrb[0].mxu0 %v7832
  %v8158 = vpop.f32.mrb[0].mxu0
  %v8159 = vadd.f32 %v7858, %v8158
  %v8160 = vpop.f32.mrb[0].mxu0
  %v8161 = vpop.f32.mrb[0].mxu0
  %v8162 = vadd.f32 %v7858, %v8161
  %v8163 = vpop.f32.mrb[0].mxu0
  %8164 = vmatprep.mubr.bf16.mxu0 0
  %8165 = vmatmul.mubr.bf16.gmra.mrb[0].mxu0 %v7833
  %v8166 = vpop.f32.mrb[0].mxu0
  %v8167 = vadd.f32 %v7858, %v8166
  %v8168 = vpop.f32.mrb[0].mxu0
  %v8169 = vpop.f32.mrb[0].mxu0
  %v8170 = vadd.f32 %v7858, %v8169
  %v8171 = vpop.f32.mrb[0].mxu0
  %8172 = vmatprep.mubr.bf16.mxu0 0
  %8173 = vmatmul.mubr.bf16.gmra.mrb[0].mxu0 %v7834
  %v8174 = vpop.f32.mrb[0].mxu0
  %v8175 = vadd.f32 %v7858, %v8174
  %v8176 = vpop.f32.mrb[0].mxu0
  %v8177 = vpop.f32.mrb[0].mxu0
  %v8178 = vadd.f32 %v7858, %v8177
  %v8179 = vpop.f32.mrb[0].mxu0
  %8180 = vmatprep.mubr.bf16.mxu0 0
  %8181 = vmatmul.mubr.bf16.gmra.mrb[0].mxu0 %v7835
  %v8182 = vpop.f32.mrb[0].mxu0
  %v8183 = vadd.f32 %v7858, %v8182
  %v8184 = vpop.f32.mrb[0].mxu0
  %v8185 = vpop.f32.mrb[0].mxu0
  %v8186 = vadd.f32 %v7858, %v8185
  %v8187 = vpop.f32.mrb[0].mxu0
  %8188 = vmatprep.mubr.bf16.mxu0 0
  %8189 = vmatmul.mubr.bf16.gmra.mrb[0].mxu0 %v7836
  %v8190 = vpop.f32.mrb[0].mxu0
  %v8191 = vadd.f32 %v7858, %v8190
  %v8192 = vpop.f32.mrb[0].mxu0
  %v8193 = vpop.f32.mrb[0].mxu0
  %v8194 = vadd.f32 %v7858, %v8193
  %v8195 = vpop.f32.mrb[0].mxu0
  %8196 = vdwg.mxu0
  %8197 = vst [vmem:[%s8] sm:$0xff] %v7943
  %8198 = vst [vmem:[%s8 + $0x8] sm:$0xff] %v7946
  %8199 = vst [vmem:[%s8 + $0x10] sm:$0xff] %v7951
  %8200 = vst [vmem:[%s8 + $0x18] sm:$0xff] %v7954
  %8201 = vst [vmem:[%s8 + $0x20] sm:$0xff] %v7959
  %8202 = vst [vmem:[%s8 + $0x28] sm:$0xff] %v7962
  %8203 = vst [vmem:[%s8 + $0x30] sm:$0xff] %v7967
  %8204 = vst [vmem:[%s8 + $0x38] sm:$0xff] %v7970
  %8205 = vst [vmem:[%s8 + $0x40] sm:$0xff] %v7975
  %8206 = vst [vmem:[%s8 + $0x48] sm:$0xff] %v7978
  %8207 = vst [vmem:[%s8 + $0x50] sm:$0xff] %v7983
  %8208 = vst [vmem:[%s8 + $0x58] sm:$0xff] %v7986
  %8209 = vst [vmem:[%s8 + $0x60] sm:$0xff] %v7991
  %8210 = vst [vmem:[%s8 + $0x68] sm:$0xff] %v7994
  %8211 = vst [vmem:[%s8 + $0x70] sm:$0xff] %v7999
  %8212 = vst [vmem:[%s8 + $0x78] sm:$0xff] %v8002
  %8213 = vst [vmem:[%s8 + $0x80] sm:$0xff] %v8007
  %8214 = vst [vmem:[%s8 + $0x88] sm:$0xff] %v8010
  %8215 = vst [vmem:[%s8 + $0x90] sm:$0xff] %v8015
  %8216 = vst [vmem:[%s8 + $0x98] sm:$0xff] %v8018
  %8217 = vst [vmem:[%s8 + $0xa0] sm:$0xff] %v8023
  %8218 = vst [vmem:[%s8 + $0xa8] sm:$0xff] %v8026
  %8219 = vst [vmem:[%s8 + $0xb0] sm:$0xff] %v8031
  %8220 = vst [vmem:[%s8 + $0xb8] sm:$0xff] %v8034
  %8221 = vst [vmem:[%s8 + $0xc0] sm:$0xff] %v8039
  %8222 = vst [vmem:[%s8 + $0xc8] sm:$0xff] %v8042
  %8223 = vst [vmem:[%s8 + $0xd0] sm:$0xff] %v8047
  %8224 = vst [vmem:[%s8 + $0xd8] sm:$0xff] %v8050
  %8225 = vst [vmem:[%s8 + $0xe0] sm:$0xff] %v8055
  %8226 = vst [vmem:[%s8 + $0xe8] sm:$0xff] %v8058
  %8227 = vst [vmem:[%s8 + $0xf0] sm:$0xff] %v8063
  %8228 = vst [vmem:[%s8 + $0xf8] sm:$0xff] %v8066
  %8229 = vst [vmem:[%s8 + $0x100] sm:$0xff] %v8071
  %8230 = vst [vmem:[%s8 + $0x108] sm:$0xff] %v8074
  %8231 = vst [vmem:[%s8 + $0x110] sm:$0xff] %v8079
  %8232 = vst [vmem:[%s8 + $0x118] sm:$0xff] %v8082
  %8233 = vst [vmem:[%s8 + $0x120] sm:$0xff] %v8087
  %8234 = vst [vmem:[%s8 + $0x128] sm:$0xff] %v8090
  %8235 = vst [vmem:[%s8 + $0x130] sm:$0xff] %v8095
  %8236 = vst [vmem:[%s8 + $0x138] sm:$0xff] %v8098
  %8237 = vst [vmem:[%s8 + $0x140] sm:$0xff] %v8103
  %8238 = vst [vmem:[%s8 + $0x148] sm:$0xff] %v8106
  %8239 = vst [vmem:[%s8 + $0x150] sm:$0xff] %v8111
  %8240 = vst [vmem:[%s8 + $0x158] sm:$0xff] %v8114
  %8241 = vst [vmem:[%s8 + $0x160] sm:$0xff] %v8119
  %8242 = vst [vmem:[%s8 + $0x168] sm:$0xff] %v8122
  %8243 = vst [vmem:[%s8 + $0x170] sm:$0xff] %v8127
  %8244 = vst [vmem:[%s8 + $0x178] sm:$0xff] %v8130
  %8245 = vst [vmem:[%s8 + $0x180] sm:$0xff] %v8135
  %8246 = vst [vmem:[%s8 + $0x188] sm:$0xff] %v8138
  %8247 = vst [vmem:[%s8 + $0x190] sm:$0xff] %v8143
  %8248 = vst [vmem:[%s8 + $0x198] sm:$0xff] %v8146
  %8249 = vst [vmem:[%s8 + $0x1a0] sm:$0xff] %v8151
  %8250 = vst [vmem:[%s8 + $0x1a8] sm:$0xff] %v8154
  %8251 = vst [vmem:[%s8 + $0x1b0] sm:$0xff] %v8159
  %8252 = vst [vmem:[%s8 + $0x1b8] sm:$0xff] %v8162
  %8253 = vst [vmem:[%s8 + $0x1c0] sm:$0xff] %v8167
  %8254 = vst [vmem:[%s8 + $0x1c8] sm:$0xff] %v8170
  %8255 = vst [vmem:[%s8 + $0x1d0] sm:$0xff] %v8175
  %8256 = vst [vmem:[%s8 + $0x1d8] sm:$0xff] %v8178
  %8257 = vst [vmem:[%s8 + $0x1e0] sm:$0xff] %v8183
  %8258 = vst [vmem:[%s8 + $0x1e8] sm:$0xff] %v8186
  %8259 = vst [vmem:[%s8 + $0x1f0] sm:$0xff] %v8191
  %8260 = vst [vmem:[%s8 + $0x1f8] sm:$0xff] %v8194
  // Predicated region
  $region34: #{vae_forward.1} parent=0 // pred_check
    _
  $region35: #{vae_forward.1} parent=0 // pred_check_branch
    %8262 = sbr.rel (0) target = $region37
  $region36: #{vae_forward.1} parent=0 // pred_region
    _
  $region37: #{vae_forward.1} parent=0 // pred_fallthru
    _
  // Predicated region
  $region38: #{vae_forward.1} parent=0 // pred_check
    _
  $region39: #{vae_forward.1} parent=0 // pred_check_branch
    %8264 = sbr.rel (0) target = $region41
  $region40: #{vae_forward.1} parent=0 // pred_region
    _
  $region41: #{vae_forward.1} parent=0 // pred_fallthru
    _
  // Predicated region
  $region42: #{vae_forward.1} parent=0 // pred_check
    _
  $region43: #{vae_forward.1} parent=0 // pred_check_branch
    %8266 = sbr.rel (0) target = $region45
  $region44: #{vae_forward.1} parent=0 // pred_region
    _
  $region45: #{vae_forward.1} parent=0 // pred_fallthru
    _
  // Predicated region
  $region46: #{vae_forward.1} parent=0 // pred_check
    _
  $region47: #{vae_forward.1} parent=0 // pred_check_branch
    %8268 = sbr.rel (0) target = $region49
  $region48: #{vae_forward.1} parent=0 // pred_region
    _
  $region49: #{vae_forward.1} parent=0 // pred_fallthru
    _

</llo_original>
